<compile_context>
chip_gen: v7x
topology: tpu7x:2x2x1
jax: 0.10.0
libtpu: 0.0.40
codegen_flags: <defaults>
</compile_context>

<pallas_src>
import functools

import jax
import jax.numpy as jnp
from jax import lax
from jax.experimental import pallas as pl
from jax.experimental.pallas import tpu as pltpu

EPS = 1e-5
LANE = 128
PADL = 8            # left/right spatial padding (8 keeps interior stores aligned)


def _round_up(x, m):
    return (x + m - 1) // m * m


# --------------------------------- kernels ---------------------------------- #

def _rrb_stage1_kernel(x_ref, w1_ref, b1_ref, mask_ref, w3_ref, b3_ref,
                       inp_ref, tpad_ref, sum_ref, sq_ref, *, H, W, Hp, Wp):
    """conv1x1 + conv3x3 #1 (single fused K=9*C GEMM) + partial BN stats."""
    CP = w3_ref.shape[1]
    M = H * W

    # conv1x1 over the whole zero-padded image (ring stays zero: bias added
    # only on interior pixels via the mask, so the conv3x3 SAME padding is 0).
    xp = x_ref[0]                                                 # (Hp*Wp, CinP) bf16
    y = jnp.dot(xp, w1_ref[...], preferred_element_type=jnp.float32)
    y3 = y.reshape(Hp, Wp, CP)
    y3 = y3 + b1_ref[...].reshape(1, 1, CP) * mask_ref[...]

    # nine shifted views, fused into one GEMM with K = 9*CP.
    taps = [y3[kh:kh + H, PADL - 1 + kw:PADL - 1 + kw + W, :]
            for kh in range(3) for kw in range(3)]
    inp_ref[0] = taps[4].reshape(M, CP)                           # residual = conv1x1 out
    tap2d = jnp.concatenate(taps, axis=-1).reshape(M, 9 * CP).astype(jnp.bfloat16)
    t = jnp.dot(tap2d, w3_ref[...], preferred_element_type=jnp.float32) + b3_ref[...]

    # per-image partial BatchNorm statistics (reduced across the grid in JAX).
    s = jnp.sum(t, axis=0, keepdims=True)
    sq = jnp.sum(t * t, axis=0, keepdims=True)
    sum_ref[0] = jnp.broadcast_to(s, (8, CP))
    sq_ref[0] = jnp.broadcast_to(sq, (8, CP))

    # hand the pre-BN activation to stage 2 already zero-padded spatially.
    tpad_ref[...] = jnp.zeros(tpad_ref.shape, tpad_ref.dtype)
    tpad_ref[0, 1:H + 1, PADL:PADL + W, :] = t.reshape(H, W, CP)


def _rrb_stage2_kernel(tpad_ref, scale_ref, shift_ref, mask_ref, w3_ref, b3_ref,
                       inp_ref, out_ref, *, H, W, Hp, Wp):
    """fused BN + ReLU + conv3x3 #2 + residual + ReLU."""
    CP = w3_ref.shape[1]
    M = H * W

    t3 = tpad_ref[0]                                              # (Hp, Wp, CP) f32
    a3 = jnp.maximum(t3 * scale_ref[...].reshape(1, 1, CP)
                     + shift_ref[...].reshape(1, 1, CP), 0.0) * mask_ref[...]

    taps = [a3[kh:kh + H, PADL - 1 + kw:PADL - 1 + kw + W, :]
            for kh in range(3) for kw in range(3)]
    tap2d = jnp.concatenate(taps, axis=-1).reshape(M, 9 * CP).astype(jnp.bfloat16)
    z = jnp.dot(tap2d, w3_ref[...], preferred_element_type=jnp.float32) + b3_ref[...]
    out_ref[0] = jnp.maximum(z + inp_ref[0], 0.0)


# ------------------------------ pallas wrappers ------------------------------ #

def _stage1(x_pad_flat, w1, b1, mask, w3f, b3, *, N, H, W, Hp, Wp, CinP, CP):
    M, Mp = H * W, Hp * Wp
    kern = functools.partial(_rrb_stage1_kernel, H=H, W=W, Hp=Hp, Wp=Wp)
    return pl.pallas_call(
        kern,
        grid=(N,),
        in_specs=[
            pl.BlockSpec((1, Mp, CinP), lambda n: (n, 0, 0)),        # x (padded, flat)
            pl.BlockSpec((CinP, CP), lambda n: (0, 0)),              # w1 (resident)
            pl.BlockSpec((1, CP), lambda n: (0, 0)),                 # b1
            pl.BlockSpec((Hp, Wp, 1), lambda n: (0, 0, 0)),          # interior mask
            pl.BlockSpec((9 * CP, CP), lambda n: (0, 0)),            # w3 flat (resident)
            pl.BlockSpec((1, CP), lambda n: (0, 0)),                 # b3
        ],
        out_specs=[
            pl.BlockSpec((1, M, CP), lambda n: (n, 0, 0)),           # residual
            pl.BlockSpec((1, Hp, Wp, CP), lambda n: (n, 0, 0, 0)),   # pre-BN (padded)
            pl.BlockSpec((1, 8, CP), lambda n: (n, 0, 0)),           # partial sum
            pl.BlockSpec((1, 8, CP), lambda n: (n, 0, 0)),           # partial sum-of-squares
        ],
        out_shape=[
            jax.ShapeDtypeStruct((N, M, CP), jnp.float32),
            jax.ShapeDtypeStruct((N, Hp, Wp, CP), jnp.float32),
            jax.ShapeDtypeStruct((N, 8, CP), jnp.float32),
            jax.ShapeDtypeStruct((N, 8, CP), jnp.float32),
        ],
        compiler_params=pltpu.CompilerParams(dimension_semantics=("parallel",)),
    )(x_pad_flat, w1, b1, mask, w3f, b3)


def _stage2(t_pad, scale, shift, mask, w3f, b3, inp2d, *, N, H, W, Hp, Wp, CP):
    M = H * W
    kern = functools.partial(_rrb_stage2_kernel, H=H, W=W, Hp=Hp, Wp=Wp)
    return pl.pallas_call(
        kern,
        grid=(N,),
        in_specs=[
            pl.BlockSpec((1, Hp, Wp, CP), lambda n: (n, 0, 0, 0)),   # pre-BN (padded)
            pl.BlockSpec((1, CP), lambda n: (0, 0)),                 # BN scale
            pl.BlockSpec((1, CP), lambda n: (0, 0)),                 # BN shift
            pl.BlockSpec((Hp, Wp, 1), lambda n: (0, 0, 0)),          # interior mask
            pl.BlockSpec((9 * CP, CP), lambda n: (0, 0)),            # w3 flat (resident)
            pl.BlockSpec((1, CP), lambda n: (0, 0)),                 # b3
            pl.BlockSpec((1, M, CP), lambda n: (n, 0, 0)),           # residual
        ],
        out_specs=pl.BlockSpec((1, M, CP), lambda n: (n, 0, 0)),
        out_shape=jax.ShapeDtypeStruct((N, M, CP), jnp.float32),
        compiler_params=pltpu.CompilerParams(dimension_semantics=("parallel",)),
    )(t_pad, scale, shift, mask, w3f, b3, inp2d)


# -------------------------------- glue / model ------------------------------- #

def rrb_forward(x_nchw, params):
    N, Cin, H, W = x_nchw.shape
    Cout = params['b1'].shape[0]
    CinP = _round_up(Cin, LANE)
    CP = _round_up(Cout, LANE)
    Hp = H + 2
    Wp = _round_up(PADL + W + 1, 8)
    Mtot = N * H * W

    # NCHW -> NHWC, zero-pad spatially (left pad = PADL) and channel-pad to 128.
    x = jnp.transpose(x_nchw, (0, 2, 3, 1)).astype(jnp.float32)
    x_pad = jnp.pad(x, ((0, 0), (1, Hp - H - 1), (PADL, Wp - W - PADL),
                        (0, CinP - Cin)))
    x_pad_flat = x_pad.reshape(N, Hp * Wp, CinP).astype(jnp.bfloat16)

    # interior mask (1 on real pixels, 0 on the padding ring / filler columns).
    mask = jnp.pad(jnp.ones((H, W, 1), jnp.float32),
                   ((1, Hp - H - 1), (PADL, Wp - W - PADL), (0, 0)))

    # parameters, channel-padded to the lane width; bf16 for MXU operands.
    w1 = jnp.zeros((CinP, CP), jnp.float32).at[:Cin, :Cout].set(
        params['w1'].reshape(Cout, Cin).T).astype(jnp.bfloat16)
    b1 = jnp.zeros((1, CP), jnp.float32).at[0, :Cout].set(params['b1'])
    w3 = jnp.zeros((3, 3, CP, CP), jnp.float32).at[:, :, :Cout, :Cout].set(
        jnp.transpose(params['w3'], (2, 3, 1, 0)))           # (kh, kw, cin, cout)
    w3f = w3.reshape(9 * CP, CP).astype(jnp.bfloat16)
    b3 = jnp.zeros((1, CP), jnp.float32).at[0, :Cout].set(params['b3'])
    gamma = jnp.zeros((CP,), jnp.float32).at[:Cout].set(params['gamma'])
    beta = jnp.zeros((CP,), jnp.float32).at[:Cout].set(params['beta'])

    # stage 1: conv1x1 + conv3x3 #1 + partial BN stats.
    inp2d, t_pad, psum, psq = _stage1(x_pad_flat, w1, b1, mask, w3f, b3,
                                      N=N, H=H, W=W, Hp=Hp, Wp=Wp,
                                      CinP=CinP, CP=CP)

    # BatchNorm (training-mode biased batch stats) folded to scale/shift.
    s = jnp.sum(psum[:, 0, :], axis=0)
    sq = jnp.sum(psq[:, 0, :], axis=0)
    mean = s / Mtot
    var = jnp.maximum(sq / Mtot - mean * mean, 0.0)   # clamp cancellation negatives
    scale = (gamma * lax.rsqrt(var + EPS)).reshape(1, CP)
    shift = (beta - mean * scale[0]).reshape(1, CP)
    # TODO(synk): BatchNorm running_mean/var momentum buffer updates are
    # training-time state mutations that do not affect the forward output; skipped.

    # stage 2: BN + ReLU + conv3x3 #2 (same weights) + residual + ReLU.
    out2d = _stage2(t_pad, scale, shift, mask, w3f, b3, inp2d,
                    N=N, H=H, W=W, Hp=Hp, Wp=Wp, CP=CP)
    out = out2d.reshape(N, H, W, CP)[..., :Cout]
    return jnp.transpose(out, (0, 3, 1, 2))            # NHWC -> NCHW


# ------------------------------ pure-JAX reference --------------------------- #

def rrb_reference(x, p):
    dn = ('NCHW', 'OIHW', 'NCHW')
    inp = lax.conv_general_dilated(x, p['w1'], (1, 1), 'VALID',
                                   dimension_numbers=dn) + p['b1'][None, :, None, None]
    t = lax.conv_general_dilated(inp, p['w3'], (1, 1), ((1, 1), (1, 1)),
                                 dimension_numbers=dn) + p['b3'][None, :, None, None]
    mean = t.mean((0, 2, 3), keepdims=True)
    var = t.var((0, 2, 3), keepdims=True)
    a = (t - mean) * lax.rsqrt(var + EPS) * p['gamma'][None, :, None, None] \
        + p['beta'][None, :, None, None]
    a = jnp.maximum(a, 0.0)
    z = lax.conv_general_dilated(a, p['w3'], (1, 1), ((1, 1), (1, 1)),
                                 dimension_numbers=dn) + p['b3'][None, :, None, None]
    return jnp.maximum(z + inp, 0.0)


# ------------------------------------ main ----------------------------------- #

if __name__ == "__main__":
    N, Cin, Cout, H, W = 2, 4, 8, 16, 16
    ks = jax.random.split(jax.random.PRNGKey(0), 7)
    x = jax.random.normal(ks[0], (N, Cin, H, W), jnp.float32)
    params = {
        'w1': 0.3 * jax.random.normal(ks[1], (Cout, Cin, 1, 1), jnp.float32),
        'b1': 0.1 * jax.random.normal(ks[2], (Cout,), jnp.float32),
        'w3': 0.2 * jax.random.normal(ks[3], (Cout, Cout, 3, 3), jnp.float32),
        'b3': 0.1 * jax.random.normal(ks[4], (Cout,), jnp.float32),
        'gamma': 1.0 + 0.1 * jax.random.normal(ks[5], (Cout,), jnp.float32),
        'beta': 0.1 * jax.random.normal(ks[6], (Cout,), jnp.float32),
    }

    out = jax.block_until_ready(jax.jit(rrb_forward)(x, params))
    ref = rrb_reference(x, params)

    assert out.shape == (N, Cout, H, W), out.shape
    err = float(jnp.max(jnp.abs(out - ref)))
    # bf16 MXU inputs (f32 accumulation) -> slightly looser tolerance than pure f32.
    assert jnp.allclose(out, ref, atol=5e-2, rtol=5e-2), f"max abs err {err}"
    print("KERNEL_OK")
</pallas_src>

<mosaic_0001>
module attributes {stable_mosaic.version = 11 : i64} {
  func.func @_rrb_stage1_kernel(%arg0: i32, %arg1: memref<1x576x128xbf16, #tpu.memory_space<vmem>>, %arg2: memref<128x128xbf16, #tpu.memory_space<vmem>>, %arg3: memref<1x128xf32, #tpu.memory_space<vmem>>, %arg4: memref<18x32x1xf32, #tpu.memory_space<vmem>>, %arg5: memref<1152x128xbf16, #tpu.memory_space<vmem>>, %arg6: memref<1x128xf32, #tpu.memory_space<vmem>>, %arg7: memref<1x256x128xf32, #tpu.memory_space<vmem>>, %arg8: memref<1x18x32x128xf32, #tpu.memory_space<vmem>>, %arg9: memref<1x8x128xf32, #tpu.memory_space<vmem>>, %arg10: memref<1x8x128xf32, #tpu.memory_space<vmem>>) attributes {dimension_semantics = [#tpu.dimension_semantics<parallel>], iteration_bounds = array<i64: 2>, scalar_prefetch = 0 : i64, scratch_operands = 0 : i64, tpu.core_type = #tpu.core_type<tc>, window_params = [{transform_indices = @transform_0, window_bounds = array<i64: 1, 576, 128>}, {pipeline_mode = #tpu.pipeline_mode<synchronous>, transform_indices = @transform_1, window_bounds = array<i64: 128, 128>}, {pipeline_mode = #tpu.pipeline_mode<synchronous>, transform_indices = @transform_2, window_bounds = array<i64: 1, 128>}, {pipeline_mode = #tpu.pipeline_mode<synchronous>, transform_indices = @transform_3, window_bounds = array<i64: 18, 32, 1>}, {pipeline_mode = #tpu.pipeline_mode<synchronous>, transform_indices = @transform_4, window_bounds = array<i64: 1152, 128>}, {pipeline_mode = #tpu.pipeline_mode<synchronous>, transform_indices = @transform_5, window_bounds = array<i64: 1, 128>}, {transform_indices = @transform_6, window_bounds = array<i64: 1, 256, 128>}, {transform_indices = @transform_7, window_bounds = array<i64: 1, 18, 32, 128>}, {transform_indices = @transform_8, window_bounds = array<i64: 1, 8, 128>}, {transform_indices = @transform_9, window_bounds = array<i64: 1, 8, 128>}]} {
    %c0 = arith.constant 0 : index
    %c0_0 = arith.constant 0 : index
    %c0_1 = arith.constant 0 : index
    %0 = vector.load %arg1[%c0, %c0_0, %c0_1] : memref<1x576x128xbf16, #tpu.memory_space<vmem>>, vector<1x576x128xbf16>
    %1 = vector.shape_cast %0 : vector<1x576x128xbf16> to vector<576x128xbf16>
    %c0_2 = arith.constant 0 : index
    %c0_3 = arith.constant 0 : index
    %2 = vector.load %arg2[%c0_2, %c0_3] : memref<128x128xbf16, #tpu.memory_space<vmem>>, vector<128x128xbf16>
    %cst = arith.constant dense<0.000000e+00> : vector<576x128xf32>
    %3 = tpu.matmul %1, %2, %cst {dimension_numbers = #tpu.dot_dimension_numbers<[1], [0], [0], [1], [0, 0, 1, 1], [], []>} : vector<576x128xbf16>, vector<128x128xbf16>, vector<576x128xf32> -> vector<576x128xf32>
    %4 = vector.shape_cast %3 : vector<576x128xf32> to vector<18x32x128xf32>
    %c0_4 = arith.constant 0 : index
    %c0_5 = arith.constant 0 : index
    %5 = vector.load %arg3[%c0_4, %c0_5] : memref<1x128xf32, #tpu.memory_space<vmem>>, vector<1x128xf32>
    %6 = vector.shape_cast %5 : vector<1x128xf32> to vector<1x1x128xf32>
    %c0_6 = arith.constant 0 : index
    %c0_7 = arith.constant 0 : index
    %c0_8 = arith.constant 0 : index
    %7 = vector.load %arg4[%c0_6, %c0_7, %c0_8] : memref<18x32x1xf32, #tpu.memory_space<vmem>>, vector<18x32x1xf32>
    %8 = vector.broadcast %6 : vector<1x1x128xf32> to vector<18x32x128xf32>
    %9 = vector.broadcast %7 : vector<18x32x1xf32> to vector<18x32x128xf32>
    %10 = arith.mulf %8, %9 : vector<18x32x128xf32>
    %11 = arith.addf %4, %10 : vector<18x32x128xf32>
    %12 = vector.extract_strided_slice %11 {offsets = [0, 7, 0], sizes = [16, 16, 128], strides = [1, 1, 1]} : vector<18x32x128xf32> to vector<16x16x128xf32>
    %13 = vector.extract_strided_slice %11 {offsets = [0, 8, 0], sizes = [16, 16, 128], strides = [1, 1, 1]} : vector<18x32x128xf32> to vector<16x16x128xf32>
    %14 = vector.extract_strided_slice %11 {offsets = [0, 9, 0], sizes = [16, 16, 128], strides = [1, 1, 1]} : vector<18x32x128xf32> to vector<16x16x128xf32>
    %15 = vector.extract_strided_slice %11 {offsets = [1, 7, 0], sizes = [16, 16, 128], strides = [1, 1, 1]} : vector<18x32x128xf32> to vector<16x16x128xf32>
    %16 = vector.extract_strided_slice %11 {offsets = [1, 8, 0], sizes = [16, 16, 128], strides = [1, 1, 1]} : vector<18x32x128xf32> to vector<16x16x128xf32>
    %17 = vector.extract_strided_slice %11 {offsets = [1, 9, 0], sizes = [16, 16, 128], strides = [1, 1, 1]} : vector<18x32x128xf32> to vector<16x16x128xf32>
    %18 = vector.extract_strided_slice %11 {offsets = [2, 7, 0], sizes = [16, 16, 128], strides = [1, 1, 1]} : vector<18x32x128xf32> to vector<16x16x128xf32>
    %19 = vector.extract_strided_slice %11 {offsets = [2, 8, 0], sizes = [16, 16, 128], strides = [1, 1, 1]} : vector<18x32x128xf32> to vector<16x16x128xf32>
    %20 = vector.extract_strided_slice %11 {offsets = [2, 9, 0], sizes = [16, 16, 128], strides = [1, 1, 1]} : vector<18x32x128xf32> to vector<16x16x128xf32>
    %21 = vector.shape_cast %16 : vector<16x16x128xf32> to vector<256x128xf32>
    %c0_9 = arith.constant 0 : index
    %c0_10 = arith.constant 0 : index
    %c0_11 = arith.constant 0 : index
    %22 = vector.load %arg7[%c0_9, %c0_10, %c0_11] : memref<1x256x128xf32, #tpu.memory_space<vmem>>, vector<1x256x128xf32>
    %23 = vector.shape_cast %22 : vector<1x256x128xf32> to vector<256x128xf32>
    %24 = vector.shape_cast %21 : vector<256x128xf32> to vector<1x256x128xf32>
    tpu.vector_store %arg7[%c0_9, %c0_10, %c0_11], %24 {strides = array<i32>} : memref<1x256x128xf32, #tpu.memory_space<vmem>>, vector<1x256x128xf32>,
    %25 = tpu.concatenate %12, %13, %14, %15, %16, %17, %18, %19, %20 in 2 : vector<16x16x128xf32>, vector<16x16x128xf32>, vector<16x16x128xf32>, vector<16x16x128xf32>, vector<16x16x128xf32>, vector<16x16x128xf32>, vector<16x16x128xf32>, vector<16x16x128xf32>, vector<16x16x128xf32> -> vector<16x16x1152xf32>
    %26 = vector.shape_cast %25 : vector<16x16x1152xf32> to vector<256x1152xf32>
    %27 = arith.truncf %26 : vector<256x1152xf32> to vector<256x1152xbf16>
    %c0_12 = arith.constant 0 : index
    %c0_13 = arith.constant 0 : index
    %28 = vector.load %arg5[%c0_12, %c0_13] : memref<1152x128xbf16, #tpu.memory_space<vmem>>, vector<1152x128xbf16>
    %cst_14 = arith.constant dense<0.000000e+00> : vector<256x128xf32>
    %29 = tpu.matmul %27, %28, %cst_14 {dimension_numbers = #tpu.dot_dimension_numbers<[1], [0], [0], [1], [0, 0, 1, 1], [], []>} : vector<256x1152xbf16>, vector<1152x128xbf16>, vector<256x128xf32> -> vector<256x128xf32>
    %c0_15 = arith.constant 0 : index
    %c0_16 = arith.constant 0 : index
    %30 = vector.load %arg6[%c0_15, %c0_16] : memref<1x128xf32, #tpu.memory_space<vmem>>, vector<1x128xf32>
    %31 = vector.broadcast %30 : vector<1x128xf32> to vector<256x128xf32>
    %32 = arith.addf %29, %31 : vector<256x128xf32>
    %cst_17 = arith.constant dense<0.000000e+00> : vector<128xf32>
    %33 = vector.multi_reduction <add>, %32, %cst_17 [0] : vector<256x128xf32> to vector<128xf32>
    %34 = vector.shape_cast %33 : vector<128xf32> to vector<1x128xf32>
    %35 = arith.mulf %32, %32 : vector<256x128xf32>
    %cst_18 = arith.constant dense<0.000000e+00> : vector<128xf32>
    %36 = vector.multi_reduction <add>, %35, %cst_18 [0] : vector<256x128xf32> to vector<128xf32>
    %37 = vector.shape_cast %36 : vector<128xf32> to vector<1x128xf32>
    %38 = vector.shape_cast %34 : vector<1x128xf32> to vector<1x128xf32>
    %39 = vector.broadcast %38 : vector<1x128xf32> to vector<8x128xf32>
    %c0_19 = arith.constant 0 : index
    %c0_20 = arith.constant 0 : index
    %c0_21 = arith.constant 0 : index
    %40 = vector.load %arg9[%c0_19, %c0_20, %c0_21] : memref<1x8x128xf32, #tpu.memory_space<vmem>>, vector<1x8x128xf32>
    %41 = vector.shape_cast %40 : vector<1x8x128xf32> to vector<8x128xf32>
    %42 = vector.shape_cast %39 : vector<8x128xf32> to vector<1x8x128xf32>
    tpu.vector_store %arg9[%c0_19, %c0_20, %c0_21], %42 {strides = array<i32>} : memref<1x8x128xf32, #tpu.memory_space<vmem>>, vector<1x8x128xf32>,
    %43 = vector.shape_cast %37 : vector<1x128xf32> to vector<1x128xf32>
    %44 = vector.broadcast %43 : vector<1x128xf32> to vector<8x128xf32>
    %c0_22 = arith.constant 0 : index
    %c0_23 = arith.constant 0 : index
    %c0_24 = arith.constant 0 : index
    %45 = vector.load %arg10[%c0_22, %c0_23, %c0_24] : memref<1x8x128xf32, #tpu.memory_space<vmem>>, vector<1x8x128xf32>
    %46 = vector.shape_cast %45 : vector<1x8x128xf32> to vector<8x128xf32>
    %47 = vector.shape_cast %44 : vector<8x128xf32> to vector<1x8x128xf32>
    tpu.vector_store %arg10[%c0_22, %c0_23, %c0_24], %47 {strides = array<i32>} : memref<1x8x128xf32, #tpu.memory_space<vmem>>, vector<1x8x128xf32>,
    %cst_25 = arith.constant 0.000000e+00 : f32
    %48 = vector.broadcast %cst_25 : f32 to vector<1x18x32x128xf32>
    %c0_26 = arith.constant 0 : index
    %c0_27 = arith.constant 0 : index
    %c0_28 = arith.constant 0 : index
    %c0_29 = arith.constant 0 : index
    %49 = vector.load %arg8[%c0_26, %c0_27, %c0_28, %c0_29] : memref<1x18x32x128xf32, #tpu.memory_space<vmem>>, vector<1x18x32x128xf32>
    tpu.vector_store %arg8[%c0_26, %c0_27, %c0_28, %c0_29], %48 {strides = array<i32>} : memref<1x18x32x128xf32, #tpu.memory_space<vmem>>, vector<1x18x32x128xf32>,
    %50 = vector.shape_cast %32 : vector<256x128xf32> to vector<16x16x128xf32>
    %c0_30 = arith.constant 0 : index
    %c1 = arith.constant 1 : index
    %c8 = arith.constant 8 : index
    %c0_31 = arith.constant 0 : index
    %51 = vector.load %arg8[%c0_30, %c1, %c8, %c0_31] : memref<1x18x32x128xf32, #tpu.memory_space<vmem>>, vector<1x16x16x128xf32>
    %52 = vector.shape_cast %51 : vector<1x16x16x128xf32> to vector<16x16x128xf32>
    %53 = vector.shape_cast %50 : vector<16x16x128xf32> to vector<1x16x16x128xf32>
    tpu.vector_store %arg8[%c0_30, %c1, %c8, %c0_31], %53 {strides = array<i32>} : memref<1x18x32x128xf32, #tpu.memory_space<vmem>>, vector<1x16x16x128xf32>,
    return
  }
  func.func @transform_0(%arg0: i32) -> (i32, i32, i32) {
    %c0_i32 = arith.constant 0 : i32
    %c0_i32_0 = arith.constant 0 : i32
    %c0_i32_1 = arith.constant 0 : i32
    return %arg0, %c0_i32, %c0_i32_0 : i32, i32, i32
  }
  func.func @transform_1(%arg0: i32) -> (i32, i32) {
    %c0_i32 = arith.constant 0 : i32
    %c0_i32_0 = arith.constant 0 : i32
    %c0_i32_1 = arith.constant 0 : i32
    return %c0_i32, %c0_i32_0 : i32, i32
  }
  func.func @transform_2(%arg0: i32) -> (i32, i32) {
    %c0_i32 = arith.constant 0 : i32
    %c0_i32_0 = arith.constant 0 : i32
    %c0_i32_1 = arith.constant 0 : i32
    return %c0_i32, %c0_i32_0 : i32, i32
  }
  func.func @transform_3(%arg0: i32) -> (i32, i32, i32) {
    %c0_i32 = arith.constant 0 : i32
    %c0_i32_0 = arith.constant 0 : i32
    %c0_i32_1 = arith.constant 0 : i32
    %c0_i32_2 = arith.constant 0 : i32
    return %c0_i32, %c0_i32_0, %c0_i32_1 : i32, i32, i32
  }
  func.func @transform_4(%arg0: i32) -> (i32, i32) {
    %c0_i32 = arith.constant 0 : i32
    %c0_i32_0 = arith.constant 0 : i32
    %c0_i32_1 = arith.constant 0 : i32
    return %c0_i32, %c0_i32_0 : i32, i32
  }
  func.func @transform_5(%arg0: i32) -> (i32, i32) {
    %c0_i32 = arith.constant 0 : i32
    %c0_i32_0 = arith.constant 0 : i32
    %c0_i32_1 = arith.constant 0 : i32
    return %c0_i32, %c0_i32_0 : i32, i32
  }
  func.func @transform_6(%arg0: i32) -> (i32, i32, i32) {
    %c0_i32 = arith.constant 0 : i32
    %c0_i32_0 = arith.constant 0 : i32
    %c0_i32_1 = arith.constant 0 : i32
    return %arg0, %c0_i32, %c0_i32_0 : i32, i32, i32
  }
  func.func @transform_7(%arg0: i32) -> (i32, i32, i32, i32) {
    %c0_i32 = arith.constant 0 : i32
    %c0_i32_0 = arith.constant 0 : i32
    %c0_i32_1 = arith.constant 0 : i32
    %c0_i32_2 = arith.constant 0 : i32
    return %arg0, %c0_i32, %c0_i32_0, %c0_i32_1 : i32, i32, i32, i32
  }
  func.func @transform_8(%arg0: i32) -> (i32, i32, i32) {
    %c0_i32 = arith.constant 0 : i32
    %c0_i32_0 = arith.constant 0 : i32
    %c0_i32_1 = arith.constant 0 : i32
    return %arg0, %c0_i32, %c0_i32_0 : i32, i32, i32
  }
  func.func @transform_9(%arg0: i32) -> (i32, i32, i32) {
    %c0_i32 = arith.constant 0 : i32
    %c0_i32_0 = arith.constant 0 : i32
    %c0_i32_1 = arith.constant 0 : i32
    return %arg0, %c0_i32, %c0_i32_0 : i32, i32, i32
  }
}

module attributes {stable_mosaic.version = 11 : i64} {
  func.func @_rrb_stage2_kernel(%arg0: i32, %arg1: memref<1x18x32x128xf32, #tpu.memory_space<vmem>>, %arg2: memref<1x128xf32, #tpu.memory_space<vmem>>, %arg3: memref<1x128xf32, #tpu.memory_space<vmem>>, %arg4: memref<18x32x1xf32, #tpu.memory_space<vmem>>, %arg5: memref<1152x128xbf16, #tpu.memory_space<vmem>>, %arg6: memref<1x128xf32, #tpu.memory_space<vmem>>, %arg7: memref<1x256x128xf32, #tpu.memory_space<vmem>>, %arg8: memref<1x256x128xf32, #tpu.memory_space<vmem>>) attributes {dimension_semantics = [#tpu.dimension_semantics<parallel>], iteration_bounds = array<i64: 2>, scalar_prefetch = 0 : i64, scratch_operands = 0 : i64, tpu.core_type = #tpu.core_type<tc>, window_params = [{transform_indices = @transform_0, window_bounds = array<i64: 1, 18, 32, 128>}, {pipeline_mode = #tpu.pipeline_mode<synchronous>, transform_indices = @transform_1, window_bounds = array<i64: 1, 128>}, {pipeline_mode = #tpu.pipeline_mode<synchronous>, transform_indices = @transform_2, window_bounds = array<i64: 1, 128>}, {pipeline_mode = #tpu.pipeline_mode<synchronous>, transform_indices = @transform_3, window_bounds = array<i64: 18, 32, 1>}, {pipeline_mode = #tpu.pipeline_mode<synchronous>, transform_indices = @transform_4, window_bounds = array<i64: 1152, 128>}, {pipeline_mode = #tpu.pipeline_mode<synchronous>, transform_indices = @transform_5, window_bounds = array<i64: 1, 128>}, {transform_indices = @transform_6, window_bounds = array<i64: 1, 256, 128>}, {transform_indices = @transform_7, window_bounds = array<i64: 1, 256, 128>}]} {
    %c0 = arith.constant 0 : index
    %c0_0 = arith.constant 0 : index
    %c0_1 = arith.constant 0 : index
    %c0_2 = arith.constant 0 : index
    %0 = vector.load %arg1[%c0, %c0_0, %c0_1, %c0_2] : memref<1x18x32x128xf32, #tpu.memory_space<vmem>>, vector<1x18x32x128xf32>
    %1 = vector.shape_cast %0 : vector<1x18x32x128xf32> to vector<18x32x128xf32>
    %c0_3 = arith.constant 0 : index
    %c0_4 = arith.constant 0 : index
    %2 = vector.load %arg2[%c0_3, %c0_4] : memref<1x128xf32, #tpu.memory_space<vmem>>, vector<1x128xf32>
    %3 = vector.shape_cast %2 : vector<1x128xf32> to vector<1x1x128xf32>
    %4 = vector.broadcast %3 : vector<1x1x128xf32> to vector<18x32x128xf32>
    %5 = arith.mulf %1, %4 : vector<18x32x128xf32>
    %c0_5 = arith.constant 0 : index
    %c0_6 = arith.constant 0 : index
    %6 = vector.load %arg3[%c0_5, %c0_6] : memref<1x128xf32, #tpu.memory_space<vmem>>, vector<1x128xf32>
    %7 = vector.shape_cast %6 : vector<1x128xf32> to vector<1x1x128xf32>
    %8 = vector.broadcast %7 : vector<1x1x128xf32> to vector<18x32x128xf32>
    %9 = arith.addf %5, %8 : vector<18x32x128xf32>
    %cst = arith.constant 0.000000e+00 : f32
    %10 = vector.broadcast %cst : f32 to vector<18x32x128xf32>
    %11 = arith.maximumf %9, %10 : vector<18x32x128xf32>
    %c0_7 = arith.constant 0 : index
    %c0_8 = arith.constant 0 : index
    %c0_9 = arith.constant 0 : index
    %12 = vector.load %arg4[%c0_7, %c0_8, %c0_9] : memref<18x32x1xf32, #tpu.memory_space<vmem>>, vector<18x32x1xf32>
    %13 = vector.broadcast %12 : vector<18x32x1xf32> to vector<18x32x128xf32>
    %14 = arith.mulf %11, %13 : vector<18x32x128xf32>
    %15 = vector.extract_strided_slice %14 {offsets = [0, 7, 0], sizes = [16, 16, 128], strides = [1, 1, 1]} : vector<18x32x128xf32> to vector<16x16x128xf32>
    %16 = vector.extract_strided_slice %14 {offsets = [0, 8, 0], sizes = [16, 16, 128], strides = [1, 1, 1]} : vector<18x32x128xf32> to vector<16x16x128xf32>
    %17 = vector.extract_strided_slice %14 {offsets = [0, 9, 0], sizes = [16, 16, 128], strides = [1, 1, 1]} : vector<18x32x128xf32> to vector<16x16x128xf32>
    %18 = vector.extract_strided_slice %14 {offsets = [1, 7, 0], sizes = [16, 16, 128], strides = [1, 1, 1]} : vector<18x32x128xf32> to vector<16x16x128xf32>
    %19 = vector.extract_strided_slice %14 {offsets = [1, 8, 0], sizes = [16, 16, 128], strides = [1, 1, 1]} : vector<18x32x128xf32> to vector<16x16x128xf32>
    %20 = vector.extract_strided_slice %14 {offsets = [1, 9, 0], sizes = [16, 16, 128], strides = [1, 1, 1]} : vector<18x32x128xf32> to vector<16x16x128xf32>
    %21 = vector.extract_strided_slice %14 {offsets = [2, 7, 0], sizes = [16, 16, 128], strides = [1, 1, 1]} : vector<18x32x128xf32> to vector<16x16x128xf32>
    %22 = vector.extract_strided_slice %14 {offsets = [2, 8, 0], sizes = [16, 16, 128], strides = [1, 1, 1]} : vector<18x32x128xf32> to vector<16x16x128xf32>
    %23 = vector.extract_strided_slice %14 {offsets = [2, 9, 0], sizes = [16, 16, 128], strides = [1, 1, 1]} : vector<18x32x128xf32> to vector<16x16x128xf32>
    %24 = tpu.concatenate %15, %16, %17, %18, %19, %20, %21, %22, %23 in 2 : vector<16x16x128xf32>, vector<16x16x128xf32>, vector<16x16x128xf32>, vector<16x16x128xf32>, vector<16x16x128xf32>, vector<16x16x128xf32>, vector<16x16x128xf32>, vector<16x16x128xf32>, vector<16x16x128xf32> -> vector<16x16x1152xf32>
    %25 = vector.shape_cast %24 : vector<16x16x1152xf32> to vector<256x1152xf32>
    %26 = arith.truncf %25 : vector<256x1152xf32> to vector<256x1152xbf16>
    %c0_10 = arith.constant 0 : index
    %c0_11 = arith.constant 0 : index
    %27 = vector.load %arg5[%c0_10, %c0_11] : memref<1152x128xbf16, #tpu.memory_space<vmem>>, vector<1152x128xbf16>
    %cst_12 = arith.constant dense<0.000000e+00> : vector<256x128xf32>
    %28 = tpu.matmul %26, %27, %cst_12 {dimension_numbers = #tpu.dot_dimension_numbers<[1], [0], [0], [1], [0, 0, 1, 1], [], []>} : vector<256x1152xbf16>, vector<1152x128xbf16>, vector<256x128xf32> -> vector<256x128xf32>
    %c0_13 = arith.constant 0 : index
    %c0_14 = arith.constant 0 : index
    %29 = vector.load %arg6[%c0_13, %c0_14] : memref<1x128xf32, #tpu.memory_space<vmem>>, vector<1x128xf32>
    %30 = vector.broadcast %29 : vector<1x128xf32> to vector<256x128xf32>
    %31 = arith.addf %28, %30 : vector<256x128xf32>
    %c0_15 = arith.constant 0 : index
    %c0_16 = arith.constant 0 : index
    %c0_17 = arith.constant 0 : index
    %32 = vector.load %arg7[%c0_15, %c0_16, %c0_17] : memref<1x256x128xf32, #tpu.memory_space<vmem>>, vector<1x256x128xf32>
    %33 = vector.shape_cast %32 : vector<1x256x128xf32> to vector<256x128xf32>
    %34 = arith.addf %31, %33 : vector<256x128xf32>
    %cst_18 = arith.constant 0.000000e+00 : f32
    %35 = vector.broadcast %cst_18 : f32 to vector<256x128xf32>
    %36 = arith.maximumf %34, %35 : vector<256x128xf32>
    %c0_19 = arith.constant 0 : index
    %c0_20 = arith.constant 0 : index
    %c0_21 = arith.constant 0 : index
    %37 = vector.load %arg8[%c0_19, %c0_20, %c0_21] : memref<1x256x128xf32, #tpu.memory_space<vmem>>, vector<1x256x128xf32>
    %38 = vector.shape_cast %37 : vector<1x256x128xf32> to vector<256x128xf32>
    %39 = vector.shape_cast %36 : vector<256x128xf32> to vector<1x256x128xf32>
    tpu.vector_store %arg8[%c0_19, %c0_20, %c0_21], %39 {strides = array<i32>} : memref<1x256x128xf32, #tpu.memory_space<vmem>>, vector<1x256x128xf32>,
    return
  }
  func.func @transform_0(%arg0: i32) -> (i32, i32, i32, i32) {
    %c0_i32 = arith.constant 0 : i32
    %c0_i32_0 = arith.constant 0 : i32
    %c0_i32_1 = arith.constant 0 : i32
    %c0_i32_2 = arith.constant 0 : i32
    return %arg0, %c0_i32, %c0_i32_0, %c0_i32_1 : i32, i32, i32, i32
  }
  func.func @transform_1(%arg0: i32) -> (i32, i32) {
    %c0_i32 = arith.constant 0 : i32
    %c0_i32_0 = arith.constant 0 : i32
    %c0_i32_1 = arith.constant 0 : i32
    return %c0_i32, %c0_i32_0 : i32, i32
  }
  func.func @transform_2(%arg0: i32) -> (i32, i32) {
    %c0_i32 = arith.constant 0 : i32
    %c0_i32_0 = arith.constant 0 : i32
    %c0_i32_1 = arith.constant 0 : i32
    return %c0_i32, %c0_i32_0 : i32, i32
  }
  func.func @transform_3(%arg0: i32) -> (i32, i32, i32) {
    %c0_i32 = arith.constant 0 : i32
    %c0_i32_0 = arith.constant 0 : i32
    %c0_i32_1 = arith.constant 0 : i32
    %c0_i32_2 = arith.constant 0 : i32
    return %c0_i32, %c0_i32_0, %c0_i32_1 : i32, i32, i32
  }
  func.func @transform_4(%arg0: i32) -> (i32, i32) {
    %c0_i32 = arith.constant 0 : i32
    %c0_i32_0 = arith.constant 0 : i32
    %c0_i32_1 = arith.constant 0 : i32
    return %c0_i32, %c0_i32_0 : i32, i32
  }
  func.func @transform_5(%arg0: i32) -> (i32, i32) {
    %c0_i32 = arith.constant 0 : i32
    %c0_i32_0 = arith.constant 0 : i32
    %c0_i32_1 = arith.constant 0 : i32
    return %c0_i32, %c0_i32_0 : i32, i32
  }
  func.func @transform_6(%arg0: i32) -> (i32, i32, i32) {
    %c0_i32 = arith.constant 0 : i32
    %c0_i32_0 = arith.constant 0 : i32
    %c0_i32_1 = arith.constant 0 : i32
    return %arg0, %c0_i32, %c0_i32_0 : i32, i32, i32
  }
  func.func @transform_7(%arg0: i32) -> (i32, i32, i32) {
    %c0_i32 = arith.constant 0 : i32
    %c0_i32_0 = arith.constant 0 : i32
    %c0_i32_1 = arith.constant 0 : i32
    return %arg0, %c0_i32, %c0_i32_0 : i32, i32, i32
  }
}

</mosaic_0001>

<llo_original>
// kernel: rrb_forward.2
$region0: #{rrb_forward.2}
  #allocation0 [shape = 'u32[]', space=smem, size = 0x4, offset = 0x4, fixed_abs, tag = 'smem constant byte address 0x4 - core index']
  #allocation1 [shape = 'u32[144,128]{1,0:T(1,128)}', space=vmem, size = 0x12000, scoped, tag = 'internal scratch']
  %s0 = inlined_call_operand.vmem [shape: bf16[2,576,128], index: 0, kind: input, shape index: {}]
  %s1 = inlined_call_operand.vmem [shape: bf16[128,128], index: 1, kind: input, shape index: {}]
  %s2 = inlined_call_operand.vmem [shape: f32[1,128], index: 2, kind: input, shape index: {}]
  %s3 = inlined_call_operand.vmem [shape: f32[18,32,1], index: 3, kind: input, shape index: {}]
  %s4 = inlined_call_operand.vmem [shape: bf16[1152,128], index: 4, kind: input, shape index: {}]
  %s5 = inlined_call_operand.vmem [shape: f32[1,128], index: 5, kind: input, shape index: {}]
  %s6 = inlined_call_operand.vmem [shape: f32[2,256,128], index: 6, kind: output, shape index: {0}]
  %s7 = inlined_call_operand.vmem [shape: f32[2,18,32,128], index: 7, kind: output, shape index: {1}]
  %s8 = inlined_call_operand.vmem [shape: f32[2,8,128], index: 8, kind: output, shape index: {2}]
  %s9 = inlined_call_operand.vmem [shape: f32[2,8,128], index: 9, kind: output, shape index: {3}]
  %10 = xla_tuple %s6, %s7, %s8, %s9
  %s11 = sld [smem:[#allocation0]]
  $region81: #{rrb_forward.2} parent=0
    _
  %s13 = ssub.s32 1, %s11
  %s14 = scalar_select 0, %s13, %s11
  loop: start=0, step=1, limit=4
  $region2: #{rrb_forward.2} parent=0 // loop_pre_header
    _
  $region3: #{rrb_forward.2} parent=0 // loop_header
    %s16 = sphi 0, %s20
    %p17 = scmp.ge.s32.totalorder %s16, 4
    %s26 = sphi 0, %s28
    %s29 = sphi 0, %s26
    %s30 = sphi 0, %s29
    %s46 = sphi 0, %s30
    %s50 = sphi 0, %s50
    %s52 = sphi 0, %s50
    %s53 = sphi 0, %s52
    %s67 = sphi 0, %s53
    %s71 = sphi 0, %s71
    %s73 = sphi 0, %s71
    %s74 = sphi 0, %s73
    %s88 = sphi 0, %s74
    %s92 = sphi 0, %s92
    %s94 = sphi 0, %s92
    %s95 = sphi 0, %s94
    %s109 = sphi 0, %s95
    %s113 = sphi 0, %s113
    %s115 = sphi 0, %s113
    %s116 = sphi 0, %s115
    %s130 = sphi 0, %s116
    %s134 = sphi 0, %s134
    %s136 = sphi 0, %s134
    %s137 = sphi 0, %s136
    %s151 = sphi 0, %s137
    %s157 = sphi 0, %s159
    %s160 = sphi 0, %s157
    %s161 = sphi 0, %s160
    %s177 = sphi 0, %s161
    %s183 = sphi 0, %s185
    %s186 = sphi 0, %s183
    %s187 = sphi 0, %s186
    %s203 = sphi 0, %s187
    %s209 = sphi 0, %s211
    %s212 = sphi 0, %s209
    %s213 = sphi 0, %s212
    %s229 = sphi 0, %s213
    %s235 = sphi 0, %s237
    %s238 = sphi 0, %s235
    %s239 = sphi 0, %s238
    %s255 = sphi 0, %s239
  $region4: #{rrb_forward.2} parent=0 // loop_header_branch
    %19 = sbr.rel (%p17) target = $region8
  $region5: #{rrb_forward.2} parent=0 // loop_body
    %s21 = ssub.s32 %s16, 1
    %s22 = ssub.s32 %s16, 2
    %s23 = sadd.s32 %s16, 1
    %s24 = ssub.s32 %s16, %s23
    %p25 = scmp.eq.s32.totalorder %s24, 0
    %s27 = sadd.s32 %s26, 1
    %s28 = scalar_select %p25, %s26, %s27
    %p31 = pneg %p25
    %p32 = scmp.eq.s32.totalorder %s16, 1
    %p33 = por %p31, %p32
    %p34 = scmp.ne.s32.totalorder %s26, %s29
    %p35 = scmp.eq.s32.totalorder %s16, 0
    %p36 = por %p34, %p35
    %p37 = scmp.ne.s32.totalorder %s26, %s29
    %p38 = scmp.eq.s32.totalorder %s21, 1
    %p39 = por %p37, %p38
    %p40 = scmp.ne.s32.totalorder %s29, %s30
    %p41 = scmp.eq.s32.totalorder %s21, 0
    %p42 = por %p40, %p41
    %p43 = scmp.ne.s32.totalorder %s29, %s30
    %p44 = scmp.eq.s32.totalorder %s22, 1
    %p45 = por %p43, %p44
    %p47 = scmp.ne.s32.totalorder %s30, %s46
    %p48 = scmp.eq.s32.totalorder %s22, 0
    %p49 = por %p47, %p48
    %s51 = sadd.s32 %s50, 1
    %p54 = scmp.eq.s32.totalorder %s16, 1
    %p55 = scmp.ne.s32.totalorder %s50, %s52
    %p56 = scmp.eq.s32.totalorder %s16, 0
    %p57 = por %p55, %p56
    %p58 = scmp.ne.s32.totalorder %s50, %s52
    %p59 = scmp.eq.s32.totalorder %s21, 1
    %p60 = por %p58, %p59
    %p61 = scmp.ne.s32.totalorder %s52, %s53
    %p62 = scmp.eq.s32.totalorder %s21, 0
    %p63 = por %p61, %p62
    %p64 = scmp.ne.s32.totalorder %s52, %s53
    %p65 = scmp.eq.s32.totalorder %s22, 1
    %p66 = por %p64, %p65
    %p68 = scmp.ne.s32.totalorder %s53, %s67
    %p69 = scmp.eq.s32.totalorder %s22, 0
    %p70 = por %p68, %p69
    %s72 = sadd.s32 %s71, 1
    %p75 = scmp.eq.s32.totalorder %s16, 1
    %p76 = scmp.ne.s32.totalorder %s71, %s73
    %p77 = scmp.eq.s32.totalorder %s16, 0
    %p78 = por %p76, %p77
    %p79 = scmp.ne.s32.totalorder %s71, %s73
    %p80 = scmp.eq.s32.totalorder %s21, 1
    %p81 = por %p79, %p80
    %p82 = scmp.ne.s32.totalorder %s73, %s74
    %p83 = scmp.eq.s32.totalorder %s21, 0
    %p84 = por %p82, %p83
    %p85 = scmp.ne.s32.totalorder %s73, %s74
    %p86 = scmp.eq.s32.totalorder %s22, 1
    %p87 = por %p85, %p86
    %p89 = scmp.ne.s32.totalorder %s74, %s88
    %p90 = scmp.eq.s32.totalorder %s22, 0
    %p91 = por %p89, %p90
    %s93 = sadd.s32 %s92, 1
    %p96 = scmp.eq.s32.totalorder %s16, 1
    %p97 = scmp.ne.s32.totalorder %s92, %s94
    %p98 = scmp.eq.s32.totalorder %s16, 0
    %p99 = por %p97, %p98
    %p100 = scmp.ne.s32.totalorder %s92, %s94
    %p101 = scmp.eq.s32.totalorder %s21, 1
    %p102 = por %p100, %p101
    %p103 = scmp.ne.s32.totalorder %s94, %s95
    %p104 = scmp.eq.s32.totalorder %s21, 0
    %p105 = por %p103, %p104
    %p106 = scmp.ne.s32.totalorder %s94, %s95
    %p107 = scmp.eq.s32.totalorder %s22, 1
    %p108 = por %p106, %p107
    %p110 = scmp.ne.s32.totalorder %s95, %s109
    %p111 = scmp.eq.s32.totalorder %s22, 0
    %p112 = por %p110, %p111
    %s114 = sadd.s32 %s113, 1
    %p117 = scmp.eq.s32.totalorder %s16, 1
    %p118 = scmp.ne.s32.totalorder %s113, %s115
    %p119 = scmp.eq.s32.totalorder %s16, 0
    %p120 = por %p118, %p119
    %p121 = scmp.ne.s32.totalorder %s113, %s115
    %p122 = scmp.eq.s32.totalorder %s21, 1
    %p123 = por %p121, %p122
    %p124 = scmp.ne.s32.totalorder %s115, %s116
    %p125 = scmp.eq.s32.totalorder %s21, 0
    %p126 = por %p124, %p125
    %p127 = scmp.ne.s32.totalorder %s115, %s116
    %p128 = scmp.eq.s32.totalorder %s22, 1
    %p129 = por %p127, %p128
    %p131 = scmp.ne.s32.totalorder %s116, %s130
    %p132 = scmp.eq.s32.totalorder %s22, 0
    %p133 = por %p131, %p132
    %s135 = sadd.s32 %s134, 1
    %p138 = scmp.eq.s32.totalorder %s16, 1
    %p139 = scmp.ne.s32.totalorder %s134, %s136
    %p140 = scmp.eq.s32.totalorder %s16, 0
    %p141 = por %p139, %p140
    %p142 = scmp.ne.s32.totalorder %s134, %s136
    %p143 = scmp.eq.s32.totalorder %s21, 1
    %p144 = por %p142, %p143
    %p145 = scmp.ne.s32.totalorder %s136, %s137
    %p146 = scmp.eq.s32.totalorder %s21, 0
    %p147 = por %p145, %p146
    %p148 = scmp.ne.s32.totalorder %s136, %s137
    %p149 = scmp.eq.s32.totalorder %s22, 1
    %p150 = por %p148, %p149
    %p152 = scmp.ne.s32.totalorder %s137, %s151
    %p153 = scmp.eq.s32.totalorder %s22, 0
    %p154 = por %p152, %p153
    %s155 = ssub.s32 %s16, %s23
    %p156 = scmp.eq.s32.totalorder %s155, 0
    %s158 = sadd.s32 %s157, 1
    %s159 = scalar_select %p156, %s157, %s158
    %p162 = pneg %p156
    %p163 = scmp.eq.s32.totalorder %s16, 1
    %p164 = por %p162, %p163
    %p165 = scmp.ne.s32.totalorder %s157, %s160
    %p166 = scmp.eq.s32.totalorder %s16, 0
    %p167 = por %p165, %p166
    %p168 = scmp.ne.s32.totalorder %s157, %s160
    %p169 = scmp.eq.s32.totalorder %s21, 1
    %p170 = por %p168, %p169
    %p171 = scmp.ne.s32.totalorder %s160, %s161
    %p172 = scmp.eq.s32.totalorder %s21, 0
    %p173 = por %p171, %p172
    %p174 = scmp.ne.s32.totalorder %s160, %s161
    %p175 = scmp.eq.s32.totalorder %s22, 1
    %p176 = por %p174, %p175
    %p178 = scmp.ne.s32.totalorder %s161, %s177
    %p179 = scmp.eq.s32.totalorder %s22, 0
    %p180 = por %p178, %p179
    %s181 = ssub.s32 %s16, %s23
    %p182 = scmp.eq.s32.totalorder %s181, 0
    %s184 = sadd.s32 %s183, 1
    %s185 = scalar_select %p182, %s183, %s184
    %p188 = pneg %p182
    %p189 = scmp.eq.s32.totalorder %s16, 1
    %p190 = por %p188, %p189
    %p191 = scmp.ne.s32.totalorder %s183, %s186
    %p192 = scmp.eq.s32.totalorder %s16, 0
    %p193 = por %p191, %p192
    %p194 = scmp.ne.s32.totalorder %s183, %s186
    %p195 = scmp.eq.s32.totalorder %s21, 1
    %p196 = por %p194, %p195
    %p197 = scmp.ne.s32.totalorder %s186, %s187
    %p198 = scmp.eq.s32.totalorder %s21, 0
    %p199 = por %p197, %p198
    %p200 = scmp.ne.s32.totalorder %s186, %s187
    %p201 = scmp.eq.s32.totalorder %s22, 1
    %p202 = por %p200, %p201
    %p204 = scmp.ne.s32.totalorder %s187, %s203
    %p205 = scmp.eq.s32.totalorder %s22, 0
    %p206 = por %p204, %p205
    %s207 = ssub.s32 %s16, %s23
    %p208 = scmp.eq.s32.totalorder %s207, 0
    %s210 = sadd.s32 %s209, 1
    %s211 = scalar_select %p208, %s209, %s210
    %p214 = pneg %p208
    %p215 = scmp.eq.s32.totalorder %s16, 1
    %p216 = por %p214, %p215
    %p217 = scmp.ne.s32.totalorder %s209, %s212
    %p218 = scmp.eq.s32.totalorder %s16, 0
    %p219 = por %p217, %p218
    %p220 = scmp.ne.s32.totalorder %s209, %s212
    %p221 = scmp.eq.s32.totalorder %s21, 1
    %p222 = por %p220, %p221
    %p223 = scmp.ne.s32.totalorder %s212, %s213
    %p224 = scmp.eq.s32.totalorder %s21, 0
    %p225 = por %p223, %p224
    %p226 = scmp.ne.s32.totalorder %s212, %s213
    %p227 = scmp.eq.s32.totalorder %s22, 1
    %p228 = por %p226, %p227
    %p230 = scmp.ne.s32.totalorder %s213, %s229
    %p231 = scmp.eq.s32.totalorder %s22, 0
    %p232 = por %p230, %p231
    %s233 = ssub.s32 %s16, %s23
    %p234 = scmp.eq.s32.totalorder %s233, 0
    %s236 = sadd.s32 %s235, 1
    %s237 = scalar_select %p234, %s235, %s236
    %p240 = pneg %p234
    %p241 = scmp.eq.s32.totalorder %s16, 1
    %p242 = por %p240, %p241
    %p243 = scmp.ne.s32.totalorder %s235, %s238
    %p244 = scmp.eq.s32.totalorder %s16, 0
    %p245 = por %p243, %p244
    %p246 = scmp.ne.s32.totalorder %s235, %s238
    %p247 = scmp.eq.s32.totalorder %s21, 1
    %p248 = por %p246, %p247
    %p249 = scmp.ne.s32.totalorder %s238, %s239
    %p250 = scmp.eq.s32.totalorder %s21, 0
    %p251 = por %p249, %p250
    %p252 = scmp.ne.s32.totalorder %s238, %s239
    %p253 = scmp.eq.s32.totalorder %s22, 1
    %p254 = por %p252, %p253
    %p256 = scmp.ne.s32.totalorder %s239, %s255
    %p257 = scmp.eq.s32.totalorder %s22, 0
    %p258 = por %p256, %p257
    %p259 = scmp.le.s32.totalorder 1, %s16
    %p260 = scmp.lt.s32.totalorder %s16, 3
    %p261 = pnand %p259, %p260
    %p262 = pneg %p261
    // Predicated region
    $region9: #{rrb_forward.2} parent=5 // pred_check
      _
    $region10: #{rrb_forward.2} parent=5 // pred_check_branch
      %264 = sbr.rel (%p261) target = $region12
    $region11: #{rrb_forward.2} parent=5 // pred_region
      %s265 = ssub.s32 %s16, 1
      // Predicated region
      $region13: #{rrb_forward.2} parent=11 // pred_check
        %p266 = pneg %p63
      $region14: #{rrb_forward.2} parent=11 // pred_check_branch
        %268 = sbr.rel (%p266) target = $region16
      $region15: #{rrb_forward.2} parent=11 // pred_region
        _
      $region16: #{rrb_forward.2} parent=11 // pred_fallthru
        _
      // Predicated region
      $region17: #{rrb_forward.2} parent=11 // pred_check
        %p269 = pneg %p84
      $region18: #{rrb_forward.2} parent=11 // pred_check_branch
        %271 = sbr.rel (%p269) target = $region20
      $region19: #{rrb_forward.2} parent=11 // pred_region
        _
      $region20: #{rrb_forward.2} parent=11 // pred_fallthru
        _
      // Predicated region
      $region21: #{rrb_forward.2} parent=11 // pred_check
        %p272 = pneg %p105
      $region22: #{rrb_forward.2} parent=11 // pred_check_branch
        %274 = sbr.rel (%p272) target = $region24
      $region23: #{rrb_forward.2} parent=11 // pred_region
        _
      $region24: #{rrb_forward.2} parent=11 // pred_fallthru
        _
      // Predicated region
      $region25: #{rrb_forward.2} parent=11 // pred_check
        %p275 = pneg %p126
      $region26: #{rrb_forward.2} parent=11 // pred_check_branch
        %277 = sbr.rel (%p275) target = $region28
      $region27: #{rrb_forward.2} parent=11 // pred_region
        _
      $region28: #{rrb_forward.2} parent=11 // pred_fallthru
        _
      // Predicated region
      $region29: #{rrb_forward.2} parent=11 // pred_check
        %p278 = pneg %p147
      $region30: #{rrb_forward.2} parent=11 // pred_check_branch
        %280 = sbr.rel (%p278) target = $region32
      $region31: #{rrb_forward.2} parent=11 // pred_region
        _
      $region32: #{rrb_forward.2} parent=11 // pred_fallthru
        _
    $region12: #{rrb_forward.2} parent=5 // pred_fallthru
      _
    %p281 = scmp.lt.s32.totalorder %s16, 2
    // Predicated region
    $region33: #{rrb_forward.2} parent=5 // pred_check
      %p282 = pneg %p281
    $region34: #{rrb_forward.2} parent=5 // pred_check_branch
      %284 = sbr.rel (%p282) target = $region36
    $region35: #{rrb_forward.2} parent=5 // pred_region
      // Predicated region
      $region37: #{rrb_forward.2} parent=35 // pred_check
        %p285 = pneg %p36
      $region38: #{rrb_forward.2} parent=35 // pred_check_branch
        %287 = sbr.rel (%p285) target = $region40
      $region39: #{rrb_forward.2} parent=35 // pred_region
        %p288 = scmp.lt.s32.totalorder %s16, 1
        %s289 = scalar_select %p288, %s16, 1
        %s290 = smul.addr %s289, 72
        %s291 = smul.addr %s290, 4
        %s292 = scalar_lea.vmem %s0, %s291
      $region40: #{rrb_forward.2} parent=35 // pred_fallthru
        _
    $region36: #{rrb_forward.2} parent=5 // pred_fallthru
      _
    %p293 = scmp.le.s32.totalorder 1, %s16
    %p294 = scmp.lt.s32.totalorder %s16, 3
    %p295 = pnand %p293, %p294
    %p296 = pneg %p295
    // Predicated region
    $region41: #{rrb_forward.2} parent=5 // pred_check
      _
    $region42: #{rrb_forward.2} parent=5 // pred_check_branch
      %298 = sbr.rel (%p295) target = $region44
    $region43: #{rrb_forward.2} parent=5 // pred_region
      %s299 = ssub.s32 %s16, 1
      %p300 = scmp.lt.s32.totalorder %s21, 1
      %s301 = scalar_select %p300, %s21, 1
      %s302 = smul.addr %s301, 72
      %s303 = smul.addr %s302, 4
      %s304 = scalar_lea.vmem %s0, %s303
      %p305 = pneg %p42
      %p306 = pneg %p39
      %p307 = pneg %p63
      %p308 = pneg %p60
      %p309 = pneg %p84
      %p310 = pneg %p81
      %p311 = pneg %p105
      %p312 = pneg %p102
      %p313 = pneg %p126
      %p314 = pneg %p123
      %p315 = pneg %p147
      %p316 = pneg %p144
      %p317 = pneg %p173
      %p318 = pneg %p170
      %p319 = scmp.lt.s32.totalorder %s21, 1
      %s320 = scalar_select %p319, %s21, 1
      %s321 = smul.addr %s320, 32
      %s322 = smul.addr %s321, 8
      %s323 = scalar_lea.vmem %s6, %s322
      %p324 = pneg %p199
      %p325 = pneg %p196
      %p326 = scmp.lt.s32.totalorder %s21, 1
      %s327 = scalar_select %p326, %s21, 1
      %s328 = smul.addr %s327, 72
      %s329 = smul.addr %s328, 8
      %s330 = scalar_lea.vmem %s7, %s329
      %p331 = pneg %p225
      %p332 = pneg %p222
      %p333 = scmp.lt.s32.totalorder %s21, 1
      %s334 = scalar_select %p333, %s21, 1
      %s335 = smul.addr %s334, 8
      %s336 = scalar_lea.vmem %s8, %s335
      %p337 = pneg %p251
      %p338 = pneg %p248
      %p339 = scmp.lt.s32.totalorder %s21, 1
      %s340 = scalar_select %p339, %s21, 1
      %s341 = smul.addr %s340, 8
      %s342 = scalar_lea.vmem %s9, %s341
      %p343 = scmp.lt.s32.totalorder %s21, 1
      %s344 = scalar_select %p343, %s21, 1
      %s345 = smul.addr %s344, 72
      %s346 = smul.addr %s345, 4
      %s347 = scalar_lea.vmem %s0, %s346
      %p348 = scmp.lt.s32.totalorder %s21, 1
      %s349 = scalar_select %p348, %s21, 1
      %s350 = smul.addr %s349, 32
      %s351 = smul.addr %s350, 8
      %s352 = scalar_lea.vmem %s6, %s351
      %p353 = scmp.lt.s32.totalorder %s21, 1
      %s354 = scalar_select %p353, %s21, 1
      %s355 = smul.addr %s354, 72
      %s356 = smul.addr %s355, 8
      %s357 = scalar_lea.vmem %s7, %s356
      %p358 = scmp.lt.s32.totalorder %s21, 1
      %s359 = scalar_select %p358, %s21, 1
      %s360 = smul.addr %s359, 8
      %s361 = scalar_lea.vmem %s8, %s360
      %p362 = scmp.lt.s32.totalorder %s21, 1
      %s363 = scalar_select %p362, %s21, 1
      %s364 = smul.addr %s363, 8
      %s365 = scalar_lea.vmem %s9, %s364
      %v367 = vld [vmem:[%s347] sm:$0xf]
      %v368 = vld [vmem:[%s347 + $0x4] sm:$0xf]
      %v369 = vld [vmem:[%s347 + $0x8] sm:$0xf]
      %v370 = vld [vmem:[%s347 + $0xc] sm:$0xf]
      %v371 = vld [vmem:[%s347 + $0x10] sm:$0xf]
      %v372 = vld [vmem:[%s347 + $0x14] sm:$0xf]
      %v373 = vld [vmem:[%s347 + $0x18] sm:$0xf]
      %v374 = vld [vmem:[%s347 + $0x1c] sm:$0xf]
      %v375 = vld [vmem:[%s347 + $0x20] sm:$0xf]
      %v376 = vld [vmem:[%s347 + $0x24] sm:$0xf]
      %v377 = vld [vmem:[%s347 + $0x28] sm:$0xf]
      %v378 = vld [vmem:[%s347 + $0x2c] sm:$0xf]
      %v379 = vld [vmem:[%s347 + $0x30] sm:$0xf]
      %v380 = vld [vmem:[%s347 + $0x34] sm:$0xf]
      %v381 = vld [vmem:[%s347 + $0x38] sm:$0xf]
      %v382 = vld [vmem:[%s347 + $0x3c] sm:$0xf]
      %v383 = vld [vmem:[%s347 + $0x40] sm:$0xf]
      %v384 = vld [vmem:[%s347 + $0x44] sm:$0xf]
      %v385 = vld [vmem:[%s347 + $0x48] sm:$0xf]
      %v386 = vld [vmem:[%s347 + $0x4c] sm:$0xf]
      %v387 = vld [vmem:[%s347 + $0x50] sm:$0xf]
      %v388 = vld [vmem:[%s347 + $0x54] sm:$0xf]
      %v389 = vld [vmem:[%s347 + $0x58] sm:$0xf]
      %v390 = vld [vmem:[%s347 + $0x5c] sm:$0xf]
      %v391 = vld [vmem:[%s347 + $0x60] sm:$0xf]
      %v392 = vld [vmem:[%s347 + $0x64] sm:$0xf]
      %v393 = vld [vmem:[%s347 + $0x68] sm:$0xf]
      %v394 = vld [vmem:[%s347 + $0x6c] sm:$0xf]
      %v395 = vld [vmem:[%s347 + $0x70] sm:$0xf]
      %v396 = vld [vmem:[%s347 + $0x74] sm:$0xf]
      %v397 = vld [vmem:[%s347 + $0x78] sm:$0xf]
      %v398 = vld [vmem:[%s347 + $0x7c] sm:$0xf]
      %v399 = vld [vmem:[%s347 + $0x80] sm:$0xf]
      %v400 = vld [vmem:[%s347 + $0x84] sm:$0xf]
      %v401 = vld [vmem:[%s347 + $0x88] sm:$0xf]
      %v402 = vld [vmem:[%s347 + $0x8c] sm:$0xf]
      %v403 = vld [vmem:[%s347 + $0x90] sm:$0xf]
      %v404 = vld [vmem:[%s347 + $0x94] sm:$0xf]
      %v405 = vld [vmem:[%s347 + $0x98] sm:$0xf]
      %v406 = vld [vmem:[%s347 + $0x9c] sm:$0xf]
      %v407 = vld [vmem:[%s347 + $0xa0] sm:$0xf]
      %v408 = vld [vmem:[%s347 + $0xa4] sm:$0xf]
      %v409 = vld [vmem:[%s347 + $0xa8] sm:$0xf]
      %v410 = vld [vmem:[%s347 + $0xac] sm:$0xf]
      %v411 = vld [vmem:[%s347 + $0xb0] sm:$0xf]
      %v412 = vld [vmem:[%s347 + $0xb4] sm:$0xf]
      %v413 = vld [vmem:[%s347 + $0xb8] sm:$0xf]
      %v414 = vld [vmem:[%s347 + $0xbc] sm:$0xf]
      %v415 = vld [vmem:[%s347 + $0xc0] sm:$0xf]
      %v416 = vld [vmem:[%s347 + $0xc4] sm:$0xf]
      %v417 = vld [vmem:[%s347 + $0xc8] sm:$0xf]
      %v418 = vld [vmem:[%s347 + $0xcc] sm:$0xf]
      %v419 = vld [vmem:[%s347 + $0xd0] sm:$0xf]
      %v420 = vld [vmem:[%s347 + $0xd4] sm:$0xf]
      %v421 = vld [vmem:[%s347 + $0xd8] sm:$0xf]
      %v422 = vld [vmem:[%s347 + $0xdc] sm:$0xf]
      %v423 = vld [vmem:[%s347 + $0xe0] sm:$0xf]
      %v424 = vld [vmem:[%s347 + $0xe4] sm:$0xf]
      %v425 = vld [vmem:[%s347 + $0xe8] sm:$0xf]
      %v426 = vld [vmem:[%s347 + $0xec] sm:$0xf]
      %v427 = vld [vmem:[%s347 + $0xf0] sm:$0xf]
      %v428 = vld [vmem:[%s347 + $0xf4] sm:$0xf]
      %v429 = vld [vmem:[%s347 + $0xf8] sm:$0xf]
      %v430 = vld [vmem:[%s347 + $0xfc] sm:$0xf]
      %v431 = vld [vmem:[%s347 + $0x100] sm:$0xf]
      %v432 = vld [vmem:[%s347 + $0x104] sm:$0xf]
      %v433 = vld [vmem:[%s347 + $0x108] sm:$0xf]
      %v434 = vld [vmem:[%s347 + $0x10c] sm:$0xf]
      %v435 = vld [vmem:[%s347 + $0x110] sm:$0xf]
      %v436 = vld [vmem:[%s347 + $0x114] sm:$0xf]
      %v437 = vld [vmem:[%s347 + $0x118] sm:$0xf]
      %v438 = vld [vmem:[%s347 + $0x11c] sm:$0xf]
      %v439 = vld [vmem:[%s1] sm:$0xf]
      %v440 = vld [vmem:[%s1 + $0x4] sm:$0xf]
      %v441 = vld [vmem:[%s1 + $0x8] sm:$0xf]
      %v442 = vld [vmem:[%s1 + $0xc] sm:$0xf]
      %v443 = vld [vmem:[%s1 + $0x10] sm:$0xf]
      %v444 = vld [vmem:[%s1 + $0x14] sm:$0xf]
      %v445 = vld [vmem:[%s1 + $0x18] sm:$0xf]
      %v446 = vld [vmem:[%s1 + $0x1c] sm:$0xf]
      %v447 = vld [vmem:[%s1 + $0x20] sm:$0xf]
      %v448 = vld [vmem:[%s1 + $0x24] sm:$0xf]
      %v449 = vld [vmem:[%s1 + $0x28] sm:$0xf]
      %v450 = vld [vmem:[%s1 + $0x2c] sm:$0xf]
      %v451 = vld [vmem:[%s1 + $0x30] sm:$0xf]
      %v452 = vld [vmem:[%s1 + $0x34] sm:$0xf]
      %v453 = vld [vmem:[%s1 + $0x38] sm:$0xf]
      %v454 = vld [vmem:[%s1 + $0x3c] sm:$0xf]
      %v527 = vunpack.c.l.b16 %v367
      %v528 = vunpack.c.l.b16 %v368
      %v529 = vunpack.c.l.b16 %v369
      %v530 = vunpack.c.l.b16 %v370
      %v531 = vunpack.c.l.b16 %v371
      %v532 = vunpack.c.l.b16 %v372
      %v533 = vunpack.c.l.b16 %v373
      %v534 = vunpack.c.l.b16 %v374
      %v535 = vunpack.c.l.b16 %v375
      %v536 = vunpack.c.l.b16 %v376
      %v537 = vunpack.c.l.b16 %v377
      %v538 = vunpack.c.l.b16 %v378
      %v539 = vunpack.c.l.b16 %v379
      %v540 = vunpack.c.l.b16 %v380
      %v541 = vunpack.c.l.b16 %v381
      %v542 = vunpack.c.l.b16 %v382
      %v543 = vunpack.c.l.b16 %v383
      %v544 = vunpack.c.l.b16 %v384
      %v545 = vunpack.c.l.b16 %v385
      %v546 = vunpack.c.l.b16 %v386
      %v547 = vunpack.c.l.b16 %v387
      %v548 = vunpack.c.l.b16 %v388
      %v549 = vunpack.c.l.b16 %v389
      %v550 = vunpack.c.l.b16 %v390
      %v551 = vunpack.c.l.b16 %v391
      %v552 = vunpack.c.l.b16 %v392
      %v553 = vunpack.c.l.b16 %v393
      %v554 = vunpack.c.l.b16 %v394
      %v555 = vunpack.c.l.b16 %v395
      %v556 = vunpack.c.l.b16 %v396
      %v557 = vunpack.c.l.b16 %v397
      %v558 = vunpack.c.l.b16 %v398
      %v559 = vunpack.c.l.b16 %v399
      %v560 = vunpack.c.l.b16 %v400
      %v561 = vunpack.c.l.b16 %v401
      %v562 = vunpack.c.l.b16 %v402
      %v563 = vunpack.c.l.b16 %v403
      %v564 = vunpack.c.l.b16 %v404
      %v565 = vunpack.c.l.b16 %v405
      %v566 = vunpack.c.l.b16 %v406
      %v567 = vunpack.c.l.b16 %v407
      %v568 = vunpack.c.l.b16 %v408
      %v569 = vunpack.c.l.b16 %v409
      %v570 = vunpack.c.l.b16 %v410
      %v571 = vunpack.c.l.b16 %v411
      %v572 = vunpack.c.l.b16 %v412
      %v573 = vunpack.c.l.b16 %v413
      %v574 = vunpack.c.l.b16 %v414
      %v575 = vunpack.c.l.b16 %v415
      %v576 = vunpack.c.l.b16 %v416
      %v577 = vunpack.c.l.b16 %v417
      %v578 = vunpack.c.l.b16 %v418
      %v579 = vunpack.c.l.b16 %v419
      %v580 = vunpack.c.l.b16 %v420
      %v581 = vunpack.c.l.b16 %v421
      %v582 = vunpack.c.l.b16 %v422
      %v583 = vunpack.c.l.b16 %v423
      %v584 = vunpack.c.l.b16 %v424
      %v585 = vunpack.c.l.b16 %v425
      %v586 = vunpack.c.l.b16 %v426
      %v587 = vunpack.c.l.b16 %v427
      %v588 = vunpack.c.l.b16 %v428
      %v589 = vunpack.c.l.b16 %v429
      %v590 = vunpack.c.l.b16 %v430
      %v591 = vunpack.c.l.b16 %v431
      %v592 = vunpack.c.l.b16 %v432
      %v593 = vunpack.c.l.b16 %v433
      %v594 = vunpack.c.l.b16 %v434
      %v595 = vunpack.c.l.b16 %v435
      %v596 = vunpack.c.l.b16 %v436
      %v597 = vunpack.c.l.b16 %v437
      %v598 = vunpack.c.l.b16 %v438
      %v599 = vpack.c.b16 %v528, %v527
      %v600 = vpack.c.b16 %v530, %v529
      %v601 = vpack.c.b16 %v532, %v531
      %v602 = vpack.c.b16 %v534, %v533
      %v603 = vpack.c.b16 %v536, %v535
      %v604 = vpack.c.b16 %v538, %v537
      %v605 = vpack.c.b16 %v540, %v539
      %v606 = vpack.c.b16 %v542, %v541
      %v607 = vpack.c.b16 %v544, %v543
      %v608 = vpack.c.b16 %v546, %v545
      %v609 = vpack.c.b16 %v548, %v547
      %v610 = vpack.c.b16 %v550, %v549
      %v611 = vpack.c.b16 %v552, %v551
      %v612 = vpack.c.b16 %v554, %v553
      %v613 = vpack.c.b16 %v556, %v555
      %v614 = vpack.c.b16 %v558, %v557
      %v615 = vpack.c.b16 %v560, %v559
      %v616 = vpack.c.b16 %v562, %v561
      %v617 = vpack.c.b16 %v564, %v563
      %v618 = vpack.c.b16 %v566, %v565
      %v619 = vpack.c.b16 %v568, %v567
      %v620 = vpack.c.b16 %v570, %v569
      %v621 = vpack.c.b16 %v572, %v571
      %v622 = vpack.c.b16 %v574, %v573
      %v623 = vpack.c.b16 %v576, %v575
      %v624 = vpack.c.b16 %v578, %v577
      %v625 = vpack.c.b16 %v580, %v579
      %v626 = vpack.c.b16 %v582, %v581
      %v627 = vpack.c.b16 %v584, %v583
      %v628 = vpack.c.b16 %v586, %v585
      %v629 = vpack.c.b16 %v588, %v587
      %v630 = vpack.c.b16 %v590, %v589
      %v631 = vpack.c.b16 %v592, %v591
      %v632 = vpack.c.b16 %v594, %v593
      %v633 = vpack.c.b16 %v596, %v595
      %v634 = vpack.c.b16 %v598, %v597
      %v687 = vunpack.c.l.b16 %v439
      %v688 = vunpack.c.l.b16 %v440
      %v689 = vunpack.c.l.b16 %v441
      %v690 = vunpack.c.l.b16 %v442
      %v691 = vunpack.c.l.b16 %v443
      %v692 = vunpack.c.l.b16 %v444
      %v693 = vunpack.c.l.b16 %v445
      %v694 = vunpack.c.l.b16 %v446
      %v695 = vunpack.c.l.b16 %v447
      %v696 = vunpack.c.l.b16 %v448
      %v697 = vunpack.c.l.b16 %v449
      %v698 = vunpack.c.l.b16 %v450
      %v699 = vunpack.c.l.b16 %v451
      %v700 = vunpack.c.l.b16 %v452
      %v701 = vunpack.c.l.b16 %v453
      %v702 = vunpack.c.l.b16 %v454
      %v703 = vpack.c.b16 %v688, %v687
      %v704 = vpack.c.b16 %v690, %v689
      %v705 = vpack.c.b16 %v692, %v691
      %v706 = vpack.c.b16 %v694, %v693
      %v707 = vpack.c.b16 %v696, %v695
      %v708 = vpack.c.b16 %v698, %v697
      %v709 = vpack.c.b16 %v700, %v699
      %v710 = vpack.c.b16 %v702, %v701
      %719 = vmatprep.subr.bf16.mxu0 0
      %720 = vmatpush1.bf16.msra.mxu0 %v703
      %721 = vmatprep.subr.bf16.mxu0 0
      %722 = vmatpush1.bf16.msra.mxu0 %v704
      %723 = vmatprep.subr.bf16.mxu0 0
      %724 = vmatpush1.bf16.msra.mxu0 %v705
      %725 = vmatprep.subr.bf16.mxu0 0
      %726 = vmatpush1.bf16.msra.mxu0 %v706
      %727 = vmatprep.subr.bf16.mxu0 0
      %728 = vmatpush1.bf16.msra.mxu0 %v707
      %729 = vmatprep.subr.bf16.mxu0 0
      %730 = vmatpush1.bf16.msra.mxu0 %v708
      %731 = vmatprep.subr.bf16.mxu0 0
      %732 = vmatpush1.bf16.msra.mxu0 %v709
      %733 = vmatprep.subr.bf16.mxu0 0
      %734 = vmatpush1.bf16.msra.mxu0 %v710
      %735 = vmatprep.subr.bf16.mxu0 0
      %736 = vmatpush1.bf16.msra.mxu0 0
      %737 = vmatprep.subr.bf16.mxu0 0
      %738 = vmatpush1.bf16.msra.mxu0 0
      %739 = vmatprep.subr.bf16.mxu0 0
      %740 = vmatpush1.bf16.msra.mxu0 0
      %741 = vmatprep.subr.bf16.mxu0 0
      %742 = vmatpush1.bf16.msra.mxu0 0
      %743 = vmatprep.subr.bf16.mxu0 0
      %744 = vmatpush1.bf16.msra.mxu0 0
      %745 = vmatprep.subr.bf16.mxu0 0
      %746 = vmatpush1.bf16.msra.mxu0 0
      %747 = vmatprep.subr.bf16.mxu0 0
      %748 = vmatpush1.bf16.msra.mxu0 0
      %749 = vmatprep.subr.bf16.mxu0 0
      %750 = vmatpush1.bf16.msra.mxu0 0
      %751 = vmatprep.mubr.bf16.mxu0 0
      %752 = vmatmul.mubr.bf16.gmra.mrb[0].mxu0 %v599
      %v753 = vpop.f32.mrb[0].mxu0
      %v754 = vadd.f32 0.0, %v753
      %v755 = vpop.f32.mrb[0].mxu0
      %v756 = vpop.f32.mrb[0].mxu0
      %v757 = vadd.f32 0.0, %v756
      %v758 = vpop.f32.mrb[0].mxu0
      %759 = vmatprep.mubr.bf16.mxu0 0
      %760 = vmatmul.mubr.bf16.gmra.mrb[0].mxu0 %v600
      %v761 = vpop.f32.mrb[0].mxu0
      %v762 = vadd.f32 0.0, %v761
      %v763 = vpop.f32.mrb[0].mxu0
      %v764 = vpop.f32.mrb[0].mxu0
      %v765 = vadd.f32 0.0, %v764
      %v766 = vpop.f32.mrb[0].mxu0
      %767 = vmatprep.mubr.bf16.mxu0 0
      %768 = vmatmul.mubr.bf16.gmra.mrb[0].mxu0 %v601
      %v769 = vpop.f32.mrb[0].mxu0
      %v770 = vadd.f32 0.0, %v769
      %v771 = vpop.f32.mrb[0].mxu0
      %v772 = vpop.f32.mrb[0].mxu0
      %v773 = vadd.f32 0.0, %v772
      %v774 = vpop.f32.mrb[0].mxu0
      %775 = vmatprep.mubr.bf16.mxu0 0
      %776 = vmatmul.mubr.bf16.gmra.mrb[0].mxu0 %v602
      %v777 = vpop.f32.mrb[0].mxu0
      %v778 = vadd.f32 0.0, %v777
      %v779 = vpop.f32.mrb[0].mxu0
      %v780 = vpop.f32.mrb[0].mxu0
      %v781 = vadd.f32 0.0, %v780
      %v782 = vpop.f32.mrb[0].mxu0
      %783 = vmatprep.mubr.bf16.mxu0 0
      %784 = vmatmul.mubr.bf16.gmra.mrb[0].mxu0 %v603
      %v785 = vpop.f32.mrb[0].mxu0
      %v786 = vadd.f32 0.0, %v785
      %v787 = vpop.f32.mrb[0].mxu0
      %v788 = vpop.f32.mrb[0].mxu0
      %v789 = vadd.f32 0.0, %v788
      %v790 = vpop.f32.mrb[0].mxu0
      %791 = vmatprep.mubr.bf16.mxu0 0
      %792 = vmatmul.mubr.bf16.gmra.mrb[0].mxu0 %v604
      %v793 = vpop.f32.mrb[0].mxu0
      %v794 = vadd.f32 0.0, %v793
      %v795 = vpop.f32.mrb[0].mxu0
      %v796 = vpop.f32.mrb[0].mxu0
      %v797 = vadd.f32 0.0, %v796
      %v798 = vpop.f32.mrb[0].mxu0
      %799 = vmatprep.mubr.bf16.mxu0 0
      %800 = vmatmul.mubr.bf16.gmra.mrb[0].mxu0 %v605
      %v801 = vpop.f32.mrb[0].mxu0
      %v802 = vadd.f32 0.0, %v801
      %v803 = vpop.f32.mrb[0].mxu0
      %v804 = vpop.f32.mrb[0].mxu0
      %v805 = vadd.f32 0.0, %v804
      %v806 = vpop.f32.mrb[0].mxu0
      %807 = vmatprep.mubr.bf16.mxu0 0
      %808 = vmatmul.mubr.bf16.gmra.mrb[0].mxu0 %v606
      %v809 = vpop.f32.mrb[0].mxu0
      %v810 = vadd.f32 0.0, %v809
      %v811 = vpop.f32.mrb[0].mxu0
      %v812 = vpop.f32.mrb[0].mxu0
      %v813 = vadd.f32 0.0, %v812
      %v814 = vpop.f32.mrb[0].mxu0
      %815 = vmatprep.mubr.bf16.mxu0 0
      %816 = vmatmul.mubr.bf16.gmra.mrb[0].mxu0 %v607
      %v817 = vpop.f32.mrb[0].mxu0
      %v818 = vadd.f32 0.0, %v817
      %v819 = vpop.f32.mrb[0].mxu0
      %v820 = vpop.f32.mrb[0].mxu0
      %v821 = vadd.f32 0.0, %v820
      %v822 = vpop.f32.mrb[0].mxu0
      %823 = vmatprep.mubr.bf16.mxu0 0
      %824 = vmatmul.mubr.bf16.gmra.mrb[0].mxu0 %v608
      %v825 = vpop.f32.mrb[0].mxu0
      %v826 = vadd.f32 0.0, %v825
      %v827 = vpop.f32.mrb[0].mxu0
      %v828 = vpop.f32.mrb[0].mxu0
      %v829 = vadd.f32 0.0, %v828
      %v830 = vpop.f32.mrb[0].mxu0
      %831 = vmatprep.mubr.bf16.mxu0 0
      %832 = vmatmul.mubr.bf16.gmra.mrb[0].mxu0 %v609
      %v833 = vpop.f32.mrb[0].mxu0
      %v834 = vadd.f32 0.0, %v833
      %v835 = vpop.f32.mrb[0].mxu0
      %v836 = vpop.f32.mrb[0].mxu0
      %v837 = vadd.f32 0.0, %v836
      %v838 = vpop.f32.mrb[0].mxu0
      %839 = vmatprep.mubr.bf16.mxu0 0
      %840 = vmatmul.mubr.bf16.gmra.mrb[0].mxu0 %v610
      %v841 = vpop.f32.mrb[0].mxu0
      %v842 = vadd.f32 0.0, %v841
      %v843 = vpop.f32.mrb[0].mxu0
      %v844 = vpop.f32.mrb[0].mxu0
      %v845 = vadd.f32 0.0, %v844
      %v846 = vpop.f32.mrb[0].mxu0
      %847 = vmatprep.mubr.bf16.mxu0 0
      %848 = vmatmul.mubr.bf16.gmra.mrb[0].mxu0 %v611
      %v849 = vpop.f32.mrb[0].mxu0
      %v850 = vadd.f32 0.0, %v849
      %v851 = vpop.f32.mrb[0].mxu0
      %v852 = vpop.f32.mrb[0].mxu0
      %v853 = vadd.f32 0.0, %v852
      %v854 = vpop.f32.mrb[0].mxu0
      %855 = vmatprep.mubr.bf16.mxu0 0
      %856 = vmatmul.mubr.bf16.gmra.mrb[0].mxu0 %v612
      %v857 = vpop.f32.mrb[0].mxu0
      %v858 = vadd.f32 0.0, %v857
      %v859 = vpop.f32.mrb[0].mxu0
      %v860 = vpop.f32.mrb[0].mxu0
      %v861 = vadd.f32 0.0, %v860
      %v862 = vpop.f32.mrb[0].mxu0
      %863 = vmatprep.mubr.bf16.mxu0 0
      %864 = vmatmul.mubr.bf16.gmra.mrb[0].mxu0 %v613
      %v865 = vpop.f32.mrb[0].mxu0
      %v866 = vadd.f32 0.0, %v865
      %v867 = vpop.f32.mrb[0].mxu0
      %v868 = vpop.f32.mrb[0].mxu0
      %v869 = vadd.f32 0.0, %v868
      %v870 = vpop.f32.mrb[0].mxu0
      %871 = vmatprep.mubr.bf16.mxu0 0
      %872 = vmatmul.mubr.bf16.gmra.mrb[0].mxu0 %v614
      %v873 = vpop.f32.mrb[0].mxu0
      %v874 = vadd.f32 0.0, %v873
      %v875 = vpop.f32.mrb[0].mxu0
      %v876 = vpop.f32.mrb[0].mxu0
      %v877 = vadd.f32 0.0, %v876
      %v878 = vpop.f32.mrb[0].mxu0
      %879 = vmatprep.mubr.bf16.mxu0 0
      %880 = vmatmul.mubr.bf16.gmra.mrb[0].mxu0 %v615
      %v881 = vpop.f32.mrb[0].mxu0
      %v882 = vadd.f32 0.0, %v881
      %v883 = vpop.f32.mrb[0].mxu0
      %v884 = vpop.f32.mrb[0].mxu0
      %v885 = vadd.f32 0.0, %v884
      %v886 = vpop.f32.mrb[0].mxu0
      %887 = vmatprep.mubr.bf16.mxu0 0
      %888 = vmatmul.mubr.bf16.gmra.mrb[0].mxu0 %v616
      %v889 = vpop.f32.mrb[0].mxu0
      %v890 = vadd.f32 0.0, %v889
      %v891 = vpop.f32.mrb[0].mxu0
      %v892 = vpop.f32.mrb[0].mxu0
      %v893 = vadd.f32 0.0, %v892
      %v894 = vpop.f32.mrb[0].mxu0
      %895 = vmatprep.mubr.bf16.mxu0 0
      %896 = vmatmul.mubr.bf16.gmra.mrb[0].mxu0 %v617
      %v897 = vpop.f32.mrb[0].mxu0
      %v898 = vadd.f32 0.0, %v897
      %v899 = vpop.f32.mrb[0].mxu0
      %v900 = vpop.f32.mrb[0].mxu0
      %v901 = vadd.f32 0.0, %v900
      %v902 = vpop.f32.mrb[0].mxu0
      %903 = vmatprep.mubr.bf16.mxu0 0
      %904 = vmatmul.mubr.bf16.gmra.mrb[0].mxu0 %v618
      %v905 = vpop.f32.mrb[0].mxu0
      %v906 = vadd.f32 0.0, %v905
      %v907 = vpop.f32.mrb[0].mxu0
      %v908 = vpop.f32.mrb[0].mxu0
      %v909 = vadd.f32 0.0, %v908
      %v910 = vpop.f32.mrb[0].mxu0
      %911 = vmatprep.mubr.bf16.mxu0 0
      %912 = vmatmul.mubr.bf16.gmra.mrb[0].mxu0 %v619
      %v913 = vpop.f32.mrb[0].mxu0
      %v914 = vadd.f32 0.0, %v913
      %v915 = vpop.f32.mrb[0].mxu0
      %v916 = vpop.f32.mrb[0].mxu0
      %v917 = vadd.f32 0.0, %v916
      %v918 = vpop.f32.mrb[0].mxu0
      %919 = vmatprep.mubr.bf16.mxu0 0
      %920 = vmatmul.mubr.bf16.gmra.mrb[0].mxu0 %v620
      %v921 = vpop.f32.mrb[0].mxu0
      %v922 = vadd.f32 0.0, %v921
      %v923 = vpop.f32.mrb[0].mxu0
      %v924 = vpop.f32.mrb[0].mxu0
      %v925 = vadd.f32 0.0, %v924
      %v926 = vpop.f32.mrb[0].mxu0
      %927 = vmatprep.mubr.bf16.mxu0 0
      %928 = vmatmul.mubr.bf16.gmra.mrb[0].mxu0 %v621
      %v929 = vpop.f32.mrb[0].mxu0
      %v930 = vadd.f32 0.0, %v929
      %v931 = vpop.f32.mrb[0].mxu0
      %v932 = vpop.f32.mrb[0].mxu0
      %v933 = vadd.f32 0.0, %v932
      %v934 = vpop.f32.mrb[0].mxu0
      %935 = vmatprep.mubr.bf16.mxu0 0
      %936 = vmatmul.mubr.bf16.gmra.mrb[0].mxu0 %v622
      %v937 = vpop.f32.mrb[0].mxu0
      %v938 = vadd.f32 0.0, %v937
      %v939 = vpop.f32.mrb[0].mxu0
      %v940 = vpop.f32.mrb[0].mxu0
      %v941 = vadd.f32 0.0, %v940
      %v942 = vpop.f32.mrb[0].mxu0
      %943 = vmatprep.mubr.bf16.mxu0 0
      %944 = vmatmul.mubr.bf16.gmra.mrb[0].mxu0 %v623
      %v945 = vpop.f32.mrb[0].mxu0
      %v946 = vadd.f32 0.0, %v945
      %v947 = vpop.f32.mrb[0].mxu0
      %v948 = vpop.f32.mrb[0].mxu0
      %v949 = vadd.f32 0.0, %v948
      %v950 = vpop.f32.mrb[0].mxu0
      %951 = vmatprep.mubr.bf16.mxu0 0
      %952 = vmatmul.mubr.bf16.gmra.mrb[0].mxu0 %v624
      %v953 = vpop.f32.mrb[0].mxu0
      %v954 = vadd.f32 0.0, %v953
      %v955 = vpop.f32.mrb[0].mxu0
      %v956 = vpop.f32.mrb[0].mxu0
      %v957 = vadd.f32 0.0, %v956
      %v958 = vpop.f32.mrb[0].mxu0
      %959 = vmatprep.mubr.bf16.mxu0 0
      %960 = vmatmul.mubr.bf16.gmra.mrb[0].mxu0 %v625
      %v961 = vpop.f32.mrb[0].mxu0
      %v962 = vadd.f32 0.0, %v961
      %v963 = vpop.f32.mrb[0].mxu0
      %v964 = vpop.f32.mrb[0].mxu0
      %v965 = vadd.f32 0.0, %v964
      %v966 = vpop.f32.mrb[0].mxu0
      %967 = vmatprep.mubr.bf16.mxu0 0
      %968 = vmatmul.mubr.bf16.gmra.mrb[0].mxu0 %v626
      %v969 = vpop.f32.mrb[0].mxu0
      %v970 = vadd.f32 0.0, %v969
      %v971 = vpop.f32.mrb[0].mxu0
      %v972 = vpop.f32.mrb[0].mxu0
      %v973 = vadd.f32 0.0, %v972
      %v974 = vpop.f32.mrb[0].mxu0
      %975 = vmatprep.mubr.bf16.mxu0 0
      %976 = vmatmul.mubr.bf16.gmra.mrb[0].mxu0 %v627
      %v977 = vpop.f32.mrb[0].mxu0
      %v978 = vadd.f32 0.0, %v977
      %v979 = vpop.f32.mrb[0].mxu0
      %v980 = vpop.f32.mrb[0].mxu0
      %v981 = vadd.f32 0.0, %v980
      %v982 = vpop.f32.mrb[0].mxu0
      %983 = vmatprep.mubr.bf16.mxu0 0
      %984 = vmatmul.mubr.bf16.gmra.mrb[0].mxu0 %v628
      %v985 = vpop.f32.mrb[0].mxu0
      %v986 = vadd.f32 0.0, %v985
      %v987 = vpop.f32.mrb[0].mxu0
      %v988 = vpop.f32.mrb[0].mxu0
      %v989 = vadd.f32 0.0, %v988
      %v990 = vpop.f32.mrb[0].mxu0
      %991 = vmatprep.mubr.bf16.mxu0 0
      %992 = vmatmul.mubr.bf16.gmra.mrb[0].mxu0 %v629
      %v993 = vpop.f32.mrb[0].mxu0
      %v994 = vadd.f32 0.0, %v993
      %v995 = vpop.f32.mrb[0].mxu0
      %v996 = vpop.f32.mrb[0].mxu0
      %v997 = vadd.f32 0.0, %v996
      %v998 = vpop.f32.mrb[0].mxu0
      %999 = vmatprep.mubr.bf16.mxu0 0
      %1000 = vmatmul.mubr.bf16.gmra.mrb[0].mxu0 %v630
      %v1001 = vpop.f32.mrb[0].mxu0
      %v1002 = vadd.f32 0.0, %v1001
      %v1003 = vpop.f32.mrb[0].mxu0
      %v1004 = vpop.f32.mrb[0].mxu0
      %v1005 = vadd.f32 0.0, %v1004
      %v1006 = vpop.f32.mrb[0].mxu0
      %1007 = vmatprep.mubr.bf16.mxu0 0
      %1008 = vmatmul.mubr.bf16.gmra.mrb[0].mxu0 %v631
      %v1009 = vpop.f32.mrb[0].mxu0
      %v1010 = vadd.f32 0.0, %v1009
      %v1011 = vpop.f32.mrb[0].mxu0
      %v1012 = vpop.f32.mrb[0].mxu0
      %v1013 = vadd.f32 0.0, %v1012
      %v1014 = vpop.f32.mrb[0].mxu0
      %1015 = vmatprep.mubr.bf16.mxu0 0
      %1016 = vmatmul.mubr.bf16.gmra.mrb[0].mxu0 %v632
      %v1017 = vpop.f32.mrb[0].mxu0
      %v1018 = vadd.f32 0.0, %v1017
      %v1019 = vpop.f32.mrb[0].mxu0
      %v1020 = vpop.f32.mrb[0].mxu0
      %v1021 = vadd.f32 0.0, %v1020
      %v1022 = vpop.f32.mrb[0].mxu0
      %1023 = vmatprep.mubr.bf16.mxu0 0
      %1024 = vmatmul.mubr.bf16.gmra.mrb[0].mxu0 %v633
      %v1025 = vpop.f32.mrb[0].mxu0
      %v1026 = vadd.f32 0.0, %v1025
      %v1027 = vpop.f32.mrb[0].mxu0
      %v1028 = vpop.f32.mrb[0].mxu0
      %v1029 = vadd.f32 0.0, %v1028
      %v1030 = vpop.f32.mrb[0].mxu0
      %1031 = vmatprep.mubr.bf16.mxu0 0
      %1032 = vmatmul.mubr.bf16.gmra.mrb[0].mxu0 %v634
      %v1033 = vpop.f32.mrb[0].mxu0
      %v1034 = vadd.f32 0.0, %v1033
      %v1035 = vpop.f32.mrb[0].mxu0
      %v1036 = vpop.f32.mrb[0].mxu0
      %v1037 = vadd.f32 0.0, %v1036
      %v1038 = vpop.f32.mrb[0].mxu0
      %1039 = vdwg.mxu0
      %v1040 = vld [vmem:[%s2] sm:$0x1]
      %v1041 = vld [vmem:[%s3] sm:$0xff]
      %v1042 = vld [vmem:[%s3 + $0x8] sm:$0xff]
      %v1043 = vld [vmem:[%s3 + $0x10] sm:$0xff]
      %v1044 = vld [vmem:[%s3 + $0x18] sm:$0xff]
      %v1045 = vld [vmem:[%s3 + $0x20] sm:$0xff]
      %v1046 = vld [vmem:[%s3 + $0x28] sm:$0xff]
      %v1047 = vld [vmem:[%s3 + $0x30] sm:$0xff]
      %v1048 = vld [vmem:[%s3 + $0x38] sm:$0xff]
      %v1049 = vld [vmem:[%s3 + $0x40] sm:$0xff]
      %v1050 = vld [vmem:[%s3 + $0x48] sm:$0xff]
      %v1051 = vld [vmem:[%s3 + $0x50] sm:$0xff]
      %v1052 = vld [vmem:[%s3 + $0x58] sm:$0xff]
      %v1053 = vld [vmem:[%s3 + $0x60] sm:$0xff]
      %v1054 = vld [vmem:[%s3 + $0x68] sm:$0xff]
      %v1055 = vld [vmem:[%s3 + $0x70] sm:$0xff]
      %v1056 = vld [vmem:[%s3 + $0x78] sm:$0xff]
      %v1057 = vld [vmem:[%s3 + $0x80] sm:$0xff]
      %v1058 = vld [vmem:[%s3 + $0x88] sm:$0xff]
      %v1059 = vld [vmem:[%s3 + $0x90] sm:$0xff]
      %v1060 = vld [vmem:[%s3 + $0x98] sm:$0xff]
      %v1061 = vld [vmem:[%s3 + $0xa0] sm:$0xff]
      %v1062 = vld [vmem:[%s3 + $0xa8] sm:$0xff]
      %v1063 = vld [vmem:[%s3 + $0xb0] sm:$0xff]
      %v1064 = vld [vmem:[%s3 + $0xb8] sm:$0xff]
      %v1065 = vld [vmem:[%s3 + $0xc0] sm:$0xff]
      %v1066 = vld [vmem:[%s3 + $0xc8] sm:$0xff]
      %v1067 = vld [vmem:[%s3 + $0xd0] sm:$0xff]
      %v1068 = vld [vmem:[%s3 + $0xd8] sm:$0xff]
      %v1069 = vld [vmem:[%s3 + $0xe0] sm:$0xff]
      %v1070 = vld [vmem:[%s3 + $0xe8] sm:$0xff]
      %v1071 = vld [vmem:[%s3 + $0xf0] sm:$0xff]
      %v1072 = vld [vmem:[%s3 + $0xf8] sm:$0xff]
      %v1073 = vld [vmem:[%s3 + $0x100] sm:$0xff]
      %v1074 = vld [vmem:[%s3 + $0x108] sm:$0xff]
      %v1075 = vld [vmem:[%s3 + $0x110] sm:$0xff]
      %v1076 = vld [vmem:[%s3 + $0x118] sm:$0xff]
      %v1077 = vld [vmem:[%s3 + $0x120] sm:$0xff]
      %v1078 = vld [vmem:[%s3 + $0x128] sm:$0xff]
      %v1079 = vld [vmem:[%s3 + $0x130] sm:$0xff]
      %v1080 = vld [vmem:[%s3 + $0x138] sm:$0xff]
      %v1081 = vld [vmem:[%s3 + $0x140] sm:$0xff]
      %v1082 = vld [vmem:[%s3 + $0x148] sm:$0xff]
      %v1083 = vld [vmem:[%s3 + $0x150] sm:$0xff]
      %v1084 = vld [vmem:[%s3 + $0x158] sm:$0xff]
      %v1085 = vld [vmem:[%s3 + $0x160] sm:$0xff]
      %v1086 = vld [vmem:[%s3 + $0x168] sm:$0xff]
      %v1087 = vld [vmem:[%s3 + $0x170] sm:$0xff]
      %v1088 = vld [vmem:[%s3 + $0x178] sm:$0xff]
      %v1089 = vld [vmem:[%s3 + $0x180] sm:$0xff]
      %v1090 = vld [vmem:[%s3 + $0x188] sm:$0xff]
      %v1091 = vld [vmem:[%s3 + $0x190] sm:$0xff]
      %v1092 = vld [vmem:[%s3 + $0x198] sm:$0xff]
      %v1093 = vld [vmem:[%s3 + $0x1a0] sm:$0xff]
      %v1094 = vld [vmem:[%s3 + $0x1a8] sm:$0xff]
      %v1095 = vld [vmem:[%s3 + $0x1b0] sm:$0xff]
      %v1096 = vld [vmem:[%s3 + $0x1b8] sm:$0xff]
      %v1097 = vld [vmem:[%s3 + $0x1c0] sm:$0xff]
      %v1098 = vld [vmem:[%s3 + $0x1c8] sm:$0xff]
      %v1099 = vld [vmem:[%s3 + $0x1d0] sm:$0xff]
      %v1100 = vld [vmem:[%s3 + $0x1d8] sm:$0xff]
      %v1101 = vld [vmem:[%s3 + $0x1e0] sm:$0xff]
      %v1102 = vld [vmem:[%s3 + $0x1e8] sm:$0xff]
      %v1103 = vld [vmem:[%s3 + $0x1f0] sm:$0xff]
      %v1104 = vld [vmem:[%s3 + $0x1f8] sm:$0xff]
      %v1105 = vld [vmem:[%s3 + $0x200] sm:$0xff]
      %v1106 = vld [vmem:[%s3 + $0x208] sm:$0xff]
      %v1107 = vld [vmem:[%s3 + $0x210] sm:$0xff]
      %v1108 = vld [vmem:[%s3 + $0x218] sm:$0xff]
      %v1109 = vld [vmem:[%s3 + $0x220] sm:$0xff]
      %v1110 = vld [vmem:[%s3 + $0x228] sm:$0xff]
      %v1111 = vld [vmem:[%s3 + $0x230] sm:$0xff]
      %v1112 = vld [vmem:[%s3 + $0x238] sm:$0xff]
      %v1114 = vlaneseq
      %v1115 = vshrl.u32 %v1114, 7
      %v1116 = vsub.s32 0, %v1115
      %v1117 = vrot.slane %v1040, %v1116
      %1120 = vset.pattern.permute.xlu0 0
      %1121 = vperm.xlu0 %1120, %v1041
      %v1122 = vpop.permute.xlu0 %1121
      %1125 = vset.pattern.permute.xlu0 0
      %1126 = vperm.xlu0 %1125, %v1042
      %v1127 = vpop.permute.xlu0 %1126
      %1130 = vset.pattern.permute.xlu0 0
      %1131 = vperm.xlu0 %1130, %v1043
      %v1132 = vpop.permute.xlu0 %1131
      %1135 = vset.pattern.permute.xlu0 0
      %1136 = vperm.xlu0 %1135, %v1044
      %v1137 = vpop.permute.xlu0 %1136
      %1140 = vset.pattern.permute.xlu0 0
      %1141 = vperm.xlu0 %1140, %v1045
      %v1142 = vpop.permute.xlu0 %1141
      %1145 = vset.pattern.permute.xlu0 0
      %1146 = vperm.xlu0 %1145, %v1046
      %v1147 = vpop.permute.xlu0 %1146
      %1150 = vset.pattern.permute.xlu0 0
      %1151 = vperm.xlu0 %1150, %v1047
      %v1152 = vpop.permute.xlu0 %1151
      %1155 = vset.pattern.permute.xlu0 0
      %1156 = vperm.xlu0 %1155, %v1048
      %v1157 = vpop.permute.xlu0 %1156
      %1160 = vset.pattern.permute.xlu0 0
      %1161 = vperm.xlu0 %1160, %v1049
      %v1162 = vpop.permute.xlu0 %1161
      %1165 = vset.pattern.permute.xlu0 0
      %1166 = vperm.xlu0 %1165, %v1050
      %v1167 = vpop.permute.xlu0 %1166
      %1170 = vset.pattern.permute.xlu0 0
      %1171 = vperm.xlu0 %1170, %v1051
      %v1172 = vpop.permute.xlu0 %1171
      %1175 = vset.pattern.permute.xlu0 0
      %1176 = vperm.xlu0 %1175, %v1052
      %v1177 = vpop.permute.xlu0 %1176
      %1180 = vset.pattern.permute.xlu0 0
      %1181 = vperm.xlu0 %1180, %v1053
      %v1182 = vpop.permute.xlu0 %1181
      %1185 = vset.pattern.permute.xlu0 0
      %1186 = vperm.xlu0 %1185, %v1054
      %v1187 = vpop.permute.xlu0 %1186
      %1190 = vset.pattern.permute.xlu0 0
      %1191 = vperm.xlu0 %1190, %v1055
      %v1192 = vpop.permute.xlu0 %1191
      %1195 = vset.pattern.permute.xlu0 0
      %1196 = vperm.xlu0 %1195, %v1056
      %v1197 = vpop.permute.xlu0 %1196
      %1200 = vset.pattern.permute.xlu0 0
      %1201 = vperm.xlu0 %1200, %v1057
      %v1202 = vpop.permute.xlu0 %1201
      %1205 = vset.pattern.permute.xlu0 0
      %1206 = vperm.xlu0 %1205, %v1058
      %v1207 = vpop.permute.xlu0 %1206
      %1210 = vset.pattern.permute.xlu0 0
      %1211 = vperm.xlu0 %1210, %v1059
      %v1212 = vpop.permute.xlu0 %1211
      %1215 = vset.pattern.permute.xlu0 0
      %1216 = vperm.xlu0 %1215, %v1060
      %v1217 = vpop.permute.xlu0 %1216
      %1220 = vset.pattern.permute.xlu0 0
      %1221 = vperm.xlu0 %1220, %v1061
      %v1222 = vpop.permute.xlu0 %1221
      %1225 = vset.pattern.permute.xlu0 0
      %1226 = vperm.xlu0 %1225, %v1062
      %v1227 = vpop.permute.xlu0 %1226
      %1230 = vset.pattern.permute.xlu0 0
      %1231 = vperm.xlu0 %1230, %v1063
      %v1232 = vpop.permute.xlu0 %1231
      %1235 = vset.pattern.permute.xlu0 0
      %1236 = vperm.xlu0 %1235, %v1064
      %v1237 = vpop.permute.xlu0 %1236
      %1240 = vset.pattern.permute.xlu0 0
      %1241 = vperm.xlu0 %1240, %v1065
      %v1242 = vpop.permute.xlu0 %1241
      %1245 = vset.pattern.permute.xlu0 0
      %1246 = vperm.xlu0 %1245, %v1066
      %v1247 = vpop.permute.xlu0 %1246
      %1250 = vset.pattern.permute.xlu0 0
      %1251 = vperm.xlu0 %1250, %v1067
      %v1252 = vpop.permute.xlu0 %1251
      %1255 = vset.pattern.permute.xlu0 0
      %1256 = vperm.xlu0 %1255, %v1068
      %v1257 = vpop.permute.xlu0 %1256
      %1260 = vset.pattern.permute.xlu0 0
      %1261 = vperm.xlu0 %1260, %v1069
      %v1262 = vpop.permute.xlu0 %1261
      %1265 = vset.pattern.permute.xlu0 0
      %1266 = vperm.xlu0 %1265, %v1070
      %v1267 = vpop.permute.xlu0 %1266
      %1270 = vset.pattern.permute.xlu0 0
      %1271 = vperm.xlu0 %1270, %v1071
      %v1272 = vpop.permute.xlu0 %1271
      %1275 = vset.pattern.permute.xlu0 0
      %1276 = vperm.xlu0 %1275, %v1072
      %v1277 = vpop.permute.xlu0 %1276
      %1280 = vset.pattern.permute.xlu0 0
      %1281 = vperm.xlu0 %1280, %v1073
      %v1282 = vpop.permute.xlu0 %1281
      %1285 = vset.pattern.permute.xlu0 0
      %1286 = vperm.xlu0 %1285, %v1074
      %v1287 = vpop.permute.xlu0 %1286
      %1290 = vset.pattern.permute.xlu0 0
      %1291 = vperm.xlu0 %1290, %v1075
      %v1292 = vpop.permute.xlu0 %1291
      %1295 = vset.pattern.permute.xlu0 0
      %1296 = vperm.xlu0 %1295, %v1076
      %v1297 = vpop.permute.xlu0 %1296
      %1300 = vset.pattern.permute.xlu0 0
      %1301 = vperm.xlu0 %1300, %v1077
      %v1302 = vpop.permute.xlu0 %1301
      %1305 = vset.pattern.permute.xlu0 0
      %1306 = vperm.xlu0 %1305, %v1078
      %v1307 = vpop.permute.xlu0 %1306
      %1310 = vset.pattern.permute.xlu0 0
      %1311 = vperm.xlu0 %1310, %v1079
      %v1312 = vpop.permute.xlu0 %1311
      %1315 = vset.pattern.permute.xlu0 0
      %1316 = vperm.xlu0 %1315, %v1080
      %v1317 = vpop.permute.xlu0 %1316
      %1320 = vset.pattern.permute.xlu0 0
      %1321 = vperm.xlu0 %1320, %v1081
      %v1322 = vpop.permute.xlu0 %1321
      %1325 = vset.pattern.permute.xlu0 0
      %1326 = vperm.xlu0 %1325, %v1082
      %v1327 = vpop.permute.xlu0 %1326
      %1330 = vset.pattern.permute.xlu0 0
      %1331 = vperm.xlu0 %1330, %v1083
      %v1332 = vpop.permute.xlu0 %1331
      %1335 = vset.pattern.permute.xlu0 0
      %1336 = vperm.xlu0 %1335, %v1084
      %v1337 = vpop.permute.xlu0 %1336
      %1340 = vset.pattern.permute.xlu0 0
      %1341 = vperm.xlu0 %1340, %v1085
      %v1342 = vpop.permute.xlu0 %1341
      %1345 = vset.pattern.permute.xlu0 0
      %1346 = vperm.xlu0 %1345, %v1086
      %v1347 = vpop.permute.xlu0 %1346
      %1350 = vset.pattern.permute.xlu0 0
      %1351 = vperm.xlu0 %1350, %v1087
      %v1352 = vpop.permute.xlu0 %1351
      %1355 = vset.pattern.permute.xlu0 0
      %1356 = vperm.xlu0 %1355, %v1088
      %v1357 = vpop.permute.xlu0 %1356
      %1360 = vset.pattern.permute.xlu0 0
      %1361 = vperm.xlu0 %1360, %v1089
      %v1362 = vpop.permute.xlu0 %1361
      %1365 = vset.pattern.permute.xlu0 0
      %1366 = vperm.xlu0 %1365, %v1090
      %v1367 = vpop.permute.xlu0 %1366
      %1370 = vset.pattern.permute.xlu0 0
      %1371 = vperm.xlu0 %1370, %v1091
      %v1372 = vpop.permute.xlu0 %1371
      %1375 = vset.pattern.permute.xlu0 0
      %1376 = vperm.xlu0 %1375, %v1092
      %v1377 = vpop.permute.xlu0 %1376
      %1380 = vset.pattern.permute.xlu0 0
      %1381 = vperm.xlu0 %1380, %v1093
      %v1382 = vpop.permute.xlu0 %1381
      %1385 = vset.pattern.permute.xlu0 0
      %1386 = vperm.xlu0 %1385, %v1094
      %v1387 = vpop.permute.xlu0 %1386
      %1390 = vset.pattern.permute.xlu0 0
      %1391 = vperm.xlu0 %1390, %v1095
      %v1392 = vpop.permute.xlu0 %1391
      %1395 = vset.pattern.permute.xlu0 0
      %1396 = vperm.xlu0 %1395, %v1096
      %v1397 = vpop.permute.xlu0 %1396
      %1400 = vset.pattern.permute.xlu0 0
      %1401 = vperm.xlu0 %1400, %v1097
      %v1402 = vpop.permute.xlu0 %1401
      %1405 = vset.pattern.permute.xlu0 0
      %1406 = vperm.xlu0 %1405, %v1098
      %v1407 = vpop.permute.xlu0 %1406
      %1410 = vset.pattern.permute.xlu0 0
      %1411 = vperm.xlu0 %1410, %v1099
      %v1412 = vpop.permute.xlu0 %1411
      %1415 = vset.pattern.permute.xlu0 0
      %1416 = vperm.xlu0 %1415, %v1100
      %v1417 = vpop.permute.xlu0 %1416
      %1420 = vset.pattern.permute.xlu0 0
      %1421 = vperm.xlu0 %1420, %v1101
      %v1422 = vpop.permute.xlu0 %1421
      %1425 = vset.pattern.permute.xlu0 0
      %1426 = vperm.xlu0 %1425, %v1102
      %v1427 = vpop.permute.xlu0 %1426
      %1430 = vset.pattern.permute.xlu0 0
      %1431 = vperm.xlu0 %1430, %v1103
      %v1432 = vpop.permute.xlu0 %1431
      %1435 = vset.pattern.permute.xlu0 0
      %1436 = vperm.xlu0 %1435, %v1104
      %v1437 = vpop.permute.xlu0 %1436
      %1440 = vset.pattern.permute.xlu0 0
      %1441 = vperm.xlu0 %1440, %v1105
      %v1442 = vpop.permute.xlu0 %1441
      %1445 = vset.pattern.permute.xlu0 0
      %1446 = vperm.xlu0 %1445, %v1106
      %v1447 = vpop.permute.xlu0 %1446
      %1450 = vset.pattern.permute.xlu0 0
      %1451 = vperm.xlu0 %1450, %v1107
      %v1452 = vpop.permute.xlu0 %1451
      %1455 = vset.pattern.permute.xlu0 0
      %1456 = vperm.xlu0 %1455, %v1108
      %v1457 = vpop.permute.xlu0 %1456
      %1460 = vset.pattern.permute.xlu0 0
      %1461 = vperm.xlu0 %1460, %v1109
      %v1462 = vpop.permute.xlu0 %1461
      %1465 = vset.pattern.permute.xlu0 0
      %1466 = vperm.xlu0 %1465, %v1110
      %v1467 = vpop.permute.xlu0 %1466
      %1470 = vset.pattern.permute.xlu0 0
      %1471 = vperm.xlu0 %1470, %v1111
      %v1472 = vpop.permute.xlu0 %1471
      %1475 = vset.pattern.permute.xlu0 0
      %1476 = vperm.xlu0 %1475, %v1112
      %v1477 = vpop.permute.xlu0 %1476
      %v1479 = vmul.f32 %v1117, %v1122
      %v1480 = vmul.f32 %v1117, %v1127
      %v1481 = vmul.f32 %v1117, %v1132
      %v1482 = vmul.f32 %v1117, %v1137
      %v1483 = vmul.f32 %v1117, %v1142
      %v1484 = vmul.f32 %v1117, %v1147
      %v1485 = vmul.f32 %v1117, %v1152
      %v1486 = vmul.f32 %v1117, %v1157
      %v1487 = vmul.f32 %v1117, %v1162
      %v1488 = vmul.f32 %v1117, %v1167
      %v1489 = vmul.f32 %v1117, %v1172
      %v1490 = vmul.f32 %v1117, %v1177
      %v1491 = vmul.f32 %v1117, %v1182
      %v1492 = vmul.f32 %v1117, %v1187
      %v1493 = vmul.f32 %v1117, %v1192
      %v1494 = vmul.f32 %v1117, %v1197
      %v1495 = vmul.f32 %v1117, %v1202
      %v1496 = vmul.f32 %v1117, %v1207
      %v1497 = vmul.f32 %v1117, %v1212
      %v1498 = vmul.f32 %v1117, %v1217
      %v1499 = vmul.f32 %v1117, %v1222
      %v1500 = vmul.f32 %v1117, %v1227
      %v1501 = vmul.f32 %v1117, %v1232
      %v1502 = vmul.f32 %v1117, %v1237
      %v1503 = vmul.f32 %v1117, %v1242
      %v1504 = vmul.f32 %v1117, %v1247
      %v1505 = vmul.f32 %v1117, %v1252
      %v1506 = vmul.f32 %v1117, %v1257
      %v1507 = vmul.f32 %v1117, %v1262
      %v1508 = vmul.f32 %v1117, %v1267
      %v1509 = vmul.f32 %v1117, %v1272
      %v1510 = vmul.f32 %v1117, %v1277
      %v1511 = vmul.f32 %v1117, %v1282
      %v1512 = vmul.f32 %v1117, %v1287
      %v1513 = vmul.f32 %v1117, %v1292
      %v1514 = vmul.f32 %v1117, %v1297
      %v1515 = vmul.f32 %v1117, %v1302
      %v1516 = vmul.f32 %v1117, %v1307
      %v1517 = vmul.f32 %v1117, %v1312
      %v1518 = vmul.f32 %v1117, %v1317
      %v1519 = vmul.f32 %v1117, %v1322
      %v1520 = vmul.f32 %v1117, %v1327
      %v1521 = vmul.f32 %v1117, %v1332
      %v1522 = vmul.f32 %v1117, %v1337
      %v1523 = vmul.f32 %v1117, %v1342
      %v1524 = vmul.f32 %v1117, %v1347
      %v1525 = vmul.f32 %v1117, %v1352
      %v1526 = vmul.f32 %v1117, %v1357
      %v1527 = vmul.f32 %v1117, %v1362
      %v1528 = vmul.f32 %v1117, %v1367
      %v1529 = vmul.f32 %v1117, %v1372
      %v1530 = vmul.f32 %v1117, %v1377
      %v1531 = vmul.f32 %v1117, %v1382
      %v1532 = vmul.f32 %v1117, %v1387
      %v1533 = vmul.f32 %v1117, %v1392
      %v1534 = vmul.f32 %v1117, %v1397
      %v1535 = vmul.f32 %v1117, %v1402
      %v1536 = vmul.f32 %v1117, %v1407
      %v1537 = vmul.f32 %v1117, %v1412
      %v1538 = vmul.f32 %v1117, %v1417
      %v1539 = vmul.f32 %v1117, %v1422
      %v1540 = vmul.f32 %v1117, %v1427
      %v1541 = vmul.f32 %v1117, %v1432
      %v1542 = vmul.f32 %v1117, %v1437
      %v1543 = vmul.f32 %v1117, %v1442
      %v1544 = vmul.f32 %v1117, %v1447
      %v1545 = vmul.f32 %v1117, %v1452
      %v1546 = vmul.f32 %v1117, %v1457
      %v1547 = vmul.f32 %v1117, %v1462
      %v1548 = vmul.f32 %v1117, %v1467
      %v1549 = vmul.f32 %v1117, %v1472
      %v1550 = vmul.f32 %v1117, %v1477
      %v1551 = vadd.f32 %v754, %v1479
      %v1552 = vadd.f32 %v757, %v1480
      %v1553 = vadd.f32 %v762, %v1481
      %v1554 = vadd.f32 %v765, %v1482
      %v1555 = vadd.f32 %v770, %v1483
      %v1556 = vadd.f32 %v773, %v1484
      %v1557 = vadd.f32 %v778, %v1485
      %v1558 = vadd.f32 %v781, %v1486
      %v1559 = vadd.f32 %v786, %v1487
      %v1560 = vadd.f32 %v789, %v1488
      %v1561 = vadd.f32 %v794, %v1489
      %v1562 = vadd.f32 %v797, %v1490
      %v1563 = vadd.f32 %v802, %v1491
      %v1564 = vadd.f32 %v805, %v1492
      %v1565 = vadd.f32 %v810, %v1493
      %v1566 = vadd.f32 %v813, %v1494
      %v1567 = vadd.f32 %v818, %v1495
      %v1568 = vadd.f32 %v821, %v1496
      %v1569 = vadd.f32 %v826, %v1497
      %v1570 = vadd.f32 %v829, %v1498
      %v1571 = vadd.f32 %v834, %v1499
      %v1572 = vadd.f32 %v837, %v1500
      %v1573 = vadd.f32 %v842, %v1501
      %v1574 = vadd.f32 %v845, %v1502
      %v1575 = vadd.f32 %v850, %v1503
      %v1576 = vadd.f32 %v853, %v1504
      %v1577 = vadd.f32 %v858, %v1505
      %v1578 = vadd.f32 %v861, %v1506
      %v1579 = vadd.f32 %v866, %v1507
      %v1580 = vadd.f32 %v869, %v1508
      %v1581 = vadd.f32 %v874, %v1509
      %v1582 = vadd.f32 %v877, %v1510
      %v1583 = vadd.f32 %v882, %v1511
      %v1584 = vadd.f32 %v885, %v1512
      %v1585 = vadd.f32 %v890, %v1513
      %v1586 = vadd.f32 %v893, %v1514
      %v1587 = vadd.f32 %v898, %v1515
      %v1588 = vadd.f32 %v901, %v1516
      %v1589 = vadd.f32 %v906, %v1517
      %v1590 = vadd.f32 %v909, %v1518
      %v1591 = vadd.f32 %v914, %v1519
      %v1592 = vadd.f32 %v917, %v1520
      %v1593 = vadd.f32 %v922, %v1521
      %v1594 = vadd.f32 %v925, %v1522
      %v1595 = vadd.f32 %v930, %v1523
      %v1596 = vadd.f32 %v933, %v1524
      %v1597 = vadd.f32 %v938, %v1525
      %v1598 = vadd.f32 %v941, %v1526
      %v1599 = vadd.f32 %v946, %v1527
      %v1600 = vadd.f32 %v949, %v1528
      %v1601 = vadd.f32 %v954, %v1529
      %v1602 = vadd.f32 %v957, %v1530
      %v1603 = vadd.f32 %v962, %v1531
      %v1604 = vadd.f32 %v965, %v1532
      %v1605 = vadd.f32 %v970, %v1533
      %v1606 = vadd.f32 %v973, %v1534
      %v1607 = vadd.f32 %v978, %v1535
      %v1608 = vadd.f32 %v981, %v1536
      %v1609 = vadd.f32 %v986, %v1537
      %v1610 = vadd.f32 %v989, %v1538
      %v1611 = vadd.f32 %v994, %v1539
      %v1612 = vadd.f32 %v997, %v1540
      %v1613 = vadd.f32 %v1002, %v1541
      %v1614 = vadd.f32 %v1005, %v1542
      %v1615 = vadd.f32 %v1010, %v1543
      %v1616 = vadd.f32 %v1013, %v1544
      %v1617 = vadd.f32 %v1018, %v1545
      %v1618 = vadd.f32 %v1021, %v1546
      %v1619 = vadd.f32 %v1026, %v1547
      %v1620 = vadd.f32 %v1029, %v1548
      %v1621 = vadd.f32 %v1034, %v1549
      %v1622 = vadd.f32 %v1037, %v1550
      %1623 = vst [vmem:[%s352] sm:$0xff] %v1556
      %1624 = vst [vmem:[%s352 + $0x8] sm:$0xff] %v1557
      %1625 = vst [vmem:[%s352 + $0x10] sm:$0xff] %v1560
      %1626 = vst [vmem:[%s352 + $0x18] sm:$0xff] %v1561
      %1627 = vst [vmem:[%s352 + $0x20] sm:$0xff] %v1564
      %1628 = vst [vmem:[%s352 + $0x28] sm:$0xff] %v1565
      %1629 = vst [vmem:[%s352 + $0x30] sm:$0xff] %v1568
      %1630 = vst [vmem:[%s352 + $0x38] sm:$0xff] %v1569
      %1631 = vst [vmem:[%s352 + $0x40] sm:$0xff] %v1572
      %1632 = vst [vmem:[%s352 + $0x48] sm:$0xff] %v1573
      %1633 = vst [vmem:[%s352 + $0x50] sm:$0xff] %v1576
      %1634 = vst [vmem:[%s352 + $0x58] sm:$0xff] %v1577
      %1635 = vst [vmem:[%s352 + $0x60] sm:$0xff] %v1580
      %1636 = vst [vmem:[%s352 + $0x68] sm:$0xff] %v1581
      %1637 = vst [vmem:[%s352 + $0x70] sm:$0xff] %v1584
      %1638 = vst [vmem:[%s352 + $0x78] sm:$0xff] %v1585
      %1639 = vst [vmem:[%s352 + $0x80] sm:$0xff] %v1588
      %1640 = vst [vmem:[%s352 + $0x88] sm:$0xff] %v1589
      %1641 = vst [vmem:[%s352 + $0x90] sm:$0xff] %v1592
      %1642 = vst [vmem:[%s352 + $0x98] sm:$0xff] %v1593
      %1643 = vst [vmem:[%s352 + $0xa0] sm:$0xff] %v1596
      %1644 = vst [vmem:[%s352 + $0xa8] sm:$0xff] %v1597
      %1645 = vst [vmem:[%s352 + $0xb0] sm:$0xff] %v1600
      %1646 = vst [vmem:[%s352 + $0xb8] sm:$0xff] %v1601
      %1647 = vst [vmem:[%s352 + $0xc0] sm:$0xff] %v1604
      %1648 = vst [vmem:[%s352 + $0xc8] sm:$0xff] %v1605
      %1649 = vst [vmem:[%s352 + $0xd0] sm:$0xff] %v1608
      %1650 = vst [vmem:[%s352 + $0xd8] sm:$0xff] %v1609
      %1651 = vst [vmem:[%s352 + $0xe0] sm:$0xff] %v1612
      %1652 = vst [vmem:[%s352 + $0xe8] sm:$0xff] %v1613
      %1653 = vst [vmem:[%s352 + $0xf0] sm:$0xff] %v1616
      %1654 = vst [vmem:[%s352 + $0xf8] sm:$0xff] %v1617
      %vm1687 = vcmask 1046528
      %v1688 = vrot.slane %v1552, 1
      %v1689 = vrot.slane %v1553, 1
      %v1690 = vsel %vm1687, %v1688, %v1689
      %v1691 = vrot.slane %v1556, 1
      %v1692 = vrot.slane %v1557, 1
      %v1693 = vsel %vm1687, %v1691, %v1692
      %v1694 = vrot.slane %v1560, 1
      %v1695 = vrot.slane %v1561, 1
      %v1696 = vsel %vm1687, %v1694, %v1695
      %v1697 = vrot.slane %v1564, 1
      %v1698 = vrot.slane %v1565, 1
      %v1699 = vsel %vm1687, %v1697, %v1698
      %v1700 = vrot.slane %v1568, 1
      %v1701 = vrot.slane %v1569, 1
      %v1702 = vsel %vm1687, %v1700, %v1701
      %v1703 = vrot.slane %v1572, 1
      %v1704 = vrot.slane %v1573, 1
      %v1705 = vsel %vm1687, %v1703, %v1704
      %v1706 = vrot.slane %v1576, 1
      %v1707 = vrot.slane %v1577, 1
      %v1708 = vsel %vm1687, %v1706, %v1707
      %v1709 = vrot.slane %v1580, 1
      %v1710 = vrot.slane %v1581, 1
      %v1711 = vsel %vm1687, %v1709, %v1710
      %v1712 = vrot.slane %v1584, 1
      %v1713 = vrot.slane %v1585, 1
      %v1714 = vsel %vm1687, %v1712, %v1713
      %v1715 = vrot.slane %v1588, 1
      %v1716 = vrot.slane %v1589, 1
      %v1717 = vsel %vm1687, %v1715, %v1716
      %v1718 = vrot.slane %v1592, 1
      %v1719 = vrot.slane %v1593, 1
      %v1720 = vsel %vm1687, %v1718, %v1719
      %v1721 = vrot.slane %v1596, 1
      %v1722 = vrot.slane %v1597, 1
      %v1723 = vsel %vm1687, %v1721, %v1722
      %v1724 = vrot.slane %v1600, 1
      %v1725 = vrot.slane %v1601, 1
      %v1726 = vsel %vm1687, %v1724, %v1725
      %v1727 = vrot.slane %v1604, 1
      %v1728 = vrot.slane %v1605, 1
      %v1729 = vsel %vm1687, %v1727, %v1728
      %v1730 = vrot.slane %v1608, 1
      %v1731 = vrot.slane %v1609, 1
      %v1732 = vsel %vm1687, %v1730, %v1731
      %v1733 = vrot.slane %v1612, 1
      %v1734 = vrot.slane %v1613, 1
      %v1735 = vsel %vm1687, %v1733, %v1734
      %vm1752 = vcmask 1045504
      %v1753 = vrot.slane %v1552, 2
      %v1754 = vrot.slane %v1553, 2
      %v1755 = vsel %vm1752, %v1753, %v1754
      %v1756 = vrot.slane %v1554, 2
      %v1757 = vsel %vm1752, %v1754, %v1756
      %v1758 = vrot.slane %v1556, 2
      %v1759 = vrot.slane %v1557, 2
      %v1760 = vsel %vm1752, %v1758, %v1759
      %v1761 = vrot.slane %v1558, 2
      %v1762 = vsel %vm1752, %v1759, %v1761
      %v1763 = vrot.slane %v1560, 2
      %v1764 = vrot.slane %v1561, 2
      %v1765 = vsel %vm1752, %v1763, %v1764
      %v1766 = vrot.slane %v1562, 2
      %v1767 = vsel %vm1752, %v1764, %v1766
      %v1768 = vrot.slane %v1564, 2
      %v1769 = vrot.slane %v1565, 2
      %v1770 = vsel %vm1752, %v1768, %v1769
      %v1771 = vrot.slane %v1566, 2
      %v1772 = vsel %vm1752, %v1769, %v1771
      %v1773 = vrot.slane %v1568, 2
      %v1774 = vrot.slane %v1569, 2
      %v1775 = vsel %vm1752, %v1773, %v1774
      %v1776 = vrot.slane %v1570, 2
      %v1777 = vsel %vm1752, %v1774, %v1776
      %v1778 = vrot.slane %v1572, 2
      %v1779 = vrot.slane %v1573, 2
      %v1780 = vsel %vm1752, %v1778, %v1779
      %v1781 = vrot.slane %v1574, 2
      %v1782 = vsel %vm1752, %v1779, %v1781
      %v1783 = vrot.slane %v1576, 2
      %v1784 = vrot.slane %v1577, 2
      %v1785 = vsel %vm1752, %v1783, %v1784
      %v1786 = vrot.slane %v1578, 2
      %v1787 = vsel %vm1752, %v1784, %v1786
      %v1788 = vrot.slane %v1580, 2
      %v1789 = vrot.slane %v1581, 2
      %v1790 = vsel %vm1752, %v1788, %v1789
      %v1791 = vrot.slane %v1582, 2
      %v1792 = vsel %vm1752, %v1789, %v1791
      %v1793 = vrot.slane %v1584, 2
      %v1794 = vrot.slane %v1585, 2
      %v1795 = vsel %vm1752, %v1793, %v1794
      %v1796 = vrot.slane %v1586, 2
      %v1797 = vsel %vm1752, %v1794, %v1796
      %v1798 = vrot.slane %v1588, 2
      %v1799 = vrot.slane %v1589, 2
      %v1800 = vsel %vm1752, %v1798, %v1799
      %v1801 = vrot.slane %v1590, 2
      %v1802 = vsel %vm1752, %v1799, %v1801
      %v1803 = vrot.slane %v1592, 2
      %v1804 = vrot.slane %v1593, 2
      %v1805 = vsel %vm1752, %v1803, %v1804
      %v1806 = vrot.slane %v1594, 2
      %v1807 = vsel %vm1752, %v1804, %v1806
      %v1808 = vrot.slane %v1596, 2
      %v1809 = vrot.slane %v1597, 2
      %v1810 = vsel %vm1752, %v1808, %v1809
      %v1811 = vrot.slane %v1598, 2
      %v1812 = vsel %vm1752, %v1809, %v1811
      %v1813 = vrot.slane %v1600, 2
      %v1814 = vrot.slane %v1601, 2
      %v1815 = vsel %vm1752, %v1813, %v1814
      %v1816 = vrot.slane %v1602, 2
      %v1817 = vsel %vm1752, %v1814, %v1816
      %v1818 = vrot.slane %v1604, 2
      %v1819 = vrot.slane %v1605, 2
      %v1820 = vsel %vm1752, %v1818, %v1819
      %v1821 = vrot.slane %v1606, 2
      %v1822 = vsel %vm1752, %v1819, %v1821
      %v1823 = vrot.slane %v1608, 2
      %v1824 = vrot.slane %v1609, 2
      %v1825 = vsel %vm1752, %v1823, %v1824
      %v1826 = vrot.slane %v1610, 2
      %v1827 = vsel %vm1752, %v1824, %v1826
      %v1828 = vrot.slane %v1612, 2
      %v1829 = vrot.slane %v1613, 2
      %v1830 = vsel %vm1752, %v1828, %v1829
      %v1831 = vrot.slane %v1614, 2
      %v1832 = vsel %vm1752, %v1829, %v1831
      %v1835 = vrot.slane %v1616, 1
      %v1836 = vrot.slane %v1617, 1
      %v1837 = vsel %vm1687, %v1835, %v1836
      %v1839 = vrot.slane %v1616, 2
      %v1840 = vrot.slane %v1617, 2
      %v1841 = vsel %vm1752, %v1839, %v1840
      %v1842 = vrot.slane %v1618, 2
      %v1843 = vsel %vm1752, %v1840, %v1842
      %v1846 = vrot.slane %v1620, 1
      %v1847 = vrot.slane %v1621, 1
      %v1848 = vsel %vm1687, %v1846, %v1847
      %v1850 = vrot.slane %v1620, 2
      %v1851 = vrot.slane %v1621, 2
      %v1852 = vsel %vm1752, %v1850, %v1851
      %v1853 = vrot.slane %v1622, 2
      %v1854 = vsel %vm1752, %v1851, %v1853
      %vm1873 = vcmask 1040384
      %v1874 = vrot.slane %v1551, 7
      %v1875 = vrot.slane %v1552, 7
      %v1876 = vsel %vm1873, %v1874, %v1875
      %v1877 = vrot.slane %v1688, 7
      %v1878 = vrot.slane %v1690, 7
      %v1879 = vsel %vm1873, %v1877, %v1878
      %v1880 = vrot.slane %v1753, 7
      %v1881 = vrot.slane %v1755, 7
      %v1882 = vsel %vm1873, %v1880, %v1881
      %v1883 = vrot.slane %v1555, 7
      %v1884 = vrot.slane %v1556, 7
      %v1885 = vsel %vm1873, %v1883, %v1884
      %v1886 = vrot.slane %v1691, 7
      %v1887 = vrot.slane %v1693, 7
      %v1888 = vsel %vm1873, %v1886, %v1887
      %v1889 = vrot.slane %v1758, 7
      %v1890 = vrot.slane %v1760, 7
      %v1891 = vsel %vm1873, %v1889, %v1890
      %v1892 = vrot.slane %v1559, 7
      %v1893 = vrot.slane %v1560, 7
      %v1894 = vsel %vm1873, %v1892, %v1893
      %v1895 = vrot.slane %v1694, 7
      %v1896 = vrot.slane %v1696, 7
      %v1897 = vsel %vm1873, %v1895, %v1896
      %v1898 = vrot.slane %v1763, 7
      %v1899 = vrot.slane %v1765, 7
      %v1900 = vsel %vm1873, %v1898, %v1899
      %v1901 = vrot.slane %v1553, 7
      %v1902 = vsel %vm1873, %v1875, %v1901
      %v1903 = vrot.slane %v1689, 7
      %v1904 = vsel %vm1873, %v1878, %v1903
      %v1905 = vrot.slane %v1757, 7
      %v1906 = vsel %vm1873, %v1881, %v1905
      %v1907 = vrot.slane %v1557, 7
      %v1908 = vsel %vm1873, %v1884, %v1907
      %v1909 = vrot.slane %v1692, 7
      %v1910 = vsel %vm1873, %v1887, %v1909
      %v1911 = vrot.slane %v1762, 7
      %v1912 = vsel %vm1873, %v1890, %v1911
      %v1913 = vrot.slane %v1561, 7
      %v1914 = vsel %vm1873, %v1893, %v1913
      %v1915 = vrot.slane %v1695, 7
      %v1916 = vsel %vm1873, %v1896, %v1915
      %v1917 = vrot.slane %v1767, 7
      %v1918 = vsel %vm1873, %v1899, %v1917
      %v1919 = vrot.slane %v1563, 7
      %v1920 = vrot.slane %v1564, 7
      %v1921 = vsel %vm1873, %v1919, %v1920
      %v1922 = vrot.slane %v1697, 7
      %v1923 = vrot.slane %v1699, 7
      %v1924 = vsel %vm1873, %v1922, %v1923
      %v1925 = vrot.slane %v1768, 7
      %v1926 = vrot.slane %v1770, 7
      %v1927 = vsel %vm1873, %v1925, %v1926
      %v1928 = vrot.slane %v1565, 7
      %v1929 = vsel %vm1873, %v1920, %v1928
      %v1930 = vrot.slane %v1698, 7
      %v1931 = vsel %vm1873, %v1923, %v1930
      %v1932 = vrot.slane %v1772, 7
      %v1933 = vsel %vm1873, %v1926, %v1932
      %v1934 = vrot.slane %v1567, 7
      %v1935 = vrot.slane %v1568, 7
      %v1936 = vsel %vm1873, %v1934, %v1935
      %v1937 = vrot.slane %v1700, 7
      %v1938 = vrot.slane %v1702, 7
      %v1939 = vsel %vm1873, %v1937, %v1938
      %v1940 = vrot.slane %v1773, 7
      %v1941 = vrot.slane %v1775, 7
      %v1942 = vsel %vm1873, %v1940, %v1941
      %v1943 = vrot.slane %v1569, 7
      %v1944 = vsel %vm1873, %v1935, %v1943
      %v1945 = vrot.slane %v1701, 7
      %v1946 = vsel %vm1873, %v1938, %v1945
      %v1947 = vrot.slane %v1777, 7
      %v1948 = vsel %vm1873, %v1941, %v1947
      %v1949 = vrot.slane %v1571, 7
      %v1950 = vrot.slane %v1572, 7
      %v1951 = vsel %vm1873, %v1949, %v1950
      %v1952 = vrot.slane %v1703, 7
      %v1953 = vrot.slane %v1705, 7
      %v1954 = vsel %vm1873, %v1952, %v1953
      %v1955 = vrot.slane %v1778, 7
      %v1956 = vrot.slane %v1780, 7
      %v1957 = vsel %vm1873, %v1955, %v1956
      %v1958 = vrot.slane %v1573, 7
      %v1959 = vsel %vm1873, %v1950, %v1958
      %v1960 = vrot.slane %v1704, 7
      %v1961 = vsel %vm1873, %v1953, %v1960
      %v1962 = vrot.slane %v1782, 7
      %v1963 = vsel %vm1873, %v1956, %v1962
      %v1964 = vrot.slane %v1575, 7
      %v1965 = vrot.slane %v1576, 7
      %v1966 = vsel %vm1873, %v1964, %v1965
      %v1967 = vrot.slane %v1706, 7
      %v1968 = vrot.slane %v1708, 7
      %v1969 = vsel %vm1873, %v1967, %v1968
      %v1970 = vrot.slane %v1783, 7
      %v1971 = vrot.slane %v1785, 7
      %v1972 = vsel %vm1873, %v1970, %v1971
      %v1973 = vrot.slane %v1577, 7
      %v1974 = vsel %vm1873, %v1965, %v1973
      %v1975 = vrot.slane %v1707, 7
      %v1976 = vsel %vm1873, %v1968, %v1975
      %v1977 = vrot.slane %v1787, 7
      %v1978 = vsel %vm1873, %v1971, %v1977
      %v1979 = vrot.slane %v1579, 7
      %v1980 = vrot.slane %v1580, 7
      %v1981 = vsel %vm1873, %v1979, %v1980
      %v1982 = vrot.slane %v1709, 7
      %v1983 = vrot.slane %v1711, 7
      %v1984 = vsel %vm1873, %v1982, %v1983
      %v1985 = vrot.slane %v1788, 7
      %v1986 = vrot.slane %v1790, 7
      %v1987 = vsel %vm1873, %v1985, %v1986
      %v1988 = vrot.slane %v1581, 7
      %v1989 = vsel %vm1873, %v1980, %v1988
      %v1990 = vrot.slane %v1710, 7
      %v1991 = vsel %vm1873, %v1983, %v1990
      %v1992 = vrot.slane %v1792, 7
      %v1993 = vsel %vm1873, %v1986, %v1992
      %v1994 = vrot.slane %v1583, 7
      %v1995 = vrot.slane %v1584, 7
      %v1996 = vsel %vm1873, %v1994, %v1995
      %v1997 = vrot.slane %v1712, 7
      %v1998 = vrot.slane %v1714, 7
      %v1999 = vsel %vm1873, %v1997, %v1998
      %v2000 = vrot.slane %v1793, 7
      %v2001 = vrot.slane %v1795, 7
      %v2002 = vsel %vm1873, %v2000, %v2001
      %v2003 = vrot.slane %v1585, 7
      %v2004 = vsel %vm1873, %v1995, %v2003
      %v2005 = vrot.slane %v1713, 7
      %v2006 = vsel %vm1873, %v1998, %v2005
      %v2007 = vrot.slane %v1797, 7
      %v2008 = vsel %vm1873, %v2001, %v2007
      %v2009 = vrot.slane %v1587, 7
      %v2010 = vrot.slane %v1588, 7
      %v2011 = vsel %vm1873, %v2009, %v2010
      %v2012 = vrot.slane %v1715, 7
      %v2013 = vrot.slane %v1717, 7
      %v2014 = vsel %vm1873, %v2012, %v2013
      %v2015 = vrot.slane %v1798, 7
      %v2016 = vrot.slane %v1800, 7
      %v2017 = vsel %vm1873, %v2015, %v2016
      %v2018 = vrot.slane %v1589, 7
      %v2019 = vsel %vm1873, %v2010, %v2018
      %v2020 = vrot.slane %v1716, 7
      %v2021 = vsel %vm1873, %v2013, %v2020
      %v2022 = vrot.slane %v1802, 7
      %v2023 = vsel %vm1873, %v2016, %v2022
      %v2024 = vrot.slane %v1591, 7
      %v2025 = vrot.slane %v1592, 7
      %v2026 = vsel %vm1873, %v2024, %v2025
      %v2027 = vrot.slane %v1718, 7
      %v2028 = vrot.slane %v1720, 7
      %v2029 = vsel %vm1873, %v2027, %v2028
      %v2030 = vrot.slane %v1803, 7
      %v2031 = vrot.slane %v1805, 7
      %v2032 = vsel %vm1873, %v2030, %v2031
      %v2033 = vrot.slane %v1593, 7
      %v2034 = vsel %vm1873, %v2025, %v2033
      %v2035 = vrot.slane %v1719, 7
      %v2036 = vsel %vm1873, %v2028, %v2035
      %v2037 = vrot.slane %v1807, 7
      %v2038 = vsel %vm1873, %v2031, %v2037
      %v2039 = vrot.slane %v1595, 7
      %v2040 = vrot.slane %v1596, 7
      %v2041 = vsel %vm1873, %v2039, %v2040
      %v2042 = vrot.slane %v1721, 7
      %v2043 = vrot.slane %v1723, 7
      %v2044 = vsel %vm1873, %v2042, %v2043
      %v2045 = vrot.slane %v1808, 7
      %v2046 = vrot.slane %v1810, 7
      %v2047 = vsel %vm1873, %v2045, %v2046
      %v2048 = vrot.slane %v1597, 7
      %v2049 = vsel %vm1873, %v2040, %v2048
      %v2050 = vrot.slane %v1722, 7
      %v2051 = vsel %vm1873, %v2043, %v2050
      %v2052 = vrot.slane %v1812, 7
      %v2053 = vsel %vm1873, %v2046, %v2052
      %v2054 = vrot.slane %v1599, 7
      %v2055 = vrot.slane %v1600, 7
      %v2056 = vsel %vm1873, %v2054, %v2055
      %v2057 = vrot.slane %v1724, 7
      %v2058 = vrot.slane %v1726, 7
      %v2059 = vsel %vm1873, %v2057, %v2058
      %v2060 = vrot.slane %v1813, 7
      %v2061 = vrot.slane %v1815, 7
      %v2062 = vsel %vm1873, %v2060, %v2061
      %v2063 = vrot.slane %v1601, 7
      %v2064 = vsel %vm1873, %v2055, %v2063
      %v2065 = vrot.slane %v1725, 7
      %v2066 = vsel %vm1873, %v2058, %v2065
      %v2067 = vrot.slane %v1817, 7
      %v2068 = vsel %vm1873, %v2061, %v2067
      %v2069 = vrot.slane %v1603, 7
      %v2070 = vrot.slane %v1604, 7
      %v2071 = vsel %vm1873, %v2069, %v2070
      %v2072 = vrot.slane %v1727, 7
      %v2073 = vrot.slane %v1729, 7
      %v2074 = vsel %vm1873, %v2072, %v2073
      %v2075 = vrot.slane %v1818, 7
      %v2076 = vrot.slane %v1820, 7
      %v2077 = vsel %vm1873, %v2075, %v2076
      %v2078 = vrot.slane %v1605, 7
      %v2079 = vsel %vm1873, %v2070, %v2078
      %v2080 = vrot.slane %v1728, 7
      %v2081 = vsel %vm1873, %v2073, %v2080
      %v2082 = vrot.slane %v1822, 7
      %v2083 = vsel %vm1873, %v2076, %v2082
      %v2084 = vrot.slane %v1607, 7
      %v2085 = vrot.slane %v1608, 7
      %v2086 = vsel %vm1873, %v2084, %v2085
      %v2087 = vrot.slane %v1730, 7
      %v2088 = vrot.slane %v1732, 7
      %v2089 = vsel %vm1873, %v2087, %v2088
      %v2090 = vrot.slane %v1823, 7
      %v2091 = vrot.slane %v1825, 7
      %v2092 = vsel %vm1873, %v2090, %v2091
      %v2093 = vrot.slane %v1609, 7
      %v2094 = vsel %vm1873, %v2085, %v2093
      %v2095 = vrot.slane %v1731, 7
      %v2096 = vsel %vm1873, %v2088, %v2095
      %v2097 = vrot.slane %v1827, 7
      %v2098 = vsel %vm1873, %v2091, %v2097
      %v2099 = vrot.slane %v1611, 7
      %v2100 = vrot.slane %v1612, 7
      %v2101 = vsel %vm1873, %v2099, %v2100
      %v2102 = vrot.slane %v1733, 7
      %v2103 = vrot.slane %v1735, 7
      %v2104 = vsel %vm1873, %v2102, %v2103
      %v2105 = vrot.slane %v1828, 7
      %v2106 = vrot.slane %v1830, 7
      %v2107 = vsel %vm1873, %v2105, %v2106
      %v2108 = vrot.slane %v1613, 7
      %v2109 = vsel %vm1873, %v2100, %v2108
      %v2110 = vrot.slane %v1734, 7
      %v2111 = vsel %vm1873, %v2103, %v2110
      %v2112 = vrot.slane %v1832, 7
      %v2113 = vsel %vm1873, %v2106, %v2112
      %v2114 = vrot.slane %v1615, 7
      %v2115 = vrot.slane %v1616, 7
      %v2116 = vsel %vm1873, %v2114, %v2115
      %v2117 = vrot.slane %v1835, 7
      %v2118 = vrot.slane %v1837, 7
      %v2119 = vsel %vm1873, %v2117, %v2118
      %v2120 = vrot.slane %v1839, 7
      %v2121 = vrot.slane %v1841, 7
      %v2122 = vsel %vm1873, %v2120, %v2121
      %v2123 = vrot.slane %v1617, 7
      %v2124 = vsel %vm1873, %v2115, %v2123
      %v2125 = vrot.slane %v1836, 7
      %v2126 = vsel %vm1873, %v2118, %v2125
      %v2127 = vrot.slane %v1843, 7
      %v2128 = vsel %vm1873, %v2121, %v2127
      %v2129 = vrot.slane %v1619, 7
      %v2130 = vrot.slane %v1620, 7
      %v2131 = vsel %vm1873, %v2129, %v2130
      %v2132 = vrot.slane %v1846, 7
      %v2133 = vrot.slane %v1848, 7
      %v2134 = vsel %vm1873, %v2132, %v2133
      %v2135 = vrot.slane %v1850, 7
      %v2136 = vrot.slane %v1852, 7
      %v2137 = vsel %vm1873, %v2135, %v2136
      %v2138 = vrot.slane %v1621, 7
      %v2139 = vsel %vm1873, %v2130, %v2138
      %v2140 = vrot.slane %v1847, 7
      %v2141 = vsel %vm1873, %v2133, %v2140
      %v2142 = vrot.slane %v1854, 7
      %v2143 = vsel %vm1873, %v2136, %v2142
      %v2252 = vpack.c.bf16 %v1902, %v1876
      %v2253 = vpack.c.bf16 %v1904, %v1879
      %v2254 = vpack.c.bf16 %v1906, %v1882
      %v2255 = vpack.c.bf16 %v1908, %v1885
      %v2256 = vpack.c.bf16 %v1910, %v1888
      %v2257 = vpack.c.bf16 %v1912, %v1891
      %v2258 = vpack.c.bf16 %v1914, %v1894
      %v2259 = vpack.c.bf16 %v1916, %v1897
      %v2260 = vpack.c.bf16 %v1918, %v1900
      %v2261 = vpack.c.bf16 %v1929, %v1921
      %v2262 = vpack.c.bf16 %v1931, %v1924
      %v2263 = vpack.c.bf16 %v1933, %v1927
      %v2264 = vpack.c.bf16 %v1944, %v1936
      %v2265 = vpack.c.bf16 %v1946, %v1939
      %v2266 = vpack.c.bf16 %v1948, %v1942
      %v2267 = vpack.c.bf16 %v1959, %v1951
      %v2268 = vpack.c.bf16 %v1961, %v1954
      %v2269 = vpack.c.bf16 %v1963, %v1957
      %v2270 = vpack.c.bf16 %v1974, %v1966
      %v2271 = vpack.c.bf16 %v1976, %v1969
      %v2272 = vpack.c.bf16 %v1978, %v1972
      %v2273 = vpack.c.bf16 %v1989, %v1981
      %v2274 = vpack.c.bf16 %v1991, %v1984
      %v2275 = vpack.c.bf16 %v1993, %v1987
      %v2276 = vpack.c.bf16 %v2004, %v1996
      %v2277 = vpack.c.bf16 %v2006, %v1999
      %v2278 = vpack.c.bf16 %v2008, %v2002
      %v2279 = vpack.c.bf16 %v2019, %v2011
      %v2280 = vpack.c.bf16 %v2021, %v2014
      %v2281 = vpack.c.bf16 %v2023, %v2017
      %v2282 = vpack.c.bf16 %v2034, %v2026
      %v2283 = vpack.c.bf16 %v2036, %v2029
      %v2284 = vpack.c.bf16 %v2038, %v2032
      %v2285 = vpack.c.bf16 %v2049, %v2041
      %v2286 = vpack.c.bf16 %v2051, %v2044
      %v2287 = vpack.c.bf16 %v2053, %v2047
      %v2288 = vpack.c.bf16 %v2064, %v2056
      %v2289 = vpack.c.bf16 %v2066, %v2059
      %v2290 = vpack.c.bf16 %v2068, %v2062
      %v2291 = vpack.c.bf16 %v2079, %v2071
      %v2292 = vpack.c.bf16 %v2081, %v2074
      %v2293 = vpack.c.bf16 %v2083, %v2077
      %v2294 = vpack.c.bf16 %v2094, %v2086
      %v2295 = vpack.c.bf16 %v2096, %v2089
      %v2296 = vpack.c.bf16 %v2098, %v2092
      %v2297 = vpack.c.bf16 %v2109, %v2101
      %v2298 = vpack.c.bf16 %v2111, %v2104
      %v2299 = vpack.c.bf16 %v2113, %v2107
      %v2300 = vpack.c.bf16 %v2124, %v2116
      %v2301 = vpack.c.bf16 %v2126, %v2119
      %v2302 = vpack.c.bf16 %v2128, %v2122
      %v2303 = vpack.c.bf16 %v2139, %v2131
      %v2304 = vpack.c.bf16 %v2141, %v2134
      %v2305 = vpack.c.bf16 %v2143, %v2137
      %v2306 = vld [vmem:[%s4] sm:$0xf]
      %v2307 = vld [vmem:[%s4 + $0x4] sm:$0xf]
      %v2308 = vld [vmem:[%s4 + $0x8] sm:$0xf]
      %v2309 = vld [vmem:[%s4 + $0xc] sm:$0xf]
      %v2310 = vld [vmem:[%s4 + $0x10] sm:$0xf]
      %v2311 = vld [vmem:[%s4 + $0x14] sm:$0xf]
      %v2312 = vld [vmem:[%s4 + $0x18] sm:$0xf]
      %v2313 = vld [vmem:[%s4 + $0x1c] sm:$0xf]
      %v2314 = vld [vmem:[%s4 + $0x20] sm:$0xf]
      %v2315 = vld [vmem:[%s4 + $0x24] sm:$0xf]
      %v2316 = vld [vmem:[%s4 + $0x28] sm:$0xf]
      %v2317 = vld [vmem:[%s4 + $0x2c] sm:$0xf]
      %v2318 = vld [vmem:[%s4 + $0x30] sm:$0xf]
      %v2319 = vld [vmem:[%s4 + $0x34] sm:$0xf]
      %v2320 = vld [vmem:[%s4 + $0x38] sm:$0xf]
      %v2321 = vld [vmem:[%s4 + $0x3c] sm:$0xf]
      %v2322 = vld [vmem:[%s4 + $0x40] sm:$0xf]
      %v2323 = vld [vmem:[%s4 + $0x44] sm:$0xf]
      %v2324 = vld [vmem:[%s4 + $0x48] sm:$0xf]
      %v2325 = vld [vmem:[%s4 + $0x4c] sm:$0xf]
      %v2326 = vld [vmem:[%s4 + $0x50] sm:$0xf]
      %v2327 = vld [vmem:[%s4 + $0x54] sm:$0xf]
      %v2328 = vld [vmem:[%s4 + $0x58] sm:$0xf]
      %v2329 = vld [vmem:[%s4 + $0x5c] sm:$0xf]
      %v2330 = vld [vmem:[%s4 + $0x60] sm:$0xf]
      %v2331 = vld [vmem:[%s4 + $0x64] sm:$0xf]
      %v2332 = vld [vmem:[%s4 + $0x68] sm:$0xf]
      %v2333 = vld [vmem:[%s4 + $0x6c] sm:$0xf]
      %v2334 = vld [vmem:[%s4 + $0x70] sm:$0xf]
      %v2335 = vld [vmem:[%s4 + $0x74] sm:$0xf]
      %v2336 = vld [vmem:[%s4 + $0x78] sm:$0xf]
      %v2337 = vld [vmem:[%s4 + $0x7c] sm:$0xf]
      %v2338 = vld [vmem:[%s4 + $0x80] sm:$0xf]
      %v2339 = vld [vmem:[%s4 + $0x84] sm:$0xf]
      %v2340 = vld [vmem:[%s4 + $0x88] sm:$0xf]
      %v2341 = vld [vmem:[%s4 + $0x8c] sm:$0xf]
      %v2342 = vld [vmem:[%s4 + $0x90] sm:$0xf]
      %v2343 = vld [vmem:[%s4 + $0x94] sm:$0xf]
      %v2344 = vld [vmem:[%s4 + $0x98] sm:$0xf]
      %v2345 = vld [vmem:[%s4 + $0x9c] sm:$0xf]
      %v2346 = vld [vmem:[%s4 + $0xa0] sm:$0xf]
      %v2347 = vld [vmem:[%s4 + $0xa4] sm:$0xf]
      %v2348 = vld [vmem:[%s4 + $0xa8] sm:$0xf]
      %v2349 = vld [vmem:[%s4 + $0xac] sm:$0xf]
      %v2350 = vld [vmem:[%s4 + $0xb0] sm:$0xf]
      %v2351 = vld [vmem:[%s4 + $0xb4] sm:$0xf]
      %v2352 = vld [vmem:[%s4 + $0xb8] sm:$0xf]
      %v2353 = vld [vmem:[%s4 + $0xbc] sm:$0xf]
      %v2354 = vld [vmem:[%s4 + $0xc0] sm:$0xf]
      %v2355 = vld [vmem:[%s4 + $0xc4] sm:$0xf]
      %v2356 = vld [vmem:[%s4 + $0xc8] sm:$0xf]
      %v2357 = vld [vmem:[%s4 + $0xcc] sm:$0xf]
      %v2358 = vld [vmem:[%s4 + $0xd0] sm:$0xf]
      %v2359 = vld [vmem:[%s4 + $0xd4] sm:$0xf]
      %v2360 = vld [vmem:[%s4 + $0xd8] sm:$0xf]
      %v2361 = vld [vmem:[%s4 + $0xdc] sm:$0xf]
      %v2362 = vld [vmem:[%s4 + $0xe0] sm:$0xf]
      %v2363 = vld [vmem:[%s4 + $0xe4] sm:$0xf]
      %v2364 = vld [vmem:[%s4 + $0xe8] sm:$0xf]
      %v2365 = vld [vmem:[%s4 + $0xec] sm:$0xf]
      %v2366 = vld [vmem:[%s4 + $0xf0] sm:$0xf]
      %v2367 = vld [vmem:[%s4 + $0xf4] sm:$0xf]
      %v2368 = vld [vmem:[%s4 + $0xf8] sm:$0xf]
      %v2369 = vld [vmem:[%s4 + $0xfc] sm:$0xf]
      %v2370 = vld [vmem:[%s4 + $0x100] sm:$0xf]
      %v2371 = vld [vmem:[%s4 + $0x104] sm:$0xf]
      %v2372 = vld [vmem:[%s4 + $0x108] sm:$0xf]
      %v2373 = vld [vmem:[%s4 + $0x10c] sm:$0xf]
      %v2374 = vld [vmem:[%s4 + $0x110] sm:$0xf]
      %v2375 = vld [vmem:[%s4 + $0x114] sm:$0xf]
      %v2376 = vld [vmem:[%s4 + $0x118] sm:$0xf]
      %v2377 = vld [vmem:[%s4 + $0x11c] sm:$0xf]
      %v2378 = vld [vmem:[%s4 + $0x120] sm:$0xf]
      %v2379 = vld [vmem:[%s4 + $0x124] sm:$0xf]
      %v2380 = vld [vmem:[%s4 + $0x128] sm:$0xf]
      %v2381 = vld [vmem:[%s4 + $0x12c] sm:$0xf]
      %v2382 = vld [vmem:[%s4 + $0x130] sm:$0xf]
      %v2383 = vld [vmem:[%s4 + $0x134] sm:$0xf]
      %v2384 = vld [vmem:[%s4 + $0x138] sm:$0xf]
      %v2385 = vld [vmem:[%s4 + $0x13c] sm:$0xf]
      %v2386 = vld [vmem:[%s4 + $0x140] sm:$0xf]
      %v2387 = vld [vmem:[%s4 + $0x144] sm:$0xf]
      %v2388 = vld [vmem:[%s4 + $0x148] sm:$0xf]
      %v2389 = vld [vmem:[%s4 + $0x14c] sm:$0xf]
      %v2390 = vld [vmem:[%s4 + $0x150] sm:$0xf]
      %v2391 = vld [vmem:[%s4 + $0x154] sm:$0xf]
      %v2392 = vld [vmem:[%s4 + $0x158] sm:$0xf]
      %v2393 = vld [vmem:[%s4 + $0x15c] sm:$0xf]
      %v2394 = vld [vmem:[%s4 + $0x160] sm:$0xf]
      %v2395 = vld [vmem:[%s4 + $0x164] sm:$0xf]
      %v2396 = vld [vmem:[%s4 + $0x168] sm:$0xf]
      %v2397 = vld [vmem:[%s4 + $0x16c] sm:$0xf]
      %v2398 = vld [vmem:[%s4 + $0x170] sm:$0xf]
      %v2399 = vld [vmem:[%s4 + $0x174] sm:$0xf]
      %v2400 = vld [vmem:[%s4 + $0x178] sm:$0xf]
      %v2401 = vld [vmem:[%s4 + $0x17c] sm:$0xf]
      %v2402 = vld [vmem:[%s4 + $0x180] sm:$0xf]
      %v2403 = vld [vmem:[%s4 + $0x184] sm:$0xf]
      %v2404 = vld [vmem:[%s4 + $0x188] sm:$0xf]
      %v2405 = vld [vmem:[%s4 + $0x18c] sm:$0xf]
      %v2406 = vld [vmem:[%s4 + $0x190] sm:$0xf]
      %v2407 = vld [vmem:[%s4 + $0x194] sm:$0xf]
      %v2408 = vld [vmem:[%s4 + $0x198] sm:$0xf]
      %v2409 = vld [vmem:[%s4 + $0x19c] sm:$0xf]
      %v2410 = vld [vmem:[%s4 + $0x1a0] sm:$0xf]
      %v2411 = vld [vmem:[%s4 + $0x1a4] sm:$0xf]
      %v2412 = vld [vmem:[%s4 + $0x1a8] sm:$0xf]
      %v2413 = vld [vmem:[%s4 + $0x1ac] sm:$0xf]
      %v2414 = vld [vmem:[%s4 + $0x1b0] sm:$0xf]
      %v2415 = vld [vmem:[%s4 + $0x1b4] sm:$0xf]
      %v2416 = vld [vmem:[%s4 + $0x1b8] sm:$0xf]
      %v2417 = vld [vmem:[%s4 + $0x1bc] sm:$0xf]
      %v2418 = vld [vmem:[%s4 + $0x1c0] sm:$0xf]
      %v2419 = vld [vmem:[%s4 + $0x1c4] sm:$0xf]
      %v2420 = vld [vmem:[%s4 + $0x1c8] sm:$0xf]
      %v2421 = vld [vmem:[%s4 + $0x1cc] sm:$0xf]
      %v2422 = vld [vmem:[%s4 + $0x1d0] sm:$0xf]
      %v2423 = vld [vmem:[%s4 + $0x1d4] sm:$0xf]
      %v2424 = vld [vmem:[%s4 + $0x1d8] sm:$0xf]
      %v2425 = vld [vmem:[%s4 + $0x1dc] sm:$0xf]
      %v2426 = vld [vmem:[%s4 + $0x1e0] sm:$0xf]
      %v2427 = vld [vmem:[%s4 + $0x1e4] sm:$0xf]
      %v2428 = vld [vmem:[%s4 + $0x1e8] sm:$0xf]
      %v2429 = vld [vmem:[%s4 + $0x1ec] sm:$0xf]
      %v2430 = vld [vmem:[%s4 + $0x1f0] sm:$0xf]
      %v2431 = vld [vmem:[%s4 + $0x1f4] sm:$0xf]
      %v2432 = vld [vmem:[%s4 + $0x1f8] sm:$0xf]
      %v2433 = vld [vmem:[%s4 + $0x1fc] sm:$0xf]
      %v2434 = vld [vmem:[%s4 + $0x200] sm:$0xf]
      %v2435 = vld [vmem:[%s4 + $0x204] sm:$0xf]
      %v2436 = vld [vmem:[%s4 + $0x208] sm:$0xf]
      %v2437 = vld [vmem:[%s4 + $0x20c] sm:$0xf]
      %v2438 = vld [vmem:[%s4 + $0x210] sm:$0xf]
      %v2439 = vld [vmem:[%s4 + $0x214] sm:$0xf]
      %v2440 = vld [vmem:[%s4 + $0x218] sm:$0xf]
      %v2441 = vld [vmem:[%s4 + $0x21c] sm:$0xf]
      %v2442 = vld [vmem:[%s4 + $0x220] sm:$0xf]
      %v2443 = vld [vmem:[%s4 + $0x224] sm:$0xf]
      %v2444 = vld [vmem:[%s4 + $0x228] sm:$0xf]
      %v2445 = vld [vmem:[%s4 + $0x22c] sm:$0xf]
      %v2446 = vld [vmem:[%s4 + $0x230] sm:$0xf]
      %v2447 = vld [vmem:[%s4 + $0x234] sm:$0xf]
      %v2448 = vld [vmem:[%s4 + $0x238] sm:$0xf]
      %v2449 = vld [vmem:[%s4 + $0x23c] sm:$0xf]
      %v2450 = vld [vmem:[%s5] sm:$0x1]
      %v2452 = vlaneseq
      %v2453 = vshrl.u32 %v2452, 7
      %v2454 = vsub.s32 0, %v2453
      %v2455 = vrot.slane %v2450, %v2454
      %v2601 = vunpack.c.l.b16 %v2306
      %v2602 = vunpack.c.l.b16 %v2307
      %v2603 = vunpack.c.l.b16 %v2308
      %v2604 = vunpack.c.l.b16 %v2309
      %v2605 = vunpack.c.l.b16 %v2310
      %v2606 = vunpack.c.l.b16 %v2311
      %v2607 = vunpack.c.l.b16 %v2312
      %v2608 = vunpack.c.l.b16 %v2313
      %v2609 = vunpack.c.l.b16 %v2314
      %v2610 = vunpack.c.l.b16 %v2315
      %v2611 = vunpack.c.l.b16 %v2316
      %v2612 = vunpack.c.l.b16 %v2317
      %v2613 = vunpack.c.l.b16 %v2318
      %v2614 = vunpack.c.l.b16 %v2319
      %v2615 = vunpack.c.l.b16 %v2320
      %v2616 = vunpack.c.l.b16 %v2321
      %v2617 = vunpack.c.l.b16 %v2322
      %v2618 = vunpack.c.l.b16 %v2323
      %v2619 = vunpack.c.l.b16 %v2324
      %v2620 = vunpack.c.l.b16 %v2325
      %v2621 = vunpack.c.l.b16 %v2326
      %v2622 = vunpack.c.l.b16 %v2327
      %v2623 = vunpack.c.l.b16 %v2328
      %v2624 = vunpack.c.l.b16 %v2329
      %v2625 = vunpack.c.l.b16 %v2330
      %v2626 = vunpack.c.l.b16 %v2331
      %v2627 = vunpack.c.l.b16 %v2332
      %v2628 = vunpack.c.l.b16 %v2333
      %v2629 = vunpack.c.l.b16 %v2334
      %v2630 = vunpack.c.l.b16 %v2335
      %v2631 = vunpack.c.l.b16 %v2336
      %v2632 = vunpack.c.l.b16 %v2337
      %v2633 = vunpack.c.l.b16 %v2338
      %v2634 = vunpack.c.l.b16 %v2339
      %v2635 = vunpack.c.l.b16 %v2340
      %v2636 = vunpack.c.l.b16 %v2341
      %v2637 = vunpack.c.l.b16 %v2342
      %v2638 = vunpack.c.l.b16 %v2343
      %v2639 = vunpack.c.l.b16 %v2344
      %v2640 = vunpack.c.l.b16 %v2345
      %v2641 = vunpack.c.l.b16 %v2346
      %v2642 = vunpack.c.l.b16 %v2347
      %v2643 = vunpack.c.l.b16 %v2348
      %v2644 = vunpack.c.l.b16 %v2349
      %v2645 = vunpack.c.l.b16 %v2350
      %v2646 = vunpack.c.l.b16 %v2351
      %v2647 = vunpack.c.l.b16 %v2352
      %v2648 = vunpack.c.l.b16 %v2353
      %v2649 = vunpack.c.l.b16 %v2354
      %v2650 = vunpack.c.l.b16 %v2355
      %v2651 = vunpack.c.l.b16 %v2356
      %v2652 = vunpack.c.l.b16 %v2357
      %v2653 = vunpack.c.l.b16 %v2358
      %v2654 = vunpack.c.l.b16 %v2359
      %v2655 = vunpack.c.l.b16 %v2360
      %v2656 = vunpack.c.l.b16 %v2361
      %v2657 = vunpack.c.l.b16 %v2362
      %v2658 = vunpack.c.l.b16 %v2363
      %v2659 = vunpack.c.l.b16 %v2364
      %v2660 = vunpack.c.l.b16 %v2365
      %v2661 = vunpack.c.l.b16 %v2366
      %v2662 = vunpack.c.l.b16 %v2367
      %v2663 = vunpack.c.l.b16 %v2368
      %v2664 = vunpack.c.l.b16 %v2369
      %v2665 = vunpack.c.l.b16 %v2370
      %v2666 = vunpack.c.l.b16 %v2371
      %v2667 = vunpack.c.l.b16 %v2372
      %v2668 = vunpack.c.l.b16 %v2373
      %v2669 = vunpack.c.l.b16 %v2374
      %v2670 = vunpack.c.l.b16 %v2375
      %v2671 = vunpack.c.l.b16 %v2376
      %v2672 = vunpack.c.l.b16 %v2377
      %v2673 = vunpack.c.l.b16 %v2378
      %v2674 = vunpack.c.l.b16 %v2379
      %v2675 = vunpack.c.l.b16 %v2380
      %v2676 = vunpack.c.l.b16 %v2381
      %v2677 = vunpack.c.l.b16 %v2382
      %v2678 = vunpack.c.l.b16 %v2383
      %v2679 = vunpack.c.l.b16 %v2384
      %v2680 = vunpack.c.l.b16 %v2385
      %v2681 = vunpack.c.l.b16 %v2386
      %v2682 = vunpack.c.l.b16 %v2387
      %v2683 = vunpack.c.l.b16 %v2388
      %v2684 = vunpack.c.l.b16 %v2389
      %v2685 = vunpack.c.l.b16 %v2390
      %v2686 = vunpack.c.l.b16 %v2391
      %v2687 = vunpack.c.l.b16 %v2392
      %v2688 = vunpack.c.l.b16 %v2393
      %v2689 = vunpack.c.l.b16 %v2394
      %v2690 = vunpack.c.l.b16 %v2395
      %v2691 = vunpack.c.l.b16 %v2396
      %v2692 = vunpack.c.l.b16 %v2397
      %v2693 = vunpack.c.l.b16 %v2398
      %v2694 = vunpack.c.l.b16 %v2399
      %v2695 = vunpack.c.l.b16 %v2400
      %v2696 = vunpack.c.l.b16 %v2401
      %v2697 = vunpack.c.l.b16 %v2402
      %v2698 = vunpack.c.l.b16 %v2403
      %v2699 = vunpack.c.l.b16 %v2404
      %v2700 = vunpack.c.l.b16 %v2405
      %v2701 = vunpack.c.l.b16 %v2406
      %v2702 = vunpack.c.l.b16 %v2407
      %v2703 = vunpack.c.l.b16 %v2408
      %v2704 = vunpack.c.l.b16 %v2409
      %v2705 = vunpack.c.l.b16 %v2410
      %v2706 = vunpack.c.l.b16 %v2411
      %v2707 = vunpack.c.l.b16 %v2412
      %v2708 = vunpack.c.l.b16 %v2413
      %v2709 = vunpack.c.l.b16 %v2414
      %v2710 = vunpack.c.l.b16 %v2415
      %v2711 = vunpack.c.l.b16 %v2416
      %v2712 = vunpack.c.l.b16 %v2417
      %v2713 = vunpack.c.l.b16 %v2418
      %v2714 = vunpack.c.l.b16 %v2419
      %v2715 = vunpack.c.l.b16 %v2420
      %v2716 = vunpack.c.l.b16 %v2421
      %v2717 = vunpack.c.l.b16 %v2422
      %v2718 = vunpack.c.l.b16 %v2423
      %v2719 = vunpack.c.l.b16 %v2424
      %v2720 = vunpack.c.l.b16 %v2425
      %v2721 = vunpack.c.l.b16 %v2426
      %v2722 = vunpack.c.l.b16 %v2427
      %v2723 = vunpack.c.l.b16 %v2428
      %v2724 = vunpack.c.l.b16 %v2429
      %v2725 = vunpack.c.l.b16 %v2430
      %v2726 = vunpack.c.l.b16 %v2431
      %v2727 = vunpack.c.l.b16 %v2432
      %v2728 = vunpack.c.l.b16 %v2433
      %v2729 = vunpack.c.l.b16 %v2434
      %v2730 = vunpack.c.l.b16 %v2435
      %v2731 = vunpack.c.l.b16 %v2436
      %v2732 = vunpack.c.l.b16 %v2437
      %v2733 = vunpack.c.l.b16 %v2438
      %v2734 = vunpack.c.l.b16 %v2439
      %v2735 = vunpack.c.l.b16 %v2440
      %v2736 = vunpack.c.l.b16 %v2441
      %v2737 = vunpack.c.l.b16 %v2442
      %v2738 = vunpack.c.l.b16 %v2443
      %v2739 = vunpack.c.l.b16 %v2444
      %v2740 = vunpack.c.l.b16 %v2445
      %v2741 = vunpack.c.l.b16 %v2446
      %v2742 = vunpack.c.l.b16 %v2447
      %v2743 = vunpack.c.l.b16 %v2448
      %v2744 = vunpack.c.l.b16 %v2449
      %v2745 = vpack.c.b16 %v2602, %v2601
      %v2746 = vpack.c.b16 %v2604, %v2603
      %v2747 = vpack.c.b16 %v2606, %v2605
      %v2748 = vpack.c.b16 %v2608, %v2607
      %v2749 = vpack.c.b16 %v2610, %v2609
      %v2750 = vpack.c.b16 %v2612, %v2611
      %v2751 = vpack.c.b16 %v2614, %v2613
      %v2752 = vpack.c.b16 %v2616, %v2615
      %v2753 = vpack.c.b16 %v2618, %v2617
      %v2754 = vpack.c.b16 %v2620, %v2619
      %v2755 = vpack.c.b16 %v2622, %v2621
      %v2756 = vpack.c.b16 %v2624, %v2623
      %v2757 = vpack.c.b16 %v2626, %v2625
      %v2758 = vpack.c.b16 %v2628, %v2627
      %v2759 = vpack.c.b16 %v2630, %v2629
      %v2760 = vpack.c.b16 %v2632, %v2631
      %v2761 = vpack.c.b16 %v2634, %v2633
      %v2762 = vpack.c.b16 %v2636, %v2635
      %v2763 = vpack.c.b16 %v2638, %v2637
      %v2764 = vpack.c.b16 %v2640, %v2639
      %v2765 = vpack.c.b16 %v2642, %v2641
      %v2766 = vpack.c.b16 %v2644, %v2643
      %v2767 = vpack.c.b16 %v2646, %v2645
      %v2768 = vpack.c.b16 %v2648, %v2647
      %v2769 = vpack.c.b16 %v2650, %v2649
      %v2770 = vpack.c.b16 %v2652, %v2651
      %v2771 = vpack.c.b16 %v2654, %v2653
      %v2772 = vpack.c.b16 %v2656, %v2655
      %v2773 = vpack.c.b16 %v2658, %v2657
      %v2774 = vpack.c.b16 %v2660, %v2659
      %v2775 = vpack.c.b16 %v2662, %v2661
      %v2776 = vpack.c.b16 %v2664, %v2663
      %v2777 = vpack.c.b16 %v2666, %v2665
      %v2778 = vpack.c.b16 %v2668, %v2667
      %v2779 = vpack.c.b16 %v2670, %v2669
      %v2780 = vpack.c.b16 %v2672, %v2671
      %v2781 = vpack.c.b16 %v2674, %v2673
      %v2782 = vpack.c.b16 %v2676, %v2675
      %v2783 = vpack.c.b16 %v2678, %v2677
      %v2784 = vpack.c.b16 %v2680, %v2679
      %v2785 = vpack.c.b16 %v2682, %v2681
      %v2786 = vpack.c.b16 %v2684, %v2683
      %v2787 = vpack.c.b16 %v2686, %v2685
      %v2788 = vpack.c.b16 %v2688, %v2687
      %v2789 = vpack.c.b16 %v2690, %v2689
      %v2790 = vpack.c.b16 %v2692, %v2691
      %v2791 = vpack.c.b16 %v2694, %v2693
      %v2792 = vpack.c.b16 %v2696, %v2695
      %v2793 = vpack.c.b16 %v2698, %v2697
      %v2794 = vpack.c.b16 %v2700, %v2699
      %v2795 = vpack.c.b16 %v2702, %v2701
      %v2796 = vpack.c.b16 %v2704, %v2703
      %v2797 = vpack.c.b16 %v2706, %v2705
      %v2798 = vpack.c.b16 %v2708, %v2707
      %v2799 = vpack.c.b16 %v2710, %v2709
      %v2800 = vpack.c.b16 %v2712, %v2711
      %v2801 = vpack.c.b16 %v2714, %v2713
      %v2802 = vpack.c.b16 %v2716, %v2715
      %v2803 = vpack.c.b16 %v2718, %v2717
      %v2804 = vpack.c.b16 %v2720, %v2719
      %v2805 = vpack.c.b16 %v2722, %v2721
      %v2806 = vpack.c.b16 %v2724, %v2723
      %v2807 = vpack.c.b16 %v2726, %v2725
      %v2808 = vpack.c.b16 %v2728, %v2727
      %v2809 = vpack.c.b16 %v2730, %v2729
      %v2810 = vpack.c.b16 %v2732, %v2731
      %v2811 = vpack.c.b16 %v2734, %v2733
      %v2812 = vpack.c.b16 %v2736, %v2735
      %v2813 = vpack.c.b16 %v2738, %v2737
      %v2814 = vpack.c.b16 %v2740, %v2739
      %v2815 = vpack.c.b16 %v2742, %v2741
      %v2816 = vpack.c.b16 %v2744, %v2743
      %2889 = vmatprep.subr.bf16.mxu0 0
      %2890 = vmatpush1.bf16.msra.mxu0 %v2745
      %2891 = vmatprep.subr.bf16.mxu0 0
      %2892 = vmatpush1.bf16.msra.mxu0 %v2746
      %2893 = vmatprep.subr.bf16.mxu0 0
      %2894 = vmatpush1.bf16.msra.mxu0 %v2747
      %2895 = vmatprep.subr.bf16.mxu0 0
      %2896 = vmatpush1.bf16.msra.mxu0 %v2748
      %2897 = vmatprep.subr.bf16.mxu0 0
      %2898 = vmatpush1.bf16.msra.mxu0 %v2749
      %2899 = vmatprep.subr.bf16.mxu0 0
      %2900 = vmatpush1.bf16.msra.mxu0 %v2750
      %2901 = vmatprep.subr.bf16.mxu0 0
      %2902 = vmatpush1.bf16.msra.mxu0 %v2751
      %2903 = vmatprep.subr.bf16.mxu0 0
      %2904 = vmatpush1.bf16.msra.mxu0 %v2752
      %2905 = vmatprep.subr.bf16.mxu0 0
      %2906 = vmatpush1.bf16.msra.mxu0 %v2753
      %2907 = vmatprep.subr.bf16.mxu0 0
      %2908 = vmatpush1.bf16.msra.mxu0 %v2754
      %2909 = vmatprep.subr.bf16.mxu0 0
      %2910 = vmatpush1.bf16.msra.mxu0 %v2755
      %2911 = vmatprep.subr.bf16.mxu0 0
      %2912 = vmatpush1.bf16.msra.mxu0 %v2756
      %2913 = vmatprep.subr.bf16.mxu0 0
      %2914 = vmatpush1.bf16.msra.mxu0 %v2757
      %2915 = vmatprep.subr.bf16.mxu0 0
      %2916 = vmatpush1.bf16.msra.mxu0 %v2758
      %2917 = vmatprep.subr.bf16.mxu0 0
      %2918 = vmatpush1.bf16.msra.mxu0 %v2759
      %2919 = vmatprep.subr.bf16.mxu0 0
      %2920 = vmatpush1.bf16.msra.mxu0 %v2760
      %2921 = vmatprep.mubr.bf16.mxu0 %v2253
      %2922 = vmatmul.mubr.bf16.gmra.mrb[0].mxu0 %v2252
      %v2923 = vpop.f32.mrb[0].mxu0
      %v2924 = vadd.f32 %v2455, %v2923
      %v2925 = vpop.f32.mrb[0].mxu0
      %v2926 = vpop.f32.mrb[0].mxu0
      %v2927 = vadd.f32 %v2455, %v2926
      %v2928 = vpop.f32.mrb[0].mxu0
      %2929 = vmatprep.mubr.bf16.mxu0 %v2256
      %2930 = vmatmul.mubr.bf16.gmra.mrb[0].mxu0 %v2255
      %v2931 = vpop.f32.mrb[0].mxu0
      %v2932 = vadd.f32 %v2455, %v2931
      %v2933 = vpop.f32.mrb[0].mxu0
      %v2934 = vpop.f32.mrb[0].mxu0
      %v2935 = vadd.f32 %v2455, %v2934
      %v2936 = vpop.f32.mrb[0].mxu0
      %2937 = vmatprep.mubr.bf16.mxu0 %v2259
      %2938 = vmatmul.mubr.bf16.gmra.mrb[0].mxu0 %v2258
      %v2939 = vpop.f32.mrb[0].mxu0
      %v2940 = vadd.f32 %v2455, %v2939
      %v2941 = vpop.f32.mrb[0].mxu0
      %v2942 = vpop.f32.mrb[0].mxu0
      %v2943 = vadd.f32 %v2455, %v2942
      %v2944 = vpop.f32.mrb[0].mxu0
      %2945 = vmatprep.mubr.bf16.mxu0 %v2262
      %2946 = vmatmul.mubr.bf16.gmra.mrb[0].mxu0 %v2261
      %v2947 = vpop.f32.mrb[0].mxu0
      %v2948 = vadd.f32 %v2455, %v2947
      %v2949 = vpop.f32.mrb[0].mxu0
      %v2950 = vpop.f32.mrb[0].mxu0
      %v2951 = vadd.f32 %v2455, %v2950
      %v2952 = vpop.f32.mrb[0].mxu0
      %2953 = vmatprep.mubr.bf16.mxu0 %v2265
      %2954 = vmatmul.mubr.bf16.gmra.mrb[0].mxu0 %v2264
      %v2955 = vpop.f32.mrb[0].mxu0
      %v2956 = vadd.f32 %v2455, %v2955
      %v2957 = vpop.f32.mrb[0].mxu0
      %v2958 = vpop.f32.mrb[0].mxu0
      %v2959 = vadd.f32 %v2455, %v2958
      %v2960 = vpop.f32.mrb[0].mxu0
      %2961 = vmatprep.mubr.bf16.mxu0 %v2268
      %2962 = vmatmul.mubr.bf16.gmra.mrb[0].mxu0 %v2267
      %v2963 = vpop.f32.mrb[0].mxu0
      %v2964 = vadd.f32 %v2455, %v2963
      %v2965 = vpop.f32.mrb[0].mxu0
      %v2966 = vpop.f32.mrb[0].mxu0
      %v2967 = vadd.f32 %v2455, %v2966
      %v2968 = vpop.f32.mrb[0].mxu0
      %2969 = vmatprep.mubr.bf16.mxu0 %v2271
      %2970 = vmatmul.mubr.bf16.gmra.mrb[0].mxu0 %v2270
      %v2971 = vpop.f32.mrb[0].mxu0
      %v2972 = vadd.f32 %v2455, %v2971
      %v2973 = vpop.f32.mrb[0].mxu0
      %v2974 = vpop.f32.mrb[0].mxu0
      %v2975 = vadd.f32 %v2455, %v2974
      %v2976 = vpop.f32.mrb[0].mxu0
      %2977 = vmatprep.mubr.bf16.mxu0 %v2274
      %2978 = vmatmul.mubr.bf16.gmra.mrb[0].mxu0 %v2273
      %v2979 = vpop.f32.mrb[0].mxu0
      %v2980 = vadd.f32 %v2455, %v2979
      %v2981 = vpop.f32.mrb[0].mxu0
      %v2982 = vpop.f32.mrb[0].mxu0
      %v2983 = vadd.f32 %v2455, %v2982
      %v2984 = vpop.f32.mrb[0].mxu0
      %2985 = vmatprep.mubr.bf16.mxu0 %v2277
      %2986 = vmatmul.mubr.bf16.gmra.mrb[0].mxu0 %v2276
      %v2987 = vpop.f32.mrb[0].mxu0
      %v2988 = vadd.f32 %v2455, %v2987
      %v2989 = vpop.f32.mrb[0].mxu0
      %v2990 = vpop.f32.mrb[0].mxu0
      %v2991 = vadd.f32 %v2455, %v2990
      %v2992 = vpop.f32.mrb[0].mxu0
      %2993 = vmatprep.mubr.bf16.mxu0 %v2280
      %2994 = vmatmul.mubr.bf16.gmra.mrb[0].mxu0 %v2279
      %v2995 = vpop.f32.mrb[0].mxu0
      %v2996 = vadd.f32 %v2455, %v2995
      %v2997 = vpop.f32.mrb[0].mxu0
      %v2998 = vpop.f32.mrb[0].mxu0
      %v2999 = vadd.f32 %v2455, %v2998
      %v3000 = vpop.f32.mrb[0].mxu0
      %3001 = vmatprep.mubr.bf16.mxu0 %v2283
      %3002 = vmatmul.mubr.bf16.gmra.mrb[0].mxu0 %v2282
      %v3003 = vpop.f32.mrb[0].mxu0
      %v3004 = vadd.f32 %v2455, %v3003
      %v3005 = vpop.f32.mrb[0].mxu0
      %v3006 = vpop.f32.mrb[0].mxu0
      %v3007 = vadd.f32 %v2455, %v3006
      %v3008 = vpop.f32.mrb[0].mxu0
      %3009 = vmatprep.mubr.bf16.mxu0 %v2286
      %3010 = vmatmul.mubr.bf16.gmra.mrb[0].mxu0 %v2285
      %v3011 = vpop.f32.mrb[0].mxu0
      %v3012 = vadd.f32 %v2455, %v3011
      %v3013 = vpop.f32.mrb[0].mxu0
      %v3014 = vpop.f32.mrb[0].mxu0
      %v3015 = vadd.f32 %v2455, %v3014
      %v3016 = vpop.f32.mrb[0].mxu0
      %3017 = vmatprep.mubr.bf16.mxu0 %v2289
      %3018 = vmatmul.mubr.bf16.gmra.mrb[0].mxu0 %v2288
      %v3019 = vpop.f32.mrb[0].mxu0
      %v3020 = vadd.f32 %v2455, %v3019
      %v3021 = vpop.f32.mrb[0].mxu0
      %v3022 = vpop.f32.mrb[0].mxu0
      %v3023 = vadd.f32 %v2455, %v3022
      %v3024 = vpop.f32.mrb[0].mxu0
      %3025 = vmatprep.mubr.bf16.mxu0 %v2292
      %3026 = vmatmul.mubr.bf16.gmra.mrb[0].mxu0 %v2291
      %v3027 = vpop.f32.mrb[0].mxu0
      %v3028 = vadd.f32 %v2455, %v3027
      %v3029 = vpop.f32.mrb[0].mxu0
      %v3030 = vpop.f32.mrb[0].mxu0
      %v3031 = vadd.f32 %v2455, %v3030
      %v3032 = vpop.f32.mrb[0].mxu0
      %3033 = vmatprep.mubr.bf16.mxu0 %v2295
      %3034 = vmatmul.mubr.bf16.gmra.mrb[0].mxu0 %v2294
      %v3035 = vpop.f32.mrb[0].mxu0
      %v3036 = vadd.f32 %v2455, %v3035
      %v3037 = vpop.f32.mrb[0].mxu0
      %v3038 = vpop.f32.mrb[0].mxu0
      %v3039 = vadd.f32 %v2455, %v3038
      %v3040 = vpop.f32.mrb[0].mxu0
      %3041 = vmatprep.mubr.bf16.mxu0 %v2298
      %3042 = vmatmul.mubr.bf16.gmra.mrb[0].mxu0 %v2297
      %v3043 = vpop.f32.mrb[0].mxu0
      %v3044 = vadd.f32 %v2455, %v3043
      %v3045 = vpop.f32.mrb[0].mxu0
      %v3046 = vpop.f32.mrb[0].mxu0
      %v3047 = vadd.f32 %v2455, %v3046
      %v3048 = vpop.f32.mrb[0].mxu0
      %3049 = vdwg.mxu0
      %3050 = vmatprep.subr.bf16.mxu0 0
      %3051 = vmatpush1.bf16.msra.mxu0 %v2761
      %3052 = vmatprep.subr.bf16.mxu0 0
      %3053 = vmatpush1.bf16.msra.mxu0 %v2762
      %3054 = vmatprep.subr.bf16.mxu0 0
      %3055 = vmatpush1.bf16.msra.mxu0 %v2763
      %3056 = vmatprep.subr.bf16.mxu0 0
      %3057 = vmatpush1.bf16.msra.mxu0 %v2764
      %3058 = vmatprep.subr.bf16.mxu0 0
      %3059 = vmatpush1.bf16.msra.mxu0 %v2765
      %3060 = vmatprep.subr.bf16.mxu0 0
      %3061 = vmatpush1.bf16.msra.mxu0 %v2766
      %3062 = vmatprep.subr.bf16.mxu0 0
      %3063 = vmatpush1.bf16.msra.mxu0 %v2767
      %3064 = vmatprep.subr.bf16.mxu0 0
      %3065 = vmatpush1.bf16.msra.mxu0 %v2768
      %3066 = vmatprep.subr.bf16.mxu0 0
      %3067 = vmatpush1.bf16.msra.mxu0 %v2769
      %3068 = vmatprep.subr.bf16.mxu0 0
      %3069 = vmatpush1.bf16.msra.mxu0 %v2770
      %3070 = vmatprep.subr.bf16.mxu0 0
      %3071 = vmatpush1.bf16.msra.mxu0 %v2771
      %3072 = vmatprep.subr.bf16.mxu0 0
      %3073 = vmatpush1.bf16.msra.mxu0 %v2772
      %3074 = vmatprep.subr.bf16.mxu0 0
      %3075 = vmatpush1.bf16.msra.mxu0 %v2773
      %3076 = vmatprep.subr.bf16.mxu0 0
      %3077 = vmatpush1.bf16.msra.mxu0 %v2774
      %3078 = vmatprep.subr.bf16.mxu0 0
      %3079 = vmatpush1.bf16.msra.mxu0 %v2775
      %3080 = vmatprep.subr.bf16.mxu0 0
      %3081 = vmatpush1.bf16.msra.mxu0 %v2776
      %3082 = vmatprep.mubr.bf16.mxu0 %v2255
      %3083 = vmatmul.mubr.bf16.gmra.mrb[0].mxu0 %v2254
      %v3084 = vpop.f32.mrb[0].mxu0
      %v3085 = vadd.f32 %v2924, %v3084
      %v3086 = vpop.f32.mrb[0].mxu0
      %v3087 = vpop.f32.mrb[0].mxu0
      %v3088 = vadd.f32 %v2927, %v3087
      %v3089 = vpop.f32.mrb[0].mxu0
      %3090 = vmatprep.mubr.bf16.mxu0 %v2258
      %3091 = vmatmul.mubr.bf16.gmra.mrb[0].mxu0 %v2257
      %v3092 = vpop.f32.mrb[0].mxu0
      %v3093 = vadd.f32 %v2932, %v3092
      %v3094 = vpop.f32.mrb[0].mxu0
      %v3095 = vpop.f32.mrb[0].mxu0
      %v3096 = vadd.f32 %v2935, %v3095
      %v3097 = vpop.f32.mrb[0].mxu0
      %3098 = vmatprep.mubr.bf16.mxu0 %v2261
      %3099 = vmatmul.mubr.bf16.gmra.mrb[0].mxu0 %v2260
      %v3100 = vpop.f32.mrb[0].mxu0
      %v3101 = vadd.f32 %v2940, %v3100
      %v3102 = vpop.f32.mrb[0].mxu0
      %v3103 = vpop.f32.mrb[0].mxu0
      %v3104 = vadd.f32 %v2943, %v3103
      %v3105 = vpop.f32.mrb[0].mxu0
      %3106 = vmatprep.mubr.bf16.mxu0 %v2264
      %3107 = vmatmul.mubr.bf16.gmra.mrb[0].mxu0 %v2263
      %v3108 = vpop.f32.mrb[0].mxu0
      %v3109 = vadd.f32 %v2948, %v3108
      %v3110 = vpop.f32.mrb[0].mxu0
      %v3111 = vpop.f32.mrb[0].mxu0
      %v3112 = vadd.f32 %v2951, %v3111
      %v3113 = vpop.f32.mrb[0].mxu0
      %3114 = vmatprep.mubr.bf16.mxu0 %v2267
      %3115 = vmatmul.mubr.bf16.gmra.mrb[0].mxu0 %v2266
      %v3116 = vpop.f32.mrb[0].mxu0
      %v3117 = vadd.f32 %v2956, %v3116
      %v3118 = vpop.f32.mrb[0].mxu0
      %v3119 = vpop.f32.mrb[0].mxu0
      %v3120 = vadd.f32 %v2959, %v3119
      %v3121 = vpop.f32.mrb[0].mxu0
      %3122 = vmatprep.mubr.bf16.mxu0 %v2270
      %3123 = vmatmul.mubr.bf16.gmra.mrb[0].mxu0 %v2269
      %v3124 = vpop.f32.mrb[0].mxu0
      %v3125 = vadd.f32 %v2964, %v3124
      %v3126 = vpop.f32.mrb[0].mxu0
      %v3127 = vpop.f32.mrb[0].mxu0
      %v3128 = vadd.f32 %v2967, %v3127
      %v3129 = vpop.f32.mrb[0].mxu0
      %3130 = vmatprep.mubr.bf16.mxu0 %v2273
      %3131 = vmatmul.mubr.bf16.gmra.mrb[0].mxu0 %v2272
      %v3132 = vpop.f32.mrb[0].mxu0
      %v3133 = vadd.f32 %v2972, %v3132
      %v3134 = vpop.f32.mrb[0].mxu0
      %v3135 = vpop.f32.mrb[0].mxu0
      %v3136 = vadd.f32 %v2975, %v3135
      %v3137 = vpop.f32.mrb[0].mxu0
      %3138 = vmatprep.mubr.bf16.mxu0 %v2276
      %3139 = vmatmul.mubr.bf16.gmra.mrb[0].mxu0 %v2275
      %v3140 = vpop.f32.mrb[0].mxu0
      %v3141 = vadd.f32 %v2980, %v3140
      %v3142 = vpop.f32.mrb[0].mxu0
      %v3143 = vpop.f32.mrb[0].mxu0
      %v3144 = vadd.f32 %v2983, %v3143
      %v3145 = vpop.f32.mrb[0].mxu0
      %3146 = vmatprep.mubr.bf16.mxu0 %v2279
      %3147 = vmatmul.mubr.bf16.gmra.mrb[0].mxu0 %v2278
      %v3148 = vpop.f32.mrb[0].mxu0
      %v3149 = vadd.f32 %v2988, %v3148
      %v3150 = vpop.f32.mrb[0].mxu0
      %v3151 = vpop.f32.mrb[0].mxu0
      %v3152 = vadd.f32 %v2991, %v3151
      %v3153 = vpop.f32.mrb[0].mxu0
      %3154 = vmatprep.mubr.bf16.mxu0 %v2282
      %3155 = vmatmul.mubr.bf16.gmra.mrb[0].mxu0 %v2281
      %v3156 = vpop.f32.mrb[0].mxu0
      %v3157 = vadd.f32 %v2996, %v3156
      %v3158 = vpop.f32.mrb[0].mxu0
      %v3159 = vpop.f32.mrb[0].mxu0
      %v3160 = vadd.f32 %v2999, %v3159
      %v3161 = vpop.f32.mrb[0].mxu0
      %3162 = vmatprep.mubr.bf16.mxu0 %v2285
      %3163 = vmatmul.mubr.bf16.gmra.mrb[0].mxu0 %v2284
      %v3164 = vpop.f32.mrb[0].mxu0
      %v3165 = vadd.f32 %v3004, %v3164
      %v3166 = vpop.f32.mrb[0].mxu0
      %v3167 = vpop.f32.mrb[0].mxu0
      %v3168 = vadd.f32 %v3007, %v3167
      %v3169 = vpop.f32.mrb[0].mxu0
      %3170 = vmatprep.mubr.bf16.mxu0 %v2288
      %3171 = vmatmul.mubr.bf16.gmra.mrb[0].mxu0 %v2287
      %v3172 = vpop.f32.mrb[0].mxu0
      %v3173 = vadd.f32 %v3012, %v3172
      %v3174 = vpop.f32.mrb[0].mxu0
      %v3175 = vpop.f32.mrb[0].mxu0
      %v3176 = vadd.f32 %v3015, %v3175
      %v3177 = vpop.f32.mrb[0].mxu0
      %3178 = vmatprep.mubr.bf16.mxu0 %v2291
      %3179 = vmatmul.mubr.bf16.gmra.mrb[0].mxu0 %v2290
      %v3180 = vpop.f32.mrb[0].mxu0
      %v3181 = vadd.f32 %v3020, %v3180
      %v3182 = vpop.f32.mrb[0].mxu0
      %v3183 = vpop.f32.mrb[0].mxu0
      %v3184 = vadd.f32 %v3023, %v3183
      %v3185 = vpop.f32.mrb[0].mxu0
      %3186 = vmatprep.mubr.bf16.mxu0 %v2294
      %3187 = vmatmul.mubr.bf16.gmra.mrb[0].mxu0 %v2293
      %v3188 = vpop.f32.mrb[0].mxu0
      %v3189 = vadd.f32 %v3028, %v3188
      %v3190 = vpop.f32.mrb[0].mxu0
      %v3191 = vpop.f32.mrb[0].mxu0
      %v3192 = vadd.f32 %v3031, %v3191
      %v3193 = vpop.f32.mrb[0].mxu0
      %3194 = vmatprep.mubr.bf16.mxu0 %v2297
      %3195 = vmatmul.mubr.bf16.gmra.mrb[0].mxu0 %v2296
      %v3196 = vpop.f32.mrb[0].mxu0
      %v3197 = vadd.f32 %v3036, %v3196
      %v3198 = vpop.f32.mrb[0].mxu0
      %v3199 = vpop.f32.mrb[0].mxu0
      %v3200 = vadd.f32 %v3039, %v3199
      %v3201 = vpop.f32.mrb[0].mxu0
      %3202 = vmatprep.mubr.bf16.mxu0 %v2300
      %3203 = vmatmul.mubr.bf16.gmra.mrb[0].mxu0 %v2299
      %v3204 = vpop.f32.mrb[0].mxu0
      %v3205 = vadd.f32 %v3044, %v3204
      %v3206 = vpop.f32.mrb[0].mxu0
      %v3207 = vpop.f32.mrb[0].mxu0
      %v3208 = vadd.f32 %v3047, %v3207
      %v3209 = vpop.f32.mrb[0].mxu0
      %3210 = vdwg.mxu0
      %3211 = vmatprep.subr.bf16.mxu0 0
      %3212 = vmatpush1.bf16.msra.mxu0 %v2777
      %3213 = vmatprep.subr.bf16.mxu0 0
      %3214 = vmatpush1.bf16.msra.mxu0 %v2778
      %3215 = vmatprep.subr.bf16.mxu0 0
      %3216 = vmatpush1.bf16.msra.mxu0 %v2779
      %3217 = vmatprep.subr.bf16.mxu0 0
      %3218 = vmatpush1.bf16.msra.mxu0 %v2780
      %3219 = vmatprep.subr.bf16.mxu0 0
      %3220 = vmatpush1.bf16.msra.mxu0 %v2781
      %3221 = vmatprep.subr.bf16.mxu0 0
      %3222 = vmatpush1.bf16.msra.mxu0 %v2782
      %3223 = vmatprep.subr.bf16.mxu0 0
      %3224 = vmatpush1.bf16.msra.mxu0 %v2783
      %3225 = vmatprep.subr.bf16.mxu0 0
      %3226 = vmatpush1.bf16.msra.mxu0 %v2784
      %3227 = vmatprep.subr.bf16.mxu0 0
      %3228 = vmatpush1.bf16.msra.mxu0 %v2785
      %3229 = vmatprep.subr.bf16.mxu0 0
      %3230 = vmatpush1.bf16.msra.mxu0 %v2786
      %3231 = vmatprep.subr.bf16.mxu0 0
      %3232 = vmatpush1.bf16.msra.mxu0 %v2787
      %3233 = vmatprep.subr.bf16.mxu0 0
      %3234 = vmatpush1.bf16.msra.mxu0 %v2788
      %3235 = vmatprep.subr.bf16.mxu0 0
      %3236 = vmatpush1.bf16.msra.mxu0 %v2789
      %3237 = vmatprep.subr.bf16.mxu0 0
      %3238 = vmatpush1.bf16.msra.mxu0 %v2790
      %3239 = vmatprep.subr.bf16.mxu0 0
      %3240 = vmatpush1.bf16.msra.mxu0 %v2791
      %3241 = vmatprep.subr.bf16.mxu0 0
      %3242 = vmatpush1.bf16.msra.mxu0 %v2792
      %3243 = vmatprep.mubr.bf16.mxu0 %v2257
      %3244 = vmatmul.mubr.bf16.gmra.mrb[0].mxu0 %v2256
      %v3245 = vpop.f32.mrb[0].mxu0
      %v3246 = vadd.f32 %v3085, %v3245
      %v3247 = vpop.f32.mrb[0].mxu0
      %v3248 = vpop.f32.mrb[0].mxu0
      %v3249 = vadd.f32 %v3088, %v3248
      %v3250 = vpop.f32.mrb[0].mxu0
      %3251 = vmatprep.mubr.bf16.mxu0 %v2260
      %3252 = vmatmul.mubr.bf16.gmra.mrb[0].mxu0 %v2259
      %v3253 = vpop.f32.mrb[0].mxu0
      %v3254 = vadd.f32 %v3093, %v3253
      %v3255 = vpop.f32.mrb[0].mxu0
      %v3256 = vpop.f32.mrb[0].mxu0
      %v3257 = vadd.f32 %v3096, %v3256
      %v3258 = vpop.f32.mrb[0].mxu0
      %3259 = vmatprep.mubr.bf16.mxu0 %v2263
      %3260 = vmatmul.mubr.bf16.gmra.mrb[0].mxu0 %v2262
      %v3261 = vpop.f32.mrb[0].mxu0
      %v3262 = vadd.f32 %v3101, %v3261
      %v3263 = vpop.f32.mrb[0].mxu0
      %v3264 = vpop.f32.mrb[0].mxu0
      %v3265 = vadd.f32 %v3104, %v3264
      %v3266 = vpop.f32.mrb[0].mxu0
      %3267 = vmatprep.mubr.bf16.mxu0 %v2266
      %3268 = vmatmul.mubr.bf16.gmra.mrb[0].mxu0 %v2265
      %v3269 = vpop.f32.mrb[0].mxu0
      %v3270 = vadd.f32 %v3109, %v3269
      %v3271 = vpop.f32.mrb[0].mxu0
      %v3272 = vpop.f32.mrb[0].mxu0
      %v3273 = vadd.f32 %v3112, %v3272
      %v3274 = vpop.f32.mrb[0].mxu0
      %3275 = vmatprep.mubr.bf16.mxu0 %v2269
      %3276 = vmatmul.mubr.bf16.gmra.mrb[0].mxu0 %v2268
      %v3277 = vpop.f32.mrb[0].mxu0
      %v3278 = vadd.f32 %v3117, %v3277
      %v3279 = vpop.f32.mrb[0].mxu0
      %v3280 = vpop.f32.mrb[0].mxu0
      %v3281 = vadd.f32 %v3120, %v3280
      %v3282 = vpop.f32.mrb[0].mxu0
      %3283 = vmatprep.mubr.bf16.mxu0 %v2272
      %3284 = vmatmul.mubr.bf16.gmra.mrb[0].mxu0 %v2271
      %v3285 = vpop.f32.mrb[0].mxu0
      %v3286 = vadd.f32 %v3125, %v3285
      %v3287 = vpop.f32.mrb[0].mxu0
      %v3288 = vpop.f32.mrb[0].mxu0
      %v3289 = vadd.f32 %v3128, %v3288
      %v3290 = vpop.f32.mrb[0].mxu0
      %3291 = vmatprep.mubr.bf16.mxu0 %v2275
      %3292 = vmatmul.mubr.bf16.gmra.mrb[0].mxu0 %v2274
      %v3293 = vpop.f32.mrb[0].mxu0
      %v3294 = vadd.f32 %v3133, %v3293
      %v3295 = vpop.f32.mrb[0].mxu0
      %v3296 = vpop.f32.mrb[0].mxu0
      %v3297 = vadd.f32 %v3136, %v3296
      %v3298 = vpop.f32.mrb[0].mxu0
      %3299 = vmatprep.mubr.bf16.mxu0 %v2278
      %3300 = vmatmul.mubr.bf16.gmra.mrb[0].mxu0 %v2277
      %v3301 = vpop.f32.mrb[0].mxu0
      %v3302 = vadd.f32 %v3141, %v3301
      %v3303 = vpop.f32.mrb[0].mxu0
      %v3304 = vpop.f32.mrb[0].mxu0
      %v3305 = vadd.f32 %v3144, %v3304
      %v3306 = vpop.f32.mrb[0].mxu0
      %3307 = vmatprep.mubr.bf16.mxu0 %v2281
      %3308 = vmatmul.mubr.bf16.gmra.mrb[0].mxu0 %v2280
      %v3309 = vpop.f32.mrb[0].mxu0
      %v3310 = vadd.f32 %v3149, %v3309
      %v3311 = vpop.f32.mrb[0].mxu0
      %v3312 = vpop.f32.mrb[0].mxu0
      %v3313 = vadd.f32 %v3152, %v3312
      %v3314 = vpop.f32.mrb[0].mxu0
      %3315 = vmatprep.mubr.bf16.mxu0 %v2284
      %3316 = vmatmul.mubr.bf16.gmra.mrb[0].mxu0 %v2283
      %v3317 = vpop.f32.mrb[0].mxu0
      %v3318 = vadd.f32 %v3157, %v3317
      %v3319 = vpop.f32.mrb[0].mxu0
      %v3320 = vpop.f32.mrb[0].mxu0
      %v3321 = vadd.f32 %v3160, %v3320
      %v3322 = vpop.f32.mrb[0].mxu0
      %3323 = vmatprep.mubr.bf16.mxu0 %v2287
      %3324 = vmatmul.mubr.bf16.gmra.mrb[0].mxu0 %v2286
      %v3325 = vpop.f32.mrb[0].mxu0
      %v3326 = vadd.f32 %v3165, %v3325
      %v3327 = vpop.f32.mrb[0].mxu0
      %v3328 = vpop.f32.mrb[0].mxu0
      %v3329 = vadd.f32 %v3168, %v3328
      %v3330 = vpop.f32.mrb[0].mxu0
      %3331 = vmatprep.mubr.bf16.mxu0 %v2290
      %3332 = vmatmul.mubr.bf16.gmra.mrb[0].mxu0 %v2289
      %v3333 = vpop.f32.mrb[0].mxu0
      %v3334 = vadd.f32 %v3173, %v3333
      %v3335 = vpop.f32.mrb[0].mxu0
      %v3336 = vpop.f32.mrb[0].mxu0
      %v3337 = vadd.f32 %v3176, %v3336
      %v3338 = vpop.f32.mrb[0].mxu0
      %3339 = vmatprep.mubr.bf16.mxu0 %v2293
      %3340 = vmatmul.mubr.bf16.gmra.mrb[0].mxu0 %v2292
      %v3341 = vpop.f32.mrb[0].mxu0
      %v3342 = vadd.f32 %v3181, %v3341
      %v3343 = vpop.f32.mrb[0].mxu0
      %v3344 = vpop.f32.mrb[0].mxu0
      %v3345 = vadd.f32 %v3184, %v3344
      %v3346 = vpop.f32.mrb[0].mxu0
      %3347 = vmatprep.mubr.bf16.mxu0 %v2296
      %3348 = vmatmul.mubr.bf16.gmra.mrb[0].mxu0 %v2295
      %v3349 = vpop.f32.mrb[0].mxu0
      %v3350 = vadd.f32 %v3189, %v3349
      %v3351 = vpop.f32.mrb[0].mxu0
      %v3352 = vpop.f32.mrb[0].mxu0
      %v3353 = vadd.f32 %v3192, %v3352
      %v3354 = vpop.f32.mrb[0].mxu0
      %3355 = vmatprep.mubr.bf16.mxu0 %v2299
      %3356 = vmatmul.mubr.bf16.gmra.mrb[0].mxu0 %v2298
      %v3357 = vpop.f32.mrb[0].mxu0
      %v3358 = vadd.f32 %v3197, %v3357
      %v3359 = vpop.f32.mrb[0].mxu0
      %v3360 = vpop.f32.mrb[0].mxu0
      %v3361 = vadd.f32 %v3200, %v3360
      %v3362 = vpop.f32.mrb[0].mxu0
      %3363 = vmatprep.mubr.bf16.mxu0 %v2302
      %3364 = vmatmul.mubr.bf16.gmra.mrb[0].mxu0 %v2301
      %v3365 = vpop.f32.mrb[0].mxu0
      %v3366 = vadd.f32 %v3205, %v3365
      %v3367 = vpop.f32.mrb[0].mxu0
      %v3368 = vpop.f32.mrb[0].mxu0
      %v3369 = vadd.f32 %v3208, %v3368
      %v3370 = vpop.f32.mrb[0].mxu0
      %3371 = vdwg.mxu0
      %3372 = vmatprep.subr.bf16.mxu0 0
      %3373 = vmatpush1.bf16.msra.mxu0 %v2793
      %3374 = vmatprep.subr.bf16.mxu0 0
      %3375 = vmatpush1.bf16.msra.mxu0 %v2794
      %3376 = vmatprep.subr.bf16.mxu0 0
      %3377 = vmatpush1.bf16.msra.mxu0 %v2795
      %3378 = vmatprep.subr.bf16.mxu0 0
      %3379 = vmatpush1.bf16.msra.mxu0 %v2796
      %3380 = vmatprep.subr.bf16.mxu0 0
      %3381 = vmatpush1.bf16.msra.mxu0 %v2797
      %3382 = vmatprep.subr.bf16.mxu0 0
      %3383 = vmatpush1.bf16.msra.mxu0 %v2798
      %3384 = vmatprep.subr.bf16.mxu0 0
      %3385 = vmatpush1.bf16.msra.mxu0 %v2799
      %3386 = vmatprep.subr.bf16.mxu0 0
      %3387 = vmatpush1.bf16.msra.mxu0 %v2800
      %3388 = vmatprep.subr.bf16.mxu0 0
      %3389 = vmatpush1.bf16.msra.mxu0 %v2801
      %3390 = vmatprep.subr.bf16.mxu0 0
      %3391 = vmatpush1.bf16.msra.mxu0 %v2802
      %3392 = vmatprep.subr.bf16.mxu0 0
      %3393 = vmatpush1.bf16.msra.mxu0 %v2803
      %3394 = vmatprep.subr.bf16.mxu0 0
      %3395 = vmatpush1.bf16.msra.mxu0 %v2804
      %3396 = vmatprep.subr.bf16.mxu0 0
      %3397 = vmatpush1.bf16.msra.mxu0 %v2805
      %3398 = vmatprep.subr.bf16.mxu0 0
      %3399 = vmatpush1.bf16.msra.mxu0 %v2806
      %3400 = vmatprep.subr.bf16.mxu0 0
      %3401 = vmatpush1.bf16.msra.mxu0 %v2807
      %3402 = vmatprep.subr.bf16.mxu0 0
      %3403 = vmatpush1.bf16.msra.mxu0 %v2808
      %3404 = vmatprep.mubr.bf16.mxu0 %v2259
      %3405 = vmatmul.mubr.bf16.gmra.mrb[0].mxu0 %v2258
      %v3406 = vpop.f32.mrb[0].mxu0
      %v3407 = vadd.f32 %v3246, %v3406
      %v3408 = vpop.f32.mrb[0].mxu0
      %v3409 = vpop.f32.mrb[0].mxu0
      %v3410 = vadd.f32 %v3249, %v3409
      %v3411 = vpop.f32.mrb[0].mxu0
      %3412 = vmatprep.mubr.bf16.mxu0 %v2262
      %3413 = vmatmul.mubr.bf16.gmra.mrb[0].mxu0 %v2261
      %v3414 = vpop.f32.mrb[0].mxu0
      %v3415 = vadd.f32 %v3254, %v3414
      %v3416 = vpop.f32.mrb[0].mxu0
      %v3417 = vpop.f32.mrb[0].mxu0
      %v3418 = vadd.f32 %v3257, %v3417
      %v3419 = vpop.f32.mrb[0].mxu0
      %3420 = vmatprep.mubr.bf16.mxu0 %v2265
      %3421 = vmatmul.mubr.bf16.gmra.mrb[0].mxu0 %v2264
      %v3422 = vpop.f32.mrb[0].mxu0
      %v3423 = vadd.f32 %v3262, %v3422
      %v3424 = vpop.f32.mrb[0].mxu0
      %v3425 = vpop.f32.mrb[0].mxu0
      %v3426 = vadd.f32 %v3265, %v3425
      %v3427 = vpop.f32.mrb[0].mxu0
      %3428 = vmatprep.mubr.bf16.mxu0 %v2268
      %3429 = vmatmul.mubr.bf16.gmra.mrb[0].mxu0 %v2267
      %v3430 = vpop.f32.mrb[0].mxu0
      %v3431 = vadd.f32 %v3270, %v3430
      %v3432 = vpop.f32.mrb[0].mxu0
      %v3433 = vpop.f32.mrb[0].mxu0
      %v3434 = vadd.f32 %v3273, %v3433
      %v3435 = vpop.f32.mrb[0].mxu0
      %3436 = vmatprep.mubr.bf16.mxu0 %v2271
      %3437 = vmatmul.mubr.bf16.gmra.mrb[0].mxu0 %v2270
      %v3438 = vpop.f32.mrb[0].mxu0
      %v3439 = vadd.f32 %v3278, %v3438
      %v3440 = vpop.f32.mrb[0].mxu0
      %v3441 = vpop.f32.mrb[0].mxu0
      %v3442 = vadd.f32 %v3281, %v3441
      %v3443 = vpop.f32.mrb[0].mxu0
      %3444 = vmatprep.mubr.bf16.mxu0 %v2274
      %3445 = vmatmul.mubr.bf16.gmra.mrb[0].mxu0 %v2273
      %v3446 = vpop.f32.mrb[0].mxu0
      %v3447 = vadd.f32 %v3286, %v3446
      %v3448 = vpop.f32.mrb[0].mxu0
      %v3449 = vpop.f32.mrb[0].mxu0
      %v3450 = vadd.f32 %v3289, %v3449
      %v3451 = vpop.f32.mrb[0].mxu0
      %3452 = vmatprep.mubr.bf16.mxu0 %v2277
      %3453 = vmatmul.mubr.bf16.gmra.mrb[0].mxu0 %v2276
      %v3454 = vpop.f32.mrb[0].mxu0
      %v3455 = vadd.f32 %v3294, %v3454
      %v3456 = vpop.f32.mrb[0].mxu0
      %v3457 = vpop.f32.mrb[0].mxu0
      %v3458 = vadd.f32 %v3297, %v3457
      %v3459 = vpop.f32.mrb[0].mxu0
      %3460 = vmatprep.mubr.bf16.mxu0 %v2280
      %3461 = vmatmul.mubr.bf16.gmra.mrb[0].mxu0 %v2279
      %v3462 = vpop.f32.mrb[0].mxu0
      %v3463 = vadd.f32 %v3302, %v3462
      %v3464 = vpop.f32.mrb[0].mxu0
      %v3465 = vpop.f32.mrb[0].mxu0
      %v3466 = vadd.f32 %v3305, %v3465
      %v3467 = vpop.f32.mrb[0].mxu0
      %3468 = vmatprep.mubr.bf16.mxu0 %v2283
      %3469 = vmatmul.mubr.bf16.gmra.mrb[0].mxu0 %v2282
      %v3470 = vpop.f32.mrb[0].mxu0
      %v3471 = vadd.f32 %v3310, %v3470
      %v3472 = vpop.f32.mrb[0].mxu0
      %v3473 = vpop.f32.mrb[0].mxu0
      %v3474 = vadd.f32 %v3313, %v3473
      %v3475 = vpop.f32.mrb[0].mxu0
      %3476 = vmatprep.mubr.bf16.mxu0 %v2286
      %3477 = vmatmul.mubr.bf16.gmra.mrb[0].mxu0 %v2285
      %v3478 = vpop.f32.mrb[0].mxu0
      %v3479 = vadd.f32 %v3318, %v3478
      %v3480 = vpop.f32.mrb[0].mxu0
      %v3481 = vpop.f32.mrb[0].mxu0
      %v3482 = vadd.f32 %v3321, %v3481
      %v3483 = vpop.f32.mrb[0].mxu0
      %3484 = vmatprep.mubr.bf16.mxu0 %v2289
      %3485 = vmatmul.mubr.bf16.gmra.mrb[0].mxu0 %v2288
      %v3486 = vpop.f32.mrb[0].mxu0
      %v3487 = vadd.f32 %v3326, %v3486
      %v3488 = vpop.f32.mrb[0].mxu0
      %v3489 = vpop.f32.mrb[0].mxu0
      %v3490 = vadd.f32 %v3329, %v3489
      %v3491 = vpop.f32.mrb[0].mxu0
      %3492 = vmatprep.mubr.bf16.mxu0 %v2292
      %3493 = vmatmul.mubr.bf16.gmra.mrb[0].mxu0 %v2291
      %v3494 = vpop.f32.mrb[0].mxu0
      %v3495 = vadd.f32 %v3334, %v3494
      %v3496 = vpop.f32.mrb[0].mxu0
      %v3497 = vpop.f32.mrb[0].mxu0
      %v3498 = vadd.f32 %v3337, %v3497
      %v3499 = vpop.f32.mrb[0].mxu0
      %3500 = vmatprep.mubr.bf16.mxu0 %v2295
      %3501 = vmatmul.mubr.bf16.gmra.mrb[0].mxu0 %v2294
      %v3502 = vpop.f32.mrb[0].mxu0
      %v3503 = vadd.f32 %v3342, %v3502
      %v3504 = vpop.f32.mrb[0].mxu0
      %v3505 = vpop.f32.mrb[0].mxu0
      %v3506 = vadd.f32 %v3345, %v3505
      %v3507 = vpop.f32.mrb[0].mxu0
      %3508 = vmatprep.mubr.bf16.mxu0 %v2298
      %3509 = vmatmul.mubr.bf16.gmra.mrb[0].mxu0 %v2297
      %v3510 = vpop.f32.mrb[0].mxu0
      %v3511 = vadd.f32 %v3350, %v3510
      %v3512 = vpop.f32.mrb[0].mxu0
      %v3513 = vpop.f32.mrb[0].mxu0
      %v3514 = vadd.f32 %v3353, %v3513
      %v3515 = vpop.f32.mrb[0].mxu0
      %3516 = vmatprep.mubr.bf16.mxu0 %v2301
      %3517 = vmatmul.mubr.bf16.gmra.mrb[0].mxu0 %v2300
      %v3518 = vpop.f32.mrb[0].mxu0
      %v3519 = vadd.f32 %v3358, %v3518
      %v3520 = vpop.f32.mrb[0].mxu0
      %v3521 = vpop.f32.mrb[0].mxu0
      %v3522 = vadd.f32 %v3361, %v3521
      %v3523 = vpop.f32.mrb[0].mxu0
      %3524 = vmatprep.mubr.bf16.mxu0 %v2304
      %3525 = vmatmul.mubr.bf16.gmra.mrb[0].mxu0 %v2303
      %v3526 = vpop.f32.mrb[0].mxu0
      %v3527 = vadd.f32 %v3366, %v3526
      %v3528 = vpop.f32.mrb[0].mxu0
      %v3529 = vpop.f32.mrb[0].mxu0
      %v3530 = vadd.f32 %v3369, %v3529
      %v3531 = vpop.f32.mrb[0].mxu0
      %3532 = vdwg.mxu0
      %3533 = vmatprep.subr.bf16.mxu0 0
      %3534 = vmatpush1.bf16.msra.mxu0 %v2809
      %3535 = vmatprep.subr.bf16.mxu0 0
      %3536 = vmatpush1.bf16.msra.mxu0 %v2810
      %3537 = vmatprep.subr.bf16.mxu0 0
      %3538 = vmatpush1.bf16.msra.mxu0 %v2811
      %3539 = vmatprep.subr.bf16.mxu0 0
      %3540 = vmatpush1.bf16.msra.mxu0 %v2812
      %3541 = vmatprep.subr.bf16.mxu0 0
      %3542 = vmatpush1.bf16.msra.mxu0 %v2813
      %3543 = vmatprep.subr.bf16.mxu0 0
      %3544 = vmatpush1.bf16.msra.mxu0 %v2814
      %3545 = vmatprep.subr.bf16.mxu0 0
      %3546 = vmatpush1.bf16.msra.mxu0 %v2815
      %3547 = vmatprep.subr.bf16.mxu0 0
      %3548 = vmatpush1.bf16.msra.mxu0 %v2816
      %3549 = vmatprep.subr.bf16.mxu0 0
      %3550 = vmatpush1.bf16.msra.mxu0 0
      %3551 = vmatprep.subr.bf16.mxu0 0
      %3552 = vmatpush1.bf16.msra.mxu0 0
      %3553 = vmatprep.subr.bf16.mxu0 0
      %3554 = vmatpush1.bf16.msra.mxu0 0
      %3555 = vmatprep.subr.bf16.mxu0 0
      %3556 = vmatpush1.bf16.msra.mxu0 0
      %3557 = vmatprep.subr.bf16.mxu0 0
      %3558 = vmatpush1.bf16.msra.mxu0 0
      %3559 = vmatprep.subr.bf16.mxu0 0
      %3560 = vmatpush1.bf16.msra.mxu0 0
      %3561 = vmatprep.subr.bf16.mxu0 0
      %3562 = vmatpush1.bf16.msra.mxu0 0
      %3563 = vmatprep.subr.bf16.mxu0 0
      %3564 = vmatpush1.bf16.msra.mxu0 0
      %3565 = vmatprep.mubr.bf16.mxu0 0
      %3566 = vmatmul.mubr.bf16.gmra.mrb[0].mxu0 %v2260
      %v3567 = vpop.f32.mrb[0].mxu0
      %v3568 = vadd.f32 %v3407, %v3567
      %v3569 = vpop.f32.mrb[0].mxu0
      %v3570 = vpop.f32.mrb[0].mxu0
      %v3571 = vadd.f32 %v3410, %v3570
      %v3572 = vpop.f32.mrb[0].mxu0
      %3573 = vmatprep.mubr.bf16.mxu0 0
      %3574 = vmatmul.mubr.bf16.gmra.mrb[0].mxu0 %v2263
      %v3575 = vpop.f32.mrb[0].mxu0
      %v3576 = vadd.f32 %v3415, %v3575
      %v3577 = vpop.f32.mrb[0].mxu0
      %v3578 = vpop.f32.mrb[0].mxu0
      %v3579 = vadd.f32 %v3418, %v3578
      %v3580 = vpop.f32.mrb[0].mxu0
      %3581 = vmatprep.mubr.bf16.mxu0 0
      %3582 = vmatmul.mubr.bf16.gmra.mrb[0].mxu0 %v2266
      %v3583 = vpop.f32.mrb[0].mxu0
      %v3584 = vadd.f32 %v3423, %v3583
      %v3585 = vpop.f32.mrb[0].mxu0
      %v3586 = vpop.f32.mrb[0].mxu0
      %v3587 = vadd.f32 %v3426, %v3586
      %v3588 = vpop.f32.mrb[0].mxu0
      %3589 = vmatprep.mubr.bf16.mxu0 0
      %3590 = vmatmul.mubr.bf16.gmra.mrb[0].mxu0 %v2269
      %v3591 = vpop.f32.mrb[0].mxu0
      %v3592 = vadd.f32 %v3431, %v3591
      %v3593 = vpop.f32.mrb[0].mxu0
      %v3594 = vpop.f32.mrb[0].mxu0
      %v3595 = vadd.f32 %v3434, %v3594
      %v3596 = vpop.f32.mrb[0].mxu0
      %3597 = vmatprep.mubr.bf16.mxu0 0
      %3598 = vmatmul.mubr.bf16.gmra.mrb[0].mxu0 %v2272
      %v3599 = vpop.f32.mrb[0].mxu0
      %v3600 = vadd.f32 %v3439, %v3599
      %v3601 = vpop.f32.mrb[0].mxu0
      %v3602 = vpop.f32.mrb[0].mxu0
      %v3603 = vadd.f32 %v3442, %v3602
      %v3604 = vpop.f32.mrb[0].mxu0
      %3605 = vmatprep.mubr.bf16.mxu0 0
      %3606 = vmatmul.mubr.bf16.gmra.mrb[0].mxu0 %v2275
      %v3607 = vpop.f32.mrb[0].mxu0
      %v3608 = vadd.f32 %v3447, %v3607
      %v3609 = vpop.f32.mrb[0].mxu0
      %v3610 = vpop.f32.mrb[0].mxu0
      %v3611 = vadd.f32 %v3450, %v3610
      %v3612 = vpop.f32.mrb[0].mxu0
      %3613 = vmatprep.mubr.bf16.mxu0 0
      %3614 = vmatmul.mubr.bf16.gmra.mrb[0].mxu0 %v2278
      %v3615 = vpop.f32.mrb[0].mxu0
      %v3616 = vadd.f32 %v3455, %v3615
      %v3617 = vpop.f32.mrb[0].mxu0
      %v3618 = vpop.f32.mrb[0].mxu0
      %v3619 = vadd.f32 %v3458, %v3618
      %v3620 = vpop.f32.mrb[0].mxu0
      %3621 = vmatprep.mubr.bf16.mxu0 0
      %3622 = vmatmul.mubr.bf16.gmra.mrb[0].mxu0 %v2281
      %v3623 = vpop.f32.mrb[0].mxu0
      %v3624 = vadd.f32 %v3463, %v3623
      %v3625 = vpop.f32.mrb[0].mxu0
      %v3626 = vpop.f32.mrb[0].mxu0
      %v3627 = vadd.f32 %v3466, %v3626
      %v3628 = vpop.f32.mrb[0].mxu0
      %3629 = vmatprep.mubr.bf16.mxu0 0
      %3630 = vmatmul.mubr.bf16.gmra.mrb[0].mxu0 %v2284
      %v3631 = vpop.f32.mrb[0].mxu0
      %v3632 = vadd.f32 %v3471, %v3631
      %v3633 = vpop.f32.mrb[0].mxu0
      %v3634 = vpop.f32.mrb[0].mxu0
      %v3635 = vadd.f32 %v3474, %v3634
      %v3636 = vpop.f32.mrb[0].mxu0
      %3637 = vmatprep.mubr.bf16.mxu0 0
      %3638 = vmatmul.mubr.bf16.gmra.mrb[0].mxu0 %v2287
      %v3639 = vpop.f32.mrb[0].mxu0
      %v3640 = vadd.f32 %v3479, %v3639
      %v3641 = vpop.f32.mrb[0].mxu0
      %v3642 = vpop.f32.mrb[0].mxu0
      %v3643 = vadd.f32 %v3482, %v3642
      %v3644 = vpop.f32.mrb[0].mxu0
      %3645 = vmatprep.mubr.bf16.mxu0 0
      %3646 = vmatmul.mubr.bf16.gmra.mrb[0].mxu0 %v2290
      %v3647 = vpop.f32.mrb[0].mxu0
      %v3648 = vadd.f32 %v3487, %v3647
      %v3649 = vpop.f32.mrb[0].mxu0
      %v3650 = vpop.f32.mrb[0].mxu0
      %v3651 = vadd.f32 %v3490, %v3650
      %v3652 = vpop.f32.mrb[0].mxu0
      %3653 = vmatprep.mubr.bf16.mxu0 0
      %3654 = vmatmul.mubr.bf16.gmra.mrb[0].mxu0 %v2293
      %v3655 = vpop.f32.mrb[0].mxu0
      %v3656 = vadd.f32 %v3495, %v3655
      %v3657 = vpop.f32.mrb[0].mxu0
      %v3658 = vpop.f32.mrb[0].mxu0
      %v3659 = vadd.f32 %v3498, %v3658
      %v3660 = vpop.f32.mrb[0].mxu0
      %3661 = vmatprep.mubr.bf16.mxu0 0
      %3662 = vmatmul.mubr.bf16.gmra.mrb[0].mxu0 %v2296
      %v3663 = vpop.f32.mrb[0].mxu0
      %v3664 = vadd.f32 %v3503, %v3663
      %v3665 = vpop.f32.mrb[0].mxu0
      %v3666 = vpop.f32.mrb[0].mxu0
      %v3667 = vadd.f32 %v3506, %v3666
      %v3668 = vpop.f32.mrb[0].mxu0
      %3669 = vmatprep.mubr.bf16.mxu0 0
      %3670 = vmatmul.mubr.bf16.gmra.mrb[0].mxu0 %v2299
      %v3671 = vpop.f32.mrb[0].mxu0
      %v3672 = vadd.f32 %v3511, %v3671
      %v3673 = vpop.f32.mrb[0].mxu0
      %v3674 = vpop.f32.mrb[0].mxu0
      %v3675 = vadd.f32 %v3514, %v3674
      %v3676 = vpop.f32.mrb[0].mxu0
      %3677 = vmatprep.mubr.bf16.mxu0 0
      %3678 = vmatmul.mubr.bf16.gmra.mrb[0].mxu0 %v2302
      %v3679 = vpop.f32.mrb[0].mxu0
      %v3680 = vadd.f32 %v3519, %v3679
      %v3681 = vpop.f32.mrb[0].mxu0
      %v3682 = vpop.f32.mrb[0].mxu0
      %v3683 = vadd.f32 %v3522, %v3682
      %v3684 = vpop.f32.mrb[0].mxu0
      %3685 = vmatprep.mubr.bf16.mxu0 0
      %3686 = vmatmul.mubr.bf16.gmra.mrb[0].mxu0 %v2305
      %v3687 = vpop.f32.mrb[0].mxu0
      %v3688 = vadd.f32 %v3527, %v3687
      %v3689 = vpop.f32.mrb[0].mxu0
      %v3690 = vpop.f32.mrb[0].mxu0
      %v3691 = vadd.f32 %v3530, %v3690
      %v3692 = vpop.f32.mrb[0].mxu0
      %3693 = vdwg.mxu0
      %v3694 = vadd.f32 %v3568, %v3571
      %v3695 = vadd.f32 %v3694, %v3576
      %v3696 = vadd.f32 %v3695, %v3579
      %v3697 = vadd.f32 %v3696, %v3584
      %v3698 = vadd.f32 %v3697, %v3587
      %v3699 = vadd.f32 %v3698, %v3592
      %v3700 = vadd.f32 %v3699, %v3595
      %v3701 = vadd.f32 %v3700, %v3600
      %v3702 = vadd.f32 %v3701, %v3603
      %v3703 = vadd.f32 %v3702, %v3608
      %v3704 = vadd.f32 %v3703, %v3611
      %v3705 = vadd.f32 %v3704, %v3616
      %v3706 = vadd.f32 %v3705, %v3619
      %v3707 = vadd.f32 %v3706, %v3624
      %v3708 = vadd.f32 %v3707, %v3627
      %v3709 = vadd.f32 %v3708, %v3632
      %v3710 = vadd.f32 %v3709, %v3635
      %v3711 = vadd.f32 %v3710, %v3640
      %v3712 = vadd.f32 %v3711, %v3643
      %v3713 = vadd.f32 %v3712, %v3648
      %v3714 = vadd.f32 %v3713, %v3651
      %v3715 = vadd.f32 %v3714, %v3656
      %v3716 = vadd.f32 %v3715, %v3659
      %v3717 = vadd.f32 %v3716, %v3664
      %v3718 = vadd.f32 %v3717, %v3667
      %v3719 = vadd.f32 %v3718, %v3672
      %v3720 = vadd.f32 %v3719, %v3675
      %v3721 = vadd.f32 %v3720, %v3680
      %v3722 = vadd.f32 %v3721, %v3683
      %v3723 = vadd.f32 %v3722, %v3688
      %v3724 = vadd.f32 %v3723, %v3691
      %v3725 = vrot.slane %v3724, 4
      %v3726 = vadd.f32 %v3724, %v3725
      %v3727 = vrot.slane %v3726, 2
      %v3728 = vadd.f32 %v3726, %v3727
      %v3729 = vrot.slane %v3728, 1
      %v3730 = vadd.f32 %v3728, %v3729
      %v3731 = vmul.f32 %v3568, %v3568
      %v3732 = vmul.f32 %v3571, %v3571
      %v3733 = vmul.f32 %v3576, %v3576
      %v3734 = vmul.f32 %v3579, %v3579
      %v3735 = vmul.f32 %v3584, %v3584
      %v3736 = vmul.f32 %v3587, %v3587
      %v3737 = vmul.f32 %v3592, %v3592
      %v3738 = vmul.f32 %v3595, %v3595
      %v3739 = vmul.f32 %v3600, %v3600
      %v3740 = vmul.f32 %v3603, %v3603
      %v3741 = vmul.f32 %v3608, %v3608
      %v3742 = vmul.f32 %v3611, %v3611
      %v3743 = vmul.f32 %v3616, %v3616
      %v3744 = vmul.f32 %v3619, %v3619
      %v3745 = vmul.f32 %v3624, %v3624
      %v3746 = vmul.f32 %v3627, %v3627
      %v3747 = vmul.f32 %v3632, %v3632
      %v3748 = vmul.f32 %v3635, %v3635
      %v3749 = vmul.f32 %v3640, %v3640
      %v3750 = vmul.f32 %v3643, %v3643
      %v3751 = vmul.f32 %v3648, %v3648
      %v3752 = vmul.f32 %v3651, %v3651
      %v3753 = vmul.f32 %v3656, %v3656
      %v3754 = vmul.f32 %v3659, %v3659
      %v3755 = vmul.f32 %v3664, %v3664
      %v3756 = vmul.f32 %v3667, %v3667
      %v3757 = vmul.f32 %v3672, %v3672
      %v3758 = vmul.f32 %v3675, %v3675
      %v3759 = vmul.f32 %v3680, %v3680
      %v3760 = vmul.f32 %v3683, %v3683
      %v3761 = vmul.f32 %v3688, %v3688
      %v3762 = vmul.f32 %v3691, %v3691
      %v3763 = vadd.f32 %v3731, %v3732
      %v3764 = vadd.f32 %v3763, %v3733
      %v3765 = vadd.f32 %v3764, %v3734
      %v3766 = vadd.f32 %v3765, %v3735
      %v3767 = vadd.f32 %v3766, %v3736
      %v3768 = vadd.f32 %v3767, %v3737
      %v3769 = vadd.f32 %v3768, %v3738
      %v3770 = vadd.f32 %v3769, %v3739
      %v3771 = vadd.f32 %v3770, %v3740
      %v3772 = vadd.f32 %v3771, %v3741
      %v3773 = vadd.f32 %v3772, %v3742
      %v3774 = vadd.f32 %v3773, %v3743
      %v3775 = vadd.f32 %v3774, %v3744
      %v3776 = vadd.f32 %v3775, %v3745
      %v3777 = vadd.f32 %v3776, %v3746
      %v3778 = vadd.f32 %v3777, %v3747
      %v3779 = vadd.f32 %v3778, %v3748
      %v3780 = vadd.f32 %v3779, %v3749
      %v3781 = vadd.f32 %v3780, %v3750
      %v3782 = vadd.f32 %v3781, %v3751
      %v3783 = vadd.f32 %v3782, %v3752
      %v3784 = vadd.f32 %v3783, %v3753
      %v3785 = vadd.f32 %v3784, %v3754
      %v3786 = vadd.f32 %v3785, %v3755
      %v3787 = vadd.f32 %v3786, %v3756
      %v3788 = vadd.f32 %v3787, %v3757
      %v3789 = vadd.f32 %v3788, %v3758
      %v3790 = vadd.f32 %v3789, %v3759
      %v3791 = vadd.f32 %v3790, %v3760
      %v3792 = vadd.f32 %v3791, %v3761
      %v3793 = vadd.f32 %v3792, %v3762
      %v3794 = vrot.slane %v3793, 4
      %v3795 = vadd.f32 %v3793, %v3794
      %v3796 = vrot.slane %v3795, 2
      %v3797 = vadd.f32 %v3795, %v3796
      %v3798 = vrot.slane %v3797, 1
      %v3799 = vadd.f32 %v3797, %v3798
      %3800 = vst [vmem:[%s361] sm:$0xff] %v3730
      %3801 = vst [vmem:[%s365] sm:$0xff] %v3799
      %3802 = vst [vmem:[%s357] sm:$0xff] 0.0
      %3803 = vst [vmem:[%s357 + $0x8] sm:$0xff] 0.0
      %3804 = vst [vmem:[%s357 + $0x10] sm:$0xff] 0.0
      %3805 = vst [vmem:[%s357 + $0x18] sm:$0xff] 0.0
      %3806 = vst [vmem:[%s357 + $0x20] sm:$0xff] 0.0
      %3807 = vst [vmem:[%s357 + $0x28] sm:$0xff] 0.0
      %3808 = vst [vmem:[%s357 + $0x30] sm:$0xff] 0.0
      %3809 = vst [vmem:[%s357 + $0x38] sm:$0xff] 0.0
      %3810 = vst [vmem:[%s357 + $0x40] sm:$0xff] 0.0
      %3811 = vst [vmem:[%s357 + $0x48] sm:$0xff] 0.0
      %3812 = vst [vmem:[%s357 + $0x50] sm:$0xff] 0.0
      %3813 = vst [vmem:[%s357 + $0x58] sm:$0xff] 0.0
      %3814 = vst [vmem:[%s357 + $0x60] sm:$0xff] 0.0
      %3815 = vst [vmem:[%s357 + $0x68] sm:$0xff] 0.0
      %3816 = vst [vmem:[%s357 + $0x70] sm:$0xff] 0.0
      %3817 = vst [vmem:[%s357 + $0x78] sm:$0xff] 0.0
      %3818 = vst [vmem:[%s357 + $0x80] sm:$0xff] 0.0
      %3819 = vst [vmem:[%s357 + $0x88] sm:$0xff] 0.0
      %3820 = vst [vmem:[%s357 + $0x90] sm:$0xff] 0.0
      %3821 = vst [vmem:[%s357 + $0x98] sm:$0xff] 0.0
      %3822 = vst [vmem:[%s357 + $0xa0] sm:$0xff] 0.0
      %3823 = vst [vmem:[%s357 + $0xa8] sm:$0xff] 0.0
      %3824 = vst [vmem:[%s357 + $0xb0] sm:$0xff] 0.0
      %3825 = vst [vmem:[%s357 + $0xb8] sm:$0xff] 0.0
      %3826 = vst [vmem:[%s357 + $0xc0] sm:$0xff] 0.0
      %3827 = vst [vmem:[%s357 + $0xc8] sm:$0xff] 0.0
      %3828 = vst [vmem:[%s357 + $0xd0] sm:$0xff] 0.0
      %3829 = vst [vmem:[%s357 + $0xd8] sm:$0xff] 0.0
      %3830 = vst [vmem:[%s357 + $0xe0] sm:$0xff] 0.0
      %3831 = vst [vmem:[%s357 + $0xe8] sm:$0xff] 0.0
      %3832 = vst [vmem:[%s357 + $0xf0] sm:$0xff] 0.0
      %3833 = vst [vmem:[%s357 + $0xf8] sm:$0xff] 0.0
      %3834 = vst [vmem:[%s357 + $0x100] sm:$0xff] 0.0
      %3835 = vst [vmem:[%s357 + $0x108] sm:$0xff] 0.0
      %3836 = vst [vmem:[%s357 + $0x110] sm:$0xff] 0.0
      %3837 = vst [vmem:[%s357 + $0x118] sm:$0xff] 0.0
      %3838 = vst [vmem:[%s357 + $0x120] sm:$0xff] 0.0
      %3839 = vst [vmem:[%s357 + $0x128] sm:$0xff] 0.0
      %3840 = vst [vmem:[%s357 + $0x130] sm:$0xff] 0.0
      %3841 = vst [vmem:[%s357 + $0x138] sm:$0xff] 0.0
      %3842 = vst [vmem:[%s357 + $0x140] sm:$0xff] 0.0
      %3843 = vst [vmem:[%s357 + $0x148] sm:$0xff] 0.0
      %3844 = vst [vmem:[%s357 + $0x150] sm:$0xff] 0.0
      %3845 = vst [vmem:[%s357 + $0x158] sm:$0xff] 0.0
      %3846 = vst [vmem:[%s357 + $0x160] sm:$0xff] 0.0
      %3847 = vst [vmem:[%s357 + $0x168] sm:$0xff] 0.0
      %3848 = vst [vmem:[%s357 + $0x170] sm:$0xff] 0.0
      %3849 = vst [vmem:[%s357 + $0x178] sm:$0xff] 0.0
      %3850 = vst [vmem:[%s357 + $0x180] sm:$0xff] 0.0
      %3851 = vst [vmem:[%s357 + $0x188] sm:$0xff] 0.0
      %3852 = vst [vmem:[%s357 + $0x190] sm:$0xff] 0.0
      %3853 = vst [vmem:[%s357 + $0x198] sm:$0xff] 0.0
      %3854 = vst [vmem:[%s357 + $0x1a0] sm:$0xff] 0.0
      %3855 = vst [vmem:[%s357 + $0x1a8] sm:$0xff] 0.0
      %3856 = vst [vmem:[%s357 + $0x1b0] sm:$0xff] 0.0
      %3857 = vst [vmem:[%s357 + $0x1b8] sm:$0xff] 0.0
      %3858 = vst [vmem:[%s357 + $0x1c0] sm:$0xff] 0.0
      %3859 = vst [vmem:[%s357 + $0x1c8] sm:$0xff] 0.0
      %3860 = vst [vmem:[%s357 + $0x1d0] sm:$0xff] 0.0
      %3861 = vst [vmem:[%s357 + $0x1d8] sm:$0xff] 0.0
      %3862 = vst [vmem:[%s357 + $0x1e0] sm:$0xff] 0.0
      %3863 = vst [vmem:[%s357 + $0x1e8] sm:$0xff] 0.0
      %3864 = vst [vmem:[%s357 + $0x1f0] sm:$0xff] 0.0
      %3865 = vst [vmem:[%s357 + $0x1f8] sm:$0xff] 0.0
      %3866 = vst [vmem:[%s357 + $0x200] sm:$0xff] 0.0
      %3867 = vst [vmem:[%s357 + $0x208] sm:$0xff] 0.0
      %3868 = vst [vmem:[%s357 + $0x210] sm:$0xff] 0.0
      %3869 = vst [vmem:[%s357 + $0x218] sm:$0xff] 0.0
      %3870 = vst [vmem:[%s357 + $0x220] sm:$0xff] 0.0
      %3871 = vst [vmem:[%s357 + $0x228] sm:$0xff] 0.0
      %3872 = vst [vmem:[%s357 + $0x230] sm:$0xff] 0.0
      %3873 = vst [vmem:[%s357 + $0x238] sm:$0xff] 0.0
      %s3874 = scalar_lea.vmem %s357, 32
      %3875 = vst [vmem:[%s3874 + $0x8] sm:$0xff] %v3568
      %3876 = vst [vmem:[%s3874 + $0x10] sm:$0xff] %v3571
      %3877 = vst [vmem:[%s3874 + $0x28] sm:$0xff] %v3576
      %3878 = vst [vmem:[%s3874 + $0x30] sm:$0xff] %v3579
      %3879 = vst [vmem:[%s3874 + $0x48] sm:$0xff] %v3584
      %3880 = vst [vmem:[%s3874 + $0x50] sm:$0xff] %v3587
      %3881 = vst [vmem:[%s3874 + $0x68] sm:$0xff] %v3592
      %3882 = vst [vmem:[%s3874 + $0x70] sm:$0xff] %v3595
      %3883 = vst [vmem:[%s3874 + $0x88] sm:$0xff] %v3600
      %3884 = vst [vmem:[%s3874 + $0x90] sm:$0xff] %v3603
      %3885 = vst [vmem:[%s3874 + $0xa8] sm:$0xff] %v3608
      %3886 = vst [vmem:[%s3874 + $0xb0] sm:$0xff] %v3611
      %3887 = vst [vmem:[%s3874 + $0xc8] sm:$0xff] %v3616
      %3888 = vst [vmem:[%s3874 + $0xd0] sm:$0xff] %v3619
      %3889 = vst [vmem:[%s3874 + $0xe8] sm:$0xff] %v3624
      %3890 = vst [vmem:[%s3874 + $0xf0] sm:$0xff] %v3627
      %3891 = vst [vmem:[%s3874 + $0x108] sm:$0xff] %v3632
      %3892 = vst [vmem:[%s3874 + $0x110] sm:$0xff] %v3635
      %3893 = vst [vmem:[%s3874 + $0x128] sm:$0xff] %v3640
      %3894 = vst [vmem:[%s3874 + $0x130] sm:$0xff] %v3643
      %3895 = vst [vmem:[%s3874 + $0x148] sm:$0xff] %v3648
      %3896 = vst [vmem:[%s3874 + $0x150] sm:$0xff] %v3651
      %3897 = vst [vmem:[%s3874 + $0x168] sm:$0xff] %v3656
      %3898 = vst [vmem:[%s3874 + $0x170] sm:$0xff] %v3659
      %3899 = vst [vmem:[%s3874 + $0x188] sm:$0xff] %v3664
      %3900 = vst [vmem:[%s3874 + $0x190] sm:$0xff] %v3667
      %3901 = vst [vmem:[%s3874 + $0x1a8] sm:$0xff] %v3672
      %3902 = vst [vmem:[%s3874 + $0x1b0] sm:$0xff] %v3675
      %3903 = vst [vmem:[%s3874 + $0x1c8] sm:$0xff] %v3680
      %3904 = vst [vmem:[%s3874 + $0x1d0] sm:$0xff] %v3683
      %3905 = vst [vmem:[%s3874 + $0x1e8] sm:$0xff] %v3688
      %3906 = vst [vmem:[%s3874 + $0x1f0] sm:$0xff] %v3691
      %p3907 = scmp.lt.s32.totalorder %s21, 1
      %s3908 = scalar_select %p3907, %s21, 1
      %s3909 = smul.addr %s3908, 32
      %s3910 = smul.addr %s3909, 8
      %s3911 = scalar_lea.vmem %s6, %s3910
      %p3912 = scmp.lt.s32.totalorder %s21, 1
      %s3913 = scalar_select %p3912, %s21, 1
      %s3914 = smul.addr %s3913, 72
      %s3915 = smul.addr %s3914, 8
      %s3916 = scalar_lea.vmem %s7, %s3915
      %p3917 = scmp.lt.s32.totalorder %s21, 1
      %s3918 = scalar_select %p3917, %s21, 1
      %s3919 = smul.addr %s3918, 8
      %s3920 = scalar_lea.vmem %s8, %s3919
      %p3921 = scmp.lt.s32.totalorder %s21, 1
      %s3922 = scalar_select %p3921, %s21, 1
      %s3923 = smul.addr %s3922, 8
      %s3924 = scalar_lea.vmem %s9, %s3923
      // Predicated region
      $region45: #{rrb_forward.2} parent=43 // pred_check
        %p3925 = pneg %p170
      $region46: #{rrb_forward.2} parent=43 // pred_check_branch
        %3927 = sbr.rel (%p3925) target = $region48
      $region47: #{rrb_forward.2} parent=43 // pred_region
        _
      $region48: #{rrb_forward.2} parent=43 // pred_fallthru
        _
      // Predicated region
      $region49: #{rrb_forward.2} parent=43 // pred_check
        %p3928 = pneg %p196
      $region50: #{rrb_forward.2} parent=43 // pred_check_branch
        %3930 = sbr.rel (%p3928) target = $region52
      $region51: #{rrb_forward.2} parent=43 // pred_region
        _
      $region52: #{rrb_forward.2} parent=43 // pred_fallthru
        _
      // Predicated region
      $region53: #{rrb_forward.2} parent=43 // pred_check
        %p3931 = pneg %p222
      $region54: #{rrb_forward.2} parent=43 // pred_check_branch
        %3933 = sbr.rel (%p3931) target = $region56
      $region55: #{rrb_forward.2} parent=43 // pred_region
        _
      $region56: #{rrb_forward.2} parent=43 // pred_fallthru
        _
      // Predicated region
      $region57: #{rrb_forward.2} parent=43 // pred_check
        %p3934 = pneg %p248
      $region58: #{rrb_forward.2} parent=43 // pred_check_branch
        %3936 = sbr.rel (%p3934) target = $region60
      $region59: #{rrb_forward.2} parent=43 // pred_region
        _
      $region60: #{rrb_forward.2} parent=43 // pred_fallthru
        _
    $region44: #{rrb_forward.2} parent=5 // pred_fallthru
      _
    %p3937 = scmp.le.s32.totalorder 2, %s16
    // Predicated region
    $region61: #{rrb_forward.2} parent=5 // pred_check
      %p3938 = pneg %p3937
    $region62: #{rrb_forward.2} parent=5 // pred_check_branch
      %3940 = sbr.rel (%p3938) target = $region64
    $region63: #{rrb_forward.2} parent=5 // pred_region
      %s3941 = ssub.s32 %s16, 2
      // Predicated region
      $region65: #{rrb_forward.2} parent=63 // pred_check
        %p3942 = pneg %p176
      $region66: #{rrb_forward.2} parent=63 // pred_check_branch
        %3944 = sbr.rel (%p3942) target = $region68
      $region67: #{rrb_forward.2} parent=63 // pred_region
        %p3945 = scmp.lt.s32.totalorder %s22, 1
        %s3946 = scalar_select %p3945, %s22, 1
        %s3947 = smul.addr %s3946, 32
        %s3948 = smul.addr %s3947, 8
        %s3949 = scalar_lea.vmem %s6, %s3948
      $region68: #{rrb_forward.2} parent=63 // pred_fallthru
        _
      // Predicated region
      $region69: #{rrb_forward.2} parent=63 // pred_check
        %p3950 = pneg %p202
      $region70: #{rrb_forward.2} parent=63 // pred_check_branch
        %3952 = sbr.rel (%p3950) target = $region72
      $region71: #{rrb_forward.2} parent=63 // pred_region
        %p3953 = scmp.lt.s32.totalorder %s22, 1
        %s3954 = scalar_select %p3953, %s22, 1
        %s3955 = smul.addr %s3954, 72
        %s3956 = smul.addr %s3955, 8
        %s3957 = scalar_lea.vmem %s7, %s3956
      $region72: #{rrb_forward.2} parent=63 // pred_fallthru
        _
      // Predicated region
      $region73: #{rrb_forward.2} parent=63 // pred_check
        %p3958 = pneg %p228
      $region74: #{rrb_forward.2} parent=63 // pred_check_branch
        %3960 = sbr.rel (%p3958) target = $region76
      $region75: #{rrb_forward.2} parent=63 // pred_region
        %p3961 = scmp.lt.s32.totalorder %s22, 1
        %s3962 = scalar_select %p3961, %s22, 1
        %s3963 = smul.addr %s3962, 8
        %s3964 = scalar_lea.vmem %s8, %s3963
      $region76: #{rrb_forward.2} parent=63 // pred_fallthru
        _
      // Predicated region
      $region77: #{rrb_forward.2} parent=63 // pred_check
        %p3965 = pneg %p254
      $region78: #{rrb_forward.2} parent=63 // pred_check_branch
        %3967 = sbr.rel (%p3965) target = $region80
      $region79: #{rrb_forward.2} parent=63 // pred_region
        %p3968 = scmp.lt.s32.totalorder %s22, 1
        %s3969 = scalar_select %p3968, %s22, 1
        %s3970 = smul.addr %s3969, 8
        %s3971 = scalar_lea.vmem %s9, %s3970
      $region80: #{rrb_forward.2} parent=63 // pred_fallthru
        _
    $region64: #{rrb_forward.2} parent=5 // pred_fallthru
      _
  $region6: #{rrb_forward.2} parent=0 // loop_footer
    %s20 = sadd.s32 1, %s16
  $region7: #{rrb_forward.2} parent=0 // loop_footer_branch
    %15 = sbr.rel target = $region3
  $region8: #{rrb_forward.2} parent=0 // loop_exit
    _

// kernel: rrb_forward.3
$region0: #{rrb_forward.3}
  #allocation0 [shape = 'u32[]', space=smem, size = 0x4, offset = 0x4, fixed_abs, tag = 'smem constant byte address 0x4 - core index']
  #allocation1 [shape = 'u32[144,128]{1,0:T(1,128)}', space=vmem, size = 0x12000, scoped, tag = 'internal scratch']
  %s0 = inlined_call_operand.vmem [shape: f32[2,18,32,128], index: 0, kind: input, shape index: {}]
  %s1 = inlined_call_operand.vmem [shape: f32[1,128], index: 1, kind: input, shape index: {}]
  %s2 = inlined_call_operand.vmem [shape: f32[1,128], index: 2, kind: input, shape index: {}]
  %s3 = inlined_call_operand.vmem [shape: f32[18,32,1], index: 3, kind: input, shape index: {}]
  %s4 = inlined_call_operand.vmem [shape: bf16[1152,128], index: 4, kind: input, shape index: {}]
  %s5 = inlined_call_operand.vmem [shape: f32[1,128], index: 5, kind: input, shape index: {}]
  %s6 = inlined_call_operand.vmem [shape: f32[2,256,128], index: 6, kind: input, shape index: {}]
  %s7 = inlined_call_operand.vmem [shape: f32[2,256,128], index: 7, kind: output, shape index: {}]
  %s8 = sld [smem:[#allocation0]]
  $region61: #{rrb_forward.3} parent=0
    _
  %s10 = ssub.s32 1, %s8
  %s11 = scalar_select 0, %s10, %s8
  loop: start=0, step=1, limit=4
  $region2: #{rrb_forward.3} parent=0 // loop_pre_header
    _
  $region3: #{rrb_forward.3} parent=0 // loop_header
    %s13 = sphi 0, %s17
    %p14 = scmp.ge.s32.totalorder %s13, 4
    %s23 = sphi 0, %s25
    %s26 = sphi 0, %s23
    %s27 = sphi 0, %s26
    %s43 = sphi 0, %s27
    %s47 = sphi 0, %s47
    %s49 = sphi 0, %s47
    %s50 = sphi 0, %s49
    %s64 = sphi 0, %s50
    %s68 = sphi 0, %s68
    %s70 = sphi 0, %s68
    %s71 = sphi 0, %s70
    %s85 = sphi 0, %s71
    %s89 = sphi 0, %s89
    %s91 = sphi 0, %s89
    %s92 = sphi 0, %s91
    %s106 = sphi 0, %s92
    %s110 = sphi 0, %s110
    %s112 = sphi 0, %s110
    %s113 = sphi 0, %s112
    %s127 = sphi 0, %s113
    %s131 = sphi 0, %s131
    %s133 = sphi 0, %s131
    %s134 = sphi 0, %s133
    %s148 = sphi 0, %s134
    %s154 = sphi 0, %s156
    %s157 = sphi 0, %s154
    %s158 = sphi 0, %s157
    %s174 = sphi 0, %s158
    %s180 = sphi 0, %s182
    %s183 = sphi 0, %s180
    %s184 = sphi 0, %s183
    %s200 = sphi 0, %s184
  $region4: #{rrb_forward.3} parent=0 // loop_header_branch
    %16 = sbr.rel (%p14) target = $region8
  $region5: #{rrb_forward.3} parent=0 // loop_body
    %s18 = ssub.s32 %s13, 1
    %s19 = ssub.s32 %s13, 2
    %s20 = sadd.s32 %s13, 1
    %s21 = ssub.s32 %s13, %s20
    %p22 = scmp.eq.s32.totalorder %s21, 0
    %s24 = sadd.s32 %s23, 1
    %s25 = scalar_select %p22, %s23, %s24
    %p28 = pneg %p22
    %p29 = scmp.eq.s32.totalorder %s13, 1
    %p30 = por %p28, %p29
    %p31 = scmp.ne.s32.totalorder %s23, %s26
    %p32 = scmp.eq.s32.totalorder %s13, 0
    %p33 = por %p31, %p32
    %p34 = scmp.ne.s32.totalorder %s23, %s26
    %p35 = scmp.eq.s32.totalorder %s18, 1
    %p36 = por %p34, %p35
    %p37 = scmp.ne.s32.totalorder %s26, %s27
    %p38 = scmp.eq.s32.totalorder %s18, 0
    %p39 = por %p37, %p38
    %p40 = scmp.ne.s32.totalorder %s26, %s27
    %p41 = scmp.eq.s32.totalorder %s19, 1
    %p42 = por %p40, %p41
    %p44 = scmp.ne.s32.totalorder %s27, %s43
    %p45 = scmp.eq.s32.totalorder %s19, 0
    %p46 = por %p44, %p45
    %s48 = sadd.s32 %s47, 1
    %p51 = scmp.eq.s32.totalorder %s13, 1
    %p52 = scmp.ne.s32.totalorder %s47, %s49
    %p53 = scmp.eq.s32.totalorder %s13, 0
    %p54 = por %p52, %p53
    %p55 = scmp.ne.s32.totalorder %s47, %s49
    %p56 = scmp.eq.s32.totalorder %s18, 1
    %p57 = por %p55, %p56
    %p58 = scmp.ne.s32.totalorder %s49, %s50
    %p59 = scmp.eq.s32.totalorder %s18, 0
    %p60 = por %p58, %p59
    %p61 = scmp.ne.s32.totalorder %s49, %s50
    %p62 = scmp.eq.s32.totalorder %s19, 1
    %p63 = por %p61, %p62
    %p65 = scmp.ne.s32.totalorder %s50, %s64
    %p66 = scmp.eq.s32.totalorder %s19, 0
    %p67 = por %p65, %p66
    %s69 = sadd.s32 %s68, 1
    %p72 = scmp.eq.s32.totalorder %s13, 1
    %p73 = scmp.ne.s32.totalorder %s68, %s70
    %p74 = scmp.eq.s32.totalorder %s13, 0
    %p75 = por %p73, %p74
    %p76 = scmp.ne.s32.totalorder %s68, %s70
    %p77 = scmp.eq.s32.totalorder %s18, 1
    %p78 = por %p76, %p77
    %p79 = scmp.ne.s32.totalorder %s70, %s71
    %p80 = scmp.eq.s32.totalorder %s18, 0
    %p81 = por %p79, %p80
    %p82 = scmp.ne.s32.totalorder %s70, %s71
    %p83 = scmp.eq.s32.totalorder %s19, 1
    %p84 = por %p82, %p83
    %p86 = scmp.ne.s32.totalorder %s71, %s85
    %p87 = scmp.eq.s32.totalorder %s19, 0
    %p88 = por %p86, %p87
    %s90 = sadd.s32 %s89, 1
    %p93 = scmp.eq.s32.totalorder %s13, 1
    %p94 = scmp.ne.s32.totalorder %s89, %s91
    %p95 = scmp.eq.s32.totalorder %s13, 0
    %p96 = por %p94, %p95
    %p97 = scmp.ne.s32.totalorder %s89, %s91
    %p98 = scmp.eq.s32.totalorder %s18, 1
    %p99 = por %p97, %p98
    %p100 = scmp.ne.s32.totalorder %s91, %s92
    %p101 = scmp.eq.s32.totalorder %s18, 0
    %p102 = por %p100, %p101
    %p103 = scmp.ne.s32.totalorder %s91, %s92
    %p104 = scmp.eq.s32.totalorder %s19, 1
    %p105 = por %p103, %p104
    %p107 = scmp.ne.s32.totalorder %s92, %s106
    %p108 = scmp.eq.s32.totalorder %s19, 0
    %p109 = por %p107, %p108
    %s111 = sadd.s32 %s110, 1
    %p114 = scmp.eq.s32.totalorder %s13, 1
    %p115 = scmp.ne.s32.totalorder %s110, %s112
    %p116 = scmp.eq.s32.totalorder %s13, 0
    %p117 = por %p115, %p116
    %p118 = scmp.ne.s32.totalorder %s110, %s112
    %p119 = scmp.eq.s32.totalorder %s18, 1
    %p120 = por %p118, %p119
    %p121 = scmp.ne.s32.totalorder %s112, %s113
    %p122 = scmp.eq.s32.totalorder %s18, 0
    %p123 = por %p121, %p122
    %p124 = scmp.ne.s32.totalorder %s112, %s113
    %p125 = scmp.eq.s32.totalorder %s19, 1
    %p126 = por %p124, %p125
    %p128 = scmp.ne.s32.totalorder %s113, %s127
    %p129 = scmp.eq.s32.totalorder %s19, 0
    %p130 = por %p128, %p129
    %s132 = sadd.s32 %s131, 1
    %p135 = scmp.eq.s32.totalorder %s13, 1
    %p136 = scmp.ne.s32.totalorder %s131, %s133
    %p137 = scmp.eq.s32.totalorder %s13, 0
    %p138 = por %p136, %p137
    %p139 = scmp.ne.s32.totalorder %s131, %s133
    %p140 = scmp.eq.s32.totalorder %s18, 1
    %p141 = por %p139, %p140
    %p142 = scmp.ne.s32.totalorder %s133, %s134
    %p143 = scmp.eq.s32.totalorder %s18, 0
    %p144 = por %p142, %p143
    %p145 = scmp.ne.s32.totalorder %s133, %s134
    %p146 = scmp.eq.s32.totalorder %s19, 1
    %p147 = por %p145, %p146
    %p149 = scmp.ne.s32.totalorder %s134, %s148
    %p150 = scmp.eq.s32.totalorder %s19, 0
    %p151 = por %p149, %p150
    %s152 = ssub.s32 %s13, %s20
    %p153 = scmp.eq.s32.totalorder %s152, 0
    %s155 = sadd.s32 %s154, 1
    %s156 = scalar_select %p153, %s154, %s155
    %p159 = pneg %p153
    %p160 = scmp.eq.s32.totalorder %s13, 1
    %p161 = por %p159, %p160
    %p162 = scmp.ne.s32.totalorder %s154, %s157
    %p163 = scmp.eq.s32.totalorder %s13, 0
    %p164 = por %p162, %p163
    %p165 = scmp.ne.s32.totalorder %s154, %s157
    %p166 = scmp.eq.s32.totalorder %s18, 1
    %p167 = por %p165, %p166
    %p168 = scmp.ne.s32.totalorder %s157, %s158
    %p169 = scmp.eq.s32.totalorder %s18, 0
    %p170 = por %p168, %p169
    %p171 = scmp.ne.s32.totalorder %s157, %s158
    %p172 = scmp.eq.s32.totalorder %s19, 1
    %p173 = por %p171, %p172
    %p175 = scmp.ne.s32.totalorder %s158, %s174
    %p176 = scmp.eq.s32.totalorder %s19, 0
    %p177 = por %p175, %p176
    %s178 = ssub.s32 %s13, %s20
    %p179 = scmp.eq.s32.totalorder %s178, 0
    %s181 = sadd.s32 %s180, 1
    %s182 = scalar_select %p179, %s180, %s181
    %p185 = pneg %p179
    %p186 = scmp.eq.s32.totalorder %s13, 1
    %p187 = por %p185, %p186
    %p188 = scmp.ne.s32.totalorder %s180, %s183
    %p189 = scmp.eq.s32.totalorder %s13, 0
    %p190 = por %p188, %p189
    %p191 = scmp.ne.s32.totalorder %s180, %s183
    %p192 = scmp.eq.s32.totalorder %s18, 1
    %p193 = por %p191, %p192
    %p194 = scmp.ne.s32.totalorder %s183, %s184
    %p195 = scmp.eq.s32.totalorder %s18, 0
    %p196 = por %p194, %p195
    %p197 = scmp.ne.s32.totalorder %s183, %s184
    %p198 = scmp.eq.s32.totalorder %s19, 1
    %p199 = por %p197, %p198
    %p201 = scmp.ne.s32.totalorder %s184, %s200
    %p202 = scmp.eq.s32.totalorder %s19, 0
    %p203 = por %p201, %p202
    %p204 = scmp.le.s32.totalorder 1, %s13
    %p205 = scmp.lt.s32.totalorder %s13, 3
    %p206 = pnand %p204, %p205
    %p207 = pneg %p206
    // Predicated region
    $region9: #{rrb_forward.3} parent=5 // pred_check
      _
    $region10: #{rrb_forward.3} parent=5 // pred_check_branch
      %209 = sbr.rel (%p206) target = $region12
    $region11: #{rrb_forward.3} parent=5 // pred_region
      %s210 = ssub.s32 %s13, 1
      // Predicated region
      $region13: #{rrb_forward.3} parent=11 // pred_check
        %p211 = pneg %p60
      $region14: #{rrb_forward.3} parent=11 // pred_check_branch
        %213 = sbr.rel (%p211) target = $region16
      $region15: #{rrb_forward.3} parent=11 // pred_region
        _
      $region16: #{rrb_forward.3} parent=11 // pred_fallthru
        _
      // Predicated region
      $region17: #{rrb_forward.3} parent=11 // pred_check
        %p214 = pneg %p81
      $region18: #{rrb_forward.3} parent=11 // pred_check_branch
        %216 = sbr.rel (%p214) target = $region20
      $region19: #{rrb_forward.3} parent=11 // pred_region
        _
      $region20: #{rrb_forward.3} parent=11 // pred_fallthru
        _
      // Predicated region
      $region21: #{rrb_forward.3} parent=11 // pred_check
        %p217 = pneg %p102
      $region22: #{rrb_forward.3} parent=11 // pred_check_branch
        %219 = sbr.rel (%p217) target = $region24
      $region23: #{rrb_forward.3} parent=11 // pred_region
        _
      $region24: #{rrb_forward.3} parent=11 // pred_fallthru
        _
      // Predicated region
      $region25: #{rrb_forward.3} parent=11 // pred_check
        %p220 = pneg %p123
      $region26: #{rrb_forward.3} parent=11 // pred_check_branch
        %222 = sbr.rel (%p220) target = $region28
      $region27: #{rrb_forward.3} parent=11 // pred_region
        _
      $region28: #{rrb_forward.3} parent=11 // pred_fallthru
        _
      // Predicated region
      $region29: #{rrb_forward.3} parent=11 // pred_check
        %p223 = pneg %p144
      $region30: #{rrb_forward.3} parent=11 // pred_check_branch
        %225 = sbr.rel (%p223) target = $region32
      $region31: #{rrb_forward.3} parent=11 // pred_region
        _
      $region32: #{rrb_forward.3} parent=11 // pred_fallthru
        _
    $region12: #{rrb_forward.3} parent=5 // pred_fallthru
      _
    %p226 = scmp.lt.s32.totalorder %s13, 2
    // Predicated region
    $region33: #{rrb_forward.3} parent=5 // pred_check
      %p227 = pneg %p226
    $region34: #{rrb_forward.3} parent=5 // pred_check_branch
      %229 = sbr.rel (%p227) target = $region36
    $region35: #{rrb_forward.3} parent=5 // pred_region
      // Predicated region
      $region37: #{rrb_forward.3} parent=35 // pred_check
        %p230 = pneg %p33
      $region38: #{rrb_forward.3} parent=35 // pred_check_branch
        %232 = sbr.rel (%p230) target = $region40
      $region39: #{rrb_forward.3} parent=35 // pred_region
        %p233 = scmp.lt.s32.totalorder %s13, 1
        %s234 = scalar_select %p233, %s13, 1
        %s235 = smul.addr %s234, 72
        %s236 = smul.addr %s235, 8
        %s237 = scalar_lea.vmem %s0, %s236
      $region40: #{rrb_forward.3} parent=35 // pred_fallthru
        _
      // Predicated region
      $region41: #{rrb_forward.3} parent=35 // pred_check
        %p238 = pneg %p164
      $region42: #{rrb_forward.3} parent=35 // pred_check_branch
        %240 = sbr.rel (%p238) target = $region44
      $region43: #{rrb_forward.3} parent=35 // pred_region
        %p241 = scmp.lt.s32.totalorder %s13, 1
        %s242 = scalar_select %p241, %s13, 1
        %s243 = smul.addr %s242, 32
        %s244 = smul.addr %s243, 8
        %s245 = scalar_lea.vmem %s6, %s244
      $region44: #{rrb_forward.3} parent=35 // pred_fallthru
        _
    $region36: #{rrb_forward.3} parent=5 // pred_fallthru
      _
    %p246 = scmp.le.s32.totalorder 1, %s13
    %p247 = scmp.lt.s32.totalorder %s13, 3
    %p248 = pnand %p246, %p247
    %p249 = pneg %p248
    // Predicated region
    $region45: #{rrb_forward.3} parent=5 // pred_check
      _
    $region46: #{rrb_forward.3} parent=5 // pred_check_branch
      %251 = sbr.rel (%p248) target = $region48
    $region47: #{rrb_forward.3} parent=5 // pred_region
      %s252 = ssub.s32 %s13, 1
      %p253 = scmp.lt.s32.totalorder %s18, 1
      %s254 = scalar_select %p253, %s18, 1
      %s255 = smul.addr %s254, 72
      %s256 = smul.addr %s255, 8
      %s257 = scalar_lea.vmem %s0, %s256
      %p258 = pneg %p39
      %p259 = pneg %p36
      %p260 = pneg %p60
      %p261 = pneg %p57
      %p262 = pneg %p81
      %p263 = pneg %p78
      %p264 = pneg %p102
      %p265 = pneg %p99
      %p266 = pneg %p123
      %p267 = pneg %p120
      %p268 = pneg %p144
      %p269 = pneg %p141
      %p270 = scmp.lt.s32.totalorder %s18, 1
      %s271 = scalar_select %p270, %s18, 1
      %s272 = smul.addr %s271, 32
      %s273 = smul.addr %s272, 8
      %s274 = scalar_lea.vmem %s6, %s273
      %p275 = pneg %p170
      %p276 = pneg %p167
      %p277 = pneg %p196
      %p278 = pneg %p193
      %p279 = scmp.lt.s32.totalorder %s18, 1
      %s280 = scalar_select %p279, %s18, 1
      %s281 = smul.addr %s280, 32
      %s282 = smul.addr %s281, 8
      %s283 = scalar_lea.vmem %s7, %s282
      %p284 = scmp.lt.s32.totalorder %s18, 1
      %s285 = scalar_select %p284, %s18, 1
      %s286 = smul.addr %s285, 72
      %s287 = smul.addr %s286, 8
      %s288 = scalar_lea.vmem %s0, %s287
      %p289 = scmp.lt.s32.totalorder %s18, 1
      %s290 = scalar_select %p289, %s18, 1
      %s291 = smul.addr %s290, 32
      %s292 = smul.addr %s291, 8
      %s293 = scalar_lea.vmem %s6, %s292
      %p294 = scmp.lt.s32.totalorder %s18, 1
      %s295 = scalar_select %p294, %s18, 1
      %s296 = smul.addr %s295, 32
      %s297 = smul.addr %s296, 8
      %s298 = scalar_lea.vmem %s7, %s297
      %v300 = vld [vmem:[%s288] sm:$0xff]
      %v301 = vld [vmem:[%s288 + $0x8] sm:$0xff]
      %v302 = vld [vmem:[%s288 + $0x10] sm:$0xff]
      %v303 = vld [vmem:[%s288 + $0x18] sm:$0xff]
      %v304 = vld [vmem:[%s288 + $0x20] sm:$0xff]
      %v305 = vld [vmem:[%s288 + $0x28] sm:$0xff]
      %v306 = vld [vmem:[%s288 + $0x30] sm:$0xff]
      %v307 = vld [vmem:[%s288 + $0x38] sm:$0xff]
      %v308 = vld [vmem:[%s288 + $0x40] sm:$0xff]
      %v309 = vld [vmem:[%s288 + $0x48] sm:$0xff]
      %v310 = vld [vmem:[%s288 + $0x50] sm:$0xff]
      %v311 = vld [vmem:[%s288 + $0x58] sm:$0xff]
      %v312 = vld [vmem:[%s288 + $0x60] sm:$0xff]
      %v313 = vld [vmem:[%s288 + $0x68] sm:$0xff]
      %v314 = vld [vmem:[%s288 + $0x70] sm:$0xff]
      %v315 = vld [vmem:[%s288 + $0x78] sm:$0xff]
      %v316 = vld [vmem:[%s288 + $0x80] sm:$0xff]
      %v317 = vld [vmem:[%s288 + $0x88] sm:$0xff]
      %v318 = vld [vmem:[%s288 + $0x90] sm:$0xff]
      %v319 = vld [vmem:[%s288 + $0x98] sm:$0xff]
      %v320 = vld [vmem:[%s288 + $0xa0] sm:$0xff]
      %v321 = vld [vmem:[%s288 + $0xa8] sm:$0xff]
      %v322 = vld [vmem:[%s288 + $0xb0] sm:$0xff]
      %v323 = vld [vmem:[%s288 + $0xb8] sm:$0xff]
      %v324 = vld [vmem:[%s288 + $0xc0] sm:$0xff]
      %v325 = vld [vmem:[%s288 + $0xc8] sm:$0xff]
      %v326 = vld [vmem:[%s288 + $0xd0] sm:$0xff]
      %v327 = vld [vmem:[%s288 + $0xd8] sm:$0xff]
      %v328 = vld [vmem:[%s288 + $0xe0] sm:$0xff]
      %v329 = vld [vmem:[%s288 + $0xe8] sm:$0xff]
      %v330 = vld [vmem:[%s288 + $0xf0] sm:$0xff]
      %v331 = vld [vmem:[%s288 + $0xf8] sm:$0xff]
      %v332 = vld [vmem:[%s288 + $0x100] sm:$0xff]
      %v333 = vld [vmem:[%s288 + $0x108] sm:$0xff]
      %v334 = vld [vmem:[%s288 + $0x110] sm:$0xff]
      %v335 = vld [vmem:[%s288 + $0x118] sm:$0xff]
      %v336 = vld [vmem:[%s288 + $0x120] sm:$0xff]
      %v337 = vld [vmem:[%s288 + $0x128] sm:$0xff]
      %v338 = vld [vmem:[%s288 + $0x130] sm:$0xff]
      %v339 = vld [vmem:[%s288 + $0x138] sm:$0xff]
      %v340 = vld [vmem:[%s288 + $0x140] sm:$0xff]
      %v341 = vld [vmem:[%s288 + $0x148] sm:$0xff]
      %v342 = vld [vmem:[%s288 + $0x150] sm:$0xff]
      %v343 = vld [vmem:[%s288 + $0x158] sm:$0xff]
      %v344 = vld [vmem:[%s288 + $0x160] sm:$0xff]
      %v345 = vld [vmem:[%s288 + $0x168] sm:$0xff]
      %v346 = vld [vmem:[%s288 + $0x170] sm:$0xff]
      %v347 = vld [vmem:[%s288 + $0x178] sm:$0xff]
      %v348 = vld [vmem:[%s288 + $0x180] sm:$0xff]
      %v349 = vld [vmem:[%s288 + $0x188] sm:$0xff]
      %v350 = vld [vmem:[%s288 + $0x190] sm:$0xff]
      %v351 = vld [vmem:[%s288 + $0x198] sm:$0xff]
      %v352 = vld [vmem:[%s288 + $0x1a0] sm:$0xff]
      %v353 = vld [vmem:[%s288 + $0x1a8] sm:$0xff]
      %v354 = vld [vmem:[%s288 + $0x1b0] sm:$0xff]
      %v355 = vld [vmem:[%s288 + $0x1b8] sm:$0xff]
      %v356 = vld [vmem:[%s288 + $0x1c0] sm:$0xff]
      %v357 = vld [vmem:[%s288 + $0x1c8] sm:$0xff]
      %v358 = vld [vmem:[%s288 + $0x1d0] sm:$0xff]
      %v359 = vld [vmem:[%s288 + $0x1d8] sm:$0xff]
      %v360 = vld [vmem:[%s288 + $0x1e0] sm:$0xff]
      %v361 = vld [vmem:[%s288 + $0x1e8] sm:$0xff]
      %v362 = vld [vmem:[%s288 + $0x1f0] sm:$0xff]
      %v363 = vld [vmem:[%s288 + $0x1f8] sm:$0xff]
      %v364 = vld [vmem:[%s288 + $0x200] sm:$0xff]
      %v365 = vld [vmem:[%s288 + $0x208] sm:$0xff]
      %v366 = vld [vmem:[%s288 + $0x210] sm:$0xff]
      %v367 = vld [vmem:[%s288 + $0x218] sm:$0xff]
      %v368 = vld [vmem:[%s288 + $0x220] sm:$0xff]
      %v369 = vld [vmem:[%s288 + $0x228] sm:$0xff]
      %v370 = vld [vmem:[%s288 + $0x230] sm:$0xff]
      %v371 = vld [vmem:[%s288 + $0x238] sm:$0xff]
      %v372 = vld [vmem:[%s1] sm:$0x1]
      %v374 = vlaneseq
      %v375 = vshrl.u32 %v374, 7
      %v376 = vsub.s32 0, %v375
      %v377 = vrot.slane %v372, %v376
      %v379 = vmul.f32 %v300, %v377
      %v380 = vmul.f32 %v301, %v377
      %v381 = vmul.f32 %v302, %v377
      %v382 = vmul.f32 %v303, %v377
      %v383 = vmul.f32 %v304, %v377
      %v384 = vmul.f32 %v305, %v377
      %v385 = vmul.f32 %v306, %v377
      %v386 = vmul.f32 %v307, %v377
      %v387 = vmul.f32 %v308, %v377
      %v388 = vmul.f32 %v309, %v377
      %v389 = vmul.f32 %v310, %v377
      %v390 = vmul.f32 %v311, %v377
      %v391 = vmul.f32 %v312, %v377
      %v392 = vmul.f32 %v313, %v377
      %v393 = vmul.f32 %v314, %v377
      %v394 = vmul.f32 %v315, %v377
      %v395 = vmul.f32 %v316, %v377
      %v396 = vmul.f32 %v317, %v377
      %v397 = vmul.f32 %v318, %v377
      %v398 = vmul.f32 %v319, %v377
      %v399 = vmul.f32 %v320, %v377
      %v400 = vmul.f32 %v321, %v377
      %v401 = vmul.f32 %v322, %v377
      %v402 = vmul.f32 %v323, %v377
      %v403 = vmul.f32 %v324, %v377
      %v404 = vmul.f32 %v325, %v377
      %v405 = vmul.f32 %v326, %v377
      %v406 = vmul.f32 %v327, %v377
      %v407 = vmul.f32 %v328, %v377
      %v408 = vmul.f32 %v329, %v377
      %v409 = vmul.f32 %v330, %v377
      %v410 = vmul.f32 %v331, %v377
      %v411 = vmul.f32 %v332, %v377
      %v412 = vmul.f32 %v333, %v377
      %v413 = vmul.f32 %v334, %v377
      %v414 = vmul.f32 %v335, %v377
      %v415 = vmul.f32 %v336, %v377
      %v416 = vmul.f32 %v337, %v377
      %v417 = vmul.f32 %v338, %v377
      %v418 = vmul.f32 %v339, %v377
      %v419 = vmul.f32 %v340, %v377
      %v420 = vmul.f32 %v341, %v377
      %v421 = vmul.f32 %v342, %v377
      %v422 = vmul.f32 %v343, %v377
      %v423 = vmul.f32 %v344, %v377
      %v424 = vmul.f32 %v345, %v377
      %v425 = vmul.f32 %v346, %v377
      %v426 = vmul.f32 %v347, %v377
      %v427 = vmul.f32 %v348, %v377
      %v428 = vmul.f32 %v349, %v377
      %v429 = vmul.f32 %v350, %v377
      %v430 = vmul.f32 %v351, %v377
      %v431 = vmul.f32 %v352, %v377
      %v432 = vmul.f32 %v353, %v377
      %v433 = vmul.f32 %v354, %v377
      %v434 = vmul.f32 %v355, %v377
      %v435 = vmul.f32 %v356, %v377
      %v436 = vmul.f32 %v357, %v377
      %v437 = vmul.f32 %v358, %v377
      %v438 = vmul.f32 %v359, %v377
      %v439 = vmul.f32 %v360, %v377
      %v440 = vmul.f32 %v361, %v377
      %v441 = vmul.f32 %v362, %v377
      %v442 = vmul.f32 %v363, %v377
      %v443 = vmul.f32 %v364, %v377
      %v444 = vmul.f32 %v365, %v377
      %v445 = vmul.f32 %v366, %v377
      %v446 = vmul.f32 %v367, %v377
      %v447 = vmul.f32 %v368, %v377
      %v448 = vmul.f32 %v369, %v377
      %v449 = vmul.f32 %v370, %v377
      %v450 = vmul.f32 %v371, %v377
      %v451 = vld [vmem:[%s2] sm:$0x1]
      %v453 = vlaneseq
      %v454 = vshrl.u32 %v453, 7
      %v455 = vsub.s32 0, %v454
      %v456 = vrot.slane %v451, %v455
      %v458 = vadd.f32 %v379, %v456
      %v459 = vadd.f32 %v380, %v456
      %v460 = vadd.f32 %v381, %v456
      %v461 = vadd.f32 %v382, %v456
      %v462 = vadd.f32 %v383, %v456
      %v463 = vadd.f32 %v384, %v456
      %v464 = vadd.f32 %v385, %v456
      %v465 = vadd.f32 %v386, %v456
      %v466 = vadd.f32 %v387, %v456
      %v467 = vadd.f32 %v388, %v456
      %v468 = vadd.f32 %v389, %v456
      %v469 = vadd.f32 %v390, %v456
      %v470 = vadd.f32 %v391, %v456
      %v471 = vadd.f32 %v392, %v456
      %v472 = vadd.f32 %v393, %v456
      %v473 = vadd.f32 %v394, %v456
      %v474 = vadd.f32 %v395, %v456
      %v475 = vadd.f32 %v396, %v456
      %v476 = vadd.f32 %v397, %v456
      %v477 = vadd.f32 %v398, %v456
      %v478 = vadd.f32 %v399, %v456
      %v479 = vadd.f32 %v400, %v456
      %v480 = vadd.f32 %v401, %v456
      %v481 = vadd.f32 %v402, %v456
      %v482 = vadd.f32 %v403, %v456
      %v483 = vadd.f32 %v404, %v456
      %v484 = vadd.f32 %v405, %v456
      %v485 = vadd.f32 %v406, %v456
      %v486 = vadd.f32 %v407, %v456
      %v487 = vadd.f32 %v408, %v456
      %v488 = vadd.f32 %v409, %v456
      %v489 = vadd.f32 %v410, %v456
      %v490 = vadd.f32 %v411, %v456
      %v491 = vadd.f32 %v412, %v456
      %v492 = vadd.f32 %v413, %v456
      %v493 = vadd.f32 %v414, %v456
      %v494 = vadd.f32 %v415, %v456
      %v495 = vadd.f32 %v416, %v456
      %v496 = vadd.f32 %v417, %v456
      %v497 = vadd.f32 %v418, %v456
      %v498 = vadd.f32 %v419, %v456
      %v499 = vadd.f32 %v420, %v456
      %v500 = vadd.f32 %v421, %v456
      %v501 = vadd.f32 %v422, %v456
      %v502 = vadd.f32 %v423, %v456
      %v503 = vadd.f32 %v424, %v456
      %v504 = vadd.f32 %v425, %v456
      %v505 = vadd.f32 %v426, %v456
      %v506 = vadd.f32 %v427, %v456
      %v507 = vadd.f32 %v428, %v456
      %v508 = vadd.f32 %v429, %v456
      %v509 = vadd.f32 %v430, %v456
      %v510 = vadd.f32 %v431, %v456
      %v511 = vadd.f32 %v432, %v456
      %v512 = vadd.f32 %v433, %v456
      %v513 = vadd.f32 %v434, %v456
      %v514 = vadd.f32 %v435, %v456
      %v515 = vadd.f32 %v436, %v456
      %v516 = vadd.f32 %v437, %v456
      %v517 = vadd.f32 %v438, %v456
      %v518 = vadd.f32 %v439, %v456
      %v519 = vadd.f32 %v440, %v456
      %v520 = vadd.f32 %v441, %v456
      %v521 = vadd.f32 %v442, %v456
      %v522 = vadd.f32 %v443, %v456
      %v523 = vadd.f32 %v444, %v456
      %v524 = vadd.f32 %v445, %v456
      %v525 = vadd.f32 %v446, %v456
      %v526 = vadd.f32 %v447, %v456
      %v527 = vadd.f32 %v448, %v456
      %v528 = vadd.f32 %v449, %v456
      %v529 = vadd.f32 %v450, %v456
      %v530 = vmax.f32 %v458, 0.0
      %v531 = vmax.f32 %v459, 0.0
      %v532 = vmax.f32 %v460, 0.0
      %v533 = vmax.f32 %v461, 0.0
      %v534 = vmax.f32 %v462, 0.0
      %v535 = vmax.f32 %v463, 0.0
      %v536 = vmax.f32 %v464, 0.0
      %v537 = vmax.f32 %v465, 0.0
      %v538 = vmax.f32 %v466, 0.0
      %v539 = vmax.f32 %v467, 0.0
      %v540 = vmax.f32 %v468, 0.0
      %v541 = vmax.f32 %v469, 0.0
      %v542 = vmax.f32 %v470, 0.0
      %v543 = vmax.f32 %v471, 0.0
      %v544 = vmax.f32 %v472, 0.0
      %v545 = vmax.f32 %v473, 0.0
      %v546 = vmax.f32 %v474, 0.0
      %v547 = vmax.f32 %v475, 0.0
      %v548 = vmax.f32 %v476, 0.0
      %v549 = vmax.f32 %v477, 0.0
      %v550 = vmax.f32 %v478, 0.0
      %v551 = vmax.f32 %v479, 0.0
      %v552 = vmax.f32 %v480, 0.0
      %v553 = vmax.f32 %v481, 0.0
      %v554 = vmax.f32 %v482, 0.0
      %v555 = vmax.f32 %v483, 0.0
      %v556 = vmax.f32 %v484, 0.0
      %v557 = vmax.f32 %v485, 0.0
      %v558 = vmax.f32 %v486, 0.0
      %v559 = vmax.f32 %v487, 0.0
      %v560 = vmax.f32 %v488, 0.0
      %v561 = vmax.f32 %v489, 0.0
      %v562 = vmax.f32 %v490, 0.0
      %v563 = vmax.f32 %v491, 0.0
      %v564 = vmax.f32 %v492, 0.0
      %v565 = vmax.f32 %v493, 0.0
      %v566 = vmax.f32 %v494, 0.0
      %v567 = vmax.f32 %v495, 0.0
      %v568 = vmax.f32 %v496, 0.0
      %v569 = vmax.f32 %v497, 0.0
      %v570 = vmax.f32 %v498, 0.0
      %v571 = vmax.f32 %v499, 0.0
      %v572 = vmax.f32 %v500, 0.0
      %v573 = vmax.f32 %v501, 0.0
      %v574 = vmax.f32 %v502, 0.0
      %v575 = vmax.f32 %v503, 0.0
      %v576 = vmax.f32 %v504, 0.0
      %v577 = vmax.f32 %v505, 0.0
      %v578 = vmax.f32 %v506, 0.0
      %v579 = vmax.f32 %v507, 0.0
      %v580 = vmax.f32 %v508, 0.0
      %v581 = vmax.f32 %v509, 0.0
      %v582 = vmax.f32 %v510, 0.0
      %v583 = vmax.f32 %v511, 0.0
      %v584 = vmax.f32 %v512, 0.0
      %v585 = vmax.f32 %v513, 0.0
      %v586 = vmax.f32 %v514, 0.0
      %v587 = vmax.f32 %v515, 0.0
      %v588 = vmax.f32 %v516, 0.0
      %v589 = vmax.f32 %v517, 0.0
      %v590 = vmax.f32 %v518, 0.0
      %v591 = vmax.f32 %v519, 0.0
      %v592 = vmax.f32 %v520, 0.0
      %v593 = vmax.f32 %v521, 0.0
      %v594 = vmax.f32 %v522, 0.0
      %v595 = vmax.f32 %v523, 0.0
      %v596 = vmax.f32 %v524, 0.0
      %v597 = vmax.f32 %v525, 0.0
      %v598 = vmax.f32 %v526, 0.0
      %v599 = vmax.f32 %v527, 0.0
      %v600 = vmax.f32 %v528, 0.0
      %v601 = vmax.f32 %v529, 0.0
      %v602 = vld [vmem:[%s3] sm:$0xff]
      %v603 = vld [vmem:[%s3 + $0x8] sm:$0xff]
      %v604 = vld [vmem:[%s3 + $0x10] sm:$0xff]
      %v605 = vld [vmem:[%s3 + $0x18] sm:$0xff]
      %v606 = vld [vmem:[%s3 + $0x20] sm:$0xff]
      %v607 = vld [vmem:[%s3 + $0x28] sm:$0xff]
      %v608 = vld [vmem:[%s3 + $0x30] sm:$0xff]
      %v609 = vld [vmem:[%s3 + $0x38] sm:$0xff]
      %v610 = vld [vmem:[%s3 + $0x40] sm:$0xff]
      %v611 = vld [vmem:[%s3 + $0x48] sm:$0xff]
      %v612 = vld [vmem:[%s3 + $0x50] sm:$0xff]
      %v613 = vld [vmem:[%s3 + $0x58] sm:$0xff]
      %v614 = vld [vmem:[%s3 + $0x60] sm:$0xff]
      %v615 = vld [vmem:[%s3 + $0x68] sm:$0xff]
      %v616 = vld [vmem:[%s3 + $0x70] sm:$0xff]
      %v617 = vld [vmem:[%s3 + $0x78] sm:$0xff]
      %v618 = vld [vmem:[%s3 + $0x80] sm:$0xff]
      %v619 = vld [vmem:[%s3 + $0x88] sm:$0xff]
      %v620 = vld [vmem:[%s3 + $0x90] sm:$0xff]
      %v621 = vld [vmem:[%s3 + $0x98] sm:$0xff]
      %v622 = vld [vmem:[%s3 + $0xa0] sm:$0xff]
      %v623 = vld [vmem:[%s3 + $0xa8] sm:$0xff]
      %v624 = vld [vmem:[%s3 + $0xb0] sm:$0xff]
      %v625 = vld [vmem:[%s3 + $0xb8] sm:$0xff]
      %v626 = vld [vmem:[%s3 + $0xc0] sm:$0xff]
      %v627 = vld [vmem:[%s3 + $0xc8] sm:$0xff]
      %v628 = vld [vmem:[%s3 + $0xd0] sm:$0xff]
      %v629 = vld [vmem:[%s3 + $0xd8] sm:$0xff]
      %v630 = vld [vmem:[%s3 + $0xe0] sm:$0xff]
      %v631 = vld [vmem:[%s3 + $0xe8] sm:$0xff]
      %v632 = vld [vmem:[%s3 + $0xf0] sm:$0xff]
      %v633 = vld [vmem:[%s3 + $0xf8] sm:$0xff]
      %v634 = vld [vmem:[%s3 + $0x100] sm:$0xff]
      %v635 = vld [vmem:[%s3 + $0x108] sm:$0xff]
      %v636 = vld [vmem:[%s3 + $0x110] sm:$0xff]
      %v637 = vld [vmem:[%s3 + $0x118] sm:$0xff]
      %v638 = vld [vmem:[%s3 + $0x120] sm:$0xff]
      %v639 = vld [vmem:[%s3 + $0x128] sm:$0xff]
      %v640 = vld [vmem:[%s3 + $0x130] sm:$0xff]
      %v641 = vld [vmem:[%s3 + $0x138] sm:$0xff]
      %v642 = vld [vmem:[%s3 + $0x140] sm:$0xff]
      %v643 = vld [vmem:[%s3 + $0x148] sm:$0xff]
      %v644 = vld [vmem:[%s3 + $0x150] sm:$0xff]
      %v645 = vld [vmem:[%s3 + $0x158] sm:$0xff]
      %v646 = vld [vmem:[%s3 + $0x160] sm:$0xff]
      %v647 = vld [vmem:[%s3 + $0x168] sm:$0xff]
      %v648 = vld [vmem:[%s3 + $0x170] sm:$0xff]
      %v649 = vld [vmem:[%s3 + $0x178] sm:$0xff]
      %v650 = vld [vmem:[%s3 + $0x180] sm:$0xff]
      %v651 = vld [vmem:[%s3 + $0x188] sm:$0xff]
      %v652 = vld [vmem:[%s3 + $0x190] sm:$0xff]
      %v653 = vld [vmem:[%s3 + $0x198] sm:$0xff]
      %v654 = vld [vmem:[%s3 + $0x1a0] sm:$0xff]
      %v655 = vld [vmem:[%s3 + $0x1a8] sm:$0xff]
      %v656 = vld [vmem:[%s3 + $0x1b0] sm:$0xff]
      %v657 = vld [vmem:[%s3 + $0x1b8] sm:$0xff]
      %v658 = vld [vmem:[%s3 + $0x1c0] sm:$0xff]
      %v659 = vld [vmem:[%s3 + $0x1c8] sm:$0xff]
      %v660 = vld [vmem:[%s3 + $0x1d0] sm:$0xff]
      %v661 = vld [vmem:[%s3 + $0x1d8] sm:$0xff]
      %v662 = vld [vmem:[%s3 + $0x1e0] sm:$0xff]
      %v663 = vld [vmem:[%s3 + $0x1e8] sm:$0xff]
      %v664 = vld [vmem:[%s3 + $0x1f0] sm:$0xff]
      %v665 = vld [vmem:[%s3 + $0x1f8] sm:$0xff]
      %v666 = vld [vmem:[%s3 + $0x200] sm:$0xff]
      %v667 = vld [vmem:[%s3 + $0x208] sm:$0xff]
      %v668 = vld [vmem:[%s3 + $0x210] sm:$0xff]
      %v669 = vld [vmem:[%s3 + $0x218] sm:$0xff]
      %v670 = vld [vmem:[%s3 + $0x220] sm:$0xff]
      %v671 = vld [vmem:[%s3 + $0x228] sm:$0xff]
      %v672 = vld [vmem:[%s3 + $0x230] sm:$0xff]
      %v673 = vld [vmem:[%s3 + $0x238] sm:$0xff]
      %675 = vset.pattern.permute.xlu0 0
      %676 = vperm.xlu0 %675, %v602
      %v677 = vpop.permute.xlu0 %676
      %680 = vset.pattern.permute.xlu0 0
      %681 = vperm.xlu0 %680, %v603
      %v682 = vpop.permute.xlu0 %681
      %685 = vset.pattern.permute.xlu0 0
      %686 = vperm.xlu0 %685, %v604
      %v687 = vpop.permute.xlu0 %686
      %690 = vset.pattern.permute.xlu0 0
      %691 = vperm.xlu0 %690, %v605
      %v692 = vpop.permute.xlu0 %691
      %695 = vset.pattern.permute.xlu0 0
      %696 = vperm.xlu0 %695, %v606
      %v697 = vpop.permute.xlu0 %696
      %700 = vset.pattern.permute.xlu0 0
      %701 = vperm.xlu0 %700, %v607
      %v702 = vpop.permute.xlu0 %701
      %705 = vset.pattern.permute.xlu0 0
      %706 = vperm.xlu0 %705, %v608
      %v707 = vpop.permute.xlu0 %706
      %710 = vset.pattern.permute.xlu0 0
      %711 = vperm.xlu0 %710, %v609
      %v712 = vpop.permute.xlu0 %711
      %715 = vset.pattern.permute.xlu0 0
      %716 = vperm.xlu0 %715, %v610
      %v717 = vpop.permute.xlu0 %716
      %720 = vset.pattern.permute.xlu0 0
      %721 = vperm.xlu0 %720, %v611
      %v722 = vpop.permute.xlu0 %721
      %725 = vset.pattern.permute.xlu0 0
      %726 = vperm.xlu0 %725, %v612
      %v727 = vpop.permute.xlu0 %726
      %730 = vset.pattern.permute.xlu0 0
      %731 = vperm.xlu0 %730, %v613
      %v732 = vpop.permute.xlu0 %731
      %735 = vset.pattern.permute.xlu0 0
      %736 = vperm.xlu0 %735, %v614
      %v737 = vpop.permute.xlu0 %736
      %740 = vset.pattern.permute.xlu0 0
      %741 = vperm.xlu0 %740, %v615
      %v742 = vpop.permute.xlu0 %741
      %745 = vset.pattern.permute.xlu0 0
      %746 = vperm.xlu0 %745, %v616
      %v747 = vpop.permute.xlu0 %746
      %750 = vset.pattern.permute.xlu0 0
      %751 = vperm.xlu0 %750, %v617
      %v752 = vpop.permute.xlu0 %751
      %755 = vset.pattern.permute.xlu0 0
      %756 = vperm.xlu0 %755, %v618
      %v757 = vpop.permute.xlu0 %756
      %760 = vset.pattern.permute.xlu0 0
      %761 = vperm.xlu0 %760, %v619
      %v762 = vpop.permute.xlu0 %761
      %765 = vset.pattern.permute.xlu0 0
      %766 = vperm.xlu0 %765, %v620
      %v767 = vpop.permute.xlu0 %766
      %770 = vset.pattern.permute.xlu0 0
      %771 = vperm.xlu0 %770, %v621
      %v772 = vpop.permute.xlu0 %771
      %775 = vset.pattern.permute.xlu0 0
      %776 = vperm.xlu0 %775, %v622
      %v777 = vpop.permute.xlu0 %776
      %780 = vset.pattern.permute.xlu0 0
      %781 = vperm.xlu0 %780, %v623
      %v782 = vpop.permute.xlu0 %781
      %785 = vset.pattern.permute.xlu0 0
      %786 = vperm.xlu0 %785, %v624
      %v787 = vpop.permute.xlu0 %786
      %790 = vset.pattern.permute.xlu0 0
      %791 = vperm.xlu0 %790, %v625
      %v792 = vpop.permute.xlu0 %791
      %795 = vset.pattern.permute.xlu0 0
      %796 = vperm.xlu0 %795, %v626
      %v797 = vpop.permute.xlu0 %796
      %800 = vset.pattern.permute.xlu0 0
      %801 = vperm.xlu0 %800, %v627
      %v802 = vpop.permute.xlu0 %801
      %805 = vset.pattern.permute.xlu0 0
      %806 = vperm.xlu0 %805, %v628
      %v807 = vpop.permute.xlu0 %806
      %810 = vset.pattern.permute.xlu0 0
      %811 = vperm.xlu0 %810, %v629
      %v812 = vpop.permute.xlu0 %811
      %815 = vset.pattern.permute.xlu0 0
      %816 = vperm.xlu0 %815, %v630
      %v817 = vpop.permute.xlu0 %816
      %820 = vset.pattern.permute.xlu0 0
      %821 = vperm.xlu0 %820, %v631
      %v822 = vpop.permute.xlu0 %821
      %825 = vset.pattern.permute.xlu0 0
      %826 = vperm.xlu0 %825, %v632
      %v827 = vpop.permute.xlu0 %826
      %830 = vset.pattern.permute.xlu0 0
      %831 = vperm.xlu0 %830, %v633
      %v832 = vpop.permute.xlu0 %831
      %835 = vset.pattern.permute.xlu0 0
      %836 = vperm.xlu0 %835, %v634
      %v837 = vpop.permute.xlu0 %836
      %840 = vset.pattern.permute.xlu0 0
      %841 = vperm.xlu0 %840, %v635
      %v842 = vpop.permute.xlu0 %841
      %845 = vset.pattern.permute.xlu0 0
      %846 = vperm.xlu0 %845, %v636
      %v847 = vpop.permute.xlu0 %846
      %850 = vset.pattern.permute.xlu0 0
      %851 = vperm.xlu0 %850, %v637
      %v852 = vpop.permute.xlu0 %851
      %855 = vset.pattern.permute.xlu0 0
      %856 = vperm.xlu0 %855, %v638
      %v857 = vpop.permute.xlu0 %856
      %860 = vset.pattern.permute.xlu0 0
      %861 = vperm.xlu0 %860, %v639
      %v862 = vpop.permute.xlu0 %861
      %865 = vset.pattern.permute.xlu0 0
      %866 = vperm.xlu0 %865, %v640
      %v867 = vpop.permute.xlu0 %866
      %870 = vset.pattern.permute.xlu0 0
      %871 = vperm.xlu0 %870, %v641
      %v872 = vpop.permute.xlu0 %871
      %875 = vset.pattern.permute.xlu0 0
      %876 = vperm.xlu0 %875, %v642
      %v877 = vpop.permute.xlu0 %876
      %880 = vset.pattern.permute.xlu0 0
      %881 = vperm.xlu0 %880, %v643
      %v882 = vpop.permute.xlu0 %881
      %885 = vset.pattern.permute.xlu0 0
      %886 = vperm.xlu0 %885, %v644
      %v887 = vpop.permute.xlu0 %886
      %890 = vset.pattern.permute.xlu0 0
      %891 = vperm.xlu0 %890, %v645
      %v892 = vpop.permute.xlu0 %891
      %895 = vset.pattern.permute.xlu0 0
      %896 = vperm.xlu0 %895, %v646
      %v897 = vpop.permute.xlu0 %896
      %900 = vset.pattern.permute.xlu0 0
      %901 = vperm.xlu0 %900, %v647
      %v902 = vpop.permute.xlu0 %901
      %905 = vset.pattern.permute.xlu0 0
      %906 = vperm.xlu0 %905, %v648
      %v907 = vpop.permute.xlu0 %906
      %910 = vset.pattern.permute.xlu0 0
      %911 = vperm.xlu0 %910, %v649
      %v912 = vpop.permute.xlu0 %911
      %915 = vset.pattern.permute.xlu0 0
      %916 = vperm.xlu0 %915, %v650
      %v917 = vpop.permute.xlu0 %916
      %920 = vset.pattern.permute.xlu0 0
      %921 = vperm.xlu0 %920, %v651
      %v922 = vpop.permute.xlu0 %921
      %925 = vset.pattern.permute.xlu0 0
      %926 = vperm.xlu0 %925, %v652
      %v927 = vpop.permute.xlu0 %926
      %930 = vset.pattern.permute.xlu0 0
      %931 = vperm.xlu0 %930, %v653
      %v932 = vpop.permute.xlu0 %931
      %935 = vset.pattern.permute.xlu0 0
      %936 = vperm.xlu0 %935, %v654
      %v937 = vpop.permute.xlu0 %936
      %940 = vset.pattern.permute.xlu0 0
      %941 = vperm.xlu0 %940, %v655
      %v942 = vpop.permute.xlu0 %941
      %945 = vset.pattern.permute.xlu0 0
      %946 = vperm.xlu0 %945, %v656
      %v947 = vpop.permute.xlu0 %946
      %950 = vset.pattern.permute.xlu0 0
      %951 = vperm.xlu0 %950, %v657
      %v952 = vpop.permute.xlu0 %951
      %955 = vset.pattern.permute.xlu0 0
      %956 = vperm.xlu0 %955, %v658
      %v957 = vpop.permute.xlu0 %956
      %960 = vset.pattern.permute.xlu0 0
      %961 = vperm.xlu0 %960, %v659
      %v962 = vpop.permute.xlu0 %961
      %965 = vset.pattern.permute.xlu0 0
      %966 = vperm.xlu0 %965, %v660
      %v967 = vpop.permute.xlu0 %966
      %970 = vset.pattern.permute.xlu0 0
      %971 = vperm.xlu0 %970, %v661
      %v972 = vpop.permute.xlu0 %971
      %975 = vset.pattern.permute.xlu0 0
      %976 = vperm.xlu0 %975, %v662
      %v977 = vpop.permute.xlu0 %976
      %980 = vset.pattern.permute.xlu0 0
      %981 = vperm.xlu0 %980, %v663
      %v982 = vpop.permute.xlu0 %981
      %985 = vset.pattern.permute.xlu0 0
      %986 = vperm.xlu0 %985, %v664
      %v987 = vpop.permute.xlu0 %986
      %990 = vset.pattern.permute.xlu0 0
      %991 = vperm.xlu0 %990, %v665
      %v992 = vpop.permute.xlu0 %991
      %995 = vset.pattern.permute.xlu0 0
      %996 = vperm.xlu0 %995, %v666
      %v997 = vpop.permute.xlu0 %996
      %1000 = vset.pattern.permute.xlu0 0
      %1001 = vperm.xlu0 %1000, %v667
      %v1002 = vpop.permute.xlu0 %1001
      %1005 = vset.pattern.permute.xlu0 0
      %1006 = vperm.xlu0 %1005, %v668
      %v1007 = vpop.permute.xlu0 %1006
      %1010 = vset.pattern.permute.xlu0 0
      %1011 = vperm.xlu0 %1010, %v669
      %v1012 = vpop.permute.xlu0 %1011
      %1015 = vset.pattern.permute.xlu0 0
      %1016 = vperm.xlu0 %1015, %v670
      %v1017 = vpop.permute.xlu0 %1016
      %1020 = vset.pattern.permute.xlu0 0
      %1021 = vperm.xlu0 %1020, %v671
      %v1022 = vpop.permute.xlu0 %1021
      %1025 = vset.pattern.permute.xlu0 0
      %1026 = vperm.xlu0 %1025, %v672
      %v1027 = vpop.permute.xlu0 %1026
      %1030 = vset.pattern.permute.xlu0 0
      %1031 = vperm.xlu0 %1030, %v673
      %v1032 = vpop.permute.xlu0 %1031
      %v1034 = vmul.f32 %v530, %v677
      %v1035 = vmul.f32 %v531, %v682
      %v1036 = vmul.f32 %v532, %v687
      %v1037 = vmul.f32 %v533, %v692
      %v1038 = vmul.f32 %v534, %v697
      %v1039 = vmul.f32 %v535, %v702
      %v1040 = vmul.f32 %v536, %v707
      %v1041 = vmul.f32 %v537, %v712
      %v1042 = vmul.f32 %v538, %v717
      %v1043 = vmul.f32 %v539, %v722
      %v1044 = vmul.f32 %v540, %v727
      %v1045 = vmul.f32 %v541, %v732
      %v1046 = vmul.f32 %v542, %v737
      %v1047 = vmul.f32 %v543, %v742
      %v1048 = vmul.f32 %v544, %v747
      %v1049 = vmul.f32 %v545, %v752
      %v1050 = vmul.f32 %v546, %v757
      %v1051 = vmul.f32 %v547, %v762
      %v1052 = vmul.f32 %v548, %v767
      %v1053 = vmul.f32 %v549, %v772
      %v1054 = vmul.f32 %v550, %v777
      %v1055 = vmul.f32 %v551, %v782
      %v1056 = vmul.f32 %v552, %v787
      %v1057 = vmul.f32 %v553, %v792
      %v1058 = vmul.f32 %v554, %v797
      %v1059 = vmul.f32 %v555, %v802
      %v1060 = vmul.f32 %v556, %v807
      %v1061 = vmul.f32 %v557, %v812
      %v1062 = vmul.f32 %v558, %v817
      %v1063 = vmul.f32 %v559, %v822
      %v1064 = vmul.f32 %v560, %v827
      %v1065 = vmul.f32 %v561, %v832
      %v1066 = vmul.f32 %v562, %v837
      %v1067 = vmul.f32 %v563, %v842
      %v1068 = vmul.f32 %v564, %v847
      %v1069 = vmul.f32 %v565, %v852
      %v1070 = vmul.f32 %v566, %v857
      %v1071 = vmul.f32 %v567, %v862
      %v1072 = vmul.f32 %v568, %v867
      %v1073 = vmul.f32 %v569, %v872
      %v1074 = vmul.f32 %v570, %v877
      %v1075 = vmul.f32 %v571, %v882
      %v1076 = vmul.f32 %v572, %v887
      %v1077 = vmul.f32 %v573, %v892
      %v1078 = vmul.f32 %v574, %v897
      %v1079 = vmul.f32 %v575, %v902
      %v1080 = vmul.f32 %v576, %v907
      %v1081 = vmul.f32 %v577, %v912
      %v1082 = vmul.f32 %v578, %v917
      %v1083 = vmul.f32 %v579, %v922
      %v1084 = vmul.f32 %v580, %v927
      %v1085 = vmul.f32 %v581, %v932
      %v1086 = vmul.f32 %v582, %v937
      %v1087 = vmul.f32 %v583, %v942
      %v1088 = vmul.f32 %v584, %v947
      %v1089 = vmul.f32 %v585, %v952
      %v1090 = vmul.f32 %v586, %v957
      %v1091 = vmul.f32 %v587, %v962
      %v1092 = vmul.f32 %v588, %v967
      %v1093 = vmul.f32 %v589, %v972
      %v1094 = vmul.f32 %v590, %v977
      %v1095 = vmul.f32 %v591, %v982
      %v1096 = vmul.f32 %v592, %v987
      %v1097 = vmul.f32 %v593, %v992
      %v1098 = vmul.f32 %v594, %v997
      %v1099 = vmul.f32 %v595, %v1002
      %v1100 = vmul.f32 %v596, %v1007
      %v1101 = vmul.f32 %v597, %v1012
      %v1102 = vmul.f32 %v598, %v1017
      %v1103 = vmul.f32 %v599, %v1022
      %v1104 = vmul.f32 %v600, %v1027
      %v1105 = vmul.f32 %v601, %v1032
      %vm1138 = vcmask 1046528
      %v1139 = vrot.slane %v1035, 1
      %v1140 = vrot.slane %v1036, 1
      %v1141 = vsel %vm1138, %v1139, %v1140
      %v1142 = vrot.slane %v1039, 1
      %v1143 = vrot.slane %v1040, 1
      %v1144 = vsel %vm1138, %v1142, %v1143
      %v1145 = vrot.slane %v1043, 1
      %v1146 = vrot.slane %v1044, 1
      %v1147 = vsel %vm1138, %v1145, %v1146
      %v1148 = vrot.slane %v1047, 1
      %v1149 = vrot.slane %v1048, 1
      %v1150 = vsel %vm1138, %v1148, %v1149
      %v1151 = vrot.slane %v1051, 1
      %v1152 = vrot.slane %v1052, 1
      %v1153 = vsel %vm1138, %v1151, %v1152
      %v1154 = vrot.slane %v1055, 1
      %v1155 = vrot.slane %v1056, 1
      %v1156 = vsel %vm1138, %v1154, %v1155
      %v1157 = vrot.slane %v1059, 1
      %v1158 = vrot.slane %v1060, 1
      %v1159 = vsel %vm1138, %v1157, %v1158
      %v1160 = vrot.slane %v1063, 1
      %v1161 = vrot.slane %v1064, 1
      %v1162 = vsel %vm1138, %v1160, %v1161
      %v1163 = vrot.slane %v1067, 1
      %v1164 = vrot.slane %v1068, 1
      %v1165 = vsel %vm1138, %v1163, %v1164
      %v1166 = vrot.slane %v1071, 1
      %v1167 = vrot.slane %v1072, 1
      %v1168 = vsel %vm1138, %v1166, %v1167
      %v1169 = vrot.slane %v1075, 1
      %v1170 = vrot.slane %v1076, 1
      %v1171 = vsel %vm1138, %v1169, %v1170
      %v1172 = vrot.slane %v1079, 1
      %v1173 = vrot.slane %v1080, 1
      %v1174 = vsel %vm1138, %v1172, %v1173
      %v1175 = vrot.slane %v1083, 1
      %v1176 = vrot.slane %v1084, 1
      %v1177 = vsel %vm1138, %v1175, %v1176
      %v1178 = vrot.slane %v1087, 1
      %v1179 = vrot.slane %v1088, 1
      %v1180 = vsel %vm1138, %v1178, %v1179
      %v1181 = vrot.slane %v1091, 1
      %v1182 = vrot.slane %v1092, 1
      %v1183 = vsel %vm1138, %v1181, %v1182
      %v1184 = vrot.slane %v1095, 1
      %v1185 = vrot.slane %v1096, 1
      %v1186 = vsel %vm1138, %v1184, %v1185
      %vm1203 = vcmask 1045504
      %v1204 = vrot.slane %v1035, 2
      %v1205 = vrot.slane %v1036, 2
      %v1206 = vsel %vm1203, %v1204, %v1205
      %v1207 = vrot.slane %v1037, 2
      %v1208 = vsel %vm1203, %v1205, %v1207
      %v1209 = vrot.slane %v1039, 2
      %v1210 = vrot.slane %v1040, 2
      %v1211 = vsel %vm1203, %v1209, %v1210
      %v1212 = vrot.slane %v1041, 2
      %v1213 = vsel %vm1203, %v1210, %v1212
      %v1214 = vrot.slane %v1043, 2
      %v1215 = vrot.slane %v1044, 2
      %v1216 = vsel %vm1203, %v1214, %v1215
      %v1217 = vrot.slane %v1045, 2
      %v1218 = vsel %vm1203, %v1215, %v1217
      %v1219 = vrot.slane %v1047, 2
      %v1220 = vrot.slane %v1048, 2
      %v1221 = vsel %vm1203, %v1219, %v1220
      %v1222 = vrot.slane %v1049, 2
      %v1223 = vsel %vm1203, %v1220, %v1222
      %v1224 = vrot.slane %v1051, 2
      %v1225 = vrot.slane %v1052, 2
      %v1226 = vsel %vm1203, %v1224, %v1225
      %v1227 = vrot.slane %v1053, 2
      %v1228 = vsel %vm1203, %v1225, %v1227
      %v1229 = vrot.slane %v1055, 2
      %v1230 = vrot.slane %v1056, 2
      %v1231 = vsel %vm1203, %v1229, %v1230
      %v1232 = vrot.slane %v1057, 2
      %v1233 = vsel %vm1203, %v1230, %v1232
      %v1234 = vrot.slane %v1059, 2
      %v1235 = vrot.slane %v1060, 2
      %v1236 = vsel %vm1203, %v1234, %v1235
      %v1237 = vrot.slane %v1061, 2
      %v1238 = vsel %vm1203, %v1235, %v1237
      %v1239 = vrot.slane %v1063, 2
      %v1240 = vrot.slane %v1064, 2
      %v1241 = vsel %vm1203, %v1239, %v1240
      %v1242 = vrot.slane %v1065, 2
      %v1243 = vsel %vm1203, %v1240, %v1242
      %v1244 = vrot.slane %v1067, 2
      %v1245 = vrot.slane %v1068, 2
      %v1246 = vsel %vm1203, %v1244, %v1245
      %v1247 = vrot.slane %v1069, 2
      %v1248 = vsel %vm1203, %v1245, %v1247
      %v1249 = vrot.slane %v1071, 2
      %v1250 = vrot.slane %v1072, 2
      %v1251 = vsel %vm1203, %v1249, %v1250
      %v1252 = vrot.slane %v1073, 2
      %v1253 = vsel %vm1203, %v1250, %v1252
      %v1254 = vrot.slane %v1075, 2
      %v1255 = vrot.slane %v1076, 2
      %v1256 = vsel %vm1203, %v1254, %v1255
      %v1257 = vrot.slane %v1077, 2
      %v1258 = vsel %vm1203, %v1255, %v1257
      %v1259 = vrot.slane %v1079, 2
      %v1260 = vrot.slane %v1080, 2
      %v1261 = vsel %vm1203, %v1259, %v1260
      %v1262 = vrot.slane %v1081, 2
      %v1263 = vsel %vm1203, %v1260, %v1262
      %v1264 = vrot.slane %v1083, 2
      %v1265 = vrot.slane %v1084, 2
      %v1266 = vsel %vm1203, %v1264, %v1265
      %v1267 = vrot.slane %v1085, 2
      %v1268 = vsel %vm1203, %v1265, %v1267
      %v1269 = vrot.slane %v1087, 2
      %v1270 = vrot.slane %v1088, 2
      %v1271 = vsel %vm1203, %v1269, %v1270
      %v1272 = vrot.slane %v1089, 2
      %v1273 = vsel %vm1203, %v1270, %v1272
      %v1274 = vrot.slane %v1091, 2
      %v1275 = vrot.slane %v1092, 2
      %v1276 = vsel %vm1203, %v1274, %v1275
      %v1277 = vrot.slane %v1093, 2
      %v1278 = vsel %vm1203, %v1275, %v1277
      %v1279 = vrot.slane %v1095, 2
      %v1280 = vrot.slane %v1096, 2
      %v1281 = vsel %vm1203, %v1279, %v1280
      %v1282 = vrot.slane %v1097, 2
      %v1283 = vsel %vm1203, %v1280, %v1282
      %v1286 = vrot.slane %v1099, 1
      %v1287 = vrot.slane %v1100, 1
      %v1288 = vsel %vm1138, %v1286, %v1287
      %v1290 = vrot.slane %v1099, 2
      %v1291 = vrot.slane %v1100, 2
      %v1292 = vsel %vm1203, %v1290, %v1291
      %v1293 = vrot.slane %v1101, 2
      %v1294 = vsel %vm1203, %v1291, %v1293
      %v1297 = vrot.slane %v1103, 1
      %v1298 = vrot.slane %v1104, 1
      %v1299 = vsel %vm1138, %v1297, %v1298
      %v1301 = vrot.slane %v1103, 2
      %v1302 = vrot.slane %v1104, 2
      %v1303 = vsel %vm1203, %v1301, %v1302
      %v1304 = vrot.slane %v1105, 2
      %v1305 = vsel %vm1203, %v1302, %v1304
      %vm1324 = vcmask 1040384
      %v1325 = vrot.slane %v1034, 7
      %v1326 = vrot.slane %v1035, 7
      %v1327 = vsel %vm1324, %v1325, %v1326
      %v1328 = vrot.slane %v1139, 7
      %v1329 = vrot.slane %v1141, 7
      %v1330 = vsel %vm1324, %v1328, %v1329
      %v1331 = vrot.slane %v1204, 7
      %v1332 = vrot.slane %v1206, 7
      %v1333 = vsel %vm1324, %v1331, %v1332
      %v1334 = vrot.slane %v1038, 7
      %v1335 = vrot.slane %v1039, 7
      %v1336 = vsel %vm1324, %v1334, %v1335
      %v1337 = vrot.slane %v1142, 7
      %v1338 = vrot.slane %v1144, 7
      %v1339 = vsel %vm1324, %v1337, %v1338
      %v1340 = vrot.slane %v1209, 7
      %v1341 = vrot.slane %v1211, 7
      %v1342 = vsel %vm1324, %v1340, %v1341
      %v1343 = vrot.slane %v1042, 7
      %v1344 = vrot.slane %v1043, 7
      %v1345 = vsel %vm1324, %v1343, %v1344
      %v1346 = vrot.slane %v1145, 7
      %v1347 = vrot.slane %v1147, 7
      %v1348 = vsel %vm1324, %v1346, %v1347
      %v1349 = vrot.slane %v1214, 7
      %v1350 = vrot.slane %v1216, 7
      %v1351 = vsel %vm1324, %v1349, %v1350
      %v1352 = vrot.slane %v1036, 7
      %v1353 = vsel %vm1324, %v1326, %v1352
      %v1354 = vrot.slane %v1140, 7
      %v1355 = vsel %vm1324, %v1329, %v1354
      %v1356 = vrot.slane %v1208, 7
      %v1357 = vsel %vm1324, %v1332, %v1356
      %v1358 = vrot.slane %v1040, 7
      %v1359 = vsel %vm1324, %v1335, %v1358
      %v1360 = vrot.slane %v1143, 7
      %v1361 = vsel %vm1324, %v1338, %v1360
      %v1362 = vrot.slane %v1213, 7
      %v1363 = vsel %vm1324, %v1341, %v1362
      %v1364 = vrot.slane %v1044, 7
      %v1365 = vsel %vm1324, %v1344, %v1364
      %v1366 = vrot.slane %v1146, 7
      %v1367 = vsel %vm1324, %v1347, %v1366
      %v1368 = vrot.slane %v1218, 7
      %v1369 = vsel %vm1324, %v1350, %v1368
      %v1370 = vrot.slane %v1046, 7
      %v1371 = vrot.slane %v1047, 7
      %v1372 = vsel %vm1324, %v1370, %v1371
      %v1373 = vrot.slane %v1148, 7
      %v1374 = vrot.slane %v1150, 7
      %v1375 = vsel %vm1324, %v1373, %v1374
      %v1376 = vrot.slane %v1219, 7
      %v1377 = vrot.slane %v1221, 7
      %v1378 = vsel %vm1324, %v1376, %v1377
      %v1379 = vrot.slane %v1048, 7
      %v1380 = vsel %vm1324, %v1371, %v1379
      %v1381 = vrot.slane %v1149, 7
      %v1382 = vsel %vm1324, %v1374, %v1381
      %v1383 = vrot.slane %v1223, 7
      %v1384 = vsel %vm1324, %v1377, %v1383
      %v1385 = vrot.slane %v1050, 7
      %v1386 = vrot.slane %v1051, 7
      %v1387 = vsel %vm1324, %v1385, %v1386
      %v1388 = vrot.slane %v1151, 7
      %v1389 = vrot.slane %v1153, 7
      %v1390 = vsel %vm1324, %v1388, %v1389
      %v1391 = vrot.slane %v1224, 7
      %v1392 = vrot.slane %v1226, 7
      %v1393 = vsel %vm1324, %v1391, %v1392
      %v1394 = vrot.slane %v1052, 7
      %v1395 = vsel %vm1324, %v1386, %v1394
      %v1396 = vrot.slane %v1152, 7
      %v1397 = vsel %vm1324, %v1389, %v1396
      %v1398 = vrot.slane %v1228, 7
      %v1399 = vsel %vm1324, %v1392, %v1398
      %v1400 = vrot.slane %v1054, 7
      %v1401 = vrot.slane %v1055, 7
      %v1402 = vsel %vm1324, %v1400, %v1401
      %v1403 = vrot.slane %v1154, 7
      %v1404 = vrot.slane %v1156, 7
      %v1405 = vsel %vm1324, %v1403, %v1404
      %v1406 = vrot.slane %v1229, 7
      %v1407 = vrot.slane %v1231, 7
      %v1408 = vsel %vm1324, %v1406, %v1407
      %v1409 = vrot.slane %v1056, 7
      %v1410 = vsel %vm1324, %v1401, %v1409
      %v1411 = vrot.slane %v1155, 7
      %v1412 = vsel %vm1324, %v1404, %v1411
      %v1413 = vrot.slane %v1233, 7
      %v1414 = vsel %vm1324, %v1407, %v1413
      %v1415 = vrot.slane %v1058, 7
      %v1416 = vrot.slane %v1059, 7
      %v1417 = vsel %vm1324, %v1415, %v1416
      %v1418 = vrot.slane %v1157, 7
      %v1419 = vrot.slane %v1159, 7
      %v1420 = vsel %vm1324, %v1418, %v1419
      %v1421 = vrot.slane %v1234, 7
      %v1422 = vrot.slane %v1236, 7
      %v1423 = vsel %vm1324, %v1421, %v1422
      %v1424 = vrot.slane %v1060, 7
      %v1425 = vsel %vm1324, %v1416, %v1424
      %v1426 = vrot.slane %v1158, 7
      %v1427 = vsel %vm1324, %v1419, %v1426
      %v1428 = vrot.slane %v1238, 7
      %v1429 = vsel %vm1324, %v1422, %v1428
      %v1430 = vrot.slane %v1062, 7
      %v1431 = vrot.slane %v1063, 7
      %v1432 = vsel %vm1324, %v1430, %v1431
      %v1433 = vrot.slane %v1160, 7
      %v1434 = vrot.slane %v1162, 7
      %v1435 = vsel %vm1324, %v1433, %v1434
      %v1436 = vrot.slane %v1239, 7
      %v1437 = vrot.slane %v1241, 7
      %v1438 = vsel %vm1324, %v1436, %v1437
      %v1439 = vrot.slane %v1064, 7
      %v1440 = vsel %vm1324, %v1431, %v1439
      %v1441 = vrot.slane %v1161, 7
      %v1442 = vsel %vm1324, %v1434, %v1441
      %v1443 = vrot.slane %v1243, 7
      %v1444 = vsel %vm1324, %v1437, %v1443
      %v1445 = vrot.slane %v1066, 7
      %v1446 = vrot.slane %v1067, 7
      %v1447 = vsel %vm1324, %v1445, %v1446
      %v1448 = vrot.slane %v1163, 7
      %v1449 = vrot.slane %v1165, 7
      %v1450 = vsel %vm1324, %v1448, %v1449
      %v1451 = vrot.slane %v1244, 7
      %v1452 = vrot.slane %v1246, 7
      %v1453 = vsel %vm1324, %v1451, %v1452
      %v1454 = vrot.slane %v1068, 7
      %v1455 = vsel %vm1324, %v1446, %v1454
      %v1456 = vrot.slane %v1164, 7
      %v1457 = vsel %vm1324, %v1449, %v1456
      %v1458 = vrot.slane %v1248, 7
      %v1459 = vsel %vm1324, %v1452, %v1458
      %v1460 = vrot.slane %v1070, 7
      %v1461 = vrot.slane %v1071, 7
      %v1462 = vsel %vm1324, %v1460, %v1461
      %v1463 = vrot.slane %v1166, 7
      %v1464 = vrot.slane %v1168, 7
      %v1465 = vsel %vm1324, %v1463, %v1464
      %v1466 = vrot.slane %v1249, 7
      %v1467 = vrot.slane %v1251, 7
      %v1468 = vsel %vm1324, %v1466, %v1467
      %v1469 = vrot.slane %v1072, 7
      %v1470 = vsel %vm1324, %v1461, %v1469
      %v1471 = vrot.slane %v1167, 7
      %v1472 = vsel %vm1324, %v1464, %v1471
      %v1473 = vrot.slane %v1253, 7
      %v1474 = vsel %vm1324, %v1467, %v1473
      %v1475 = vrot.slane %v1074, 7
      %v1476 = vrot.slane %v1075, 7
      %v1477 = vsel %vm1324, %v1475, %v1476
      %v1478 = vrot.slane %v1169, 7
      %v1479 = vrot.slane %v1171, 7
      %v1480 = vsel %vm1324, %v1478, %v1479
      %v1481 = vrot.slane %v1254, 7
      %v1482 = vrot.slane %v1256, 7
      %v1483 = vsel %vm1324, %v1481, %v1482
      %v1484 = vrot.slane %v1076, 7
      %v1485 = vsel %vm1324, %v1476, %v1484
      %v1486 = vrot.slane %v1170, 7
      %v1487 = vsel %vm1324, %v1479, %v1486
      %v1488 = vrot.slane %v1258, 7
      %v1489 = vsel %vm1324, %v1482, %v1488
      %v1490 = vrot.slane %v1078, 7
      %v1491 = vrot.slane %v1079, 7
      %v1492 = vsel %vm1324, %v1490, %v1491
      %v1493 = vrot.slane %v1172, 7
      %v1494 = vrot.slane %v1174, 7
      %v1495 = vsel %vm1324, %v1493, %v1494
      %v1496 = vrot.slane %v1259, 7
      %v1497 = vrot.slane %v1261, 7
      %v1498 = vsel %vm1324, %v1496, %v1497
      %v1499 = vrot.slane %v1080, 7
      %v1500 = vsel %vm1324, %v1491, %v1499
      %v1501 = vrot.slane %v1173, 7
      %v1502 = vsel %vm1324, %v1494, %v1501
      %v1503 = vrot.slane %v1263, 7
      %v1504 = vsel %vm1324, %v1497, %v1503
      %v1505 = vrot.slane %v1082, 7
      %v1506 = vrot.slane %v1083, 7
      %v1507 = vsel %vm1324, %v1505, %v1506
      %v1508 = vrot.slane %v1175, 7
      %v1509 = vrot.slane %v1177, 7
      %v1510 = vsel %vm1324, %v1508, %v1509
      %v1511 = vrot.slane %v1264, 7
      %v1512 = vrot.slane %v1266, 7
      %v1513 = vsel %vm1324, %v1511, %v1512
      %v1514 = vrot.slane %v1084, 7
      %v1515 = vsel %vm1324, %v1506, %v1514
      %v1516 = vrot.slane %v1176, 7
      %v1517 = vsel %vm1324, %v1509, %v1516
      %v1518 = vrot.slane %v1268, 7
      %v1519 = vsel %vm1324, %v1512, %v1518
      %v1520 = vrot.slane %v1086, 7
      %v1521 = vrot.slane %v1087, 7
      %v1522 = vsel %vm1324, %v1520, %v1521
      %v1523 = vrot.slane %v1178, 7
      %v1524 = vrot.slane %v1180, 7
      %v1525 = vsel %vm1324, %v1523, %v1524
      %v1526 = vrot.slane %v1269, 7
      %v1527 = vrot.slane %v1271, 7
      %v1528 = vsel %vm1324, %v1526, %v1527
      %v1529 = vrot.slane %v1088, 7
      %v1530 = vsel %vm1324, %v1521, %v1529
      %v1531 = vrot.slane %v1179, 7
      %v1532 = vsel %vm1324, %v1524, %v1531
      %v1533 = vrot.slane %v1273, 7
      %v1534 = vsel %vm1324, %v1527, %v1533
      %v1535 = vrot.slane %v1090, 7
      %v1536 = vrot.slane %v1091, 7
      %v1537 = vsel %vm1324, %v1535, %v1536
      %v1538 = vrot.slane %v1181, 7
      %v1539 = vrot.slane %v1183, 7
      %v1540 = vsel %vm1324, %v1538, %v1539
      %v1541 = vrot.slane %v1274, 7
      %v1542 = vrot.slane %v1276, 7
      %v1543 = vsel %vm1324, %v1541, %v1542
      %v1544 = vrot.slane %v1092, 7
      %v1545 = vsel %vm1324, %v1536, %v1544
      %v1546 = vrot.slane %v1182, 7
      %v1547 = vsel %vm1324, %v1539, %v1546
      %v1548 = vrot.slane %v1278, 7
      %v1549 = vsel %vm1324, %v1542, %v1548
      %v1550 = vrot.slane %v1094, 7
      %v1551 = vrot.slane %v1095, 7
      %v1552 = vsel %vm1324, %v1550, %v1551
      %v1553 = vrot.slane %v1184, 7
      %v1554 = vrot.slane %v1186, 7
      %v1555 = vsel %vm1324, %v1553, %v1554
      %v1556 = vrot.slane %v1279, 7
      %v1557 = vrot.slane %v1281, 7
      %v1558 = vsel %vm1324, %v1556, %v1557
      %v1559 = vrot.slane %v1096, 7
      %v1560 = vsel %vm1324, %v1551, %v1559
      %v1561 = vrot.slane %v1185, 7
      %v1562 = vsel %vm1324, %v1554, %v1561
      %v1563 = vrot.slane %v1283, 7
      %v1564 = vsel %vm1324, %v1557, %v1563
      %v1565 = vrot.slane %v1098, 7
      %v1566 = vrot.slane %v1099, 7
      %v1567 = vsel %vm1324, %v1565, %v1566
      %v1568 = vrot.slane %v1286, 7
      %v1569 = vrot.slane %v1288, 7
      %v1570 = vsel %vm1324, %v1568, %v1569
      %v1571 = vrot.slane %v1290, 7
      %v1572 = vrot.slane %v1292, 7
      %v1573 = vsel %vm1324, %v1571, %v1572
      %v1574 = vrot.slane %v1100, 7
      %v1575 = vsel %vm1324, %v1566, %v1574
      %v1576 = vrot.slane %v1287, 7
      %v1577 = vsel %vm1324, %v1569, %v1576
      %v1578 = vrot.slane %v1294, 7
      %v1579 = vsel %vm1324, %v1572, %v1578
      %v1580 = vrot.slane %v1102, 7
      %v1581 = vrot.slane %v1103, 7
      %v1582 = vsel %vm1324, %v1580, %v1581
      %v1583 = vrot.slane %v1297, 7
      %v1584 = vrot.slane %v1299, 7
      %v1585 = vsel %vm1324, %v1583, %v1584
      %v1586 = vrot.slane %v1301, 7
      %v1587 = vrot.slane %v1303, 7
      %v1588 = vsel %vm1324, %v1586, %v1587
      %v1589 = vrot.slane %v1104, 7
      %v1590 = vsel %vm1324, %v1581, %v1589
      %v1591 = vrot.slane %v1298, 7
      %v1592 = vsel %vm1324, %v1584, %v1591
      %v1593 = vrot.slane %v1305, 7
      %v1594 = vsel %vm1324, %v1587, %v1593
      %v1703 = vpack.c.bf16 %v1353, %v1327
      %v1704 = vpack.c.bf16 %v1355, %v1330
      %v1705 = vpack.c.bf16 %v1357, %v1333
      %v1706 = vpack.c.bf16 %v1359, %v1336
      %v1707 = vpack.c.bf16 %v1361, %v1339
      %v1708 = vpack.c.bf16 %v1363, %v1342
      %v1709 = vpack.c.bf16 %v1365, %v1345
      %v1710 = vpack.c.bf16 %v1367, %v1348
      %v1711 = vpack.c.bf16 %v1369, %v1351
      %v1712 = vpack.c.bf16 %v1380, %v1372
      %v1713 = vpack.c.bf16 %v1382, %v1375
      %v1714 = vpack.c.bf16 %v1384, %v1378
      %v1715 = vpack.c.bf16 %v1395, %v1387
      %v1716 = vpack.c.bf16 %v1397, %v1390
      %v1717 = vpack.c.bf16 %v1399, %v1393
      %v1718 = vpack.c.bf16 %v1410, %v1402
      %v1719 = vpack.c.bf16 %v1412, %v1405
      %v1720 = vpack.c.bf16 %v1414, %v1408
      %v1721 = vpack.c.bf16 %v1425, %v1417
      %v1722 = vpack.c.bf16 %v1427, %v1420
      %v1723 = vpack.c.bf16 %v1429, %v1423
      %v1724 = vpack.c.bf16 %v1440, %v1432
      %v1725 = vpack.c.bf16 %v1442, %v1435
      %v1726 = vpack.c.bf16 %v1444, %v1438
      %v1727 = vpack.c.bf16 %v1455, %v1447
      %v1728 = vpack.c.bf16 %v1457, %v1450
      %v1729 = vpack.c.bf16 %v1459, %v1453
      %v1730 = vpack.c.bf16 %v1470, %v1462
      %v1731 = vpack.c.bf16 %v1472, %v1465
      %v1732 = vpack.c.bf16 %v1474, %v1468
      %v1733 = vpack.c.bf16 %v1485, %v1477
      %v1734 = vpack.c.bf16 %v1487, %v1480
      %v1735 = vpack.c.bf16 %v1489, %v1483
      %v1736 = vpack.c.bf16 %v1500, %v1492
      %v1737 = vpack.c.bf16 %v1502, %v1495
      %v1738 = vpack.c.bf16 %v1504, %v1498
      %v1739 = vpack.c.bf16 %v1515, %v1507
      %v1740 = vpack.c.bf16 %v1517, %v1510
      %v1741 = vpack.c.bf16 %v1519, %v1513
      %v1742 = vpack.c.bf16 %v1530, %v1522
      %v1743 = vpack.c.bf16 %v1532, %v1525
      %v1744 = vpack.c.bf16 %v1534, %v1528
      %v1745 = vpack.c.bf16 %v1545, %v1537
      %v1746 = vpack.c.bf16 %v1547, %v1540
      %v1747 = vpack.c.bf16 %v1549, %v1543
      %v1748 = vpack.c.bf16 %v1560, %v1552
      %v1749 = vpack.c.bf16 %v1562, %v1555
      %v1750 = vpack.c.bf16 %v1564, %v1558
      %v1751 = vpack.c.bf16 %v1575, %v1567
      %v1752 = vpack.c.bf16 %v1577, %v1570
      %v1753 = vpack.c.bf16 %v1579, %v1573
      %v1754 = vpack.c.bf16 %v1590, %v1582
      %v1755 = vpack.c.bf16 %v1592, %v1585
      %v1756 = vpack.c.bf16 %v1594, %v1588
      %v1757 = vld [vmem:[%s4] sm:$0xf]
      %v1758 = vld [vmem:[%s4 + $0x4] sm:$0xf]
      %v1759 = vld [vmem:[%s4 + $0x8] sm:$0xf]
      %v1760 = vld [vmem:[%s4 + $0xc] sm:$0xf]
      %v1761 = vld [vmem:[%s4 + $0x10] sm:$0xf]
      %v1762 = vld [vmem:[%s4 + $0x14] sm:$0xf]
      %v1763 = vld [vmem:[%s4 + $0x18] sm:$0xf]
      %v1764 = vld [vmem:[%s4 + $0x1c] sm:$0xf]
      %v1765 = vld [vmem:[%s4 + $0x20] sm:$0xf]
      %v1766 = vld [vmem:[%s4 + $0x24] sm:$0xf]
      %v1767 = vld [vmem:[%s4 + $0x28] sm:$0xf]
      %v1768 = vld [vmem:[%s4 + $0x2c] sm:$0xf]
      %v1769 = vld [vmem:[%s4 + $0x30] sm:$0xf]
      %v1770 = vld [vmem:[%s4 + $0x34] sm:$0xf]
      %v1771 = vld [vmem:[%s4 + $0x38] sm:$0xf]
      %v1772 = vld [vmem:[%s4 + $0x3c] sm:$0xf]
      %v1773 = vld [vmem:[%s4 + $0x40] sm:$0xf]
      %v1774 = vld [vmem:[%s4 + $0x44] sm:$0xf]
      %v1775 = vld [vmem:[%s4 + $0x48] sm:$0xf]
      %v1776 = vld [vmem:[%s4 + $0x4c] sm:$0xf]
      %v1777 = vld [vmem:[%s4 + $0x50] sm:$0xf]
      %v1778 = vld [vmem:[%s4 + $0x54] sm:$0xf]
      %v1779 = vld [vmem:[%s4 + $0x58] sm:$0xf]
      %v1780 = vld [vmem:[%s4 + $0x5c] sm:$0xf]
      %v1781 = vld [vmem:[%s4 + $0x60] sm:$0xf]
      %v1782 = vld [vmem:[%s4 + $0x64] sm:$0xf]
      %v1783 = vld [vmem:[%s4 + $0x68] sm:$0xf]
      %v1784 = vld [vmem:[%s4 + $0x6c] sm:$0xf]
      %v1785 = vld [vmem:[%s4 + $0x70] sm:$0xf]
      %v1786 = vld [vmem:[%s4 + $0x74] sm:$0xf]
      %v1787 = vld [vmem:[%s4 + $0x78] sm:$0xf]
      %v1788 = vld [vmem:[%s4 + $0x7c] sm:$0xf]
      %v1789 = vld [vmem:[%s4 + $0x80] sm:$0xf]
      %v1790 = vld [vmem:[%s4 + $0x84] sm:$0xf]
      %v1791 = vld [vmem:[%s4 + $0x88] sm:$0xf]
      %v1792 = vld [vmem:[%s4 + $0x8c] sm:$0xf]
      %v1793 = vld [vmem:[%s4 + $0x90] sm:$0xf]
      %v1794 = vld [vmem:[%s4 + $0x94] sm:$0xf]
      %v1795 = vld [vmem:[%s4 + $0x98] sm:$0xf]
      %v1796 = vld [vmem:[%s4 + $0x9c] sm:$0xf]
      %v1797 = vld [vmem:[%s4 + $0xa0] sm:$0xf]
      %v1798 = vld [vmem:[%s4 + $0xa4] sm:$0xf]
      %v1799 = vld [vmem:[%s4 + $0xa8] sm:$0xf]
      %v1800 = vld [vmem:[%s4 + $0xac] sm:$0xf]
      %v1801 = vld [vmem:[%s4 + $0xb0] sm:$0xf]
      %v1802 = vld [vmem:[%s4 + $0xb4] sm:$0xf]
      %v1803 = vld [vmem:[%s4 + $0xb8] sm:$0xf]
      %v1804 = vld [vmem:[%s4 + $0xbc] sm:$0xf]
      %v1805 = vld [vmem:[%s4 + $0xc0] sm:$0xf]
      %v1806 = vld [vmem:[%s4 + $0xc4] sm:$0xf]
      %v1807 = vld [vmem:[%s4 + $0xc8] sm:$0xf]
      %v1808 = vld [vmem:[%s4 + $0xcc] sm:$0xf]
      %v1809 = vld [vmem:[%s4 + $0xd0] sm:$0xf]
      %v1810 = vld [vmem:[%s4 + $0xd4] sm:$0xf]
      %v1811 = vld [vmem:[%s4 + $0xd8] sm:$0xf]
      %v1812 = vld [vmem:[%s4 + $0xdc] sm:$0xf]
      %v1813 = vld [vmem:[%s4 + $0xe0] sm:$0xf]
      %v1814 = vld [vmem:[%s4 + $0xe4] sm:$0xf]
      %v1815 = vld [vmem:[%s4 + $0xe8] sm:$0xf]
      %v1816 = vld [vmem:[%s4 + $0xec] sm:$0xf]
      %v1817 = vld [vmem:[%s4 + $0xf0] sm:$0xf]
      %v1818 = vld [vmem:[%s4 + $0xf4] sm:$0xf]
      %v1819 = vld [vmem:[%s4 + $0xf8] sm:$0xf]
      %v1820 = vld [vmem:[%s4 + $0xfc] sm:$0xf]
      %v1821 = vld [vmem:[%s4 + $0x100] sm:$0xf]
      %v1822 = vld [vmem:[%s4 + $0x104] sm:$0xf]
      %v1823 = vld [vmem:[%s4 + $0x108] sm:$0xf]
      %v1824 = vld [vmem:[%s4 + $0x10c] sm:$0xf]
      %v1825 = vld [vmem:[%s4 + $0x110] sm:$0xf]
      %v1826 = vld [vmem:[%s4 + $0x114] sm:$0xf]
      %v1827 = vld [vmem:[%s4 + $0x118] sm:$0xf]
      %v1828 = vld [vmem:[%s4 + $0x11c] sm:$0xf]
      %v1829 = vld [vmem:[%s4 + $0x120] sm:$0xf]
      %v1830 = vld [vmem:[%s4 + $0x124] sm:$0xf]
      %v1831 = vld [vmem:[%s4 + $0x128] sm:$0xf]
      %v1832 = vld [vmem:[%s4 + $0x12c] sm:$0xf]
      %v1833 = vld [vmem:[%s4 + $0x130] sm:$0xf]
      %v1834 = vld [vmem:[%s4 + $0x134] sm:$0xf]
      %v1835 = vld [vmem:[%s4 + $0x138] sm:$0xf]
      %v1836 = vld [vmem:[%s4 + $0x13c] sm:$0xf]
      %v1837 = vld [vmem:[%s4 + $0x140] sm:$0xf]
      %v1838 = vld [vmem:[%s4 + $0x144] sm:$0xf]
      %v1839 = vld [vmem:[%s4 + $0x148] sm:$0xf]
      %v1840 = vld [vmem:[%s4 + $0x14c] sm:$0xf]
      %v1841 = vld [vmem:[%s4 + $0x150] sm:$0xf]
      %v1842 = vld [vmem:[%s4 + $0x154] sm:$0xf]
      %v1843 = vld [vmem:[%s4 + $0x158] sm:$0xf]
      %v1844 = vld [vmem:[%s4 + $0x15c] sm:$0xf]
      %v1845 = vld [vmem:[%s4 + $0x160] sm:$0xf]
      %v1846 = vld [vmem:[%s4 + $0x164] sm:$0xf]
      %v1847 = vld [vmem:[%s4 + $0x168] sm:$0xf]
      %v1848 = vld [vmem:[%s4 + $0x16c] sm:$0xf]
      %v1849 = vld [vmem:[%s4 + $0x170] sm:$0xf]
      %v1850 = vld [vmem:[%s4 + $0x174] sm:$0xf]
      %v1851 = vld [vmem:[%s4 + $0x178] sm:$0xf]
      %v1852 = vld [vmem:[%s4 + $0x17c] sm:$0xf]
      %v1853 = vld [vmem:[%s4 + $0x180] sm:$0xf]
      %v1854 = vld [vmem:[%s4 + $0x184] sm:$0xf]
      %v1855 = vld [vmem:[%s4 + $0x188] sm:$0xf]
      %v1856 = vld [vmem:[%s4 + $0x18c] sm:$0xf]
      %v1857 = vld [vmem:[%s4 + $0x190] sm:$0xf]
      %v1858 = vld [vmem:[%s4 + $0x194] sm:$0xf]
      %v1859 = vld [vmem:[%s4 + $0x198] sm:$0xf]
      %v1860 = vld [vmem:[%s4 + $0x19c] sm:$0xf]
      %v1861 = vld [vmem:[%s4 + $0x1a0] sm:$0xf]
      %v1862 = vld [vmem:[%s4 + $0x1a4] sm:$0xf]
      %v1863 = vld [vmem:[%s4 + $0x1a8] sm:$0xf]
      %v1864 = vld [vmem:[%s4 + $0x1ac] sm:$0xf]
      %v1865 = vld [vmem:[%s4 + $0x1b0] sm:$0xf]
      %v1866 = vld [vmem:[%s4 + $0x1b4] sm:$0xf]
      %v1867 = vld [vmem:[%s4 + $0x1b8] sm:$0xf]
      %v1868 = vld [vmem:[%s4 + $0x1bc] sm:$0xf]
      %v1869 = vld [vmem:[%s4 + $0x1c0] sm:$0xf]
      %v1870 = vld [vmem:[%s4 + $0x1c4] sm:$0xf]
      %v1871 = vld [vmem:[%s4 + $0x1c8] sm:$0xf]
      %v1872 = vld [vmem:[%s4 + $0x1cc] sm:$0xf]
      %v1873 = vld [vmem:[%s4 + $0x1d0] sm:$0xf]
      %v1874 = vld [vmem:[%s4 + $0x1d4] sm:$0xf]
      %v1875 = vld [vmem:[%s4 + $0x1d8] sm:$0xf]
      %v1876 = vld [vmem:[%s4 + $0x1dc] sm:$0xf]
      %v1877 = vld [vmem:[%s4 + $0x1e0] sm:$0xf]
      %v1878 = vld [vmem:[%s4 + $0x1e4] sm:$0xf]
      %v1879 = vld [vmem:[%s4 + $0x1e8] sm:$0xf]
      %v1880 = vld [vmem:[%s4 + $0x1ec] sm:$0xf]
      %v1881 = vld [vmem:[%s4 + $0x1f0] sm:$0xf]
      %v1882 = vld [vmem:[%s4 + $0x1f4] sm:$0xf]
      %v1883 = vld [vmem:[%s4 + $0x1f8] sm:$0xf]
      %v1884 = vld [vmem:[%s4 + $0x1fc] sm:$0xf]
      %v1885 = vld [vmem:[%s4 + $0x200] sm:$0xf]
      %v1886 = vld [vmem:[%s4 + $0x204] sm:$0xf]
      %v1887 = vld [vmem:[%s4 + $0x208] sm:$0xf]
      %v1888 = vld [vmem:[%s4 + $0x20c] sm:$0xf]
      %v1889 = vld [vmem:[%s4 + $0x210] sm:$0xf]
      %v1890 = vld [vmem:[%s4 + $0x214] sm:$0xf]
      %v1891 = vld [vmem:[%s4 + $0x218] sm:$0xf]
      %v1892 = vld [vmem:[%s4 + $0x21c] sm:$0xf]
      %v1893 = vld [vmem:[%s4 + $0x220] sm:$0xf]
      %v1894 = vld [vmem:[%s4 + $0x224] sm:$0xf]
      %v1895 = vld [vmem:[%s4 + $0x228] sm:$0xf]
      %v1896 = vld [vmem:[%s4 + $0x22c] sm:$0xf]
      %v1897 = vld [vmem:[%s4 + $0x230] sm:$0xf]
      %v1898 = vld [vmem:[%s4 + $0x234] sm:$0xf]
      %v1899 = vld [vmem:[%s4 + $0x238] sm:$0xf]
      %v1900 = vld [vmem:[%s4 + $0x23c] sm:$0xf]
      %v1901 = vld [vmem:[%s5] sm:$0x1]
      %v1903 = vlaneseq
      %v1904 = vshrl.u32 %v1903, 7
      %v1905 = vsub.s32 0, %v1904
      %v1906 = vrot.slane %v1901, %v1905
      %v2052 = vunpack.c.l.b16 %v1757
      %v2053 = vunpack.c.l.b16 %v1758
      %v2054 = vunpack.c.l.b16 %v1759
      %v2055 = vunpack.c.l.b16 %v1760
      %v2056 = vunpack.c.l.b16 %v1761
      %v2057 = vunpack.c.l.b16 %v1762
      %v2058 = vunpack.c.l.b16 %v1763
      %v2059 = vunpack.c.l.b16 %v1764
      %v2060 = vunpack.c.l.b16 %v1765
      %v2061 = vunpack.c.l.b16 %v1766
      %v2062 = vunpack.c.l.b16 %v1767
      %v2063 = vunpack.c.l.b16 %v1768
      %v2064 = vunpack.c.l.b16 %v1769
      %v2065 = vunpack.c.l.b16 %v1770
      %v2066 = vunpack.c.l.b16 %v1771
      %v2067 = vunpack.c.l.b16 %v1772
      %v2068 = vunpack.c.l.b16 %v1773
      %v2069 = vunpack.c.l.b16 %v1774
      %v2070 = vunpack.c.l.b16 %v1775
      %v2071 = vunpack.c.l.b16 %v1776
      %v2072 = vunpack.c.l.b16 %v1777
      %v2073 = vunpack.c.l.b16 %v1778
      %v2074 = vunpack.c.l.b16 %v1779
      %v2075 = vunpack.c.l.b16 %v1780
      %v2076 = vunpack.c.l.b16 %v1781
      %v2077 = vunpack.c.l.b16 %v1782
      %v2078 = vunpack.c.l.b16 %v1783
      %v2079 = vunpack.c.l.b16 %v1784
      %v2080 = vunpack.c.l.b16 %v1785
      %v2081 = vunpack.c.l.b16 %v1786
      %v2082 = vunpack.c.l.b16 %v1787
      %v2083 = vunpack.c.l.b16 %v1788
      %v2084 = vunpack.c.l.b16 %v1789
      %v2085 = vunpack.c.l.b16 %v1790
      %v2086 = vunpack.c.l.b16 %v1791
      %v2087 = vunpack.c.l.b16 %v1792
      %v2088 = vunpack.c.l.b16 %v1793
      %v2089 = vunpack.c.l.b16 %v1794
      %v2090 = vunpack.c.l.b16 %v1795
      %v2091 = vunpack.c.l.b16 %v1796
      %v2092 = vunpack.c.l.b16 %v1797
      %v2093 = vunpack.c.l.b16 %v1798
      %v2094 = vunpack.c.l.b16 %v1799
      %v2095 = vunpack.c.l.b16 %v1800
      %v2096 = vunpack.c.l.b16 %v1801
      %v2097 = vunpack.c.l.b16 %v1802
      %v2098 = vunpack.c.l.b16 %v1803
      %v2099 = vunpack.c.l.b16 %v1804
      %v2100 = vunpack.c.l.b16 %v1805
      %v2101 = vunpack.c.l.b16 %v1806
      %v2102 = vunpack.c.l.b16 %v1807
      %v2103 = vunpack.c.l.b16 %v1808
      %v2104 = vunpack.c.l.b16 %v1809
      %v2105 = vunpack.c.l.b16 %v1810
      %v2106 = vunpack.c.l.b16 %v1811
      %v2107 = vunpack.c.l.b16 %v1812
      %v2108 = vunpack.c.l.b16 %v1813
      %v2109 = vunpack.c.l.b16 %v1814
      %v2110 = vunpack.c.l.b16 %v1815
      %v2111 = vunpack.c.l.b16 %v1816
      %v2112 = vunpack.c.l.b16 %v1817
      %v2113 = vunpack.c.l.b16 %v1818
      %v2114 = vunpack.c.l.b16 %v1819
      %v2115 = vunpack.c.l.b16 %v1820
      %v2116 = vunpack.c.l.b16 %v1821
      %v2117 = vunpack.c.l.b16 %v1822
      %v2118 = vunpack.c.l.b16 %v1823
      %v2119 = vunpack.c.l.b16 %v1824
      %v2120 = vunpack.c.l.b16 %v1825
      %v2121 = vunpack.c.l.b16 %v1826
      %v2122 = vunpack.c.l.b16 %v1827
      %v2123 = vunpack.c.l.b16 %v1828
      %v2124 = vunpack.c.l.b16 %v1829
      %v2125 = vunpack.c.l.b16 %v1830
      %v2126 = vunpack.c.l.b16 %v1831
      %v2127 = vunpack.c.l.b16 %v1832
      %v2128 = vunpack.c.l.b16 %v1833
      %v2129 = vunpack.c.l.b16 %v1834
      %v2130 = vunpack.c.l.b16 %v1835
      %v2131 = vunpack.c.l.b16 %v1836
      %v2132 = vunpack.c.l.b16 %v1837
      %v2133 = vunpack.c.l.b16 %v1838
      %v2134 = vunpack.c.l.b16 %v1839
      %v2135 = vunpack.c.l.b16 %v1840
      %v2136 = vunpack.c.l.b16 %v1841
      %v2137 = vunpack.c.l.b16 %v1842
      %v2138 = vunpack.c.l.b16 %v1843
      %v2139 = vunpack.c.l.b16 %v1844
      %v2140 = vunpack.c.l.b16 %v1845
      %v2141 = vunpack.c.l.b16 %v1846
      %v2142 = vunpack.c.l.b16 %v1847
      %v2143 = vunpack.c.l.b16 %v1848
      %v2144 = vunpack.c.l.b16 %v1849
      %v2145 = vunpack.c.l.b16 %v1850
      %v2146 = vunpack.c.l.b16 %v1851
      %v2147 = vunpack.c.l.b16 %v1852
      %v2148 = vunpack.c.l.b16 %v1853
      %v2149 = vunpack.c.l.b16 %v1854
      %v2150 = vunpack.c.l.b16 %v1855
      %v2151 = vunpack.c.l.b16 %v1856
      %v2152 = vunpack.c.l.b16 %v1857
      %v2153 = vunpack.c.l.b16 %v1858
      %v2154 = vunpack.c.l.b16 %v1859
      %v2155 = vunpack.c.l.b16 %v1860
      %v2156 = vunpack.c.l.b16 %v1861
      %v2157 = vunpack.c.l.b16 %v1862
      %v2158 = vunpack.c.l.b16 %v1863
      %v2159 = vunpack.c.l.b16 %v1864
      %v2160 = vunpack.c.l.b16 %v1865
      %v2161 = vunpack.c.l.b16 %v1866
      %v2162 = vunpack.c.l.b16 %v1867
      %v2163 = vunpack.c.l.b16 %v1868
      %v2164 = vunpack.c.l.b16 %v1869
      %v2165 = vunpack.c.l.b16 %v1870
      %v2166 = vunpack.c.l.b16 %v1871
      %v2167 = vunpack.c.l.b16 %v1872
      %v2168 = vunpack.c.l.b16 %v1873
      %v2169 = vunpack.c.l.b16 %v1874
      %v2170 = vunpack.c.l.b16 %v1875
      %v2171 = vunpack.c.l.b16 %v1876
      %v2172 = vunpack.c.l.b16 %v1877
      %v2173 = vunpack.c.l.b16 %v1878
      %v2174 = vunpack.c.l.b16 %v1879
      %v2175 = vunpack.c.l.b16 %v1880
      %v2176 = vunpack.c.l.b16 %v1881
      %v2177 = vunpack.c.l.b16 %v1882
      %v2178 = vunpack.c.l.b16 %v1883
      %v2179 = vunpack.c.l.b16 %v1884
      %v2180 = vunpack.c.l.b16 %v1885
      %v2181 = vunpack.c.l.b16 %v1886
      %v2182 = vunpack.c.l.b16 %v1887
      %v2183 = vunpack.c.l.b16 %v1888
      %v2184 = vunpack.c.l.b16 %v1889
      %v2185 = vunpack.c.l.b16 %v1890
      %v2186 = vunpack.c.l.b16 %v1891
      %v2187 = vunpack.c.l.b16 %v1892
      %v2188 = vunpack.c.l.b16 %v1893
      %v2189 = vunpack.c.l.b16 %v1894
      %v2190 = vunpack.c.l.b16 %v1895
      %v2191 = vunpack.c.l.b16 %v1896
      %v2192 = vunpack.c.l.b16 %v1897
      %v2193 = vunpack.c.l.b16 %v1898
      %v2194 = vunpack.c.l.b16 %v1899
      %v2195 = vunpack.c.l.b16 %v1900
      %v2196 = vpack.c.b16 %v2053, %v2052
      %v2197 = vpack.c.b16 %v2055, %v2054
      %v2198 = vpack.c.b16 %v2057, %v2056
      %v2199 = vpack.c.b16 %v2059, %v2058
      %v2200 = vpack.c.b16 %v2061, %v2060
      %v2201 = vpack.c.b16 %v2063, %v2062
      %v2202 = vpack.c.b16 %v2065, %v2064
      %v2203 = vpack.c.b16 %v2067, %v2066
      %v2204 = vpack.c.b16 %v2069, %v2068
      %v2205 = vpack.c.b16 %v2071, %v2070
      %v2206 = vpack.c.b16 %v2073, %v2072
      %v2207 = vpack.c.b16 %v2075, %v2074
      %v2208 = vpack.c.b16 %v2077, %v2076
      %v2209 = vpack.c.b16 %v2079, %v2078
      %v2210 = vpack.c.b16 %v2081, %v2080
      %v2211 = vpack.c.b16 %v2083, %v2082
      %v2212 = vpack.c.b16 %v2085, %v2084
      %v2213 = vpack.c.b16 %v2087, %v2086
      %v2214 = vpack.c.b16 %v2089, %v2088
      %v2215 = vpack.c.b16 %v2091, %v2090
      %v2216 = vpack.c.b16 %v2093, %v2092
      %v2217 = vpack.c.b16 %v2095, %v2094
      %v2218 = vpack.c.b16 %v2097, %v2096
      %v2219 = vpack.c.b16 %v2099, %v2098
      %v2220 = vpack.c.b16 %v2101, %v2100
      %v2221 = vpack.c.b16 %v2103, %v2102
      %v2222 = vpack.c.b16 %v2105, %v2104
      %v2223 = vpack.c.b16 %v2107, %v2106
      %v2224 = vpack.c.b16 %v2109, %v2108
      %v2225 = vpack.c.b16 %v2111, %v2110
      %v2226 = vpack.c.b16 %v2113, %v2112
      %v2227 = vpack.c.b16 %v2115, %v2114
      %v2228 = vpack.c.b16 %v2117, %v2116
      %v2229 = vpack.c.b16 %v2119, %v2118
      %v2230 = vpack.c.b16 %v2121, %v2120
      %v2231 = vpack.c.b16 %v2123, %v2122
      %v2232 = vpack.c.b16 %v2125, %v2124
      %v2233 = vpack.c.b16 %v2127, %v2126
      %v2234 = vpack.c.b16 %v2129, %v2128
      %v2235 = vpack.c.b16 %v2131, %v2130
      %v2236 = vpack.c.b16 %v2133, %v2132
      %v2237 = vpack.c.b16 %v2135, %v2134
      %v2238 = vpack.c.b16 %v2137, %v2136
      %v2239 = vpack.c.b16 %v2139, %v2138
      %v2240 = vpack.c.b16 %v2141, %v2140
      %v2241 = vpack.c.b16 %v2143, %v2142
      %v2242 = vpack.c.b16 %v2145, %v2144
      %v2243 = vpack.c.b16 %v2147, %v2146
      %v2244 = vpack.c.b16 %v2149, %v2148
      %v2245 = vpack.c.b16 %v2151, %v2150
      %v2246 = vpack.c.b16 %v2153, %v2152
      %v2247 = vpack.c.b16 %v2155, %v2154
      %v2248 = vpack.c.b16 %v2157, %v2156
      %v2249 = vpack.c.b16 %v2159, %v2158
      %v2250 = vpack.c.b16 %v2161, %v2160
      %v2251 = vpack.c.b16 %v2163, %v2162
      %v2252 = vpack.c.b16 %v2165, %v2164
      %v2253 = vpack.c.b16 %v2167, %v2166
      %v2254 = vpack.c.b16 %v2169, %v2168
      %v2255 = vpack.c.b16 %v2171, %v2170
      %v2256 = vpack.c.b16 %v2173, %v2172
      %v2257 = vpack.c.b16 %v2175, %v2174
      %v2258 = vpack.c.b16 %v2177, %v2176
      %v2259 = vpack.c.b16 %v2179, %v2178
      %v2260 = vpack.c.b16 %v2181, %v2180
      %v2261 = vpack.c.b16 %v2183, %v2182
      %v2262 = vpack.c.b16 %v2185, %v2184
      %v2263 = vpack.c.b16 %v2187, %v2186
      %v2264 = vpack.c.b16 %v2189, %v2188
      %v2265 = vpack.c.b16 %v2191, %v2190
      %v2266 = vpack.c.b16 %v2193, %v2192
      %v2267 = vpack.c.b16 %v2195, %v2194
      %2340 = vmatprep.subr.bf16.mxu0 0
      %2341 = vmatpush1.bf16.msra.mxu0 %v2196
      %2342 = vmatprep.subr.bf16.mxu0 0
      %2343 = vmatpush1.bf16.msra.mxu0 %v2197
      %2344 = vmatprep.subr.bf16.mxu0 0
      %2345 = vmatpush1.bf16.msra.mxu0 %v2198
      %2346 = vmatprep.subr.bf16.mxu0 0
      %2347 = vmatpush1.bf16.msra.mxu0 %v2199
      %2348 = vmatprep.subr.bf16.mxu0 0
      %2349 = vmatpush1.bf16.msra.mxu0 %v2200
      %2350 = vmatprep.subr.bf16.mxu0 0
      %2351 = vmatpush1.bf16.msra.mxu0 %v2201
      %2352 = vmatprep.subr.bf16.mxu0 0
      %2353 = vmatpush1.bf16.msra.mxu0 %v2202
      %2354 = vmatprep.subr.bf16.mxu0 0
      %2355 = vmatpush1.bf16.msra.mxu0 %v2203
      %2356 = vmatprep.subr.bf16.mxu0 0
      %2357 = vmatpush1.bf16.msra.mxu0 %v2204
      %2358 = vmatprep.subr.bf16.mxu0 0
      %2359 = vmatpush1.bf16.msra.mxu0 %v2205
      %2360 = vmatprep.subr.bf16.mxu0 0
      %2361 = vmatpush1.bf16.msra.mxu0 %v2206
      %2362 = vmatprep.subr.bf16.mxu0 0
      %2363 = vmatpush1.bf16.msra.mxu0 %v2207
      %2364 = vmatprep.subr.bf16.mxu0 0
      %2365 = vmatpush1.bf16.msra.mxu0 %v2208
      %2366 = vmatprep.subr.bf16.mxu0 0
      %2367 = vmatpush1.bf16.msra.mxu0 %v2209
      %2368 = vmatprep.subr.bf16.mxu0 0
      %2369 = vmatpush1.bf16.msra.mxu0 %v2210
      %2370 = vmatprep.subr.bf16.mxu0 0
      %2371 = vmatpush1.bf16.msra.mxu0 %v2211
      %2372 = vmatprep.mubr.bf16.mxu0 %v1704
      %2373 = vmatmul.mubr.bf16.gmra.mrb[0].mxu0 %v1703
      %v2374 = vpop.f32.mrb[0].mxu0
      %v2375 = vadd.f32 %v1906, %v2374
      %v2376 = vpop.f32.mrb[0].mxu0
      %v2377 = vpop.f32.mrb[0].mxu0
      %v2378 = vadd.f32 %v1906, %v2377
      %v2379 = vpop.f32.mrb[0].mxu0
      %2380 = vmatprep.mubr.bf16.mxu0 %v1707
      %2381 = vmatmul.mubr.bf16.gmra.mrb[0].mxu0 %v1706
      %v2382 = vpop.f32.mrb[0].mxu0
      %v2383 = vadd.f32 %v1906, %v2382
      %v2384 = vpop.f32.mrb[0].mxu0
      %v2385 = vpop.f32.mrb[0].mxu0
      %v2386 = vadd.f32 %v1906, %v2385
      %v2387 = vpop.f32.mrb[0].mxu0
      %2388 = vmatprep.mubr.bf16.mxu0 %v1710
      %2389 = vmatmul.mubr.bf16.gmra.mrb[0].mxu0 %v1709
      %v2390 = vpop.f32.mrb[0].mxu0
      %v2391 = vadd.f32 %v1906, %v2390
      %v2392 = vpop.f32.mrb[0].mxu0
      %v2393 = vpop.f32.mrb[0].mxu0
      %v2394 = vadd.f32 %v1906, %v2393
      %v2395 = vpop.f32.mrb[0].mxu0
      %2396 = vmatprep.mubr.bf16.mxu0 %v1713
      %2397 = vmatmul.mubr.bf16.gmra.mrb[0].mxu0 %v1712
      %v2398 = vpop.f32.mrb[0].mxu0
      %v2399 = vadd.f32 %v1906, %v2398
      %v2400 = vpop.f32.mrb[0].mxu0
      %v2401 = vpop.f32.mrb[0].mxu0
      %v2402 = vadd.f32 %v1906, %v2401
      %v2403 = vpop.f32.mrb[0].mxu0
      %2404 = vmatprep.mubr.bf16.mxu0 %v1716
      %2405 = vmatmul.mubr.bf16.gmra.mrb[0].mxu0 %v1715
      %v2406 = vpop.f32.mrb[0].mxu0
      %v2407 = vadd.f32 %v1906, %v2406
      %v2408 = vpop.f32.mrb[0].mxu0
      %v2409 = vpop.f32.mrb[0].mxu0
      %v2410 = vadd.f32 %v1906, %v2409
      %v2411 = vpop.f32.mrb[0].mxu0
      %2412 = vmatprep.mubr.bf16.mxu0 %v1719
      %2413 = vmatmul.mubr.bf16.gmra.mrb[0].mxu0 %v1718
      %v2414 = vpop.f32.mrb[0].mxu0
      %v2415 = vadd.f32 %v1906, %v2414
      %v2416 = vpop.f32.mrb[0].mxu0
      %v2417 = vpop.f32.mrb[0].mxu0
      %v2418 = vadd.f32 %v1906, %v2417
      %v2419 = vpop.f32.mrb[0].mxu0
      %2420 = vmatprep.mubr.bf16.mxu0 %v1722
      %2421 = vmatmul.mubr.bf16.gmra.mrb[0].mxu0 %v1721
      %v2422 = vpop.f32.mrb[0].mxu0
      %v2423 = vadd.f32 %v1906, %v2422
      %v2424 = vpop.f32.mrb[0].mxu0
      %v2425 = vpop.f32.mrb[0].mxu0
      %v2426 = vadd.f32 %v1906, %v2425
      %v2427 = vpop.f32.mrb[0].mxu0
      %2428 = vmatprep.mubr.bf16.mxu0 %v1725
      %2429 = vmatmul.mubr.bf16.gmra.mrb[0].mxu0 %v1724
      %v2430 = vpop.f32.mrb[0].mxu0
      %v2431 = vadd.f32 %v1906, %v2430
      %v2432 = vpop.f32.mrb[0].mxu0
      %v2433 = vpop.f32.mrb[0].mxu0
      %v2434 = vadd.f32 %v1906, %v2433
      %v2435 = vpop.f32.mrb[0].mxu0
      %2436 = vmatprep.mubr.bf16.mxu0 %v1728
      %2437 = vmatmul.mubr.bf16.gmra.mrb[0].mxu0 %v1727
      %v2438 = vpop.f32.mrb[0].mxu0
      %v2439 = vadd.f32 %v1906, %v2438
      %v2440 = vpop.f32.mrb[0].mxu0
      %v2441 = vpop.f32.mrb[0].mxu0
      %v2442 = vadd.f32 %v1906, %v2441
      %v2443 = vpop.f32.mrb[0].mxu0
      %2444 = vmatprep.mubr.bf16.mxu0 %v1731
      %2445 = vmatmul.mubr.bf16.gmra.mrb[0].mxu0 %v1730
      %v2446 = vpop.f32.mrb[0].mxu0
      %v2447 = vadd.f32 %v1906, %v2446
      %v2448 = vpop.f32.mrb[0].mxu0
      %v2449 = vpop.f32.mrb[0].mxu0
      %v2450 = vadd.f32 %v1906, %v2449
      %v2451 = vpop.f32.mrb[0].mxu0
      %2452 = vmatprep.mubr.bf16.mxu0 %v1734
      %2453 = vmatmul.mubr.bf16.gmra.mrb[0].mxu0 %v1733
      %v2454 = vpop.f32.mrb[0].mxu0
      %v2455 = vadd.f32 %v1906, %v2454
      %v2456 = vpop.f32.mrb[0].mxu0
      %v2457 = vpop.f32.mrb[0].mxu0
      %v2458 = vadd.f32 %v1906, %v2457
      %v2459 = vpop.f32.mrb[0].mxu0
      %2460 = vmatprep.mubr.bf16.mxu0 %v1737
      %2461 = vmatmul.mubr.bf16.gmra.mrb[0].mxu0 %v1736
      %v2462 = vpop.f32.mrb[0].mxu0
      %v2463 = vadd.f32 %v1906, %v2462
      %v2464 = vpop.f32.mrb[0].mxu0
      %v2465 = vpop.f32.mrb[0].mxu0
      %v2466 = vadd.f32 %v1906, %v2465
      %v2467 = vpop.f32.mrb[0].mxu0
      %2468 = vmatprep.mubr.bf16.mxu0 %v1740
      %2469 = vmatmul.mubr.bf16.gmra.mrb[0].mxu0 %v1739
      %v2470 = vpop.f32.mrb[0].mxu0
      %v2471 = vadd.f32 %v1906, %v2470
      %v2472 = vpop.f32.mrb[0].mxu0
      %v2473 = vpop.f32.mrb[0].mxu0
      %v2474 = vadd.f32 %v1906, %v2473
      %v2475 = vpop.f32.mrb[0].mxu0
      %2476 = vmatprep.mubr.bf16.mxu0 %v1743
      %2477 = vmatmul.mubr.bf16.gmra.mrb[0].mxu0 %v1742
      %v2478 = vpop.f32.mrb[0].mxu0
      %v2479 = vadd.f32 %v1906, %v2478
      %v2480 = vpop.f32.mrb[0].mxu0
      %v2481 = vpop.f32.mrb[0].mxu0
      %v2482 = vadd.f32 %v1906, %v2481
      %v2483 = vpop.f32.mrb[0].mxu0
      %2484 = vmatprep.mubr.bf16.mxu0 %v1746
      %2485 = vmatmul.mubr.bf16.gmra.mrb[0].mxu0 %v1745
      %v2486 = vpop.f32.mrb[0].mxu0
      %v2487 = vadd.f32 %v1906, %v2486
      %v2488 = vpop.f32.mrb[0].mxu0
      %v2489 = vpop.f32.mrb[0].mxu0
      %v2490 = vadd.f32 %v1906, %v2489
      %v2491 = vpop.f32.mrb[0].mxu0
      %2492 = vmatprep.mubr.bf16.mxu0 %v1749
      %2493 = vmatmul.mubr.bf16.gmra.mrb[0].mxu0 %v1748
      %v2494 = vpop.f32.mrb[0].mxu0
      %v2495 = vadd.f32 %v1906, %v2494
      %v2496 = vpop.f32.mrb[0].mxu0
      %v2497 = vpop.f32.mrb[0].mxu0
      %v2498 = vadd.f32 %v1906, %v2497
      %v2499 = vpop.f32.mrb[0].mxu0
      %2500 = vdwg.mxu0
      %2501 = vmatprep.subr.bf16.mxu0 0
      %2502 = vmatpush1.bf16.msra.mxu0 %v2212
      %2503 = vmatprep.subr.bf16.mxu0 0
      %2504 = vmatpush1.bf16.msra.mxu0 %v2213
      %2505 = vmatprep.subr.bf16.mxu0 0
      %2506 = vmatpush1.bf16.msra.mxu0 %v2214
      %2507 = vmatprep.subr.bf16.mxu0 0
      %2508 = vmatpush1.bf16.msra.mxu0 %v2215
      %2509 = vmatprep.subr.bf16.mxu0 0
      %2510 = vmatpush1.bf16.msra.mxu0 %v2216
      %2511 = vmatprep.subr.bf16.mxu0 0
      %2512 = vmatpush1.bf16.msra.mxu0 %v2217
      %2513 = vmatprep.subr.bf16.mxu0 0
      %2514 = vmatpush1.bf16.msra.mxu0 %v2218
      %2515 = vmatprep.subr.bf16.mxu0 0
      %2516 = vmatpush1.bf16.msra.mxu0 %v2219
      %2517 = vmatprep.subr.bf16.mxu0 0
      %2518 = vmatpush1.bf16.msra.mxu0 %v2220
      %2519 = vmatprep.subr.bf16.mxu0 0
      %2520 = vmatpush1.bf16.msra.mxu0 %v2221
      %2521 = vmatprep.subr.bf16.mxu0 0
      %2522 = vmatpush1.bf16.msra.mxu0 %v2222
      %2523 = vmatprep.subr.bf16.mxu0 0
      %2524 = vmatpush1.bf16.msra.mxu0 %v2223
      %2525 = vmatprep.subr.bf16.mxu0 0
      %2526 = vmatpush1.bf16.msra.mxu0 %v2224
      %2527 = vmatprep.subr.bf16.mxu0 0
      %2528 = vmatpush1.bf16.msra.mxu0 %v2225
      %2529 = vmatprep.subr.bf16.mxu0 0
      %2530 = vmatpush1.bf16.msra.mxu0 %v2226
      %2531 = vmatprep.subr.bf16.mxu0 0
      %2532 = vmatpush1.bf16.msra.mxu0 %v2227
      %2533 = vmatprep.mubr.bf16.mxu0 %v1706
      %2534 = vmatmul.mubr.bf16.gmra.mrb[0].mxu0 %v1705
      %v2535 = vpop.f32.mrb[0].mxu0
      %v2536 = vadd.f32 %v2375, %v2535
      %v2537 = vpop.f32.mrb[0].mxu0
      %v2538 = vpop.f32.mrb[0].mxu0
      %v2539 = vadd.f32 %v2378, %v2538
      %v2540 = vpop.f32.mrb[0].mxu0
      %2541 = vmatprep.mubr.bf16.mxu0 %v1709
      %2542 = vmatmul.mubr.bf16.gmra.mrb[0].mxu0 %v1708
      %v2543 = vpop.f32.mrb[0].mxu0
      %v2544 = vadd.f32 %v2383, %v2543
      %v2545 = vpop.f32.mrb[0].mxu0
      %v2546 = vpop.f32.mrb[0].mxu0
      %v2547 = vadd.f32 %v2386, %v2546
      %v2548 = vpop.f32.mrb[0].mxu0
      %2549 = vmatprep.mubr.bf16.mxu0 %v1712
      %2550 = vmatmul.mubr.bf16.gmra.mrb[0].mxu0 %v1711
      %v2551 = vpop.f32.mrb[0].mxu0
      %v2552 = vadd.f32 %v2391, %v2551
      %v2553 = vpop.f32.mrb[0].mxu0
      %v2554 = vpop.f32.mrb[0].mxu0
      %v2555 = vadd.f32 %v2394, %v2554
      %v2556 = vpop.f32.mrb[0].mxu0
      %2557 = vmatprep.mubr.bf16.mxu0 %v1715
      %2558 = vmatmul.mubr.bf16.gmra.mrb[0].mxu0 %v1714
      %v2559 = vpop.f32.mrb[0].mxu0
      %v2560 = vadd.f32 %v2399, %v2559
      %v2561 = vpop.f32.mrb[0].mxu0
      %v2562 = vpop.f32.mrb[0].mxu0
      %v2563 = vadd.f32 %v2402, %v2562
      %v2564 = vpop.f32.mrb[0].mxu0
      %2565 = vmatprep.mubr.bf16.mxu0 %v1718
      %2566 = vmatmul.mubr.bf16.gmra.mrb[0].mxu0 %v1717
      %v2567 = vpop.f32.mrb[0].mxu0
      %v2568 = vadd.f32 %v2407, %v2567
      %v2569 = vpop.f32.mrb[0].mxu0
      %v2570 = vpop.f32.mrb[0].mxu0
      %v2571 = vadd.f32 %v2410, %v2570
      %v2572 = vpop.f32.mrb[0].mxu0
      %2573 = vmatprep.mubr.bf16.mxu0 %v1721
      %2574 = vmatmul.mubr.bf16.gmra.mrb[0].mxu0 %v1720
      %v2575 = vpop.f32.mrb[0].mxu0
      %v2576 = vadd.f32 %v2415, %v2575
      %v2577 = vpop.f32.mrb[0].mxu0
      %v2578 = vpop.f32.mrb[0].mxu0
      %v2579 = vadd.f32 %v2418, %v2578
      %v2580 = vpop.f32.mrb[0].mxu0
      %2581 = vmatprep.mubr.bf16.mxu0 %v1724
      %2582 = vmatmul.mubr.bf16.gmra.mrb[0].mxu0 %v1723
      %v2583 = vpop.f32.mrb[0].mxu0
      %v2584 = vadd.f32 %v2423, %v2583
      %v2585 = vpop.f32.mrb[0].mxu0
      %v2586 = vpop.f32.mrb[0].mxu0
      %v2587 = vadd.f32 %v2426, %v2586
      %v2588 = vpop.f32.mrb[0].mxu0
      %2589 = vmatprep.mubr.bf16.mxu0 %v1727
      %2590 = vmatmul.mubr.bf16.gmra.mrb[0].mxu0 %v1726
      %v2591 = vpop.f32.mrb[0].mxu0
      %v2592 = vadd.f32 %v2431, %v2591
      %v2593 = vpop.f32.mrb[0].mxu0
      %v2594 = vpop.f32.mrb[0].mxu0
      %v2595 = vadd.f32 %v2434, %v2594
      %v2596 = vpop.f32.mrb[0].mxu0
      %2597 = vmatprep.mubr.bf16.mxu0 %v1730
      %2598 = vmatmul.mubr.bf16.gmra.mrb[0].mxu0 %v1729
      %v2599 = vpop.f32.mrb[0].mxu0
      %v2600 = vadd.f32 %v2439, %v2599
      %v2601 = vpop.f32.mrb[0].mxu0
      %v2602 = vpop.f32.mrb[0].mxu0
      %v2603 = vadd.f32 %v2442, %v2602
      %v2604 = vpop.f32.mrb[0].mxu0
      %2605 = vmatprep.mubr.bf16.mxu0 %v1733
      %2606 = vmatmul.mubr.bf16.gmra.mrb[0].mxu0 %v1732
      %v2607 = vpop.f32.mrb[0].mxu0
      %v2608 = vadd.f32 %v2447, %v2607
      %v2609 = vpop.f32.mrb[0].mxu0
      %v2610 = vpop.f32.mrb[0].mxu0
      %v2611 = vadd.f32 %v2450, %v2610
      %v2612 = vpop.f32.mrb[0].mxu0
      %2613 = vmatprep.mubr.bf16.mxu0 %v1736
      %2614 = vmatmul.mubr.bf16.gmra.mrb[0].mxu0 %v1735
      %v2615 = vpop.f32.mrb[0].mxu0
      %v2616 = vadd.f32 %v2455, %v2615
      %v2617 = vpop.f32.mrb[0].mxu0
      %v2618 = vpop.f32.mrb[0].mxu0
      %v2619 = vadd.f32 %v2458, %v2618
      %v2620 = vpop.f32.mrb[0].mxu0
      %2621 = vmatprep.mubr.bf16.mxu0 %v1739
      %2622 = vmatmul.mubr.bf16.gmra.mrb[0].mxu0 %v1738
      %v2623 = vpop.f32.mrb[0].mxu0
      %v2624 = vadd.f32 %v2463, %v2623
      %v2625 = vpop.f32.mrb[0].mxu0
      %v2626 = vpop.f32.mrb[0].mxu0
      %v2627 = vadd.f32 %v2466, %v2626
      %v2628 = vpop.f32.mrb[0].mxu0
      %2629 = vmatprep.mubr.bf16.mxu0 %v1742
      %2630 = vmatmul.mubr.bf16.gmra.mrb[0].mxu0 %v1741
      %v2631 = vpop.f32.mrb[0].mxu0
      %v2632 = vadd.f32 %v2471, %v2631
      %v2633 = vpop.f32.mrb[0].mxu0
      %v2634 = vpop.f32.mrb[0].mxu0
      %v2635 = vadd.f32 %v2474, %v2634
      %v2636 = vpop.f32.mrb[0].mxu0
      %2637 = vmatprep.mubr.bf16.mxu0 %v1745
      %2638 = vmatmul.mubr.bf16.gmra.mrb[0].mxu0 %v1744
      %v2639 = vpop.f32.mrb[0].mxu0
      %v2640 = vadd.f32 %v2479, %v2639
      %v2641 = vpop.f32.mrb[0].mxu0
      %v2642 = vpop.f32.mrb[0].mxu0
      %v2643 = vadd.f32 %v2482, %v2642
      %v2644 = vpop.f32.mrb[0].mxu0
      %2645 = vmatprep.mubr.bf16.mxu0 %v1748
      %2646 = vmatmul.mubr.bf16.gmra.mrb[0].mxu0 %v1747
      %v2647 = vpop.f32.mrb[0].mxu0
      %v2648 = vadd.f32 %v2487, %v2647
      %v2649 = vpop.f32.mrb[0].mxu0
      %v2650 = vpop.f32.mrb[0].mxu0
      %v2651 = vadd.f32 %v2490, %v2650
      %v2652 = vpop.f32.mrb[0].mxu0
      %2653 = vmatprep.mubr.bf16.mxu0 %v1751
      %2654 = vmatmul.mubr.bf16.gmra.mrb[0].mxu0 %v1750
      %v2655 = vpop.f32.mrb[0].mxu0
      %v2656 = vadd.f32 %v2495, %v2655
      %v2657 = vpop.f32.mrb[0].mxu0
      %v2658 = vpop.f32.mrb[0].mxu0
      %v2659 = vadd.f32 %v2498, %v2658
      %v2660 = vpop.f32.mrb[0].mxu0
      %2661 = vdwg.mxu0
      %2662 = vmatprep.subr.bf16.mxu0 0
      %2663 = vmatpush1.bf16.msra.mxu0 %v2228
      %2664 = vmatprep.subr.bf16.mxu0 0
      %2665 = vmatpush1.bf16.msra.mxu0 %v2229
      %2666 = vmatprep.subr.bf16.mxu0 0
      %2667 = vmatpush1.bf16.msra.mxu0 %v2230
      %2668 = vmatprep.subr.bf16.mxu0 0
      %2669 = vmatpush1.bf16.msra.mxu0 %v2231
      %2670 = vmatprep.subr.bf16.mxu0 0
      %2671 = vmatpush1.bf16.msra.mxu0 %v2232
      %2672 = vmatprep.subr.bf16.mxu0 0
      %2673 = vmatpush1.bf16.msra.mxu0 %v2233
      %2674 = vmatprep.subr.bf16.mxu0 0
      %2675 = vmatpush1.bf16.msra.mxu0 %v2234
      %2676 = vmatprep.subr.bf16.mxu0 0
      %2677 = vmatpush1.bf16.msra.mxu0 %v2235
      %2678 = vmatprep.subr.bf16.mxu0 0
      %2679 = vmatpush1.bf16.msra.mxu0 %v2236
      %2680 = vmatprep.subr.bf16.mxu0 0
      %2681 = vmatpush1.bf16.msra.mxu0 %v2237
      %2682 = vmatprep.subr.bf16.mxu0 0
      %2683 = vmatpush1.bf16.msra.mxu0 %v2238
      %2684 = vmatprep.subr.bf16.mxu0 0
      %2685 = vmatpush1.bf16.msra.mxu0 %v2239
      %2686 = vmatprep.subr.bf16.mxu0 0
      %2687 = vmatpush1.bf16.msra.mxu0 %v2240
      %2688 = vmatprep.subr.bf16.mxu0 0
      %2689 = vmatpush1.bf16.msra.mxu0 %v2241
      %2690 = vmatprep.subr.bf16.mxu0 0
      %2691 = vmatpush1.bf16.msra.mxu0 %v2242
      %2692 = vmatprep.subr.bf16.mxu0 0
      %2693 = vmatpush1.bf16.msra.mxu0 %v2243
      %2694 = vmatprep.mubr.bf16.mxu0 %v1708
      %2695 = vmatmul.mubr.bf16.gmra.mrb[0].mxu0 %v1707
      %v2696 = vpop.f32.mrb[0].mxu0
      %v2697 = vadd.f32 %v2536, %v2696
      %v2698 = vpop.f32.mrb[0].mxu0
      %v2699 = vpop.f32.mrb[0].mxu0
      %v2700 = vadd.f32 %v2539, %v2699
      %v2701 = vpop.f32.mrb[0].mxu0
      %2702 = vmatprep.mubr.bf16.mxu0 %v1711
      %2703 = vmatmul.mubr.bf16.gmra.mrb[0].mxu0 %v1710
      %v2704 = vpop.f32.mrb[0].mxu0
      %v2705 = vadd.f32 %v2544, %v2704
      %v2706 = vpop.f32.mrb[0].mxu0
      %v2707 = vpop.f32.mrb[0].mxu0
      %v2708 = vadd.f32 %v2547, %v2707
      %v2709 = vpop.f32.mrb[0].mxu0
      %2710 = vmatprep.mubr.bf16.mxu0 %v1714
      %2711 = vmatmul.mubr.bf16.gmra.mrb[0].mxu0 %v1713
      %v2712 = vpop.f32.mrb[0].mxu0
      %v2713 = vadd.f32 %v2552, %v2712
      %v2714 = vpop.f32.mrb[0].mxu0
      %v2715 = vpop.f32.mrb[0].mxu0
      %v2716 = vadd.f32 %v2555, %v2715
      %v2717 = vpop.f32.mrb[0].mxu0
      %2718 = vmatprep.mubr.bf16.mxu0 %v1717
      %2719 = vmatmul.mubr.bf16.gmra.mrb[0].mxu0 %v1716
      %v2720 = vpop.f32.mrb[0].mxu0
      %v2721 = vadd.f32 %v2560, %v2720
      %v2722 = vpop.f32.mrb[0].mxu0
      %v2723 = vpop.f32.mrb[0].mxu0
      %v2724 = vadd.f32 %v2563, %v2723
      %v2725 = vpop.f32.mrb[0].mxu0
      %2726 = vmatprep.mubr.bf16.mxu0 %v1720
      %2727 = vmatmul.mubr.bf16.gmra.mrb[0].mxu0 %v1719
      %v2728 = vpop.f32.mrb[0].mxu0
      %v2729 = vadd.f32 %v2568, %v2728
      %v2730 = vpop.f32.mrb[0].mxu0
      %v2731 = vpop.f32.mrb[0].mxu0
      %v2732 = vadd.f32 %v2571, %v2731
      %v2733 = vpop.f32.mrb[0].mxu0
      %2734 = vmatprep.mubr.bf16.mxu0 %v1723
      %2735 = vmatmul.mubr.bf16.gmra.mrb[0].mxu0 %v1722
      %v2736 = vpop.f32.mrb[0].mxu0
      %v2737 = vadd.f32 %v2576, %v2736
      %v2738 = vpop.f32.mrb[0].mxu0
      %v2739 = vpop.f32.mrb[0].mxu0
      %v2740 = vadd.f32 %v2579, %v2739
      %v2741 = vpop.f32.mrb[0].mxu0
      %2742 = vmatprep.mubr.bf16.mxu0 %v1726
      %2743 = vmatmul.mubr.bf16.gmra.mrb[0].mxu0 %v1725
      %v2744 = vpop.f32.mrb[0].mxu0
      %v2745 = vadd.f32 %v2584, %v2744
      %v2746 = vpop.f32.mrb[0].mxu0
      %v2747 = vpop.f32.mrb[0].mxu0
      %v2748 = vadd.f32 %v2587, %v2747
      %v2749 = vpop.f32.mrb[0].mxu0
      %2750 = vmatprep.mubr.bf16.mxu0 %v1729
      %2751 = vmatmul.mubr.bf16.gmra.mrb[0].mxu0 %v1728
      %v2752 = vpop.f32.mrb[0].mxu0
      %v2753 = vadd.f32 %v2592, %v2752
      %v2754 = vpop.f32.mrb[0].mxu0
      %v2755 = vpop.f32.mrb[0].mxu0
      %v2756 = vadd.f32 %v2595, %v2755
      %v2757 = vpop.f32.mrb[0].mxu0
      %2758 = vmatprep.mubr.bf16.mxu0 %v1732
      %2759 = vmatmul.mubr.bf16.gmra.mrb[0].mxu0 %v1731
      %v2760 = vpop.f32.mrb[0].mxu0
      %v2761 = vadd.f32 %v2600, %v2760
      %v2762 = vpop.f32.mrb[0].mxu0
      %v2763 = vpop.f32.mrb[0].mxu0
      %v2764 = vadd.f32 %v2603, %v2763
      %v2765 = vpop.f32.mrb[0].mxu0
      %2766 = vmatprep.mubr.bf16.mxu0 %v1735
      %2767 = vmatmul.mubr.bf16.gmra.mrb[0].mxu0 %v1734
      %v2768 = vpop.f32.mrb[0].mxu0
      %v2769 = vadd.f32 %v2608, %v2768
      %v2770 = vpop.f32.mrb[0].mxu0
      %v2771 = vpop.f32.mrb[0].mxu0
      %v2772 = vadd.f32 %v2611, %v2771
      %v2773 = vpop.f32.mrb[0].mxu0
      %2774 = vmatprep.mubr.bf16.mxu0 %v1738
      %2775 = vmatmul.mubr.bf16.gmra.mrb[0].mxu0 %v1737
      %v2776 = vpop.f32.mrb[0].mxu0
      %v2777 = vadd.f32 %v2616, %v2776
      %v2778 = vpop.f32.mrb[0].mxu0
      %v2779 = vpop.f32.mrb[0].mxu0
      %v2780 = vadd.f32 %v2619, %v2779
      %v2781 = vpop.f32.mrb[0].mxu0
      %2782 = vmatprep.mubr.bf16.mxu0 %v1741
      %2783 = vmatmul.mubr.bf16.gmra.mrb[0].mxu0 %v1740
      %v2784 = vpop.f32.mrb[0].mxu0
      %v2785 = vadd.f32 %v2624, %v2784
      %v2786 = vpop.f32.mrb[0].mxu0
      %v2787 = vpop.f32.mrb[0].mxu0
      %v2788 = vadd.f32 %v2627, %v2787
      %v2789 = vpop.f32.mrb[0].mxu0
      %2790 = vmatprep.mubr.bf16.mxu0 %v1744
      %2791 = vmatmul.mubr.bf16.gmra.mrb[0].mxu0 %v1743
      %v2792 = vpop.f32.mrb[0].mxu0
      %v2793 = vadd.f32 %v2632, %v2792
      %v2794 = vpop.f32.mrb[0].mxu0
      %v2795 = vpop.f32.mrb[0].mxu0
      %v2796 = vadd.f32 %v2635, %v2795
      %v2797 = vpop.f32.mrb[0].mxu0
      %2798 = vmatprep.mubr.bf16.mxu0 %v1747
      %2799 = vmatmul.mubr.bf16.gmra.mrb[0].mxu0 %v1746
      %v2800 = vpop.f32.mrb[0].mxu0
      %v2801 = vadd.f32 %v2640, %v2800
      %v2802 = vpop.f32.mrb[0].mxu0
      %v2803 = vpop.f32.mrb[0].mxu0
      %v2804 = vadd.f32 %v2643, %v2803
      %v2805 = vpop.f32.mrb[0].mxu0
      %2806 = vmatprep.mubr.bf16.mxu0 %v1750
      %2807 = vmatmul.mubr.bf16.gmra.mrb[0].mxu0 %v1749
      %v2808 = vpop.f32.mrb[0].mxu0
      %v2809 = vadd.f32 %v2648, %v2808
      %v2810 = vpop.f32.mrb[0].mxu0
      %v2811 = vpop.f32.mrb[0].mxu0
      %v2812 = vadd.f32 %v2651, %v2811
      %v2813 = vpop.f32.mrb[0].mxu0
      %2814 = vmatprep.mubr.bf16.mxu0 %v1753
      %2815 = vmatmul.mubr.bf16.gmra.mrb[0].mxu0 %v1752
      %v2816 = vpop.f32.mrb[0].mxu0
      %v2817 = vadd.f32 %v2656, %v2816
      %v2818 = vpop.f32.mrb[0].mxu0
      %v2819 = vpop.f32.mrb[0].mxu0
      %v2820 = vadd.f32 %v2659, %v2819
      %v2821 = vpop.f32.mrb[0].mxu0
      %2822 = vdwg.mxu0
      %2823 = vmatprep.subr.bf16.mxu0 0
      %2824 = vmatpush1.bf16.msra.mxu0 %v2244
      %2825 = vmatprep.subr.bf16.mxu0 0
      %2826 = vmatpush1.bf16.msra.mxu0 %v2245
      %2827 = vmatprep.subr.bf16.mxu0 0
      %2828 = vmatpush1.bf16.msra.mxu0 %v2246
      %2829 = vmatprep.subr.bf16.mxu0 0
      %2830 = vmatpush1.bf16.msra.mxu0 %v2247
      %2831 = vmatprep.subr.bf16.mxu0 0
      %2832 = vmatpush1.bf16.msra.mxu0 %v2248
      %2833 = vmatprep.subr.bf16.mxu0 0
      %2834 = vmatpush1.bf16.msra.mxu0 %v2249
      %2835 = vmatprep.subr.bf16.mxu0 0
      %2836 = vmatpush1.bf16.msra.mxu0 %v2250
      %2837 = vmatprep.subr.bf16.mxu0 0
      %2838 = vmatpush1.bf16.msra.mxu0 %v2251
      %2839 = vmatprep.subr.bf16.mxu0 0
      %2840 = vmatpush1.bf16.msra.mxu0 %v2252
      %2841 = vmatprep.subr.bf16.mxu0 0
      %2842 = vmatpush1.bf16.msra.mxu0 %v2253
      %2843 = vmatprep.subr.bf16.mxu0 0
      %2844 = vmatpush1.bf16.msra.mxu0 %v2254
      %2845 = vmatprep.subr.bf16.mxu0 0
      %2846 = vmatpush1.bf16.msra.mxu0 %v2255
      %2847 = vmatprep.subr.bf16.mxu0 0
      %2848 = vmatpush1.bf16.msra.mxu0 %v2256
      %2849 = vmatprep.subr.bf16.mxu0 0
      %2850 = vmatpush1.bf16.msra.mxu0 %v2257
      %2851 = vmatprep.subr.bf16.mxu0 0
      %2852 = vmatpush1.bf16.msra.mxu0 %v2258
      %2853 = vmatprep.subr.bf16.mxu0 0
      %2854 = vmatpush1.bf16.msra.mxu0 %v2259
      %2855 = vmatprep.mubr.bf16.mxu0 %v1710
      %2856 = vmatmul.mubr.bf16.gmra.mrb[0].mxu0 %v1709
      %v2857 = vpop.f32.mrb[0].mxu0
      %v2858 = vadd.f32 %v2697, %v2857
      %v2859 = vpop.f32.mrb[0].mxu0
      %v2860 = vpop.f32.mrb[0].mxu0
      %v2861 = vadd.f32 %v2700, %v2860
      %v2862 = vpop.f32.mrb[0].mxu0
      %2863 = vmatprep.mubr.bf16.mxu0 %v1713
      %2864 = vmatmul.mubr.bf16.gmra.mrb[0].mxu0 %v1712
      %v2865 = vpop.f32.mrb[0].mxu0
      %v2866 = vadd.f32 %v2705, %v2865
      %v2867 = vpop.f32.mrb[0].mxu0
      %v2868 = vpop.f32.mrb[0].mxu0
      %v2869 = vadd.f32 %v2708, %v2868
      %v2870 = vpop.f32.mrb[0].mxu0
      %2871 = vmatprep.mubr.bf16.mxu0 %v1716
      %2872 = vmatmul.mubr.bf16.gmra.mrb[0].mxu0 %v1715
      %v2873 = vpop.f32.mrb[0].mxu0
      %v2874 = vadd.f32 %v2713, %v2873
      %v2875 = vpop.f32.mrb[0].mxu0
      %v2876 = vpop.f32.mrb[0].mxu0
      %v2877 = vadd.f32 %v2716, %v2876
      %v2878 = vpop.f32.mrb[0].mxu0
      %2879 = vmatprep.mubr.bf16.mxu0 %v1719
      %2880 = vmatmul.mubr.bf16.gmra.mrb[0].mxu0 %v1718
      %v2881 = vpop.f32.mrb[0].mxu0
      %v2882 = vadd.f32 %v2721, %v2881
      %v2883 = vpop.f32.mrb[0].mxu0
      %v2884 = vpop.f32.mrb[0].mxu0
      %v2885 = vadd.f32 %v2724, %v2884
      %v2886 = vpop.f32.mrb[0].mxu0
      %2887 = vmatprep.mubr.bf16.mxu0 %v1722
      %2888 = vmatmul.mubr.bf16.gmra.mrb[0].mxu0 %v1721
      %v2889 = vpop.f32.mrb[0].mxu0
      %v2890 = vadd.f32 %v2729, %v2889
      %v2891 = vpop.f32.mrb[0].mxu0
      %v2892 = vpop.f32.mrb[0].mxu0
      %v2893 = vadd.f32 %v2732, %v2892
      %v2894 = vpop.f32.mrb[0].mxu0
      %2895 = vmatprep.mubr.bf16.mxu0 %v1725
      %2896 = vmatmul.mubr.bf16.gmra.mrb[0].mxu0 %v1724
      %v2897 = vpop.f32.mrb[0].mxu0
      %v2898 = vadd.f32 %v2737, %v2897
      %v2899 = vpop.f32.mrb[0].mxu0
      %v2900 = vpop.f32.mrb[0].mxu0
      %v2901 = vadd.f32 %v2740, %v2900
      %v2902 = vpop.f32.mrb[0].mxu0
      %2903 = vmatprep.mubr.bf16.mxu0 %v1728
      %2904 = vmatmul.mubr.bf16.gmra.mrb[0].mxu0 %v1727
      %v2905 = vpop.f32.mrb[0].mxu0
      %v2906 = vadd.f32 %v2745, %v2905
      %v2907 = vpop.f32.mrb[0].mxu0
      %v2908 = vpop.f32.mrb[0].mxu0
      %v2909 = vadd.f32 %v2748, %v2908
      %v2910 = vpop.f32.mrb[0].mxu0
      %2911 = vmatprep.mubr.bf16.mxu0 %v1731
      %2912 = vmatmul.mubr.bf16.gmra.mrb[0].mxu0 %v1730
      %v2913 = vpop.f32.mrb[0].mxu0
      %v2914 = vadd.f32 %v2753, %v2913
      %v2915 = vpop.f32.mrb[0].mxu0
      %v2916 = vpop.f32.mrb[0].mxu0
      %v2917 = vadd.f32 %v2756, %v2916
      %v2918 = vpop.f32.mrb[0].mxu0
      %2919 = vmatprep.mubr.bf16.mxu0 %v1734
      %2920 = vmatmul.mubr.bf16.gmra.mrb[0].mxu0 %v1733
      %v2921 = vpop.f32.mrb[0].mxu0
      %v2922 = vadd.f32 %v2761, %v2921
      %v2923 = vpop.f32.mrb[0].mxu0
      %v2924 = vpop.f32.mrb[0].mxu0
      %v2925 = vadd.f32 %v2764, %v2924
      %v2926 = vpop.f32.mrb[0].mxu0
      %2927 = vmatprep.mubr.bf16.mxu0 %v1737
      %2928 = vmatmul.mubr.bf16.gmra.mrb[0].mxu0 %v1736
      %v2929 = vpop.f32.mrb[0].mxu0
      %v2930 = vadd.f32 %v2769, %v2929
      %v2931 = vpop.f32.mrb[0].mxu0
      %v2932 = vpop.f32.mrb[0].mxu0
      %v2933 = vadd.f32 %v2772, %v2932
      %v2934 = vpop.f32.mrb[0].mxu0
      %2935 = vmatprep.mubr.bf16.mxu0 %v1740
      %2936 = vmatmul.mubr.bf16.gmra.mrb[0].mxu0 %v1739
      %v2937 = vpop.f32.mrb[0].mxu0
      %v2938 = vadd.f32 %v2777, %v2937
      %v2939 = vpop.f32.mrb[0].mxu0
      %v2940 = vpop.f32.mrb[0].mxu0
      %v2941 = vadd.f32 %v2780, %v2940
      %v2942 = vpop.f32.mrb[0].mxu0
      %2943 = vmatprep.mubr.bf16.mxu0 %v1743
      %2944 = vmatmul.mubr.bf16.gmra.mrb[0].mxu0 %v1742
      %v2945 = vpop.f32.mrb[0].mxu0
      %v2946 = vadd.f32 %v2785, %v2945
      %v2947 = vpop.f32.mrb[0].mxu0
      %v2948 = vpop.f32.mrb[0].mxu0
      %v2949 = vadd.f32 %v2788, %v2948
      %v2950 = vpop.f32.mrb[0].mxu0
      %2951 = vmatprep.mubr.bf16.mxu0 %v1746
      %2952 = vmatmul.mubr.bf16.gmra.mrb[0].mxu0 %v1745
      %v2953 = vpop.f32.mrb[0].mxu0
      %v2954 = vadd.f32 %v2793, %v2953
      %v2955 = vpop.f32.mrb[0].mxu0
      %v2956 = vpop.f32.mrb[0].mxu0
      %v2957 = vadd.f32 %v2796, %v2956
      %v2958 = vpop.f32.mrb[0].mxu0
      %2959 = vmatprep.mubr.bf16.mxu0 %v1749
      %2960 = vmatmul.mubr.bf16.gmra.mrb[0].mxu0 %v1748
      %v2961 = vpop.f32.mrb[0].mxu0
      %v2962 = vadd.f32 %v2801, %v2961
      %v2963 = vpop.f32.mrb[0].mxu0
      %v2964 = vpop.f32.mrb[0].mxu0
      %v2965 = vadd.f32 %v2804, %v2964
      %v2966 = vpop.f32.mrb[0].mxu0
      %2967 = vmatprep.mubr.bf16.mxu0 %v1752
      %2968 = vmatmul.mubr.bf16.gmra.mrb[0].mxu0 %v1751
      %v2969 = vpop.f32.mrb[0].mxu0
      %v2970 = vadd.f32 %v2809, %v2969
      %v2971 = vpop.f32.mrb[0].mxu0
      %v2972 = vpop.f32.mrb[0].mxu0
      %v2973 = vadd.f32 %v2812, %v2972
      %v2974 = vpop.f32.mrb[0].mxu0
      %2975 = vmatprep.mubr.bf16.mxu0 %v1755
      %2976 = vmatmul.mubr.bf16.gmra.mrb[0].mxu0 %v1754
      %v2977 = vpop.f32.mrb[0].mxu0
      %v2978 = vadd.f32 %v2817, %v2977
      %v2979 = vpop.f32.mrb[0].mxu0
      %v2980 = vpop.f32.mrb[0].mxu0
      %v2981 = vadd.f32 %v2820, %v2980
      %v2982 = vpop.f32.mrb[0].mxu0
      %2983 = vdwg.mxu0
      %2984 = vmatprep.subr.bf16.mxu0 0
      %2985 = vmatpush1.bf16.msra.mxu0 %v2260
      %2986 = vmatprep.subr.bf16.mxu0 0
      %2987 = vmatpush1.bf16.msra.mxu0 %v2261
      %2988 = vmatprep.subr.bf16.mxu0 0
      %2989 = vmatpush1.bf16.msra.mxu0 %v2262
      %2990 = vmatprep.subr.bf16.mxu0 0
      %2991 = vmatpush1.bf16.msra.mxu0 %v2263
      %2992 = vmatprep.subr.bf16.mxu0 0
      %2993 = vmatpush1.bf16.msra.mxu0 %v2264
      %2994 = vmatprep.subr.bf16.mxu0 0
      %2995 = vmatpush1.bf16.msra.mxu0 %v2265
      %2996 = vmatprep.subr.bf16.mxu0 0
      %2997 = vmatpush1.bf16.msra.mxu0 %v2266
      %2998 = vmatprep.subr.bf16.mxu0 0
      %2999 = vmatpush1.bf16.msra.mxu0 %v2267
      %3000 = vmatprep.subr.bf16.mxu0 0
      %3001 = vmatpush1.bf16.msra.mxu0 0
      %3002 = vmatprep.subr.bf16.mxu0 0
      %3003 = vmatpush1.bf16.msra.mxu0 0
      %3004 = vmatprep.subr.bf16.mxu0 0
      %3005 = vmatpush1.bf16.msra.mxu0 0
      %3006 = vmatprep.subr.bf16.mxu0 0
      %3007 = vmatpush1.bf16.msra.mxu0 0
      %3008 = vmatprep.subr.bf16.mxu0 0
      %3009 = vmatpush1.bf16.msra.mxu0 0
      %3010 = vmatprep.subr.bf16.mxu0 0
      %3011 = vmatpush1.bf16.msra.mxu0 0
      %3012 = vmatprep.subr.bf16.mxu0 0
      %3013 = vmatpush1.bf16.msra.mxu0 0
      %3014 = vmatprep.subr.bf16.mxu0 0
      %3015 = vmatpush1.bf16.msra.mxu0 0
      %3016 = vmatprep.mubr.bf16.mxu0 0
      %3017 = vmatmul.mubr.bf16.gmra.mrb[0].mxu0 %v1711
      %v3018 = vpop.f32.mrb[0].mxu0
      %v3019 = vadd.f32 %v2858, %v3018
      %v3020 = vpop.f32.mrb[0].mxu0
      %v3021 = vpop.f32.mrb[0].mxu0
      %v3022 = vadd.f32 %v2861, %v3021
      %v3023 = vpop.f32.mrb[0].mxu0
      %3024 = vmatprep.mubr.bf16.mxu0 0
      %3025 = vmatmul.mubr.bf16.gmra.mrb[0].mxu0 %v1714
      %v3026 = vpop.f32.mrb[0].mxu0
      %v3027 = vadd.f32 %v2866, %v3026
      %v3028 = vpop.f32.mrb[0].mxu0
      %v3029 = vpop.f32.mrb[0].mxu0
      %v3030 = vadd.f32 %v2869, %v3029
      %v3031 = vpop.f32.mrb[0].mxu0
      %3032 = vmatprep.mubr.bf16.mxu0 0
      %3033 = vmatmul.mubr.bf16.gmra.mrb[0].mxu0 %v1717
      %v3034 = vpop.f32.mrb[0].mxu0
      %v3035 = vadd.f32 %v2874, %v3034
      %v3036 = vpop.f32.mrb[0].mxu0
      %v3037 = vpop.f32.mrb[0].mxu0
      %v3038 = vadd.f32 %v2877, %v3037
      %v3039 = vpop.f32.mrb[0].mxu0
      %3040 = vmatprep.mubr.bf16.mxu0 0
      %3041 = vmatmul.mubr.bf16.gmra.mrb[0].mxu0 %v1720
      %v3042 = vpop.f32.mrb[0].mxu0
      %v3043 = vadd.f32 %v2882, %v3042
      %v3044 = vpop.f32.mrb[0].mxu0
      %v3045 = vpop.f32.mrb[0].mxu0
      %v3046 = vadd.f32 %v2885, %v3045
      %v3047 = vpop.f32.mrb[0].mxu0
      %3048 = vmatprep.mubr.bf16.mxu0 0
      %3049 = vmatmul.mubr.bf16.gmra.mrb[0].mxu0 %v1723
      %v3050 = vpop.f32.mrb[0].mxu0
      %v3051 = vadd.f32 %v2890, %v3050
      %v3052 = vpop.f32.mrb[0].mxu0
      %v3053 = vpop.f32.mrb[0].mxu0
      %v3054 = vadd.f32 %v2893, %v3053
      %v3055 = vpop.f32.mrb[0].mxu0
      %3056 = vmatprep.mubr.bf16.mxu0 0
      %3057 = vmatmul.mubr.bf16.gmra.mrb[0].mxu0 %v1726
      %v3058 = vpop.f32.mrb[0].mxu0
      %v3059 = vadd.f32 %v2898, %v3058
      %v3060 = vpop.f32.mrb[0].mxu0
      %v3061 = vpop.f32.mrb[0].mxu0
      %v3062 = vadd.f32 %v2901, %v3061
      %v3063 = vpop.f32.mrb[0].mxu0
      %3064 = vmatprep.mubr.bf16.mxu0 0
      %3065 = vmatmul.mubr.bf16.gmra.mrb[0].mxu0 %v1729
      %v3066 = vpop.f32.mrb[0].mxu0
      %v3067 = vadd.f32 %v2906, %v3066
      %v3068 = vpop.f32.mrb[0].mxu0
      %v3069 = vpop.f32.mrb[0].mxu0
      %v3070 = vadd.f32 %v2909, %v3069
      %v3071 = vpop.f32.mrb[0].mxu0
      %3072 = vmatprep.mubr.bf16.mxu0 0
      %3073 = vmatmul.mubr.bf16.gmra.mrb[0].mxu0 %v1732
      %v3074 = vpop.f32.mrb[0].mxu0
      %v3075 = vadd.f32 %v2914, %v3074
      %v3076 = vpop.f32.mrb[0].mxu0
      %v3077 = vpop.f32.mrb[0].mxu0
      %v3078 = vadd.f32 %v2917, %v3077
      %v3079 = vpop.f32.mrb[0].mxu0
      %3080 = vmatprep.mubr.bf16.mxu0 0
      %3081 = vmatmul.mubr.bf16.gmra.mrb[0].mxu0 %v1735
      %v3082 = vpop.f32.mrb[0].mxu0
      %v3083 = vadd.f32 %v2922, %v3082
      %v3084 = vpop.f32.mrb[0].mxu0
      %v3085 = vpop.f32.mrb[0].mxu0
      %v3086 = vadd.f32 %v2925, %v3085
      %v3087 = vpop.f32.mrb[0].mxu0
      %3088 = vmatprep.mubr.bf16.mxu0 0
      %3089 = vmatmul.mubr.bf16.gmra.mrb[0].mxu0 %v1738
      %v3090 = vpop.f32.mrb[0].mxu0
      %v3091 = vadd.f32 %v2930, %v3090
      %v3092 = vpop.f32.mrb[0].mxu0
      %v3093 = vpop.f32.mrb[0].mxu0
      %v3094 = vadd.f32 %v2933, %v3093
      %v3095 = vpop.f32.mrb[0].mxu0
      %3096 = vmatprep.mubr.bf16.mxu0 0
      %3097 = vmatmul.mubr.bf16.gmra.mrb[0].mxu0 %v1741
      %v3098 = vpop.f32.mrb[0].mxu0
      %v3099 = vadd.f32 %v2938, %v3098
      %v3100 = vpop.f32.mrb[0].mxu0
      %v3101 = vpop.f32.mrb[0].mxu0
      %v3102 = vadd.f32 %v2941, %v3101
      %v3103 = vpop.f32.mrb[0].mxu0
      %3104 = vmatprep.mubr.bf16.mxu0 0
      %3105 = vmatmul.mubr.bf16.gmra.mrb[0].mxu0 %v1744
      %v3106 = vpop.f32.mrb[0].mxu0
      %v3107 = vadd.f32 %v2946, %v3106
      %v3108 = vpop.f32.mrb[0].mxu0
      %v3109 = vpop.f32.mrb[0].mxu0
      %v3110 = vadd.f32 %v2949, %v3109
      %v3111 = vpop.f32.mrb[0].mxu0
      %3112 = vmatprep.mubr.bf16.mxu0 0
      %3113 = vmatmul.mubr.bf16.gmra.mrb[0].mxu0 %v1747
      %v3114 = vpop.f32.mrb[0].mxu0
      %v3115 = vadd.f32 %v2954, %v3114
      %v3116 = vpop.f32.mrb[0].mxu0
      %v3117 = vpop.f32.mrb[0].mxu0
      %v3118 = vadd.f32 %v2957, %v3117
      %v3119 = vpop.f32.mrb[0].mxu0
      %3120 = vmatprep.mubr.bf16.mxu0 0
      %3121 = vmatmul.mubr.bf16.gmra.mrb[0].mxu0 %v1750
      %v3122 = vpop.f32.mrb[0].mxu0
      %v3123 = vadd.f32 %v2962, %v3122
      %v3124 = vpop.f32.mrb[0].mxu0
      %v3125 = vpop.f32.mrb[0].mxu0
      %v3126 = vadd.f32 %v2965, %v3125
      %v3127 = vpop.f32.mrb[0].mxu0
      %3128 = vmatprep.mubr.bf16.mxu0 0
      %3129 = vmatmul.mubr.bf16.gmra.mrb[0].mxu0 %v1753
      %v3130 = vpop.f32.mrb[0].mxu0
      %v3131 = vadd.f32 %v2970, %v3130
      %v3132 = vpop.f32.mrb[0].mxu0
      %v3133 = vpop.f32.mrb[0].mxu0
      %v3134 = vadd.f32 %v2973, %v3133
      %v3135 = vpop.f32.mrb[0].mxu0
      %3136 = vmatprep.mubr.bf16.mxu0 0
      %3137 = vmatmul.mubr.bf16.gmra.mrb[0].mxu0 %v1756
      %v3138 = vpop.f32.mrb[0].mxu0
      %v3139 = vadd.f32 %v2978, %v3138
      %v3140 = vpop.f32.mrb[0].mxu0
      %v3141 = vpop.f32.mrb[0].mxu0
      %v3142 = vadd.f32 %v2981, %v3141
      %v3143 = vpop.f32.mrb[0].mxu0
      %3144 = vdwg.mxu0
      %v3145 = vld [vmem:[%s293] sm:$0xff]
      %v3146 = vld [vmem:[%s293 + $0x8] sm:$0xff]
      %v3147 = vld [vmem:[%s293 + $0x10] sm:$0xff]
      %v3148 = vld [vmem:[%s293 + $0x18] sm:$0xff]
      %v3149 = vld [vmem:[%s293 + $0x20] sm:$0xff]
      %v3150 = vld [vmem:[%s293 + $0x28] sm:$0xff]
      %v3151 = vld [vmem:[%s293 + $0x30] sm:$0xff]
      %v3152 = vld [vmem:[%s293 + $0x38] sm:$0xff]
      %v3153 = vld [vmem:[%s293 + $0x40] sm:$0xff]
      %v3154 = vld [vmem:[%s293 + $0x48] sm:$0xff]
      %v3155 = vld [vmem:[%s293 + $0x50] sm:$0xff]
      %v3156 = vld [vmem:[%s293 + $0x58] sm:$0xff]
      %v3157 = vld [vmem:[%s293 + $0x60] sm:$0xff]
      %v3158 = vld [vmem:[%s293 + $0x68] sm:$0xff]
      %v3159 = vld [vmem:[%s293 + $0x70] sm:$0xff]
      %v3160 = vld [vmem:[%s293 + $0x78] sm:$0xff]
      %v3161 = vld [vmem:[%s293 + $0x80] sm:$0xff]
      %v3162 = vld [vmem:[%s293 + $0x88] sm:$0xff]
      %v3163 = vld [vmem:[%s293 + $0x90] sm:$0xff]
      %v3164 = vld [vmem:[%s293 + $0x98] sm:$0xff]
      %v3165 = vld [vmem:[%s293 + $0xa0] sm:$0xff]
      %v3166 = vld [vmem:[%s293 + $0xa8] sm:$0xff]
      %v3167 = vld [vmem:[%s293 + $0xb0] sm:$0xff]
      %v3168 = vld [vmem:[%s293 + $0xb8] sm:$0xff]
      %v3169 = vld [vmem:[%s293 + $0xc0] sm:$0xff]
      %v3170 = vld [vmem:[%s293 + $0xc8] sm:$0xff]
      %v3171 = vld [vmem:[%s293 + $0xd0] sm:$0xff]
      %v3172 = vld [vmem:[%s293 + $0xd8] sm:$0xff]
      %v3173 = vld [vmem:[%s293 + $0xe0] sm:$0xff]
      %v3174 = vld [vmem:[%s293 + $0xe8] sm:$0xff]
      %v3175 = vld [vmem:[%s293 + $0xf0] sm:$0xff]
      %v3176 = vld [vmem:[%s293 + $0xf8] sm:$0xff]
      %v3177 = vadd.f32 %v3019, %v3145
      %v3178 = vadd.f32 %v3022, %v3146
      %v3179 = vadd.f32 %v3027, %v3147
      %v3180 = vadd.f32 %v3030, %v3148
      %v3181 = vadd.f32 %v3035, %v3149
      %v3182 = vadd.f32 %v3038, %v3150
      %v3183 = vadd.f32 %v3043, %v3151
      %v3184 = vadd.f32 %v3046, %v3152
      %v3185 = vadd.f32 %v3051, %v3153
      %v3186 = vadd.f32 %v3054, %v3154
      %v3187 = vadd.f32 %v3059, %v3155
      %v3188 = vadd.f32 %v3062, %v3156
      %v3189 = vadd.f32 %v3067, %v3157
      %v3190 = vadd.f32 %v3070, %v3158
      %v3191 = vadd.f32 %v3075, %v3159
      %v3192 = vadd.f32 %v3078, %v3160
      %v3193 = vadd.f32 %v3083, %v3161
      %v3194 = vadd.f32 %v3086, %v3162
      %v3195 = vadd.f32 %v3091, %v3163
      %v3196 = vadd.f32 %v3094, %v3164
      %v3197 = vadd.f32 %v3099, %v3165
      %v3198 = vadd.f32 %v3102, %v3166
      %v3199 = vadd.f32 %v3107, %v3167
      %v3200 = vadd.f32 %v3110, %v3168
      %v3201 = vadd.f32 %v3115, %v3169
      %v3202 = vadd.f32 %v3118, %v3170
      %v3203 = vadd.f32 %v3123, %v3171
      %v3204 = vadd.f32 %v3126, %v3172
      %v3205 = vadd.f32 %v3131, %v3173
      %v3206 = vadd.f32 %v3134, %v3174
      %v3207 = vadd.f32 %v3139, %v3175
      %v3208 = vadd.f32 %v3142, %v3176
      %v3209 = vmax.f32 %v3177, 0.0
      %v3210 = vmax.f32 %v3178, 0.0
      %v3211 = vmax.f32 %v3179, 0.0
      %v3212 = vmax.f32 %v3180, 0.0
      %v3213 = vmax.f32 %v3181, 0.0
      %v3214 = vmax.f32 %v3182, 0.0
      %v3215 = vmax.f32 %v3183, 0.0
      %v3216 = vmax.f32 %v3184, 0.0
      %v3217 = vmax.f32 %v3185, 0.0
      %v3218 = vmax.f32 %v3186, 0.0
      %v3219 = vmax.f32 %v3187, 0.0
      %v3220 = vmax.f32 %v3188, 0.0
      %v3221 = vmax.f32 %v3189, 0.0
      %v3222 = vmax.f32 %v3190, 0.0
      %v3223 = vmax.f32 %v3191, 0.0
      %v3224 = vmax.f32 %v3192, 0.0
      %v3225 = vmax.f32 %v3193, 0.0
      %v3226 = vmax.f32 %v3194, 0.0
      %v3227 = vmax.f32 %v3195, 0.0
      %v3228 = vmax.f32 %v3196, 0.0
      %v3229 = vmax.f32 %v3197, 0.0
      %v3230 = vmax.f32 %v3198, 0.0
      %v3231 = vmax.f32 %v3199, 0.0
      %v3232 = vmax.f32 %v3200, 0.0
      %v3233 = vmax.f32 %v3201, 0.0
      %v3234 = vmax.f32 %v3202, 0.0
      %v3235 = vmax.f32 %v3203, 0.0
      %v3236 = vmax.f32 %v3204, 0.0
      %v3237 = vmax.f32 %v3205, 0.0
      %v3238 = vmax.f32 %v3206, 0.0
      %v3239 = vmax.f32 %v3207, 0.0
      %v3240 = vmax.f32 %v3208, 0.0
      %3241 = vst [vmem:[%s298] sm:$0xff] %v3209
      %3242 = vst [vmem:[%s298 + $0x8] sm:$0xff] %v3210
      %3243 = vst [vmem:[%s298 + $0x10] sm:$0xff] %v3211
      %3244 = vst [vmem:[%s298 + $0x18] sm:$0xff] %v3212
      %3245 = vst [vmem:[%s298 + $0x20] sm:$0xff] %v3213
      %3246 = vst [vmem:[%s298 + $0x28] sm:$0xff] %v3214
      %3247 = vst [vmem:[%s298 + $0x30] sm:$0xff] %v3215
      %3248 = vst [vmem:[%s298 + $0x38] sm:$0xff] %v3216
      %3249 = vst [vmem:[%s298 + $0x40] sm:$0xff] %v3217
      %3250 = vst [vmem:[%s298 + $0x48] sm:$0xff] %v3218
      %3251 = vst [vmem:[%s298 + $0x50] sm:$0xff] %v3219
      %3252 = vst [vmem:[%s298 + $0x58] sm:$0xff] %v3220
      %3253 = vst [vmem:[%s298 + $0x60] sm:$0xff] %v3221
      %3254 = vst [vmem:[%s298 + $0x68] sm:$0xff] %v3222
      %3255 = vst [vmem:[%s298 + $0x70] sm:$0xff] %v3223
      %3256 = vst [vmem:[%s298 + $0x78] sm:$0xff] %v3224
      %3257 = vst [vmem:[%s298 + $0x80] sm:$0xff] %v3225
      %3258 = vst [vmem:[%s298 + $0x88] sm:$0xff] %v3226
      %3259 = vst [vmem:[%s298 + $0x90] sm:$0xff] %v3227
      %3260 = vst [vmem:[%s298 + $0x98] sm:$0xff] %v3228
      %3261 = vst [vmem:[%s298 + $0xa0] sm:$0xff] %v3229
      %3262 = vst [vmem:[%s298 + $0xa8] sm:$0xff] %v3230
      %3263 = vst [vmem:[%s298 + $0xb0] sm:$0xff] %v3231
      %3264 = vst [vmem:[%s298 + $0xb8] sm:$0xff] %v3232
      %3265 = vst [vmem:[%s298 + $0xc0] sm:$0xff] %v3233
      %3266 = vst [vmem:[%s298 + $0xc8] sm:$0xff] %v3234
      %3267 = vst [vmem:[%s298 + $0xd0] sm:$0xff] %v3235
      %3268 = vst [vmem:[%s298 + $0xd8] sm:$0xff] %v3236
      %3269 = vst [vmem:[%s298 + $0xe0] sm:$0xff] %v3237
      %3270 = vst [vmem:[%s298 + $0xe8] sm:$0xff] %v3238
      %3271 = vst [vmem:[%s298 + $0xf0] sm:$0xff] %v3239
      %3272 = vst [vmem:[%s298 + $0xf8] sm:$0xff] %v3240
      %p3273 = scmp.lt.s32.totalorder %s18, 1
      %s3274 = scalar_select %p3273, %s18, 1
      %s3275 = smul.addr %s3274, 32
      %s3276 = smul.addr %s3275, 8
      %s3277 = scalar_lea.vmem %s7, %s3276
      // Predicated region
      $region49: #{rrb_forward.3} parent=47 // pred_check
        %p3278 = pneg %p193
      $region50: #{rrb_forward.3} parent=47 // pred_check_branch
        %3280 = sbr.rel (%p3278) target = $region52
      $region51: #{rrb_forward.3} parent=47 // pred_region
        _
      $region52: #{rrb_forward.3} parent=47 // pred_fallthru
        _
    $region48: #{rrb_forward.3} parent=5 // pred_fallthru
      _
    %p3281 = scmp.le.s32.totalorder 2, %s13
    // Predicated region
    $region53: #{rrb_forward.3} parent=5 // pred_check
      %p3282 = pneg %p3281
    $region54: #{rrb_forward.3} parent=5 // pred_check_branch
      %3284 = sbr.rel (%p3282) target = $region56
    $region55: #{rrb_forward.3} parent=5 // pred_region
      %s3285 = ssub.s32 %s13, 2
      // Predicated region
      $region57: #{rrb_forward.3} parent=55 // pred_check
        %p3286 = pneg %p199
      $region58: #{rrb_forward.3} parent=55 // pred_check_branch
        %3288 = sbr.rel (%p3286) target = $region60
      $region59: #{rrb_forward.3} parent=55 // pred_region
        %p3289 = scmp.lt.s32.totalorder %s19, 1
        %s3290 = scalar_select %p3289, %s19, 1
        %s3291 = smul.addr %s3290, 32
        %s3292 = smul.addr %s3291, 8
        %s3293 = scalar_lea.vmem %s7, %s3292
      $region60: #{rrb_forward.3} parent=55 // pred_fallthru
        _
    $region56: #{rrb_forward.3} parent=5 // pred_fallthru
      _
  $region6: #{rrb_forward.3} parent=0 // loop_footer
    %s17 = sadd.s32 1, %s13
  $region7: #{rrb_forward.3} parent=0 // loop_footer_branch
    %12 = sbr.rel target = $region3
  $region8: #{rrb_forward.3} parent=0 // loop_exit
    _

</llo_original>
